<compile_context>
chip_gen: v7x
topology: tpu7x:2x2x1
jax: 0.10.0
libtpu: 0.0.40
codegen_flags: <defaults>
</compile_context>

<pallas_src>
import jax
import jax.numpy as jnp
from jax.experimental import pallas as pl
from jax.experimental.pallas import tpu as pltpu

NUM_CLASSES = 10
LOGIT_PAD = 128          # pad classifier lanes to a full vreg width
FEATURE_DIM = 1280       # efficientnet_b0 classifier[1].in_features
STEM_CH = 32             # efficientnet_b0 stem output channels
HIDDEN = 512             # fc1 output size
BN_EPS = 1e-5


# ---------------------------- Fused Pallas kernel ----------------------------

def _fused_forward_kernel(p_ref, ws_ref, bs_ref, wh_ref, bh_ref,
                          w1_ref, b1_ref, w2_ref, b2_ref, o_ref):
    """One image per grid step; the whole forward pass stays on-chip.

    p_ref : (1, hw, 27)  f32   im2col patches of one image
    ws/bs : (27, 32) f32 / (1, 32) f32          stem conv (BN folded)
    wh/bh : (32, 1280) bf16 / (1, 1280) f32     1x1 head conv (BN folded)
    w1/b1 : (1280, 512) bf16 / (1, 512) f32     fc1 with BatchNorm1d folded in
    w2/b2 : (512, 128) f32 / (1, 128) f32       fc2, zero-padded to 128 lanes
    o_ref : (1, 1, 128) f32                     padded logits
    """
    patches = p_ref[0]                                            # (hw, 27)

    # --- stem conv 3x3/s2 (im2col matmul) + bias + SiLU ---
    stem = jnp.dot(patches, ws_ref[...], preferred_element_type=jnp.float32)
    stem = stem + bs_ref[...]
    stem = stem * jax.nn.sigmoid(stem)                            # SiLU (EUP), f32

    # --- 1x1 head conv (32 -> 1280) + SiLU: flat lane-dense matmul, bf16 MXU ---
    head = jnp.dot(stem.astype(jnp.bfloat16), wh_ref[...],
                   preferred_element_type=jnp.float32)            # (hw, 1280)
    head = head + bh_ref[...]
    head = head * jax.nn.sigmoid(head)                            # SiLU, f32

    # --- global average pool over spatial positions ---
    feat = jnp.mean(head, axis=0, keepdims=True)                  # (1, 1280)

    # --- dropout(identity, eval) -> fc1 (+folded BN) -> ReLU -> fc2 ---
    h = jnp.dot(feat.astype(jnp.bfloat16), w1_ref[...],
                preferred_element_type=jnp.float32) + b1_ref[...]
    h = jnp.maximum(h, 0.0)                                       # ReLU, f32
    logits = jnp.dot(h, w2_ref[...],
                     preferred_element_type=jnp.float32) + b2_ref[...]
    o_ref[...] = logits[None]                                     # (1, 1, 128)


def fused_forward(patches, params):
    n, hw, kdim = patches.shape
    out = pl.pallas_call(
        _fused_forward_kernel,
        out_shape=jax.ShapeDtypeStruct((n, 1, LOGIT_PAD), jnp.float32),
        grid=(n,),
        in_specs=[
            pl.BlockSpec((1, hw, kdim), lambda i: (i, 0, 0)),          # patches
            pl.BlockSpec((kdim, STEM_CH), lambda i: (0, 0)),           # w_stem
            pl.BlockSpec((1, STEM_CH), lambda i: (0, 0)),              # b_stem
            pl.BlockSpec((STEM_CH, FEATURE_DIM), lambda i: (0, 0)),    # w_head
            pl.BlockSpec((1, FEATURE_DIM), lambda i: (0, 0)),          # b_head
            pl.BlockSpec((FEATURE_DIM, HIDDEN), lambda i: (0, 0)),     # w1 (BN folded)
            pl.BlockSpec((1, HIDDEN), lambda i: (0, 0)),               # b1 (BN folded)
            pl.BlockSpec((HIDDEN, LOGIT_PAD), lambda i: (0, 0)),       # w2 (lane-padded)
            pl.BlockSpec((1, LOGIT_PAD), lambda i: (0, 0)),            # b2 (lane-padded)
        ],
        out_specs=pl.BlockSpec((1, 1, LOGIT_PAD), lambda i: (i, 0, 0)),
        compiler_params=pltpu.CompilerParams(
            dimension_semantics=("parallel",)),
    )(patches, params["w_stem"], params["b_stem"],
      params["w_head"], params["b_head"],
      params["w1"], params["b1"], params["w2"], params["b2"])
    # drop the lane padding added for unmasked stores
    return out.reshape(n, LOGIT_PAD)[:, :NUM_CLASSES]


# ------------------------------- JAX glue -------------------------------

def im2col_3x3_s2_p1(x_nhwc):
    """3x3 / stride-2 / pad-1 patches; patch feature order is (kh, kw, cin)."""
    n, h, w, c = x_nhwc.shape
    xp = jnp.pad(x_nhwc, ((0, 0), (1, 1), (1, 1), (0, 0)))
    ho = (h + 2 - 3) // 2 + 1
    wo = (w + 2 - 3) // 2 + 1
    cols = []
    for di in range(3):
        for dj in range(3):
            cols.append(xp[:, di:di + 2 * ho:2, dj:dj + 2 * wo:2, :])
    patches = jnp.concatenate(cols, axis=-1)            # (n, ho, wo, 9*c)
    return patches.reshape(n, ho * wo, 9 * c), ho, wo


def init_params(key):
    ks = jax.random.split(key, 10)
    p = {}
    # backbone stem conv (3x3x3 -> 32), BN folded into weight/bias (f32, tiny)
    p["w_stem"] = jax.random.normal(ks[0], (27, STEM_CH), jnp.float32) * 0.05
    p["b_stem"] = jax.random.normal(ks[1], (1, STEM_CH), jnp.float32) * 0.01
    # backbone 1x1 head conv (32 -> 1280), BN folded; bf16 weight for MXU/DMA
    p["w_head"] = (jax.random.normal(ks[2], (STEM_CH, FEATURE_DIM), jnp.float32)
                   * 0.05).astype(jnp.bfloat16)
    p["b_head"] = jax.random.normal(ks[3], (1, FEATURE_DIM), jnp.float32) * 0.01
    # fc1 (1280 -> 512) with BatchNorm1d (eval) folded in
    w1 = jax.random.normal(ks[4], (FEATURE_DIM, HIDDEN), jnp.float32) * 0.02
    b1 = jnp.zeros((HIDDEN,), jnp.float32)
    gamma = 1.0 + 0.1 * jax.random.normal(ks[5], (HIDDEN,), jnp.float32)
    beta = 0.1 * jax.random.normal(ks[6], (HIDDEN,), jnp.float32)
    r_mean = 0.1 * jax.random.normal(ks[7], (HIDDEN,), jnp.float32)
    r_var = jax.random.uniform(ks[8], (HIDDEN,), jnp.float32, 0.5, 1.5)
    scale = gamma / jnp.sqrt(r_var + BN_EPS)
    # y = (x @ w1 + b1) * scale + (beta - r_mean * scale)  ==  x @ w1' + b1'
    p["w1"] = (w1 * scale[None, :]).astype(jnp.bfloat16)
    p["b1"] = (b1 * scale + (beta - r_mean * scale)).reshape(1, HIDDEN)
    # fc2 (512 -> num_classes), zero-padded to 128 lanes for unmasked stores
    w2 = jax.random.normal(ks[9], (HIDDEN, NUM_CLASSES), jnp.float32) * 0.02
    p["w2"] = jnp.zeros((HIDDEN, LOGIT_PAD), jnp.float32).at[:, :NUM_CLASSES].set(w2)
    p["b2"] = jnp.zeros((1, LOGIT_PAD), jnp.float32)
    return p


@jax.jit
def face_recognition_forward(x_nchw, params):
    x = jnp.transpose(x_nchw, (0, 2, 3, 1)).astype(jnp.float32)   # NCHW -> NHWC
    patches, _, _ = im2col_3x3_s2_p1(x)                           # (n, ho*wo, 27)
    return fused_forward(patches, params)                         # (n, num_classes)


if __name__ == "__main__":
    key = jax.random.PRNGKey(0)
    k_x, k_p = jax.random.split(key)
    # small image shape consistent with a 3-channel CNN input
    x = jax.random.normal(k_x, (2, 3, 32, 32), jnp.float32)
    params = init_params(k_p)
    out = face_recognition_forward(x, params)
    out = jax.block_until_ready(out)
    assert out.shape == (2, NUM_CLASSES) and out.dtype == jnp.float32
    assert bool(jnp.all(jnp.isfinite(out)))
    print("KERNEL_OK")
</pallas_src>

<mosaic_0001>
module attributes {stable_mosaic.version = 11 : i64} {
  func.func @_fused_forward_kernel(%arg0: i32, %arg1: memref<1x256x27xf32, #tpu.memory_space<vmem>>, %arg2: memref<27x32xf32, #tpu.memory_space<vmem>>, %arg3: memref<1x32xf32, #tpu.memory_space<vmem>>, %arg4: memref<32x1280xbf16, #tpu.memory_space<vmem>>, %arg5: memref<1x1280xf32, #tpu.memory_space<vmem>>, %arg6: memref<1280x512xbf16, #tpu.memory_space<vmem>>, %arg7: memref<1x512xf32, #tpu.memory_space<vmem>>, %arg8: memref<512x128xf32, #tpu.memory_space<vmem>>, %arg9: memref<1x128xf32, #tpu.memory_space<vmem>>, %arg10: memref<1x1x128xf32, #tpu.memory_space<vmem>>) attributes {dimension_semantics = [#tpu.dimension_semantics<parallel>], iteration_bounds = array<i64: 2>, scalar_prefetch = 0 : i64, scratch_operands = 0 : i64, tpu.core_type = #tpu.core_type<tc>, window_params = [{transform_indices = @transform_0, window_bounds = array<i64: 1, 256, 27>}, {pipeline_mode = #tpu.pipeline_mode<synchronous>, transform_indices = @transform_1, window_bounds = array<i64: 27, 32>}, {pipeline_mode = #tpu.pipeline_mode<synchronous>, transform_indices = @transform_2, window_bounds = array<i64: 1, 32>}, {pipeline_mode = #tpu.pipeline_mode<synchronous>, transform_indices = @transform_3, window_bounds = array<i64: 32, 1280>}, {pipeline_mode = #tpu.pipeline_mode<synchronous>, transform_indices = @transform_4, window_bounds = array<i64: 1, 1280>}, {pipeline_mode = #tpu.pipeline_mode<synchronous>, transform_indices = @transform_5, window_bounds = array<i64: 1280, 512>}, {pipeline_mode = #tpu.pipeline_mode<synchronous>, transform_indices = @transform_6, window_bounds = array<i64: 1, 512>}, {pipeline_mode = #tpu.pipeline_mode<synchronous>, transform_indices = @transform_7, window_bounds = array<i64: 512, 128>}, {pipeline_mode = #tpu.pipeline_mode<synchronous>, transform_indices = @transform_8, window_bounds = array<i64: 1, 128>}, {transform_indices = @transform_9, window_bounds = array<i64: 1, 1, 128>}]} {
    %c0 = arith.constant 0 : index
    %c0_0 = arith.constant 0 : index
    %c0_1 = arith.constant 0 : index
    %0 = vector.load %arg1[%c0, %c0_0, %c0_1] : memref<1x256x27xf32, #tpu.memory_space<vmem>>, vector<1x256x27xf32>
    %1 = vector.shape_cast %0 : vector<1x256x27xf32> to vector<256x27xf32>
    %c0_2 = arith.constant 0 : index
    %c0_3 = arith.constant 0 : index
    %2 = vector.load %arg2[%c0_2, %c0_3] : memref<27x32xf32, #tpu.memory_space<vmem>>, vector<27x32xf32>
    %cst = arith.constant dense<0.000000e+00> : vector<256x32xf32>
    %3 = tpu.matmul %1, %2, %cst {dimension_numbers = #tpu.dot_dimension_numbers<[1], [0], [0], [1], [0, 0, 1, 1], [], []>} : vector<256x27xf32>, vector<27x32xf32>, vector<256x32xf32> -> vector<256x32xf32>
    %c0_4 = arith.constant 0 : index
    %c0_5 = arith.constant 0 : index
    %4 = vector.load %arg3[%c0_4, %c0_5] : memref<1x32xf32, #tpu.memory_space<vmem>>, vector<1x32xf32>
    %5 = vector.broadcast %4 : vector<1x32xf32> to vector<256x32xf32>
    %6 = arith.addf %3, %5 : vector<256x32xf32>
    %7 = arith.negf %6 : vector<256x32xf32>
    %8 = math.exp %7 : vector<256x32xf32>
    %cst_6 = arith.constant 1.000000e+00 : f32
    %9 = vector.broadcast %cst_6 : f32 to vector<256x32xf32>
    %10 = arith.addf %9, %8 : vector<256x32xf32>
    %11 = arith.divf %9, %10 : vector<256x32xf32>
    %12 = arith.mulf %6, %11 : vector<256x32xf32>
    %13 = arith.truncf %12 : vector<256x32xf32> to vector<256x32xbf16>
    %c0_7 = arith.constant 0 : index
    %c0_8 = arith.constant 0 : index
    %14 = vector.load %arg4[%c0_7, %c0_8] : memref<32x1280xbf16, #tpu.memory_space<vmem>>, vector<32x1280xbf16>
    %cst_9 = arith.constant dense<0.000000e+00> : vector<256x1280xf32>
    %15 = tpu.matmul %13, %14, %cst_9 {dimension_numbers = #tpu.dot_dimension_numbers<[1], [0], [0], [1], [0, 0, 1, 1], [], []>} : vector<256x32xbf16>, vector<32x1280xbf16>, vector<256x1280xf32> -> vector<256x1280xf32>
    %c0_10 = arith.constant 0 : index
    %c0_11 = arith.constant 0 : index
    %16 = vector.load %arg5[%c0_10, %c0_11] : memref<1x1280xf32, #tpu.memory_space<vmem>>, vector<1x1280xf32>
    %17 = vector.broadcast %16 : vector<1x1280xf32> to vector<256x1280xf32>
    %18 = arith.addf %15, %17 : vector<256x1280xf32>
    %19 = arith.negf %18 : vector<256x1280xf32>
    %20 = math.exp %19 : vector<256x1280xf32>
    %cst_12 = arith.constant 1.000000e+00 : f32
    %21 = vector.broadcast %cst_12 : f32 to vector<256x1280xf32>
    %22 = arith.addf %21, %20 : vector<256x1280xf32>
    %23 = arith.divf %21, %22 : vector<256x1280xf32>
    %24 = arith.mulf %18, %23 : vector<256x1280xf32>
    %cst_13 = arith.constant dense<0.000000e+00> : vector<1280xf32>
    %25 = vector.multi_reduction <add>, %24, %cst_13 [0] : vector<256x1280xf32> to vector<1280xf32>
    %26 = vector.shape_cast %25 : vector<1280xf32> to vector<1x1280xf32>
    %cst_14 = arith.constant 2.560000e+02 : f32
    %27 = vector.broadcast %cst_14 : f32 to vector<1x1280xf32>
    %28 = arith.divf %26, %27 : vector<1x1280xf32>
    %29 = arith.truncf %28 : vector<1x1280xf32> to vector<1x1280xbf16>
    %c0_15 = arith.constant 0 : index
    %c0_16 = arith.constant 0 : index
    %30 = vector.load %arg6[%c0_15, %c0_16] : memref<1280x512xbf16, #tpu.memory_space<vmem>>, vector<1280x512xbf16>
    %cst_17 = arith.constant dense<0.000000e+00> : vector<1x512xf32>
    %31 = tpu.matmul %29, %30, %cst_17 {dimension_numbers = #tpu.dot_dimension_numbers<[1], [0], [0], [1], [0, 0, 1, 1], [], []>} : vector<1x1280xbf16>, vector<1280x512xbf16>, vector<1x512xf32> -> vector<1x512xf32>
    %c0_18 = arith.constant 0 : index
    %c0_19 = arith.constant 0 : index
    %32 = vector.load %arg7[%c0_18, %c0_19] : memref<1x512xf32, #tpu.memory_space<vmem>>, vector<1x512xf32>
    %33 = arith.addf %31, %32 : vector<1x512xf32>
    %cst_20 = arith.constant 0.000000e+00 : f32
    %34 = vector.broadcast %cst_20 : f32 to vector<1x512xf32>
    %35 = arith.maximumf %33, %34 : vector<1x512xf32>
    %c0_21 = arith.constant 0 : index
    %c0_22 = arith.constant 0 : index
    %36 = vector.load %arg8[%c0_21, %c0_22] : memref<512x128xf32, #tpu.memory_space<vmem>>, vector<512x128xf32>
    %cst_23 = arith.constant dense<0.000000e+00> : vector<1x128xf32>
    %37 = tpu.matmul %35, %36, %cst_23 {dimension_numbers = #tpu.dot_dimension_numbers<[1], [0], [0], [1], [0, 0, 1, 1], [], []>} : vector<1x512xf32>, vector<512x128xf32>, vector<1x128xf32> -> vector<1x128xf32>
    %c0_24 = arith.constant 0 : index
    %c0_25 = arith.constant 0 : index
    %38 = vector.load %arg9[%c0_24, %c0_25] : memref<1x128xf32, #tpu.memory_space<vmem>>, vector<1x128xf32>
    %39 = arith.addf %37, %38 : vector<1x128xf32>
    %40 = vector.shape_cast %39 : vector<1x128xf32> to vector<1x1x128xf32>
    %c0_26 = arith.constant 0 : index
    %c0_27 = arith.constant 0 : index
    %c0_28 = arith.constant 0 : index
    %41 = vector.load %arg10[%c0_26, %c0_27, %c0_28] : memref<1x1x128xf32, #tpu.memory_space<vmem>>, vector<1x1x128xf32>
    tpu.vector_store %arg10[%c0_26, %c0_27, %c0_28], %40 {strides = array<i32>} : memref<1x1x128xf32, #tpu.memory_space<vmem>>, vector<1x1x128xf32>,
    return
  }
  func.func @transform_0(%arg0: i32) -> (i32, i32, i32) {
    %c0_i32 = arith.constant 0 : i32
    %c0_i32_0 = arith.constant 0 : i32
    %c0_i32_1 = arith.constant 0 : i32
    return %arg0, %c0_i32, %c0_i32_0 : i32, i32, i32
  }
  func.func @transform_1(%arg0: i32) -> (i32, i32) {
    %c0_i32 = arith.constant 0 : i32
    %c0_i32_0 = arith.constant 0 : i32
    %c0_i32_1 = arith.constant 0 : i32
    return %c0_i32, %c0_i32_0 : i32, i32
  }
  func.func @transform_2(%arg0: i32) -> (i32, i32) {
    %c0_i32 = arith.constant 0 : i32
    %c0_i32_0 = arith.constant 0 : i32
    %c0_i32_1 = arith.constant 0 : i32
    return %c0_i32, %c0_i32_0 : i32, i32
  }
  func.func @transform_3(%arg0: i32) -> (i32, i32) {
    %c0_i32 = arith.constant 0 : i32
    %c0_i32_0 = arith.constant 0 : i32
    %c0_i32_1 = arith.constant 0 : i32
    return %c0_i32, %c0_i32_0 : i32, i32
  }
  func.func @transform_4(%arg0: i32) -> (i32, i32) {
    %c0_i32 = arith.constant 0 : i32
    %c0_i32_0 = arith.constant 0 : i32
    %c0_i32_1 = arith.constant 0 : i32
    return %c0_i32, %c0_i32_0 : i32, i32
  }
  func.func @transform_5(%arg0: i32) -> (i32, i32) {
    %c0_i32 = arith.constant 0 : i32
    %c0_i32_0 = arith.constant 0 : i32
    %c0_i32_1 = arith.constant 0 : i32
    return %c0_i32, %c0_i32_0 : i32, i32
  }
  func.func @transform_6(%arg0: i32) -> (i32, i32) {
    %c0_i32 = arith.constant 0 : i32
    %c0_i32_0 = arith.constant 0 : i32
    %c0_i32_1 = arith.constant 0 : i32
    return %c0_i32, %c0_i32_0 : i32, i32
  }
  func.func @transform_7(%arg0: i32) -> (i32, i32) {
    %c0_i32 = arith.constant 0 : i32
    %c0_i32_0 = arith.constant 0 : i32
    %c0_i32_1 = arith.constant 0 : i32
    return %c0_i32, %c0_i32_0 : i32, i32
  }
  func.func @transform_8(%arg0: i32) -> (i32, i32) {
    %c0_i32 = arith.constant 0 : i32
    %c0_i32_0 = arith.constant 0 : i32
    %c0_i32_1 = arith.constant 0 : i32
    return %c0_i32, %c0_i32_0 : i32, i32
  }
  func.func @transform_9(%arg0: i32) -> (i32, i32, i32) {
    %c0_i32 = arith.constant 0 : i32
    %c0_i32_0 = arith.constant 0 : i32
    %c0_i32_1 = arith.constant 0 : i32
    return %arg0, %c0_i32, %c0_i32_0 : i32, i32, i32
  }
}

</mosaic_0001>

<llo_original>
// kernel: face_recognition_forward.1
$region0: #{face_recognition_forward.1}
  #allocation0 [shape = 'u32[]', space=smem, size = 0x4, offset = 0x4, fixed_abs, tag = 'smem constant byte address 0x4 - core index']
  #allocation1 [shape = 'u32[144,128]{1,0:T(1,128)}', space=vmem, size = 0x12000, scoped, tag = 'internal scratch']
  %s0 = inlined_call_operand.vmem [shape: f32[2,256,27], index: 0, kind: input, shape index: {}]
  %s1 = inlined_call_operand.vmem [shape: f32[27,32], index: 1, kind: input, shape index: {}]
  %s2 = inlined_call_operand.vmem [shape: f32[1,32], index: 2, kind: input, shape index: {}]
  %s3 = inlined_call_operand.vmem [shape: bf16[32,1280], index: 3, kind: input, shape index: {}]
  %s4 = inlined_call_operand.vmem [shape: f32[1,1280], index: 4, kind: input, shape index: {}]
  %s5 = inlined_call_operand.vmem [shape: bf16[1280,512], index: 5, kind: input, shape index: {}]
  %s6 = inlined_call_operand.vmem [shape: f32[1,512], index: 6, kind: input, shape index: {}]
  %s7 = inlined_call_operand.vmem [shape: f32[512,128], index: 7, kind: input, shape index: {}]
  %s8 = inlined_call_operand.vmem [shape: f32[1,128], index: 8, kind: input, shape index: {}]
  %s9 = inlined_call_operand.hbm [shape: f32[2,1,128], index: 9, kind: output, shape index: {}]
  %s10 = sld [smem:[#allocation0]]
  $region69: #{face_recognition_forward.1} parent=0
    _
  %s12 = ssub.s32 1, %s10
  %s13 = scalar_select 0, %s12, %s10
  $region1: #{face_recognition_forward.1} parent=0
    #allocation2 [shape = 'u8[1024]{0}', space=vmem, size = 0x400, scoped, tag = 'output window, operand 0']
    #allocation3 [shape = 's32[2]{0}', space=sflag, size = 0x8, scoped, tag = 'scoped memory for face_recognition_forward.1']
    %14 = vsyncpa [#allocation3], 0
    %s15 = scalar_lea.sflag [#allocation3], 1
    %16 = vsyncpa %s15, 0
    loop: start=0, step=1, limit=4
    $region2: #{face_recognition_forward.1} parent=1 // loop_pre_header
      _
    $region3: #{face_recognition_forward.1} parent=1 // loop_header
      %s18 = sphi 0, %s22
      %p19 = scmp.ge.s32.totalorder %s18, 4
      %s28 = sphi 0, %s30
      %s31 = sphi 0, %s28
      %s32 = sphi 0, %s31
      %s48 = sphi 0, %s32
      %s52 = sphi 0, %s52
      %s54 = sphi 0, %s52
      %s55 = sphi 0, %s54
      %s69 = sphi 0, %s55
      %s73 = sphi 0, %s73
      %s75 = sphi 0, %s73
      %s76 = sphi 0, %s75
      %s90 = sphi 0, %s76
      %s94 = sphi 0, %s94
      %s96 = sphi 0, %s94
      %s97 = sphi 0, %s96
      %s111 = sphi 0, %s97
      %s115 = sphi 0, %s115
      %s117 = sphi 0, %s115
      %s118 = sphi 0, %s117
      %s132 = sphi 0, %s118
      %s136 = sphi 0, %s136
      %s138 = sphi 0, %s136
      %s139 = sphi 0, %s138
      %s153 = sphi 0, %s139
      %s157 = sphi 0, %s157
      %s159 = sphi 0, %s157
      %s160 = sphi 0, %s159
      %s174 = sphi 0, %s160
      %s178 = sphi 0, %s178
      %s180 = sphi 0, %s178
      %s181 = sphi 0, %s180
      %s195 = sphi 0, %s181
      %s199 = sphi 0, %s199
      %s201 = sphi 0, %s199
      %s202 = sphi 0, %s201
      %s216 = sphi 0, %s202
      %s222 = sphi 0, %s224
      %s225 = sphi 0, %s222
      %s226 = sphi 0, %s225
      %s242 = sphi 0, %s226
    $region4: #{face_recognition_forward.1} parent=1 // loop_header_branch
      %21 = sbr.rel (%p19) target = $region8
    $region5: #{face_recognition_forward.1} parent=1 // loop_body
      %s23 = ssub.s32 %s18, 1
      %s24 = ssub.s32 %s18, 2
      %s25 = sadd.s32 %s18, 1
      %s26 = ssub.s32 %s18, %s25
      %p27 = scmp.eq.s32.totalorder %s26, 0
      %s29 = sadd.s32 %s28, 1
      %s30 = scalar_select %p27, %s28, %s29
      %p33 = pneg %p27
      %p34 = scmp.eq.s32.totalorder %s18, 1
      %p35 = por %p33, %p34
      %p36 = scmp.ne.s32.totalorder %s28, %s31
      %p37 = scmp.eq.s32.totalorder %s18, 0
      %p38 = por %p36, %p37
      %p39 = scmp.ne.s32.totalorder %s28, %s31
      %p40 = scmp.eq.s32.totalorder %s23, 1
      %p41 = por %p39, %p40
      %p42 = scmp.ne.s32.totalorder %s31, %s32
      %p43 = scmp.eq.s32.totalorder %s23, 0
      %p44 = por %p42, %p43
      %p45 = scmp.ne.s32.totalorder %s31, %s32
      %p46 = scmp.eq.s32.totalorder %s24, 1
      %p47 = por %p45, %p46
      %p49 = scmp.ne.s32.totalorder %s32, %s48
      %p50 = scmp.eq.s32.totalorder %s24, 0
      %p51 = por %p49, %p50
      %s53 = sadd.s32 %s52, 1
      %p56 = scmp.eq.s32.totalorder %s18, 1
      %p57 = scmp.ne.s32.totalorder %s52, %s54
      %p58 = scmp.eq.s32.totalorder %s18, 0
      %p59 = por %p57, %p58
      %p60 = scmp.ne.s32.totalorder %s52, %s54
      %p61 = scmp.eq.s32.totalorder %s23, 1
      %p62 = por %p60, %p61
      %p63 = scmp.ne.s32.totalorder %s54, %s55
      %p64 = scmp.eq.s32.totalorder %s23, 0
      %p65 = por %p63, %p64
      %p66 = scmp.ne.s32.totalorder %s54, %s55
      %p67 = scmp.eq.s32.totalorder %s24, 1
      %p68 = por %p66, %p67
      %p70 = scmp.ne.s32.totalorder %s55, %s69
      %p71 = scmp.eq.s32.totalorder %s24, 0
      %p72 = por %p70, %p71
      %s74 = sadd.s32 %s73, 1
      %p77 = scmp.eq.s32.totalorder %s18, 1
      %p78 = scmp.ne.s32.totalorder %s73, %s75
      %p79 = scmp.eq.s32.totalorder %s18, 0
      %p80 = por %p78, %p79
      %p81 = scmp.ne.s32.totalorder %s73, %s75
      %p82 = scmp.eq.s32.totalorder %s23, 1
      %p83 = por %p81, %p82
      %p84 = scmp.ne.s32.totalorder %s75, %s76
      %p85 = scmp.eq.s32.totalorder %s23, 0
      %p86 = por %p84, %p85
      %p87 = scmp.ne.s32.totalorder %s75, %s76
      %p88 = scmp.eq.s32.totalorder %s24, 1
      %p89 = por %p87, %p88
      %p91 = scmp.ne.s32.totalorder %s76, %s90
      %p92 = scmp.eq.s32.totalorder %s24, 0
      %p93 = por %p91, %p92
      %s95 = sadd.s32 %s94, 1
      %p98 = scmp.eq.s32.totalorder %s18, 1
      %p99 = scmp.ne.s32.totalorder %s94, %s96
      %p100 = scmp.eq.s32.totalorder %s18, 0
      %p101 = por %p99, %p100
      %p102 = scmp.ne.s32.totalorder %s94, %s96
      %p103 = scmp.eq.s32.totalorder %s23, 1
      %p104 = por %p102, %p103
      %p105 = scmp.ne.s32.totalorder %s96, %s97
      %p106 = scmp.eq.s32.totalorder %s23, 0
      %p107 = por %p105, %p106
      %p108 = scmp.ne.s32.totalorder %s96, %s97
      %p109 = scmp.eq.s32.totalorder %s24, 1
      %p110 = por %p108, %p109
      %p112 = scmp.ne.s32.totalorder %s97, %s111
      %p113 = scmp.eq.s32.totalorder %s24, 0
      %p114 = por %p112, %p113
      %s116 = sadd.s32 %s115, 1
      %p119 = scmp.eq.s32.totalorder %s18, 1
      %p120 = scmp.ne.s32.totalorder %s115, %s117
      %p121 = scmp.eq.s32.totalorder %s18, 0
      %p122 = por %p120, %p121
      %p123 = scmp.ne.s32.totalorder %s115, %s117
      %p124 = scmp.eq.s32.totalorder %s23, 1
      %p125 = por %p123, %p124
      %p126 = scmp.ne.s32.totalorder %s117, %s118
      %p127 = scmp.eq.s32.totalorder %s23, 0
      %p128 = por %p126, %p127
      %p129 = scmp.ne.s32.totalorder %s117, %s118
      %p130 = scmp.eq.s32.totalorder %s24, 1
      %p131 = por %p129, %p130
      %p133 = scmp.ne.s32.totalorder %s118, %s132
      %p134 = scmp.eq.s32.totalorder %s24, 0
      %p135 = por %p133, %p134
      %s137 = sadd.s32 %s136, 1
      %p140 = scmp.eq.s32.totalorder %s18, 1
      %p141 = scmp.ne.s32.totalorder %s136, %s138
      %p142 = scmp.eq.s32.totalorder %s18, 0
      %p143 = por %p141, %p142
      %p144 = scmp.ne.s32.totalorder %s136, %s138
      %p145 = scmp.eq.s32.totalorder %s23, 1
      %p146 = por %p144, %p145
      %p147 = scmp.ne.s32.totalorder %s138, %s139
      %p148 = scmp.eq.s32.totalorder %s23, 0
      %p149 = por %p147, %p148
      %p150 = scmp.ne.s32.totalorder %s138, %s139
      %p151 = scmp.eq.s32.totalorder %s24, 1
      %p152 = por %p150, %p151
      %p154 = scmp.ne.s32.totalorder %s139, %s153
      %p155 = scmp.eq.s32.totalorder %s24, 0
      %p156 = por %p154, %p155
      %s158 = sadd.s32 %s157, 1
      %p161 = scmp.eq.s32.totalorder %s18, 1
      %p162 = scmp.ne.s32.totalorder %s157, %s159
      %p163 = scmp.eq.s32.totalorder %s18, 0
      %p164 = por %p162, %p163
      %p165 = scmp.ne.s32.totalorder %s157, %s159
      %p166 = scmp.eq.s32.totalorder %s23, 1
      %p167 = por %p165, %p166
      %p168 = scmp.ne.s32.totalorder %s159, %s160
      %p169 = scmp.eq.s32.totalorder %s23, 0
      %p170 = por %p168, %p169
      %p171 = scmp.ne.s32.totalorder %s159, %s160
      %p172 = scmp.eq.s32.totalorder %s24, 1
      %p173 = por %p171, %p172
      %p175 = scmp.ne.s32.totalorder %s160, %s174
      %p176 = scmp.eq.s32.totalorder %s24, 0
      %p177 = por %p175, %p176
      %s179 = sadd.s32 %s178, 1
      %p182 = scmp.eq.s32.totalorder %s18, 1
      %p183 = scmp.ne.s32.totalorder %s178, %s180
      %p184 = scmp.eq.s32.totalorder %s18, 0
      %p185 = por %p183, %p184
      %p186 = scmp.ne.s32.totalorder %s178, %s180
      %p187 = scmp.eq.s32.totalorder %s23, 1
      %p188 = por %p186, %p187
      %p189 = scmp.ne.s32.totalorder %s180, %s181
      %p190 = scmp.eq.s32.totalorder %s23, 0
      %p191 = por %p189, %p190
      %p192 = scmp.ne.s32.totalorder %s180, %s181
      %p193 = scmp.eq.s32.totalorder %s24, 1
      %p194 = por %p192, %p193
      %p196 = scmp.ne.s32.totalorder %s181, %s195
      %p197 = scmp.eq.s32.totalorder %s24, 0
      %p198 = por %p196, %p197
      %s200 = sadd.s32 %s199, 1
      %p203 = scmp.eq.s32.totalorder %s18, 1
      %p204 = scmp.ne.s32.totalorder %s199, %s201
      %p205 = scmp.eq.s32.totalorder %s18, 0
      %p206 = por %p204, %p205
      %p207 = scmp.ne.s32.totalorder %s199, %s201
      %p208 = scmp.eq.s32.totalorder %s23, 1
      %p209 = por %p207, %p208
      %p210 = scmp.ne.s32.totalorder %s201, %s202
      %p211 = scmp.eq.s32.totalorder %s23, 0
      %p212 = por %p210, %p211
      %p213 = scmp.ne.s32.totalorder %s201, %s202
      %p214 = scmp.eq.s32.totalorder %s24, 1
      %p215 = por %p213, %p214
      %p217 = scmp.ne.s32.totalorder %s202, %s216
      %p218 = scmp.eq.s32.totalorder %s24, 0
      %p219 = por %p217, %p218
      %s220 = ssub.s32 %s18, %s25
      %p221 = scmp.eq.s32.totalorder %s220, 0
      %s223 = sadd.s32 %s222, 1
      %s224 = scalar_select %p221, %s222, %s223
      %p227 = pneg %p221
      %p228 = scmp.eq.s32.totalorder %s18, 1
      %p229 = por %p227, %p228
      %p230 = scmp.ne.s32.totalorder %s222, %s225
      %p231 = scmp.eq.s32.totalorder %s18, 0
      %p232 = por %p230, %p231
      %p233 = scmp.ne.s32.totalorder %s222, %s225
      %p234 = scmp.eq.s32.totalorder %s23, 1
      %p235 = por %p233, %p234
      %p236 = scmp.ne.s32.totalorder %s225, %s226
      %p237 = scmp.eq.s32.totalorder %s23, 0
      %p238 = por %p236, %p237
      %p239 = scmp.ne.s32.totalorder %s225, %s226
      %p240 = scmp.eq.s32.totalorder %s24, 1
      %p241 = por %p239, %p240
      %p243 = scmp.ne.s32.totalorder %s226, %s242
      %p244 = scmp.eq.s32.totalorder %s24, 0
      %p245 = por %p243, %p244
      %p246 = scmp.le.s32.totalorder 1, %s18
      %p247 = scmp.lt.s32.totalorder %s18, 3
      %p248 = pnand %p246, %p247
      %p249 = pneg %p248
      // Predicated region
      $region9: #{face_recognition_forward.1} parent=5 // pred_check
        _
      $region10: #{face_recognition_forward.1} parent=5 // pred_check_branch
        %251 = sbr.rel (%p248) target = $region12
      $region11: #{face_recognition_forward.1} parent=5 // pred_region
        %s252 = ssub.s32 %s18, 1
        // Predicated region
        $region13: #{face_recognition_forward.1} parent=11 // pred_check
          %p253 = pneg %p65
        $region14: #{face_recognition_forward.1} parent=11 // pred_check_branch
          %255 = sbr.rel (%p253) target = $region16
        $region15: #{face_recognition_forward.1} parent=11 // pred_region
          _
        $region16: #{face_recognition_forward.1} parent=11 // pred_fallthru
          _
        // Predicated region
        $region17: #{face_recognition_forward.1} parent=11 // pred_check
          %p256 = pneg %p86
        $region18: #{face_recognition_forward.1} parent=11 // pred_check_branch
          %258 = sbr.rel (%p256) target = $region20
        $region19: #{face_recognition_forward.1} parent=11 // pred_region
          _
        $region20: #{face_recognition_forward.1} parent=11 // pred_fallthru
          _
        // Predicated region
        $region21: #{face_recognition_forward.1} parent=11 // pred_check
          %p259 = pneg %p107
        $region22: #{face_recognition_forward.1} parent=11 // pred_check_branch
          %261 = sbr.rel (%p259) target = $region24
        $region23: #{face_recognition_forward.1} parent=11 // pred_region
          _
        $region24: #{face_recognition_forward.1} parent=11 // pred_fallthru
          _
        // Predicated region
        $region25: #{face_recognition_forward.1} parent=11 // pred_check
          %p262 = pneg %p128
        $region26: #{face_recognition_forward.1} parent=11 // pred_check_branch
          %264 = sbr.rel (%p262) target = $region28
        $region27: #{face_recognition_forward.1} parent=11 // pred_region
          _
        $region28: #{face_recognition_forward.1} parent=11 // pred_fallthru
          _
        // Predicated region
        $region29: #{face_recognition_forward.1} parent=11 // pred_check
          %p265 = pneg %p149
        $region30: #{face_recognition_forward.1} parent=11 // pred_check_branch
          %267 = sbr.rel (%p265) target = $region32
        $region31: #{face_recognition_forward.1} parent=11 // pred_region
          _
        $region32: #{face_recognition_forward.1} parent=11 // pred_fallthru
          _
        // Predicated region
        $region33: #{face_recognition_forward.1} parent=11 // pred_check
          %p268 = pneg %p170
        $region34: #{face_recognition_forward.1} parent=11 // pred_check_branch
          %270 = sbr.rel (%p268) target = $region36
        $region35: #{face_recognition_forward.1} parent=11 // pred_region
          _
        $region36: #{face_recognition_forward.1} parent=11 // pred_fallthru
          _
        // Predicated region
        $region37: #{face_recognition_forward.1} parent=11 // pred_check
          %p271 = pneg %p191
        $region38: #{face_recognition_forward.1} parent=11 // pred_check_branch
          %273 = sbr.rel (%p271) target = $region40
        $region39: #{face_recognition_forward.1} parent=11 // pred_region
          _
        $region40: #{face_recognition_forward.1} parent=11 // pred_fallthru
          _
        // Predicated region
        $region41: #{face_recognition_forward.1} parent=11 // pred_check
          %p274 = pneg %p212
        $region42: #{face_recognition_forward.1} parent=11 // pred_check_branch
          %276 = sbr.rel (%p274) target = $region44
        $region43: #{face_recognition_forward.1} parent=11 // pred_region
          _
        $region44: #{face_recognition_forward.1} parent=11 // pred_fallthru
          _
      $region12: #{face_recognition_forward.1} parent=5 // pred_fallthru
        _
      %p277 = scmp.lt.s32.totalorder %s18, 2
      // Predicated region
      $region45: #{face_recognition_forward.1} parent=5 // pred_check
        %p278 = pneg %p277
      $region46: #{face_recognition_forward.1} parent=5 // pred_check_branch
        %280 = sbr.rel (%p278) target = $region48
      $region47: #{face_recognition_forward.1} parent=5 // pred_region
        // Predicated region
        $region49: #{face_recognition_forward.1} parent=47 // pred_check
          %p281 = pneg %p38
        $region50: #{face_recognition_forward.1} parent=47 // pred_check_branch
          %283 = sbr.rel (%p281) target = $region52
        $region51: #{face_recognition_forward.1} parent=47 // pred_region
          %p284 = scmp.lt.s32.totalorder %s18, 1
          %s285 = scalar_select %p284, %s18, 1
          %s286 = smul.addr %s285, 32
          %s287 = smul.addr %s286, 8
          %s288 = scalar_lea.vmem %s0, %s287
        $region52: #{face_recognition_forward.1} parent=47 // pred_fallthru
          _
      $region48: #{face_recognition_forward.1} parent=5 // pred_fallthru
        _
      %p289 = scmp.le.s32.totalorder 1, %s18
      %p290 = scmp.lt.s32.totalorder %s18, 3
      %p291 = pnand %p289, %p290
      %p292 = pneg %p291
      // Predicated region
      $region53: #{face_recognition_forward.1} parent=5 // pred_check
        _
      $region54: #{face_recognition_forward.1} parent=5 // pred_check_branch
        %294 = sbr.rel (%p291) target = $region56
      $region55: #{face_recognition_forward.1} parent=5 // pred_region
        %s295 = ssub.s32 %s18, 1
        %p296 = scmp.lt.s32.totalorder %s23, 1
        %s297 = scalar_select %p296, %s23, 1
        %s298 = smul.addr %s297, 32
        %s299 = smul.addr %s298, 8
        %s300 = scalar_lea.vmem %s0, %s299
        %p301 = pneg %p44
        %p302 = pneg %p41
        %p303 = pneg %p65
        %p304 = pneg %p62
        %p305 = pneg %p86
        %p306 = pneg %p83
        %p307 = pneg %p107
        %p308 = pneg %p104
        %p309 = pneg %p128
        %p310 = pneg %p125
        %p311 = pneg %p149
        %p312 = pneg %p146
        %p313 = pneg %p170
        %p314 = pneg %p167
        %p315 = pneg %p191
        %p316 = pneg %p188
        %p317 = pneg %p212
        %p318 = pneg %p209
        %p319 = pneg %p238
        %p320 = pneg %p235
        %s321 = sand.u32 %s225, 1
        %s322 = scalar_lea.sflag [#allocation3], %s321
        %s323 = sand.u32 %s225, 1
        %s324 = scalar_lea.vmem [#allocation2], %s323
        %p325 = scmp.lt.s32.totalorder %s23, 1
        %s326 = scalar_select %p325, %s23, 1
        %s327 = smul.addr %s326, 32
        %s328 = smul.addr %s327, 8
        %s329 = scalar_lea.vmem %s0, %s328
        %v331 = vld [vmem:[%s329] sm:$0xff]
        %v332 = vld [vmem:[%s329 + $0x8] sm:$0xff]
        %v333 = vld [vmem:[%s329 + $0x10] sm:$0xff]
        %v334 = vld [vmem:[%s329 + $0x18] sm:$0xff]
        %v335 = vld [vmem:[%s329 + $0x20] sm:$0xff]
        %v336 = vld [vmem:[%s329 + $0x28] sm:$0xff]
        %v337 = vld [vmem:[%s329 + $0x30] sm:$0xff]
        %v338 = vld [vmem:[%s329 + $0x38] sm:$0xff]
        %v339 = vld [vmem:[%s329 + $0x40] sm:$0xff]
        %v340 = vld [vmem:[%s329 + $0x48] sm:$0xff]
        %v341 = vld [vmem:[%s329 + $0x50] sm:$0xff]
        %v342 = vld [vmem:[%s329 + $0x58] sm:$0xff]
        %v343 = vld [vmem:[%s329 + $0x60] sm:$0xff]
        %v344 = vld [vmem:[%s329 + $0x68] sm:$0xff]
        %v345 = vld [vmem:[%s329 + $0x70] sm:$0xff]
        %v346 = vld [vmem:[%s329 + $0x78] sm:$0xff]
        %v347 = vld [vmem:[%s329 + $0x80] sm:$0xff]
        %v348 = vld [vmem:[%s329 + $0x88] sm:$0xff]
        %v349 = vld [vmem:[%s329 + $0x90] sm:$0xff]
        %v350 = vld [vmem:[%s329 + $0x98] sm:$0xff]
        %v351 = vld [vmem:[%s329 + $0xa0] sm:$0xff]
        %v352 = vld [vmem:[%s329 + $0xa8] sm:$0xff]
        %v353 = vld [vmem:[%s329 + $0xb0] sm:$0xff]
        %v354 = vld [vmem:[%s329 + $0xb8] sm:$0xff]
        %v355 = vld [vmem:[%s329 + $0xc0] sm:$0xff]
        %v356 = vld [vmem:[%s329 + $0xc8] sm:$0xff]
        %v357 = vld [vmem:[%s329 + $0xd0] sm:$0xff]
        %v358 = vld [vmem:[%s329 + $0xd8] sm:$0xff]
        %v359 = vld [vmem:[%s329 + $0xe0] sm:$0xff]
        %v360 = vld [vmem:[%s329 + $0xe8] sm:$0xff]
        %v361 = vld [vmem:[%s329 + $0xf0] sm:$0xff]
        %v362 = vld [vmem:[%s329 + $0xf8] sm:$0xff]
        %v363 = vld [vmem:[%s1] sm:$0xff]
        %v364 = vld [vmem:[%s1 + $0x8] sm:$0xff]
        %v365 = vld [vmem:[%s1 + $0x10] sm:$0xff]
        %v366 = vld [vmem:[%s1 + $0x18] sm:$0x7]
        %v367 = vld [vmem:[%s2] sm:$0x1]
        %v369 = vlaneseq
        %v370 = vshrl.u32 %v369, 7
        %v371 = vsub.s32 0, %v370
        %v372 = vrot.slane %v367, %v371
        %vm374 = vcmask 220160
        %v376 = vsel %vm374, %v331, 0
        %v379 = vsel %vm374, %v332, 0
        %v382 = vsel %vm374, %v333, 0
        %v385 = vsel %vm374, %v334, 0
        %v388 = vsel %vm374, %v335, 0
        %v391 = vsel %vm374, %v336, 0
        %v394 = vsel %vm374, %v337, 0
        %v397 = vsel %vm374, %v338, 0
        %v400 = vsel %vm374, %v339, 0
        %v403 = vsel %vm374, %v340, 0
        %v406 = vsel %vm374, %v341, 0
        %v409 = vsel %vm374, %v342, 0
        %v412 = vsel %vm374, %v343, 0
        %v415 = vsel %vm374, %v344, 0
        %v418 = vsel %vm374, %v345, 0
        %v421 = vsel %vm374, %v346, 0
        %v424 = vsel %vm374, %v347, 0
        %v427 = vsel %vm374, %v348, 0
        %v430 = vsel %vm374, %v349, 0
        %v433 = vsel %vm374, %v350, 0
        %v436 = vsel %vm374, %v351, 0
        %v439 = vsel %vm374, %v352, 0
        %v442 = vsel %vm374, %v353, 0
        %v445 = vsel %vm374, %v354, 0
        %v448 = vsel %vm374, %v355, 0
        %v451 = vsel %vm374, %v356, 0
        %v454 = vsel %vm374, %v357, 0
        %v457 = vsel %vm374, %v358, 0
        %v460 = vsel %vm374, %v359, 0
        %v463 = vsel %vm374, %v360, 0
        %v466 = vsel %vm374, %v361, 0
        %v469 = vsel %vm374, %v362, 0
        %vm471 = vcmask 1042432
        %v473 = vsel %vm471, %v366, 0
        %475 = vmatprep.subr.mxu0 0.0
        %476 = vmatpush1.msra.mxu0 %v363
        %477 = vmatprep.subr.mxu0 0.0
        %478 = vmatpush1.msra.mxu0 %v364
        %479 = vmatprep.subr.mxu0 0.0
        %480 = vmatpush1.msra.mxu0 %v365
        %481 = vmatprep.subr.mxu0 0.0
        %482 = vmatpush1.msra.mxu0 %v473
        %483 = vmatprep.subr.mxu0 0.0
        %484 = vmatpush1.msra.mxu0 0.0
        %485 = vmatprep.subr.mxu0 0.0
        %486 = vmatpush1.msra.mxu0 0.0
        %487 = vmatprep.subr.mxu0 0.0
        %488 = vmatpush1.msra.mxu0 0.0
        %489 = vmatprep.subr.mxu0 0.0
        %490 = vmatpush1.msra.mxu0 0.0
        %491 = vmatprep.subr.mxu0 0.0
        %492 = vmatpush1.msra.mxu0 0.0
        %493 = vmatprep.subr.mxu0 0.0
        %494 = vmatpush1.msra.mxu0 0.0
        %495 = vmatprep.subr.mxu0 0.0
        %496 = vmatpush1.msra.mxu0 0.0
        %497 = vmatprep.subr.mxu0 0.0
        %498 = vmatpush1.msra.mxu0 0.0
        %499 = vmatprep.subr.mxu0 0.0
        %500 = vmatpush1.msra.mxu0 0.0
        %501 = vmatprep.subr.mxu0 0.0
        %502 = vmatpush1.msra.mxu0 0.0
        %503 = vmatprep.subr.mxu0 0.0
        %504 = vmatpush1.msra.mxu0 0.0
        %505 = vmatprep.subr.mxu0 0.0
        %506 = vmatpush1.msra.mxu0 0.0
        %507 = vmatprep.subr.mxu0 0.0
        %508 = vmatpush1.msra.mxu0 0.0
        %509 = vmatprep.subr.mxu0 0.0
        %510 = vmatpush1.msra.mxu0 0.0
        %511 = vmatprep.subr.mxu0 0.0
        %512 = vmatpush1.msra.mxu0 0.0
        %513 = vmatprep.subr.mxu0 0.0
        %514 = vmatpush1.msra.mxu0 0.0
        %515 = vmatprep.subr.mxu0 0.0
        %516 = vmatpush1.msra.mxu0 0.0
        %517 = vmatprep.subr.mxu0 0.0
        %518 = vmatpush1.msra.mxu0 0.0
        %519 = vmatprep.subr.mxu0 0.0
        %520 = vmatpush1.msra.mxu0 0.0
        %521 = vmatprep.subr.mxu0 0.0
        %522 = vmatpush1.msra.mxu0 0.0
        %523 = vmatprep.subr.mxu0 0.0
        %524 = vmatpush1.msra.mxu0 0.0
        %525 = vmatprep.subr.mxu0 0.0
        %526 = vmatpush1.msra.mxu0 0.0
        %527 = vmatprep.subr.mxu0 0.0
        %528 = vmatpush1.msra.mxu0 0.0
        %529 = vmatprep.subr.mxu0 0.0
        %530 = vmatpush1.msra.mxu0 0.0
        %531 = vmatprep.subr.mxu0 0.0
        %532 = vmatpush1.msra.mxu0 0.0
        %533 = vmatprep.subr.mxu0 0.0
        %534 = vmatpush1.msra.mxu0 0.0
        %535 = vmatprep.subr.mxu0 0.0
        %536 = vmatpush1.msra.mxu0 0.0
        %537 = vmatprep.subr.mxu0 0.0
        %538 = vmatpush1.msra.mxu0 0.0
        %539 = vmatprep.mubr.f32.mxu0 0.0
        %540 = vmatmul.mubr.f32.gmra.mrb[0].mxu0 %v376
        %v541 = vpop.f32.mrb[0].mxu0
        %v542 = vadd.f32 %v372, %v541
        %v543 = vpop.f32.mrb[0].mxu0
        %544 = vmatprep.mubr.f32.mxu0 0.0
        %545 = vmatmul.mubr.f32.gmra.mrb[0].mxu0 %v379
        %v546 = vpop.f32.mrb[0].mxu0
        %v547 = vadd.f32 %v372, %v546
        %v548 = vpop.f32.mrb[0].mxu0
        %549 = vmatprep.mubr.f32.mxu0 0.0
        %550 = vmatmul.mubr.f32.gmra.mrb[0].mxu0 %v382
        %v551 = vpop.f32.mrb[0].mxu0
        %v552 = vadd.f32 %v372, %v551
        %v553 = vpop.f32.mrb[0].mxu0
        %554 = vmatprep.mubr.f32.mxu0 0.0
        %555 = vmatmul.mubr.f32.gmra.mrb[0].mxu0 %v385
        %v556 = vpop.f32.mrb[0].mxu0
        %v557 = vadd.f32 %v372, %v556
        %v558 = vpop.f32.mrb[0].mxu0
        %559 = vmatprep.mubr.f32.mxu0 0.0
        %560 = vmatmul.mubr.f32.gmra.mrb[0].mxu0 %v388
        %v561 = vpop.f32.mrb[0].mxu0
        %v562 = vadd.f32 %v372, %v561
        %v563 = vpop.f32.mrb[0].mxu0
        %564 = vmatprep.mubr.f32.mxu0 0.0
        %565 = vmatmul.mubr.f32.gmra.mrb[0].mxu0 %v391
        %v566 = vpop.f32.mrb[0].mxu0
        %v567 = vadd.f32 %v372, %v566
        %v568 = vpop.f32.mrb[0].mxu0
        %569 = vmatprep.mubr.f32.mxu0 0.0
        %570 = vmatmul.mubr.f32.gmra.mrb[0].mxu0 %v394
        %v571 = vpop.f32.mrb[0].mxu0
        %v572 = vadd.f32 %v372, %v571
        %v573 = vpop.f32.mrb[0].mxu0
        %574 = vmatprep.mubr.f32.mxu0 0.0
        %575 = vmatmul.mubr.f32.gmra.mrb[0].mxu0 %v397
        %v576 = vpop.f32.mrb[0].mxu0
        %v577 = vadd.f32 %v372, %v576
        %v578 = vpop.f32.mrb[0].mxu0
        %579 = vmatprep.mubr.f32.mxu0 0.0
        %580 = vmatmul.mubr.f32.gmra.mrb[0].mxu0 %v400
        %v581 = vpop.f32.mrb[0].mxu0
        %v582 = vadd.f32 %v372, %v581
        %v583 = vpop.f32.mrb[0].mxu0
        %584 = vmatprep.mubr.f32.mxu0 0.0
        %585 = vmatmul.mubr.f32.gmra.mrb[0].mxu0 %v403
        %v586 = vpop.f32.mrb[0].mxu0
        %v587 = vadd.f32 %v372, %v586
        %v588 = vpop.f32.mrb[0].mxu0
        %589 = vmatprep.mubr.f32.mxu0 0.0
        %590 = vmatmul.mubr.f32.gmra.mrb[0].mxu0 %v406
        %v591 = vpop.f32.mrb[0].mxu0
        %v592 = vadd.f32 %v372, %v591
        %v593 = vpop.f32.mrb[0].mxu0
        %594 = vmatprep.mubr.f32.mxu0 0.0
        %595 = vmatmul.mubr.f32.gmra.mrb[0].mxu0 %v409
        %v596 = vpop.f32.mrb[0].mxu0
        %v597 = vadd.f32 %v372, %v596
        %v598 = vpop.f32.mrb[0].mxu0
        %599 = vmatprep.mubr.f32.mxu0 0.0
        %600 = vmatmul.mubr.f32.gmra.mrb[0].mxu0 %v412
        %v601 = vpop.f32.mrb[0].mxu0
        %v602 = vadd.f32 %v372, %v601
        %v603 = vpop.f32.mrb[0].mxu0
        %604 = vmatprep.mubr.f32.mxu0 0.0
        %605 = vmatmul.mubr.f32.gmra.mrb[0].mxu0 %v415
        %v606 = vpop.f32.mrb[0].mxu0
        %v607 = vadd.f32 %v372, %v606
        %v608 = vpop.f32.mrb[0].mxu0
        %609 = vmatprep.mubr.f32.mxu0 0.0
        %610 = vmatmul.mubr.f32.gmra.mrb[0].mxu0 %v418
        %v611 = vpop.f32.mrb[0].mxu0
        %v612 = vadd.f32 %v372, %v611
        %v613 = vpop.f32.mrb[0].mxu0
        %614 = vmatprep.mubr.f32.mxu0 0.0
        %615 = vmatmul.mubr.f32.gmra.mrb[0].mxu0 %v421
        %v616 = vpop.f32.mrb[0].mxu0
        %v617 = vadd.f32 %v372, %v616
        %v618 = vpop.f32.mrb[0].mxu0
        %619 = vmatprep.mubr.f32.mxu0 0.0
        %620 = vmatmul.mubr.f32.gmra.mrb[0].mxu0 %v424
        %v621 = vpop.f32.mrb[0].mxu0
        %v622 = vadd.f32 %v372, %v621
        %v623 = vpop.f32.mrb[0].mxu0
        %624 = vmatprep.mubr.f32.mxu0 0.0
        %625 = vmatmul.mubr.f32.gmra.mrb[0].mxu0 %v427
        %v626 = vpop.f32.mrb[0].mxu0
        %v627 = vadd.f32 %v372, %v626
        %v628 = vpop.f32.mrb[0].mxu0
        %629 = vmatprep.mubr.f32.mxu0 0.0
        %630 = vmatmul.mubr.f32.gmra.mrb[0].mxu0 %v430
        %v631 = vpop.f32.mrb[0].mxu0
        %v632 = vadd.f32 %v372, %v631
        %v633 = vpop.f32.mrb[0].mxu0
        %634 = vmatprep.mubr.f32.mxu0 0.0
        %635 = vmatmul.mubr.f32.gmra.mrb[0].mxu0 %v433
        %v636 = vpop.f32.mrb[0].mxu0
        %v637 = vadd.f32 %v372, %v636
        %v638 = vpop.f32.mrb[0].mxu0
        %639 = vmatprep.mubr.f32.mxu0 0.0
        %640 = vmatmul.mubr.f32.gmra.mrb[0].mxu0 %v436
        %v641 = vpop.f32.mrb[0].mxu0
        %v642 = vadd.f32 %v372, %v641
        %v643 = vpop.f32.mrb[0].mxu0
        %644 = vmatprep.mubr.f32.mxu0 0.0
        %645 = vmatmul.mubr.f32.gmra.mrb[0].mxu0 %v439
        %v646 = vpop.f32.mrb[0].mxu0
        %v647 = vadd.f32 %v372, %v646
        %v648 = vpop.f32.mrb[0].mxu0
        %649 = vmatprep.mubr.f32.mxu0 0.0
        %650 = vmatmul.mubr.f32.gmra.mrb[0].mxu0 %v442
        %v651 = vpop.f32.mrb[0].mxu0
        %v652 = vadd.f32 %v372, %v651
        %v653 = vpop.f32.mrb[0].mxu0
        %654 = vmatprep.mubr.f32.mxu0 0.0
        %655 = vmatmul.mubr.f32.gmra.mrb[0].mxu0 %v445
        %v656 = vpop.f32.mrb[0].mxu0
        %v657 = vadd.f32 %v372, %v656
        %v658 = vpop.f32.mrb[0].mxu0
        %659 = vmatprep.mubr.f32.mxu0 0.0
        %660 = vmatmul.mubr.f32.gmra.mrb[0].mxu0 %v448
        %v661 = vpop.f32.mrb[0].mxu0
        %v662 = vadd.f32 %v372, %v661
        %v663 = vpop.f32.mrb[0].mxu0
        %664 = vmatprep.mubr.f32.mxu0 0.0
        %665 = vmatmul.mubr.f32.gmra.mrb[0].mxu0 %v451
        %v666 = vpop.f32.mrb[0].mxu0
        %v667 = vadd.f32 %v372, %v666
        %v668 = vpop.f32.mrb[0].mxu0
        %669 = vmatprep.mubr.f32.mxu0 0.0
        %670 = vmatmul.mubr.f32.gmra.mrb[0].mxu0 %v454
        %v671 = vpop.f32.mrb[0].mxu0
        %v672 = vadd.f32 %v372, %v671
        %v673 = vpop.f32.mrb[0].mxu0
        %674 = vmatprep.mubr.f32.mxu0 0.0
        %675 = vmatmul.mubr.f32.gmra.mrb[0].mxu0 %v457
        %v676 = vpop.f32.mrb[0].mxu0
        %v677 = vadd.f32 %v372, %v676
        %v678 = vpop.f32.mrb[0].mxu0
        %679 = vmatprep.mubr.f32.mxu0 0.0
        %680 = vmatmul.mubr.f32.gmra.mrb[0].mxu0 %v460
        %v681 = vpop.f32.mrb[0].mxu0
        %v682 = vadd.f32 %v372, %v681
        %v683 = vpop.f32.mrb[0].mxu0
        %684 = vmatprep.mubr.f32.mxu0 0.0
        %685 = vmatmul.mubr.f32.gmra.mrb[0].mxu0 %v463
        %v686 = vpop.f32.mrb[0].mxu0
        %v687 = vadd.f32 %v372, %v686
        %v688 = vpop.f32.mrb[0].mxu0
        %689 = vmatprep.mubr.f32.mxu0 0.0
        %690 = vmatmul.mubr.f32.gmra.mrb[0].mxu0 %v466
        %v691 = vpop.f32.mrb[0].mxu0
        %v692 = vadd.f32 %v372, %v691
        %v693 = vpop.f32.mrb[0].mxu0
        %694 = vmatprep.mubr.f32.mxu0 0.0
        %695 = vmatmul.mubr.f32.gmra.mrb[0].mxu0 %v469
        %v696 = vpop.f32.mrb[0].mxu0
        %v697 = vadd.f32 %v372, %v696
        %v698 = vpop.f32.mrb[0].mxu0
        %699 = vdwg.mxu0
        %v700 = vxor.u32 %v542, 2147483648
        %v701 = vxor.u32 %v547, 2147483648
        %v702 = vxor.u32 %v552, 2147483648
        %v703 = vxor.u32 %v557, 2147483648
        %v704 = vxor.u32 %v562, 2147483648
        %v705 = vxor.u32 %v567, 2147483648
        %v706 = vxor.u32 %v572, 2147483648
        %v707 = vxor.u32 %v577, 2147483648
        %v708 = vxor.u32 %v582, 2147483648
        %v709 = vxor.u32 %v587, 2147483648
        %v710 = vxor.u32 %v592, 2147483648
        %v711 = vxor.u32 %v597, 2147483648
        %v712 = vxor.u32 %v602, 2147483648
        %v713 = vxor.u32 %v607, 2147483648
        %v714 = vxor.u32 %v612, 2147483648
        %v715 = vxor.u32 %v617, 2147483648
        %v716 = vxor.u32 %v622, 2147483648
        %v717 = vxor.u32 %v627, 2147483648
        %v718 = vxor.u32 %v632, 2147483648
        %v719 = vxor.u32 %v637, 2147483648
        %v720 = vxor.u32 %v642, 2147483648
        %v721 = vxor.u32 %v647, 2147483648
        %v722 = vxor.u32 %v652, 2147483648
        %v723 = vxor.u32 %v657, 2147483648
        %v724 = vxor.u32 %v662, 2147483648
        %v725 = vxor.u32 %v667, 2147483648
        %v726 = vxor.u32 %v672, 2147483648
        %v727 = vxor.u32 %v677, 2147483648
        %v728 = vxor.u32 %v682, 2147483648
        %v729 = vxor.u32 %v687, 2147483648
        %v730 = vxor.u32 %v692, 2147483648
        %v731 = vxor.u32 %v697, 2147483648
        %v732 = vmul.f32 %v700, 1.442695
        %v733 = vpow.pop %v732
        %v734 = vmul.f32 %v701, 1.442695
        %v735 = vpow.pop %v734
        %v736 = vmul.f32 %v702, 1.442695
        %v737 = vpow.pop %v736
        %v738 = vmul.f32 %v703, 1.442695
        %v739 = vpow.pop %v738
        %v740 = vmul.f32 %v704, 1.442695
        %v741 = vpow.pop %v740
        %v742 = vmul.f32 %v705, 1.442695
        %v743 = vpow.pop %v742
        %v744 = vmul.f32 %v706, 1.442695
        %v745 = vpow.pop %v744
        %v746 = vmul.f32 %v707, 1.442695
        %v747 = vpow.pop %v746
        %v748 = vmul.f32 %v708, 1.442695
        %v749 = vpow.pop %v748
        %v750 = vmul.f32 %v709, 1.442695
        %v751 = vpow.pop %v750
        %v752 = vmul.f32 %v710, 1.442695
        %v753 = vpow.pop %v752
        %v754 = vmul.f32 %v711, 1.442695
        %v755 = vpow.pop %v754
        %v756 = vmul.f32 %v712, 1.442695
        %v757 = vpow.pop %v756
        %v758 = vmul.f32 %v713, 1.442695
        %v759 = vpow.pop %v758
        %v760 = vmul.f32 %v714, 1.442695
        %v761 = vpow.pop %v760
        %v762 = vmul.f32 %v715, 1.442695
        %v763 = vpow.pop %v762
        %v764 = vmul.f32 %v716, 1.442695
        %v765 = vpow.pop %v764
        %v766 = vmul.f32 %v717, 1.442695
        %v767 = vpow.pop %v766
        %v768 = vmul.f32 %v718, 1.442695
        %v769 = vpow.pop %v768
        %v770 = vmul.f32 %v719, 1.442695
        %v771 = vpow.pop %v770
        %v772 = vmul.f32 %v720, 1.442695
        %v773 = vpow.pop %v772
        %v774 = vmul.f32 %v721, 1.442695
        %v775 = vpow.pop %v774
        %v776 = vmul.f32 %v722, 1.442695
        %v777 = vpow.pop %v776
        %v778 = vmul.f32 %v723, 1.442695
        %v779 = vpow.pop %v778
        %v780 = vmul.f32 %v724, 1.442695
        %v781 = vpow.pop %v780
        %v782 = vmul.f32 %v725, 1.442695
        %v783 = vpow.pop %v782
        %v784 = vmul.f32 %v726, 1.442695
        %v785 = vpow.pop %v784
        %v786 = vmul.f32 %v727, 1.442695
        %v787 = vpow.pop %v786
        %v788 = vmul.f32 %v728, 1.442695
        %v789 = vpow.pop %v788
        %v790 = vmul.f32 %v729, 1.442695
        %v791 = vpow.pop %v790
        %v792 = vmul.f32 %v730, 1.442695
        %v793 = vpow.pop %v792
        %v794 = vmul.f32 %v731, 1.442695
        %v795 = vpow.pop %v794
        %v796 = vadd.f32 %v733, 1.0
        %v797 = vadd.f32 %v735, 1.0
        %v798 = vadd.f32 %v737, 1.0
        %v799 = vadd.f32 %v739, 1.0
        %v800 = vadd.f32 %v741, 1.0
        %v801 = vadd.f32 %v743, 1.0
        %v802 = vadd.f32 %v745, 1.0
        %v803 = vadd.f32 %v747, 1.0
        %v804 = vadd.f32 %v749, 1.0
        %v805 = vadd.f32 %v751, 1.0
        %v806 = vadd.f32 %v753, 1.0
        %v807 = vadd.f32 %v755, 1.0
        %v808 = vadd.f32 %v757, 1.0
        %v809 = vadd.f32 %v759, 1.0
        %v810 = vadd.f32 %v761, 1.0
        %v811 = vadd.f32 %v763, 1.0
        %v812 = vadd.f32 %v765, 1.0
        %v813 = vadd.f32 %v767, 1.0
        %v814 = vadd.f32 %v769, 1.0
        %v815 = vadd.f32 %v771, 1.0
        %v816 = vadd.f32 %v773, 1.0
        %v817 = vadd.f32 %v775, 1.0
        %v818 = vadd.f32 %v777, 1.0
        %v819 = vadd.f32 %v779, 1.0
        %v820 = vadd.f32 %v781, 1.0
        %v821 = vadd.f32 %v783, 1.0
        %v822 = vadd.f32 %v785, 1.0
        %v823 = vadd.f32 %v787, 1.0
        %v824 = vadd.f32 %v789, 1.0
        %v825 = vadd.f32 %v791, 1.0
        %v826 = vadd.f32 %v793, 1.0
        %v827 = vadd.f32 %v795, 1.0
        %v828 = vrcp.pop %v796
        %v829 = vmul.f32 1.0, %v828
        %v830 = vrcp.pop %v797
        %v831 = vmul.f32 1.0, %v830
        %v832 = vrcp.pop %v798
        %v833 = vmul.f32 1.0, %v832
        %v834 = vrcp.pop %v799
        %v835 = vmul.f32 1.0, %v834
        %v836 = vrcp.pop %v800
        %v837 = vmul.f32 1.0, %v836
        %v838 = vrcp.pop %v801
        %v839 = vmul.f32 1.0, %v838
        %v840 = vrcp.pop %v802
        %v841 = vmul.f32 1.0, %v840
        %v842 = vrcp.pop %v803
        %v843 = vmul.f32 1.0, %v842
        %v844 = vrcp.pop %v804
        %v845 = vmul.f32 1.0, %v844
        %v846 = vrcp.pop %v805
        %v847 = vmul.f32 1.0, %v846
        %v848 = vrcp.pop %v806
        %v849 = vmul.f32 1.0, %v848
        %v850 = vrcp.pop %v807
        %v851 = vmul.f32 1.0, %v850
        %v852 = vrcp.pop %v808
        %v853 = vmul.f32 1.0, %v852
        %v854 = vrcp.pop %v809
        %v855 = vmul.f32 1.0, %v854
        %v856 = vrcp.pop %v810
        %v857 = vmul.f32 1.0, %v856
        %v858 = vrcp.pop %v811
        %v859 = vmul.f32 1.0, %v858
        %v860 = vrcp.pop %v812
        %v861 = vmul.f32 1.0, %v860
        %v862 = vrcp.pop %v813
        %v863 = vmul.f32 1.0, %v862
        %v864 = vrcp.pop %v814
        %v865 = vmul.f32 1.0, %v864
        %v866 = vrcp.pop %v815
        %v867 = vmul.f32 1.0, %v866
        %v868 = vrcp.pop %v816
        %v869 = vmul.f32 1.0, %v868
        %v870 = vrcp.pop %v817
        %v871 = vmul.f32 1.0, %v870
        %v872 = vrcp.pop %v818
        %v873 = vmul.f32 1.0, %v872
        %v874 = vrcp.pop %v819
        %v875 = vmul.f32 1.0, %v874
        %v876 = vrcp.pop %v820
        %v877 = vmul.f32 1.0, %v876
        %v878 = vrcp.pop %v821
        %v879 = vmul.f32 1.0, %v878
        %v880 = vrcp.pop %v822
        %v881 = vmul.f32 1.0, %v880
        %v882 = vrcp.pop %v823
        %v883 = vmul.f32 1.0, %v882
        %v884 = vrcp.pop %v824
        %v885 = vmul.f32 1.0, %v884
        %v886 = vrcp.pop %v825
        %v887 = vmul.f32 1.0, %v886
        %v888 = vrcp.pop %v826
        %v889 = vmul.f32 1.0, %v888
        %v890 = vrcp.pop %v827
        %v891 = vmul.f32 1.0, %v890
        %v892 = vmul.f32 %v542, %v829
        %v893 = vmul.f32 %v547, %v831
        %v894 = vmul.f32 %v552, %v833
        %v895 = vmul.f32 %v557, %v835
        %v896 = vmul.f32 %v562, %v837
        %v897 = vmul.f32 %v567, %v839
        %v898 = vmul.f32 %v572, %v841
        %v899 = vmul.f32 %v577, %v843
        %v900 = vmul.f32 %v582, %v845
        %v901 = vmul.f32 %v587, %v847
        %v902 = vmul.f32 %v592, %v849
        %v903 = vmul.f32 %v597, %v851
        %v904 = vmul.f32 %v602, %v853
        %v905 = vmul.f32 %v607, %v855
        %v906 = vmul.f32 %v612, %v857
        %v907 = vmul.f32 %v617, %v859
        %v908 = vmul.f32 %v622, %v861
        %v909 = vmul.f32 %v627, %v863
        %v910 = vmul.f32 %v632, %v865
        %v911 = vmul.f32 %v637, %v867
        %v912 = vmul.f32 %v642, %v869
        %v913 = vmul.f32 %v647, %v871
        %v914 = vmul.f32 %v652, %v873
        %v915 = vmul.f32 %v657, %v875
        %v916 = vmul.f32 %v662, %v877
        %v917 = vmul.f32 %v667, %v879
        %v918 = vmul.f32 %v672, %v881
        %v919 = vmul.f32 %v677, %v883
        %v920 = vmul.f32 %v682, %v885
        %v921 = vmul.f32 %v687, %v887
        %v922 = vmul.f32 %v692, %v889
        %v923 = vmul.f32 %v697, %v891
        %v924 = vpack.c.bf16 %v893, %v892
        %v925 = vpack.c.bf16 %v895, %v894
        %v926 = vpack.c.bf16 %v897, %v896
        %v927 = vpack.c.bf16 %v899, %v898
        %v928 = vpack.c.bf16 %v901, %v900
        %v929 = vpack.c.bf16 %v903, %v902
        %v930 = vpack.c.bf16 %v905, %v904
        %v931 = vpack.c.bf16 %v907, %v906
        %v932 = vpack.c.bf16 %v909, %v908
        %v933 = vpack.c.bf16 %v911, %v910
        %v934 = vpack.c.bf16 %v913, %v912
        %v935 = vpack.c.bf16 %v915, %v914
        %v936 = vpack.c.bf16 %v917, %v916
        %v937 = vpack.c.bf16 %v919, %v918
        %v938 = vpack.c.bf16 %v921, %v920
        %v939 = vpack.c.bf16 %v923, %v922
        %v940 = vld [vmem:[%s3] sm:$0xff]
        %v941 = vld [vmem:[%s3 + $0x8] sm:$0xff]
        %v942 = vld [vmem:[%s3 + $0x10] sm:$0xff]
        %v943 = vld [vmem:[%s3 + $0x18] sm:$0xff]
        %v944 = vld [vmem:[%s3 + $0x20] sm:$0xff]
        %v945 = vld [vmem:[%s3 + $0x28] sm:$0xff]
        %v946 = vld [vmem:[%s3 + $0x30] sm:$0xff]
        %v947 = vld [vmem:[%s3 + $0x38] sm:$0xff]
        %v948 = vld [vmem:[%s3 + $0x40] sm:$0xff]
        %v949 = vld [vmem:[%s3 + $0x48] sm:$0xff]
        %v950 = vld [vmem:[%s3 + $0x50] sm:$0xff]
        %v951 = vld [vmem:[%s3 + $0x58] sm:$0xff]
        %v952 = vld [vmem:[%s3 + $0x60] sm:$0xff]
        %v953 = vld [vmem:[%s3 + $0x68] sm:$0xff]
        %v954 = vld [vmem:[%s3 + $0x70] sm:$0xff]
        %v955 = vld [vmem:[%s3 + $0x78] sm:$0xff]
        %v956 = vld [vmem:[%s3 + $0x80] sm:$0xff]
        %v957 = vld [vmem:[%s3 + $0x88] sm:$0xff]
        %v958 = vld [vmem:[%s3 + $0x90] sm:$0xff]
        %v959 = vld [vmem:[%s3 + $0x98] sm:$0xff]
        %v960 = vld [vmem:[%s4] sm:$0xff]
        %v961 = vld [vmem:[%s4 + $0x8] sm:$0x3]
        %v964 = vlaneseq
        %v965 = vshrl.u32 %v964, 7
        %v966 = vsub.s32 0, %v965
        %v967 = vrot.slane %v960, %v966
        %v968 = vlaneseq
        %v969 = vshrl.u32 %v968, 7
        %v970 = vsub.s32 1, %v969
        %v971 = vrot.slane %v960, %v970
        %v972 = vlaneseq
        %v973 = vshrl.u32 %v972, 7
        %v974 = vsub.s32 2, %v973
        %v975 = vrot.slane %v960, %v974
        %v976 = vlaneseq
        %v977 = vshrl.u32 %v976, 7
        %v978 = vsub.s32 3, %v977
        %v979 = vrot.slane %v960, %v978
        %v980 = vlaneseq
        %v981 = vshrl.u32 %v980, 7
        %v982 = vsub.s32 4, %v981
        %v983 = vrot.slane %v960, %v982
        %v984 = vlaneseq
        %v985 = vshrl.u32 %v984, 7
        %v986 = vsub.s32 5, %v985
        %v987 = vrot.slane %v960, %v986
        %v988 = vlaneseq
        %v989 = vshrl.u32 %v988, 7
        %v990 = vsub.s32 6, %v989
        %v991 = vrot.slane %v960, %v990
        %v992 = vlaneseq
        %v993 = vshrl.u32 %v992, 7
        %v994 = vsub.s32 7, %v993
        %v995 = vrot.slane %v960, %v994
        %v996 = vlaneseq
        %v997 = vshrl.u32 %v996, 7
        %v998 = vsub.s32 0, %v997
        %v999 = vrot.slane %v961, %v998
        %v1000 = vlaneseq
        %v1001 = vshrl.u32 %v1000, 7
        %v1002 = vsub.s32 1, %v1001
        %v1003 = vrot.slane %v961, %v1002
        %v1034 = vunpack.c.l.b16 %v940
        %v1035 = vunpack.c.h.b16 %v940
        %v1036 = vunpack.c.l.b16 %v941
        %v1037 = vunpack.c.h.b16 %v941
        %v1038 = vunpack.c.l.b16 %v942
        %v1039 = vunpack.c.h.b16 %v942
        %v1040 = vunpack.c.l.b16 %v943
        %v1041 = vunpack.c.h.b16 %v943
        %v1042 = vunpack.c.l.b16 %v944
        %v1043 = vunpack.c.h.b16 %v944
        %v1044 = vunpack.c.l.b16 %v945
        %v1045 = vunpack.c.h.b16 %v945
        %v1046 = vunpack.c.l.b16 %v946
        %v1047 = vunpack.c.h.b16 %v946
        %v1048 = vunpack.c.l.b16 %v947
        %v1049 = vunpack.c.h.b16 %v947
        %v1050 = vunpack.c.l.b16 %v948
        %v1051 = vunpack.c.h.b16 %v948
        %v1052 = vunpack.c.l.b16 %v949
        %v1053 = vunpack.c.h.b16 %v949
        %v1054 = vunpack.c.l.b16 %v950
        %v1055 = vunpack.c.h.b16 %v950
        %v1056 = vunpack.c.l.b16 %v951
        %v1057 = vunpack.c.h.b16 %v951
        %v1058 = vunpack.c.l.b16 %v952
        %v1059 = vunpack.c.h.b16 %v952
        %v1060 = vunpack.c.l.b16 %v953
        %v1061 = vunpack.c.h.b16 %v953
        %v1062 = vunpack.c.l.b16 %v954
        %v1063 = vunpack.c.h.b16 %v954
        %v1064 = vunpack.c.l.b16 %v955
        %v1065 = vunpack.c.h.b16 %v955
        %v1066 = vunpack.c.l.b16 %v956
        %v1067 = vunpack.c.h.b16 %v956
        %v1068 = vunpack.c.l.b16 %v957
        %v1069 = vunpack.c.h.b16 %v957
        %v1070 = vunpack.c.l.b16 %v958
        %v1071 = vunpack.c.h.b16 %v958
        %v1072 = vunpack.c.l.b16 %v959
        %v1073 = vunpack.c.h.b16 %v959
        %v1074 = vpack.c.b16 %v1044, %v1034
        %v1075 = vpack.c.b16 %v1045, %v1035
        %v1076 = vpack.c.b16 %v1046, %v1036
        %v1077 = vpack.c.b16 %v1047, %v1037
        %v1078 = vpack.c.b16 %v1048, %v1038
        %v1079 = vpack.c.b16 %v1049, %v1039
        %v1080 = vpack.c.b16 %v1050, %v1040
        %v1081 = vpack.c.b16 %v1051, %v1041
        %v1082 = vpack.c.b16 %v1052, %v1042
        %v1083 = vpack.c.b16 %v1053, %v1043
        %v1084 = vpack.c.b16 %v1064, %v1054
        %v1085 = vpack.c.b16 %v1065, %v1055
        %v1086 = vpack.c.b16 %v1066, %v1056
        %v1087 = vpack.c.b16 %v1067, %v1057
        %v1088 = vpack.c.b16 %v1068, %v1058
        %v1089 = vpack.c.b16 %v1069, %v1059
        %v1090 = vpack.c.b16 %v1070, %v1060
        %v1091 = vpack.c.b16 %v1071, %v1061
        %v1092 = vpack.c.b16 %v1072, %v1062
        %v1093 = vpack.c.b16 %v1073, %v1063
        %vm1114 = vcmask 261120
        %v1116 = vsel %vm1114, %v924, 0
        %v1119 = vsel %vm1114, %v925, 0
        %v1122 = vsel %vm1114, %v926, 0
        %v1125 = vsel %vm1114, %v927, 0
        %v1128 = vsel %vm1114, %v928, 0
        %v1131 = vsel %vm1114, %v929, 0
        %v1134 = vsel %vm1114, %v930, 0
        %v1137 = vsel %vm1114, %v931, 0
        %v1140 = vsel %vm1114, %v932, 0
        %v1143 = vsel %vm1114, %v933, 0
        %v1146 = vsel %vm1114, %v934, 0
        %v1149 = vsel %vm1114, %v935, 0
        %v1152 = vsel %vm1114, %v936, 0
        %v1155 = vsel %vm1114, %v937, 0
        %v1158 = vsel %vm1114, %v938, 0
        %v1161 = vsel %vm1114, %v939, 0
        %1163 = vmatprep.subr.bf16.mxu0 %v1075
        %1164 = vmatpush1.bf16.msra.mxu0 %v1074
        %1165 = vmatprep.subr.bf16.mxu0 %v1085
        %1166 = vmatpush1.bf16.msra.mxu0 %v1084
        %1167 = vmatprep.subr.bf16.mxu0 0
        %1168 = vmatpush1.bf16.msra.mxu0 0
        %1169 = vmatprep.subr.bf16.mxu0 0
        %1170 = vmatpush1.bf16.msra.mxu0 0
        %1171 = vmatprep.subr.bf16.mxu0 0
        %1172 = vmatpush1.bf16.msra.mxu0 0
        %1173 = vmatprep.subr.bf16.mxu0 0
        %1174 = vmatpush1.bf16.msra.mxu0 0
        %1175 = vmatprep.subr.bf16.mxu0 0
        %1176 = vmatpush1.bf16.msra.mxu0 0
        %1177 = vmatprep.subr.bf16.mxu0 0
        %1178 = vmatpush1.bf16.msra.mxu0 0
        %1179 = vmatprep.subr.bf16.mxu0 0
        %1180 = vmatpush1.bf16.msra.mxu0 0
        %1181 = vmatprep.subr.bf16.mxu0 0
        %1182 = vmatpush1.bf16.msra.mxu0 0
        %1183 = vmatprep.subr.bf16.mxu0 0
        %1184 = vmatpush1.bf16.msra.mxu0 0
        %1185 = vmatprep.subr.bf16.mxu0 0
        %1186 = vmatpush1.bf16.msra.mxu0 0
        %1187 = vmatprep.subr.bf16.mxu0 0
        %1188 = vmatpush1.bf16.msra.mxu0 0
        %1189 = vmatprep.subr.bf16.mxu0 0
        %1190 = vmatpush1.bf16.msra.mxu0 0
        %1191 = vmatprep.subr.bf16.mxu0 0
        %1192 = vmatpush1.bf16.msra.mxu0 0
        %1193 = vmatprep.subr.bf16.mxu0 0
        %1194 = vmatpush1.bf16.msra.mxu0 0
        %1195 = vmatprep.mubr.bf16.mxu0 0
        %1196 = vmatmul.mubr.bf16.gmra.mrb[0].mxu0 %v1116
        %v1197 = vpop.f32.mrb[0].mxu0
        %v1198 = vadd.f32 %v967, %v1197
        %v1199 = vpop.f32.mrb[0].mxu0
        %v1200 = vadd.f32 %v971, %v1199
        %v1201 = vpop.f32.mrb[0].mxu0
        %v1202 = vadd.f32 %v967, %v1201
        %v1203 = vpop.f32.mrb[0].mxu0
        %v1204 = vadd.f32 %v971, %v1203
        %1205 = vmatprep.mubr.bf16.mxu0 0
        %1206 = vmatmul.mubr.bf16.gmra.mrb[0].mxu0 %v1119
        %v1207 = vpop.f32.mrb[0].mxu0
        %v1208 = vadd.f32 %v967, %v1207
        %v1209 = vpop.f32.mrb[0].mxu0
        %v1210 = vadd.f32 %v971, %v1209
        %v1211 = vpop.f32.mrb[0].mxu0
        %v1212 = vadd.f32 %v967, %v1211
        %v1213 = vpop.f32.mrb[0].mxu0
        %v1214 = vadd.f32 %v971, %v1213
        %1215 = vmatprep.mubr.bf16.mxu0 0
        %1216 = vmatmul.mubr.bf16.gmra.mrb[0].mxu0 %v1122
        %v1217 = vpop.f32.mrb[0].mxu0
        %v1218 = vadd.f32 %v967, %v1217
        %v1219 = vpop.f32.mrb[0].mxu0
        %v1220 = vadd.f32 %v971, %v1219
        %v1221 = vpop.f32.mrb[0].mxu0
        %v1222 = vadd.f32 %v967, %v1221
        %v1223 = vpop.f32.mrb[0].mxu0
        %v1224 = vadd.f32 %v971, %v1223
        %1225 = vmatprep.mubr.bf16.mxu0 0
        %1226 = vmatmul.mubr.bf16.gmra.mrb[0].mxu0 %v1125
        %v1227 = vpop.f32.mrb[0].mxu0
        %v1228 = vadd.f32 %v967, %v1227
        %v1229 = vpop.f32.mrb[0].mxu0
        %v1230 = vadd.f32 %v971, %v1229
        %v1231 = vpop.f32.mrb[0].mxu0
        %v1232 = vadd.f32 %v967, %v1231
        %v1233 = vpop.f32.mrb[0].mxu0
        %v1234 = vadd.f32 %v971, %v1233
        %1235 = vmatprep.mubr.bf16.mxu0 0
        %1236 = vmatmul.mubr.bf16.gmra.mrb[0].mxu0 %v1128
        %v1237 = vpop.f32.mrb[0].mxu0
        %v1238 = vadd.f32 %v967, %v1237
        %v1239 = vpop.f32.mrb[0].mxu0
        %v1240 = vadd.f32 %v971, %v1239
        %v1241 = vpop.f32.mrb[0].mxu0
        %v1242 = vadd.f32 %v967, %v1241
        %v1243 = vpop.f32.mrb[0].mxu0
        %v1244 = vadd.f32 %v971, %v1243
        %1245 = vmatprep.mubr.bf16.mxu0 0
        %1246 = vmatmul.mubr.bf16.gmra.mrb[0].mxu0 %v1131
        %v1247 = vpop.f32.mrb[0].mxu0
        %v1248 = vadd.f32 %v967, %v1247
        %v1249 = vpop.f32.mrb[0].mxu0
        %v1250 = vadd.f32 %v971, %v1249
        %v1251 = vpop.f32.mrb[0].mxu0
        %v1252 = vadd.f32 %v967, %v1251
        %v1253 = vpop.f32.mrb[0].mxu0
        %v1254 = vadd.f32 %v971, %v1253
        %1255 = vmatprep.mubr.bf16.mxu0 0
        %1256 = vmatmul.mubr.bf16.gmra.mrb[0].mxu0 %v1134
        %v1257 = vpop.f32.mrb[0].mxu0
        %v1258 = vadd.f32 %v967, %v1257
        %v1259 = vpop.f32.mrb[0].mxu0
        %v1260 = vadd.f32 %v971, %v1259
        %v1261 = vpop.f32.mrb[0].mxu0
        %v1262 = vadd.f32 %v967, %v1261
        %v1263 = vpop.f32.mrb[0].mxu0
        %v1264 = vadd.f32 %v971, %v1263
        %1265 = vmatprep.mubr.bf16.mxu0 0
        %1266 = vmatmul.mubr.bf16.gmra.mrb[0].mxu0 %v1137
        %v1267 = vpop.f32.mrb[0].mxu0
        %v1268 = vadd.f32 %v967, %v1267
        %v1269 = vpop.f32.mrb[0].mxu0
        %v1270 = vadd.f32 %v971, %v1269
        %v1271 = vpop.f32.mrb[0].mxu0
        %v1272 = vadd.f32 %v967, %v1271
        %v1273 = vpop.f32.mrb[0].mxu0
        %v1274 = vadd.f32 %v971, %v1273
        %1275 = vmatprep.mubr.bf16.mxu0 0
        %1276 = vmatmul.mubr.bf16.gmra.mrb[0].mxu0 %v1140
        %v1277 = vpop.f32.mrb[0].mxu0
        %v1278 = vadd.f32 %v967, %v1277
        %v1279 = vpop.f32.mrb[0].mxu0
        %v1280 = vadd.f32 %v971, %v1279
        %v1281 = vpop.f32.mrb[0].mxu0
        %v1282 = vadd.f32 %v967, %v1281
        %v1283 = vpop.f32.mrb[0].mxu0
        %v1284 = vadd.f32 %v971, %v1283
        %1285 = vmatprep.mubr.bf16.mxu0 0
        %1286 = vmatmul.mubr.bf16.gmra.mrb[0].mxu0 %v1143
        %v1287 = vpop.f32.mrb[0].mxu0
        %v1288 = vadd.f32 %v967, %v1287
        %v1289 = vpop.f32.mrb[0].mxu0
        %v1290 = vadd.f32 %v971, %v1289
        %v1291 = vpop.f32.mrb[0].mxu0
        %v1292 = vadd.f32 %v967, %v1291
        %v1293 = vpop.f32.mrb[0].mxu0
        %v1294 = vadd.f32 %v971, %v1293
        %1295 = vmatprep.mubr.bf16.mxu0 0
        %1296 = vmatmul.mubr.bf16.gmra.mrb[0].mxu0 %v1146
        %v1297 = vpop.f32.mrb[0].mxu0
        %v1298 = vadd.f32 %v967, %v1297
        %v1299 = vpop.f32.mrb[0].mxu0
        %v1300 = vadd.f32 %v971, %v1299
        %v1301 = vpop.f32.mrb[0].mxu0
        %v1302 = vadd.f32 %v967, %v1301
        %v1303 = vpop.f32.mrb[0].mxu0
        %v1304 = vadd.f32 %v971, %v1303
        %1305 = vmatprep.mubr.bf16.mxu0 0
        %1306 = vmatmul.mubr.bf16.gmra.mrb[0].mxu0 %v1149
        %v1307 = vpop.f32.mrb[0].mxu0
        %v1308 = vadd.f32 %v967, %v1307
        %v1309 = vpop.f32.mrb[0].mxu0
        %v1310 = vadd.f32 %v971, %v1309
        %v1311 = vpop.f32.mrb[0].mxu0
        %v1312 = vadd.f32 %v967, %v1311
        %v1313 = vpop.f32.mrb[0].mxu0
        %v1314 = vadd.f32 %v971, %v1313
        %1315 = vmatprep.mubr.bf16.mxu0 0
        %1316 = vmatmul.mubr.bf16.gmra.mrb[0].mxu0 %v1152
        %v1317 = vpop.f32.mrb[0].mxu0
        %v1318 = vadd.f32 %v967, %v1317
        %v1319 = vpop.f32.mrb[0].mxu0
        %v1320 = vadd.f32 %v971, %v1319
        %v1321 = vpop.f32.mrb[0].mxu0
        %v1322 = vadd.f32 %v967, %v1321
        %v1323 = vpop.f32.mrb[0].mxu0
        %v1324 = vadd.f32 %v971, %v1323
        %1325 = vmatprep.mubr.bf16.mxu0 0
        %1326 = vmatmul.mubr.bf16.gmra.mrb[0].mxu0 %v1155
        %v1327 = vpop.f32.mrb[0].mxu0
        %v1328 = vadd.f32 %v967, %v1327
        %v1329 = vpop.f32.mrb[0].mxu0
        %v1330 = vadd.f32 %v971, %v1329
        %v1331 = vpop.f32.mrb[0].mxu0
        %v1332 = vadd.f32 %v967, %v1331
        %v1333 = vpop.f32.mrb[0].mxu0
        %v1334 = vadd.f32 %v971, %v1333
        %1335 = vmatprep.mubr.bf16.mxu0 0
        %1336 = vmatmul.mubr.bf16.gmra.mrb[0].mxu0 %v1158
        %v1337 = vpop.f32.mrb[0].mxu0
        %v1338 = vadd.f32 %v967, %v1337
        %v1339 = vpop.f32.mrb[0].mxu0
        %v1340 = vadd.f32 %v971, %v1339
        %v1341 = vpop.f32.mrb[0].mxu0
        %v1342 = vadd.f32 %v967, %v1341
        %v1343 = vpop.f32.mrb[0].mxu0
        %v1344 = vadd.f32 %v971, %v1343
        %1345 = vmatprep.mubr.bf16.mxu0 0
        %1346 = vmatmul.mubr.bf16.gmra.mrb[0].mxu0 %v1161
        %v1347 = vpop.f32.mrb[0].mxu0
        %v1348 = vadd.f32 %v967, %v1347
        %v1349 = vpop.f32.mrb[0].mxu0
        %v1350 = vadd.f32 %v971, %v1349
        %v1351 = vpop.f32.mrb[0].mxu0
        %v1352 = vadd.f32 %v967, %v1351
        %v1353 = vpop.f32.mrb[0].mxu0
        %v1354 = vadd.f32 %v971, %v1353
        %1355 = vdwg.mxu0
        %1356 = vmatprep.subr.bf16.mxu0 %v1077
        %1357 = vmatpush1.bf16.msra.mxu0 %v1076
        %1358 = vmatprep.subr.bf16.mxu0 %v1087
        %1359 = vmatpush1.bf16.msra.mxu0 %v1086
        %1360 = vmatprep.subr.bf16.mxu0 0
        %1361 = vmatpush1.bf16.msra.mxu0 0
        %1362 = vmatprep.subr.bf16.mxu0 0
        %1363 = vmatpush1.bf16.msra.mxu0 0
        %1364 = vmatprep.subr.bf16.mxu0 0
        %1365 = vmatpush1.bf16.msra.mxu0 0
        %1366 = vmatprep.subr.bf16.mxu0 0
        %1367 = vmatpush1.bf16.msra.mxu0 0
        %1368 = vmatprep.subr.bf16.mxu0 0
        %1369 = vmatpush1.bf16.msra.mxu0 0
        %1370 = vmatprep.subr.bf16.mxu0 0
        %1371 = vmatpush1.bf16.msra.mxu0 0
        %1372 = vmatprep.subr.bf16.mxu0 0
        %1373 = vmatpush1.bf16.msra.mxu0 0
        %1374 = vmatprep.subr.bf16.mxu0 0
        %1375 = vmatpush1.bf16.msra.mxu0 0
        %1376 = vmatprep.subr.bf16.mxu0 0
        %1377 = vmatpush1.bf16.msra.mxu0 0
        %1378 = vmatprep.subr.bf16.mxu0 0
        %1379 = vmatpush1.bf16.msra.mxu0 0
        %1380 = vmatprep.subr.bf16.mxu0 0
        %1381 = vmatpush1.bf16.msra.mxu0 0
        %1382 = vmatprep.subr.bf16.mxu0 0
        %1383 = vmatpush1.bf16.msra.mxu0 0
        %1384 = vmatprep.subr.bf16.mxu0 0
        %1385 = vmatpush1.bf16.msra.mxu0 0
        %1386 = vmatprep.subr.bf16.mxu0 0
        %1387 = vmatpush1.bf16.msra.mxu0 0
        %1388 = vmatprep.mubr.bf16.mxu0 0
        %1389 = vmatmul.mubr.bf16.gmra.mrb[0].mxu0 %v1116
        %v1390 = vpop.f32.mrb[0].mxu0
        %v1391 = vadd.f32 %v975, %v1390
        %v1392 = vpop.f32.mrb[0].mxu0
        %v1393 = vadd.f32 %v979, %v1392
        %v1394 = vpop.f32.mrb[0].mxu0
        %v1395 = vadd.f32 %v975, %v1394
        %v1396 = vpop.f32.mrb[0].mxu0
        %v1397 = vadd.f32 %v979, %v1396
        %1398 = vmatprep.mubr.bf16.mxu0 0
        %1399 = vmatmul.mubr.bf16.gmra.mrb[0].mxu0 %v1119
        %v1400 = vpop.f32.mrb[0].mxu0
        %v1401 = vadd.f32 %v975, %v1400
        %v1402 = vpop.f32.mrb[0].mxu0
        %v1403 = vadd.f32 %v979, %v1402
        %v1404 = vpop.f32.mrb[0].mxu0
        %v1405 = vadd.f32 %v975, %v1404
        %v1406 = vpop.f32.mrb[0].mxu0
        %v1407 = vadd.f32 %v979, %v1406
        %1408 = vmatprep.mubr.bf16.mxu0 0
        %1409 = vmatmul.mubr.bf16.gmra.mrb[0].mxu0 %v1122
        %v1410 = vpop.f32.mrb[0].mxu0
        %v1411 = vadd.f32 %v975, %v1410
        %v1412 = vpop.f32.mrb[0].mxu0
        %v1413 = vadd.f32 %v979, %v1412
        %v1414 = vpop.f32.mrb[0].mxu0
        %v1415 = vadd.f32 %v975, %v1414
        %v1416 = vpop.f32.mrb[0].mxu0
        %v1417 = vadd.f32 %v979, %v1416
        %1418 = vmatprep.mubr.bf16.mxu0 0
        %1419 = vmatmul.mubr.bf16.gmra.mrb[0].mxu0 %v1125
        %v1420 = vpop.f32.mrb[0].mxu0
        %v1421 = vadd.f32 %v975, %v1420
        %v1422 = vpop.f32.mrb[0].mxu0
        %v1423 = vadd.f32 %v979, %v1422
        %v1424 = vpop.f32.mrb[0].mxu0
        %v1425 = vadd.f32 %v975, %v1424
        %v1426 = vpop.f32.mrb[0].mxu0
        %v1427 = vadd.f32 %v979, %v1426
        %1428 = vmatprep.mubr.bf16.mxu0 0
        %1429 = vmatmul.mubr.bf16.gmra.mrb[0].mxu0 %v1128
        %v1430 = vpop.f32.mrb[0].mxu0
        %v1431 = vadd.f32 %v975, %v1430
        %v1432 = vpop.f32.mrb[0].mxu0
        %v1433 = vadd.f32 %v979, %v1432
        %v1434 = vpop.f32.mrb[0].mxu0
        %v1435 = vadd.f32 %v975, %v1434
        %v1436 = vpop.f32.mrb[0].mxu0
        %v1437 = vadd.f32 %v979, %v1436
        %1438 = vmatprep.mubr.bf16.mxu0 0
        %1439 = vmatmul.mubr.bf16.gmra.mrb[0].mxu0 %v1131
        %v1440 = vpop.f32.mrb[0].mxu0
        %v1441 = vadd.f32 %v975, %v1440
        %v1442 = vpop.f32.mrb[0].mxu0
        %v1443 = vadd.f32 %v979, %v1442
        %v1444 = vpop.f32.mrb[0].mxu0
        %v1445 = vadd.f32 %v975, %v1444
        %v1446 = vpop.f32.mrb[0].mxu0
        %v1447 = vadd.f32 %v979, %v1446
        %1448 = vmatprep.mubr.bf16.mxu0 0
        %1449 = vmatmul.mubr.bf16.gmra.mrb[0].mxu0 %v1134
        %v1450 = vpop.f32.mrb[0].mxu0
        %v1451 = vadd.f32 %v975, %v1450
        %v1452 = vpop.f32.mrb[0].mxu0
        %v1453 = vadd.f32 %v979, %v1452
        %v1454 = vpop.f32.mrb[0].mxu0
        %v1455 = vadd.f32 %v975, %v1454
        %v1456 = vpop.f32.mrb[0].mxu0
        %v1457 = vadd.f32 %v979, %v1456
        %1458 = vmatprep.mubr.bf16.mxu0 0
        %1459 = vmatmul.mubr.bf16.gmra.mrb[0].mxu0 %v1137
        %v1460 = vpop.f32.mrb[0].mxu0
        %v1461 = vadd.f32 %v975, %v1460
        %v1462 = vpop.f32.mrb[0].mxu0
        %v1463 = vadd.f32 %v979, %v1462
        %v1464 = vpop.f32.mrb[0].mxu0
        %v1465 = vadd.f32 %v975, %v1464
        %v1466 = vpop.f32.mrb[0].mxu0
        %v1467 = vadd.f32 %v979, %v1466
        %1468 = vmatprep.mubr.bf16.mxu0 0
        %1469 = vmatmul.mubr.bf16.gmra.mrb[0].mxu0 %v1140
        %v1470 = vpop.f32.mrb[0].mxu0
        %v1471 = vadd.f32 %v975, %v1470
        %v1472 = vpop.f32.mrb[0].mxu0
        %v1473 = vadd.f32 %v979, %v1472
        %v1474 = vpop.f32.mrb[0].mxu0
        %v1475 = vadd.f32 %v975, %v1474
        %v1476 = vpop.f32.mrb[0].mxu0
        %v1477 = vadd.f32 %v979, %v1476
        %1478 = vmatprep.mubr.bf16.mxu0 0
        %1479 = vmatmul.mubr.bf16.gmra.mrb[0].mxu0 %v1143
        %v1480 = vpop.f32.mrb[0].mxu0
        %v1481 = vadd.f32 %v975, %v1480
        %v1482 = vpop.f32.mrb[0].mxu0
        %v1483 = vadd.f32 %v979, %v1482
        %v1484 = vpop.f32.mrb[0].mxu0
        %v1485 = vadd.f32 %v975, %v1484
        %v1486 = vpop.f32.mrb[0].mxu0
        %v1487 = vadd.f32 %v979, %v1486
        %1488 = vmatprep.mubr.bf16.mxu0 0
        %1489 = vmatmul.mubr.bf16.gmra.mrb[0].mxu0 %v1146
        %v1490 = vpop.f32.mrb[0].mxu0
        %v1491 = vadd.f32 %v975, %v1490
        %v1492 = vpop.f32.mrb[0].mxu0
        %v1493 = vadd.f32 %v979, %v1492
        %v1494 = vpop.f32.mrb[0].mxu0
        %v1495 = vadd.f32 %v975, %v1494
        %v1496 = vpop.f32.mrb[0].mxu0
        %v1497 = vadd.f32 %v979, %v1496
        %1498 = vmatprep.mubr.bf16.mxu0 0
        %1499 = vmatmul.mubr.bf16.gmra.mrb[0].mxu0 %v1149
        %v1500 = vpop.f32.mrb[0].mxu0
        %v1501 = vadd.f32 %v975, %v1500
        %v1502 = vpop.f32.mrb[0].mxu0
        %v1503 = vadd.f32 %v979, %v1502
        %v1504 = vpop.f32.mrb[0].mxu0
        %v1505 = vadd.f32 %v975, %v1504
        %v1506 = vpop.f32.mrb[0].mxu0
        %v1507 = vadd.f32 %v979, %v1506
        %1508 = vmatprep.mubr.bf16.mxu0 0
        %1509 = vmatmul.mubr.bf16.gmra.mrb[0].mxu0 %v1152
        %v1510 = vpop.f32.mrb[0].mxu0
        %v1511 = vadd.f32 %v975, %v1510
        %v1512 = vpop.f32.mrb[0].mxu0
        %v1513 = vadd.f32 %v979, %v1512
        %v1514 = vpop.f32.mrb[0].mxu0
        %v1515 = vadd.f32 %v975, %v1514
        %v1516 = vpop.f32.mrb[0].mxu0
        %v1517 = vadd.f32 %v979, %v1516
        %1518 = vmatprep.mubr.bf16.mxu0 0
        %1519 = vmatmul.mubr.bf16.gmra.mrb[0].mxu0 %v1155
        %v1520 = vpop.f32.mrb[0].mxu0
        %v1521 = vadd.f32 %v975, %v1520
        %v1522 = vpop.f32.mrb[0].mxu0
        %v1523 = vadd.f32 %v979, %v1522
        %v1524 = vpop.f32.mrb[0].mxu0
        %v1525 = vadd.f32 %v975, %v1524
        %v1526 = vpop.f32.mrb[0].mxu0
        %v1527 = vadd.f32 %v979, %v1526
        %1528 = vmatprep.mubr.bf16.mxu0 0
        %1529 = vmatmul.mubr.bf16.gmra.mrb[0].mxu0 %v1158
        %v1530 = vpop.f32.mrb[0].mxu0
        %v1531 = vadd.f32 %v975, %v1530
        %v1532 = vpop.f32.mrb[0].mxu0
        %v1533 = vadd.f32 %v979, %v1532
        %v1534 = vpop.f32.mrb[0].mxu0
        %v1535 = vadd.f32 %v975, %v1534
        %v1536 = vpop.f32.mrb[0].mxu0
        %v1537 = vadd.f32 %v979, %v1536
        %1538 = vmatprep.mubr.bf16.mxu0 0
        %1539 = vmatmul.mubr.bf16.gmra.mrb[0].mxu0 %v1161
        %v1540 = vpop.f32.mrb[0].mxu0
        %v1541 = vadd.f32 %v975, %v1540
        %v1542 = vpop.f32.mrb[0].mxu0
        %v1543 = vadd.f32 %v979, %v1542
        %v1544 = vpop.f32.mrb[0].mxu0
        %v1545 = vadd.f32 %v975, %v1544
        %v1546 = vpop.f32.mrb[0].mxu0
        %v1547 = vadd.f32 %v979, %v1546
        %1548 = vdwg.mxu0
        %1549 = vmatprep.subr.bf16.mxu0 %v1079
        %1550 = vmatpush1.bf16.msra.mxu0 %v1078
        %1551 = vmatprep.subr.bf16.mxu0 %v1089
        %1552 = vmatpush1.bf16.msra.mxu0 %v1088
        %1553 = vmatprep.subr.bf16.mxu0 0
        %1554 = vmatpush1.bf16.msra.mxu0 0
        %1555 = vmatprep.subr.bf16.mxu0 0
        %1556 = vmatpush1.bf16.msra.mxu0 0
        %1557 = vmatprep.subr.bf16.mxu0 0
        %1558 = vmatpush1.bf16.msra.mxu0 0
        %1559 = vmatprep.subr.bf16.mxu0 0
        %1560 = vmatpush1.bf16.msra.mxu0 0
        %1561 = vmatprep.subr.bf16.mxu0 0
        %1562 = vmatpush1.bf16.msra.mxu0 0
        %1563 = vmatprep.subr.bf16.mxu0 0
        %1564 = vmatpush1.bf16.msra.mxu0 0
        %1565 = vmatprep.subr.bf16.mxu0 0
        %1566 = vmatpush1.bf16.msra.mxu0 0
        %1567 = vmatprep.subr.bf16.mxu0 0
        %1568 = vmatpush1.bf16.msra.mxu0 0
        %1569 = vmatprep.subr.bf16.mxu0 0
        %1570 = vmatpush1.bf16.msra.mxu0 0
        %1571 = vmatprep.subr.bf16.mxu0 0
        %1572 = vmatpush1.bf16.msra.mxu0 0
        %1573 = vmatprep.subr.bf16.mxu0 0
        %1574 = vmatpush1.bf16.msra.mxu0 0
        %1575 = vmatprep.subr.bf16.mxu0 0
        %1576 = vmatpush1.bf16.msra.mxu0 0
        %1577 = vmatprep.subr.bf16.mxu0 0
        %1578 = vmatpush1.bf16.msra.mxu0 0
        %1579 = vmatprep.subr.bf16.mxu0 0
        %1580 = vmatpush1.bf16.msra.mxu0 0
        %1581 = vmatprep.mubr.bf16.mxu0 0
        %1582 = vmatmul.mubr.bf16.gmra.mrb[0].mxu0 %v1116
        %v1583 = vpop.f32.mrb[0].mxu0
        %v1584 = vadd.f32 %v983, %v1583
        %v1585 = vpop.f32.mrb[0].mxu0
        %v1586 = vadd.f32 %v987, %v1585
        %v1587 = vpop.f32.mrb[0].mxu0
        %v1588 = vadd.f32 %v983, %v1587
        %v1589 = vpop.f32.mrb[0].mxu0
        %v1590 = vadd.f32 %v987, %v1589
        %1591 = vmatprep.mubr.bf16.mxu0 0
        %1592 = vmatmul.mubr.bf16.gmra.mrb[0].mxu0 %v1119
        %v1593 = vpop.f32.mrb[0].mxu0
        %v1594 = vadd.f32 %v983, %v1593
        %v1595 = vpop.f32.mrb[0].mxu0
        %v1596 = vadd.f32 %v987, %v1595
        %v1597 = vpop.f32.mrb[0].mxu0
        %v1598 = vadd.f32 %v983, %v1597
        %v1599 = vpop.f32.mrb[0].mxu0
        %v1600 = vadd.f32 %v987, %v1599
        %1601 = vmatprep.mubr.bf16.mxu0 0
        %1602 = vmatmul.mubr.bf16.gmra.mrb[0].mxu0 %v1122
        %v1603 = vpop.f32.mrb[0].mxu0
        %v1604 = vadd.f32 %v983, %v1603
        %v1605 = vpop.f32.mrb[0].mxu0
        %v1606 = vadd.f32 %v987, %v1605
        %v1607 = vpop.f32.mrb[0].mxu0
        %v1608 = vadd.f32 %v983, %v1607
        %v1609 = vpop.f32.mrb[0].mxu0
        %v1610 = vadd.f32 %v987, %v1609
        %1611 = vmatprep.mubr.bf16.mxu0 0
        %1612 = vmatmul.mubr.bf16.gmra.mrb[0].mxu0 %v1125
        %v1613 = vpop.f32.mrb[0].mxu0
        %v1614 = vadd.f32 %v983, %v1613
        %v1615 = vpop.f32.mrb[0].mxu0
        %v1616 = vadd.f32 %v987, %v1615
        %v1617 = vpop.f32.mrb[0].mxu0
        %v1618 = vadd.f32 %v983, %v1617
        %v1619 = vpop.f32.mrb[0].mxu0
        %v1620 = vadd.f32 %v987, %v1619
        %1621 = vmatprep.mubr.bf16.mxu0 0
        %1622 = vmatmul.mubr.bf16.gmra.mrb[0].mxu0 %v1128
        %v1623 = vpop.f32.mrb[0].mxu0
        %v1624 = vadd.f32 %v983, %v1623
        %v1625 = vpop.f32.mrb[0].mxu0
        %v1626 = vadd.f32 %v987, %v1625
        %v1627 = vpop.f32.mrb[0].mxu0
        %v1628 = vadd.f32 %v983, %v1627
        %v1629 = vpop.f32.mrb[0].mxu0
        %v1630 = vadd.f32 %v987, %v1629
        %1631 = vmatprep.mubr.bf16.mxu0 0
        %1632 = vmatmul.mubr.bf16.gmra.mrb[0].mxu0 %v1131
        %v1633 = vpop.f32.mrb[0].mxu0
        %v1634 = vadd.f32 %v983, %v1633
        %v1635 = vpop.f32.mrb[0].mxu0
        %v1636 = vadd.f32 %v987, %v1635
        %v1637 = vpop.f32.mrb[0].mxu0
        %v1638 = vadd.f32 %v983, %v1637
        %v1639 = vpop.f32.mrb[0].mxu0
        %v1640 = vadd.f32 %v987, %v1639
        %1641 = vmatprep.mubr.bf16.mxu0 0
        %1642 = vmatmul.mubr.bf16.gmra.mrb[0].mxu0 %v1134
        %v1643 = vpop.f32.mrb[0].mxu0
        %v1644 = vadd.f32 %v983, %v1643
        %v1645 = vpop.f32.mrb[0].mxu0
        %v1646 = vadd.f32 %v987, %v1645
        %v1647 = vpop.f32.mrb[0].mxu0
        %v1648 = vadd.f32 %v983, %v1647
        %v1649 = vpop.f32.mrb[0].mxu0
        %v1650 = vadd.f32 %v987, %v1649
        %1651 = vmatprep.mubr.bf16.mxu0 0
        %1652 = vmatmul.mubr.bf16.gmra.mrb[0].mxu0 %v1137
        %v1653 = vpop.f32.mrb[0].mxu0
        %v1654 = vadd.f32 %v983, %v1653
        %v1655 = vpop.f32.mrb[0].mxu0
        %v1656 = vadd.f32 %v987, %v1655
        %v1657 = vpop.f32.mrb[0].mxu0
        %v1658 = vadd.f32 %v983, %v1657
        %v1659 = vpop.f32.mrb[0].mxu0
        %v1660 = vadd.f32 %v987, %v1659
        %1661 = vmatprep.mubr.bf16.mxu0 0
        %1662 = vmatmul.mubr.bf16.gmra.mrb[0].mxu0 %v1140
        %v1663 = vpop.f32.mrb[0].mxu0
        %v1664 = vadd.f32 %v983, %v1663
        %v1665 = vpop.f32.mrb[0].mxu0
        %v1666 = vadd.f32 %v987, %v1665
        %v1667 = vpop.f32.mrb[0].mxu0
        %v1668 = vadd.f32 %v983, %v1667
        %v1669 = vpop.f32.mrb[0].mxu0
        %v1670 = vadd.f32 %v987, %v1669
        %1671 = vmatprep.mubr.bf16.mxu0 0
        %1672 = vmatmul.mubr.bf16.gmra.mrb[0].mxu0 %v1143
        %v1673 = vpop.f32.mrb[0].mxu0
        %v1674 = vadd.f32 %v983, %v1673
        %v1675 = vpop.f32.mrb[0].mxu0
        %v1676 = vadd.f32 %v987, %v1675
        %v1677 = vpop.f32.mrb[0].mxu0
        %v1678 = vadd.f32 %v983, %v1677
        %v1679 = vpop.f32.mrb[0].mxu0
        %v1680 = vadd.f32 %v987, %v1679
        %1681 = vmatprep.mubr.bf16.mxu0 0
        %1682 = vmatmul.mubr.bf16.gmra.mrb[0].mxu0 %v1146
        %v1683 = vpop.f32.mrb[0].mxu0
        %v1684 = vadd.f32 %v983, %v1683
        %v1685 = vpop.f32.mrb[0].mxu0
        %v1686 = vadd.f32 %v987, %v1685
        %v1687 = vpop.f32.mrb[0].mxu0
        %v1688 = vadd.f32 %v983, %v1687
        %v1689 = vpop.f32.mrb[0].mxu0
        %v1690 = vadd.f32 %v987, %v1689
        %1691 = vmatprep.mubr.bf16.mxu0 0
        %1692 = vmatmul.mubr.bf16.gmra.mrb[0].mxu0 %v1149
        %v1693 = vpop.f32.mrb[0].mxu0
        %v1694 = vadd.f32 %v983, %v1693
        %v1695 = vpop.f32.mrb[0].mxu0
        %v1696 = vadd.f32 %v987, %v1695
        %v1697 = vpop.f32.mrb[0].mxu0
        %v1698 = vadd.f32 %v983, %v1697
        %v1699 = vpop.f32.mrb[0].mxu0
        %v1700 = vadd.f32 %v987, %v1699
        %1701 = vmatprep.mubr.bf16.mxu0 0
        %1702 = vmatmul.mubr.bf16.gmra.mrb[0].mxu0 %v1152
        %v1703 = vpop.f32.mrb[0].mxu0
        %v1704 = vadd.f32 %v983, %v1703
        %v1705 = vpop.f32.mrb[0].mxu0
        %v1706 = vadd.f32 %v987, %v1705
        %v1707 = vpop.f32.mrb[0].mxu0
        %v1708 = vadd.f32 %v983, %v1707
        %v1709 = vpop.f32.mrb[0].mxu0
        %v1710 = vadd.f32 %v987, %v1709
        %1711 = vmatprep.mubr.bf16.mxu0 0
        %1712 = vmatmul.mubr.bf16.gmra.mrb[0].mxu0 %v1155
        %v1713 = vpop.f32.mrb[0].mxu0
        %v1714 = vadd.f32 %v983, %v1713
        %v1715 = vpop.f32.mrb[0].mxu0
        %v1716 = vadd.f32 %v987, %v1715
        %v1717 = vpop.f32.mrb[0].mxu0
        %v1718 = vadd.f32 %v983, %v1717
        %v1719 = vpop.f32.mrb[0].mxu0
        %v1720 = vadd.f32 %v987, %v1719
        %1721 = vmatprep.mubr.bf16.mxu0 0
        %1722 = vmatmul.mubr.bf16.gmra.mrb[0].mxu0 %v1158
        %v1723 = vpop.f32.mrb[0].mxu0
        %v1724 = vadd.f32 %v983, %v1723
        %v1725 = vpop.f32.mrb[0].mxu0
        %v1726 = vadd.f32 %v987, %v1725
        %v1727 = vpop.f32.mrb[0].mxu0
        %v1728 = vadd.f32 %v983, %v1727
        %v1729 = vpop.f32.mrb[0].mxu0
        %v1730 = vadd.f32 %v987, %v1729
        %1731 = vmatprep.mubr.bf16.mxu0 0
        %1732 = vmatmul.mubr.bf16.gmra.mrb[0].mxu0 %v1161
        %v1733 = vpop.f32.mrb[0].mxu0
        %v1734 = vadd.f32 %v983, %v1733
        %v1735 = vpop.f32.mrb[0].mxu0
        %v1736 = vadd.f32 %v987, %v1735
        %v1737 = vpop.f32.mrb[0].mxu0
        %v1738 = vadd.f32 %v983, %v1737
        %v1739 = vpop.f32.mrb[0].mxu0
        %v1740 = vadd.f32 %v987, %v1739
        %1741 = vdwg.mxu0
        %1742 = vmatprep.subr.bf16.mxu0 %v1081
        %1743 = vmatpush1.bf16.msra.mxu0 %v1080
        %1744 = vmatprep.subr.bf16.mxu0 %v1091
        %1745 = vmatpush1.bf16.msra.mxu0 %v1090
        %1746 = vmatprep.subr.bf16.mxu0 0
        %1747 = vmatpush1.bf16.msra.mxu0 0
        %1748 = vmatprep.subr.bf16.mxu0 0
        %1749 = vmatpush1.bf16.msra.mxu0 0
        %1750 = vmatprep.subr.bf16.mxu0 0
        %1751 = vmatpush1.bf16.msra.mxu0 0
        %1752 = vmatprep.subr.bf16.mxu0 0
        %1753 = vmatpush1.bf16.msra.mxu0 0
        %1754 = vmatprep.subr.bf16.mxu0 0
        %1755 = vmatpush1.bf16.msra.mxu0 0
        %1756 = vmatprep.subr.bf16.mxu0 0
        %1757 = vmatpush1.bf16.msra.mxu0 0
        %1758 = vmatprep.subr.bf16.mxu0 0
        %1759 = vmatpush1.bf16.msra.mxu0 0
        %1760 = vmatprep.subr.bf16.mxu0 0
        %1761 = vmatpush1.bf16.msra.mxu0 0
        %1762 = vmatprep.subr.bf16.mxu0 0
        %1763 = vmatpush1.bf16.msra.mxu0 0
        %1764 = vmatprep.subr.bf16.mxu0 0
        %1765 = vmatpush1.bf16.msra.mxu0 0
        %1766 = vmatprep.subr.bf16.mxu0 0
        %1767 = vmatpush1.bf16.msra.mxu0 0
        %1768 = vmatprep.subr.bf16.mxu0 0
        %1769 = vmatpush1.bf16.msra.mxu0 0
        %1770 = vmatprep.subr.bf16.mxu0 0
        %1771 = vmatpush1.bf16.msra.mxu0 0
        %1772 = vmatprep.subr.bf16.mxu0 0
        %1773 = vmatpush1.bf16.msra.mxu0 0
        %1774 = vmatprep.mubr.bf16.mxu0 0
        %1775 = vmatmul.mubr.bf16.gmra.mrb[0].mxu0 %v1116
        %v1776 = vpop.f32.mrb[0].mxu0
        %v1777 = vadd.f32 %v991, %v1776
        %v1778 = vpop.f32.mrb[0].mxu0
        %v1779 = vadd.f32 %v995, %v1778
        %v1780 = vpop.f32.mrb[0].mxu0
        %v1781 = vadd.f32 %v991, %v1780
        %v1782 = vpop.f32.mrb[0].mxu0
        %v1783 = vadd.f32 %v995, %v1782
        %1784 = vmatprep.mubr.bf16.mxu0 0
        %1785 = vmatmul.mubr.bf16.gmra.mrb[0].mxu0 %v1119
        %v1786 = vpop.f32.mrb[0].mxu0
        %v1787 = vadd.f32 %v991, %v1786
        %v1788 = vpop.f32.mrb[0].mxu0
        %v1789 = vadd.f32 %v995, %v1788
        %v1790 = vpop.f32.mrb[0].mxu0
        %v1791 = vadd.f32 %v991, %v1790
        %v1792 = vpop.f32.mrb[0].mxu0
        %v1793 = vadd.f32 %v995, %v1792
        %1794 = vmatprep.mubr.bf16.mxu0 0
        %1795 = vmatmul.mubr.bf16.gmra.mrb[0].mxu0 %v1122
        %v1796 = vpop.f32.mrb[0].mxu0
        %v1797 = vadd.f32 %v991, %v1796
        %v1798 = vpop.f32.mrb[0].mxu0
        %v1799 = vadd.f32 %v995, %v1798
        %v1800 = vpop.f32.mrb[0].mxu0
        %v1801 = vadd.f32 %v991, %v1800
        %v1802 = vpop.f32.mrb[0].mxu0
        %v1803 = vadd.f32 %v995, %v1802
        %1804 = vmatprep.mubr.bf16.mxu0 0
        %1805 = vmatmul.mubr.bf16.gmra.mrb[0].mxu0 %v1125
        %v1806 = vpop.f32.mrb[0].mxu0
        %v1807 = vadd.f32 %v991, %v1806
        %v1808 = vpop.f32.mrb[0].mxu0
        %v1809 = vadd.f32 %v995, %v1808
        %v1810 = vpop.f32.mrb[0].mxu0
        %v1811 = vadd.f32 %v991, %v1810
        %v1812 = vpop.f32.mrb[0].mxu0
        %v1813 = vadd.f32 %v995, %v1812
        %1814 = vmatprep.mubr.bf16.mxu0 0
        %1815 = vmatmul.mubr.bf16.gmra.mrb[0].mxu0 %v1128
        %v1816 = vpop.f32.mrb[0].mxu0
        %v1817 = vadd.f32 %v991, %v1816
        %v1818 = vpop.f32.mrb[0].mxu0
        %v1819 = vadd.f32 %v995, %v1818
        %v1820 = vpop.f32.mrb[0].mxu0
        %v1821 = vadd.f32 %v991, %v1820
        %v1822 = vpop.f32.mrb[0].mxu0
        %v1823 = vadd.f32 %v995, %v1822
        %1824 = vmatprep.mubr.bf16.mxu0 0
        %1825 = vmatmul.mubr.bf16.gmra.mrb[0].mxu0 %v1131
        %v1826 = vpop.f32.mrb[0].mxu0
        %v1827 = vadd.f32 %v991, %v1826
        %v1828 = vpop.f32.mrb[0].mxu0
        %v1829 = vadd.f32 %v995, %v1828
        %v1830 = vpop.f32.mrb[0].mxu0
        %v1831 = vadd.f32 %v991, %v1830
        %v1832 = vpop.f32.mrb[0].mxu0
        %v1833 = vadd.f32 %v995, %v1832
        %1834 = vmatprep.mubr.bf16.mxu0 0
        %1835 = vmatmul.mubr.bf16.gmra.mrb[0].mxu0 %v1134
        %v1836 = vpop.f32.mrb[0].mxu0
        %v1837 = vadd.f32 %v991, %v1836
        %v1838 = vpop.f32.mrb[0].mxu0
        %v1839 = vadd.f32 %v995, %v1838
        %v1840 = vpop.f32.mrb[0].mxu0
        %v1841 = vadd.f32 %v991, %v1840
        %v1842 = vpop.f32.mrb[0].mxu0
        %v1843 = vadd.f32 %v995, %v1842
        %1844 = vmatprep.mubr.bf16.mxu0 0
        %1845 = vmatmul.mubr.bf16.gmra.mrb[0].mxu0 %v1137
        %v1846 = vpop.f32.mrb[0].mxu0
        %v1847 = vadd.f32 %v991, %v1846
        %v1848 = vpop.f32.mrb[0].mxu0
        %v1849 = vadd.f32 %v995, %v1848
        %v1850 = vpop.f32.mrb[0].mxu0
        %v1851 = vadd.f32 %v991, %v1850
        %v1852 = vpop.f32.mrb[0].mxu0
        %v1853 = vadd.f32 %v995, %v1852
        %1854 = vmatprep.mubr.bf16.mxu0 0
        %1855 = vmatmul.mubr.bf16.gmra.mrb[0].mxu0 %v1140
        %v1856 = vpop.f32.mrb[0].mxu0
        %v1857 = vadd.f32 %v991, %v1856
        %v1858 = vpop.f32.mrb[0].mxu0
        %v1859 = vadd.f32 %v995, %v1858
        %v1860 = vpop.f32.mrb[0].mxu0
        %v1861 = vadd.f32 %v991, %v1860
        %v1862 = vpop.f32.mrb[0].mxu0
        %v1863 = vadd.f32 %v995, %v1862
        %1864 = vmatprep.mubr.bf16.mxu0 0
        %1865 = vmatmul.mubr.bf16.gmra.mrb[0].mxu0 %v1143
        %v1866 = vpop.f32.mrb[0].mxu0
        %v1867 = vadd.f32 %v991, %v1866
        %v1868 = vpop.f32.mrb[0].mxu0
        %v1869 = vadd.f32 %v995, %v1868
        %v1870 = vpop.f32.mrb[0].mxu0
        %v1871 = vadd.f32 %v991, %v1870
        %v1872 = vpop.f32.mrb[0].mxu0
        %v1873 = vadd.f32 %v995, %v1872
        %1874 = vmatprep.mubr.bf16.mxu0 0
        %1875 = vmatmul.mubr.bf16.gmra.mrb[0].mxu0 %v1146
        %v1876 = vpop.f32.mrb[0].mxu0
        %v1877 = vadd.f32 %v991, %v1876
        %v1878 = vpop.f32.mrb[0].mxu0
        %v1879 = vadd.f32 %v995, %v1878
        %v1880 = vpop.f32.mrb[0].mxu0
        %v1881 = vadd.f32 %v991, %v1880
        %v1882 = vpop.f32.mrb[0].mxu0
        %v1883 = vadd.f32 %v995, %v1882
        %1884 = vmatprep.mubr.bf16.mxu0 0
        %1885 = vmatmul.mubr.bf16.gmra.mrb[0].mxu0 %v1149
        %v1886 = vpop.f32.mrb[0].mxu0
        %v1887 = vadd.f32 %v991, %v1886
        %v1888 = vpop.f32.mrb[0].mxu0
        %v1889 = vadd.f32 %v995, %v1888
        %v1890 = vpop.f32.mrb[0].mxu0
        %v1891 = vadd.f32 %v991, %v1890
        %v1892 = vpop.f32.mrb[0].mxu0
        %v1893 = vadd.f32 %v995, %v1892
        %1894 = vmatprep.mubr.bf16.mxu0 0
        %1895 = vmatmul.mubr.bf16.gmra.mrb[0].mxu0 %v1152
        %v1896 = vpop.f32.mrb[0].mxu0
        %v1897 = vadd.f32 %v991, %v1896
        %v1898 = vpop.f32.mrb[0].mxu0
        %v1899 = vadd.f32 %v995, %v1898
        %v1900 = vpop.f32.mrb[0].mxu0
        %v1901 = vadd.f32 %v991, %v1900
        %v1902 = vpop.f32.mrb[0].mxu0
        %v1903 = vadd.f32 %v995, %v1902
        %1904 = vmatprep.mubr.bf16.mxu0 0
        %1905 = vmatmul.mubr.bf16.gmra.mrb[0].mxu0 %v1155
        %v1906 = vpop.f32.mrb[0].mxu0
        %v1907 = vadd.f32 %v991, %v1906
        %v1908 = vpop.f32.mrb[0].mxu0
        %v1909 = vadd.f32 %v995, %v1908
        %v1910 = vpop.f32.mrb[0].mxu0
        %v1911 = vadd.f32 %v991, %v1910
        %v1912 = vpop.f32.mrb[0].mxu0
        %v1913 = vadd.f32 %v995, %v1912
        %1914 = vmatprep.mubr.bf16.mxu0 0
        %1915 = vmatmul.mubr.bf16.gmra.mrb[0].mxu0 %v1158
        %v1916 = vpop.f32.mrb[0].mxu0
        %v1917 = vadd.f32 %v991, %v1916
        %v1918 = vpop.f32.mrb[0].mxu0
        %v1919 = vadd.f32 %v995, %v1918
        %v1920 = vpop.f32.mrb[0].mxu0
        %v1921 = vadd.f32 %v991, %v1920
        %v1922 = vpop.f32.mrb[0].mxu0
        %v1923 = vadd.f32 %v995, %v1922
        %1924 = vmatprep.mubr.bf16.mxu0 0
        %1925 = vmatmul.mubr.bf16.gmra.mrb[0].mxu0 %v1161
        %v1926 = vpop.f32.mrb[0].mxu0
        %v1927 = vadd.f32 %v991, %v1926
        %v1928 = vpop.f32.mrb[0].mxu0
        %v1929 = vadd.f32 %v995, %v1928
        %v1930 = vpop.f32.mrb[0].mxu0
        %v1931 = vadd.f32 %v991, %v1930
        %v1932 = vpop.f32.mrb[0].mxu0
        %v1933 = vadd.f32 %v995, %v1932
        %1934 = vdwg.mxu0
        %1935 = vmatprep.subr.bf16.mxu0 %v1083
        %1936 = vmatpush1.bf16.msra.mxu0 %v1082
        %1937 = vmatprep.subr.bf16.mxu0 %v1093
        %1938 = vmatpush1.bf16.msra.mxu0 %v1092
        %1939 = vmatprep.subr.bf16.mxu0 0
        %1940 = vmatpush1.bf16.msra.mxu0 0
        %1941 = vmatprep.subr.bf16.mxu0 0
        %1942 = vmatpush1.bf16.msra.mxu0 0
        %1943 = vmatprep.subr.bf16.mxu0 0
        %1944 = vmatpush1.bf16.msra.mxu0 0
        %1945 = vmatprep.subr.bf16.mxu0 0
        %1946 = vmatpush1.bf16.msra.mxu0 0
        %1947 = vmatprep.subr.bf16.mxu0 0
        %1948 = vmatpush1.bf16.msra.mxu0 0
        %1949 = vmatprep.subr.bf16.mxu0 0
        %1950 = vmatpush1.bf16.msra.mxu0 0
        %1951 = vmatprep.subr.bf16.mxu0 0
        %1952 = vmatpush1.bf16.msra.mxu0 0
        %1953 = vmatprep.subr.bf16.mxu0 0
        %1954 = vmatpush1.bf16.msra.mxu0 0
        %1955 = vmatprep.subr.bf16.mxu0 0
        %1956 = vmatpush1.bf16.msra.mxu0 0
        %1957 = vmatprep.subr.bf16.mxu0 0
        %1958 = vmatpush1.bf16.msra.mxu0 0
        %1959 = vmatprep.subr.bf16.mxu0 0
        %1960 = vmatpush1.bf16.msra.mxu0 0
        %1961 = vmatprep.subr.bf16.mxu0 0
        %1962 = vmatpush1.bf16.msra.mxu0 0
        %1963 = vmatprep.subr.bf16.mxu0 0
        %1964 = vmatpush1.bf16.msra.mxu0 0
        %1965 = vmatprep.subr.bf16.mxu0 0
        %1966 = vmatpush1.bf16.msra.mxu0 0
        %1967 = vmatprep.mubr.bf16.mxu0 0
        %1968 = vmatmul.mubr.bf16.gmra.mrb[0].mxu0 %v1116
        %v1969 = vpop.f32.mrb[0].mxu0
        %v1970 = vadd.f32 %v999, %v1969
        %v1971 = vpop.f32.mrb[0].mxu0
        %v1972 = vadd.f32 %v1003, %v1971
        %v1973 = vpop.f32.mrb[0].mxu0
        %v1974 = vadd.f32 %v999, %v1973
        %v1975 = vpop.f32.mrb[0].mxu0
        %v1976 = vadd.f32 %v1003, %v1975
        %1977 = vmatprep.mubr.bf16.mxu0 0
        %1978 = vmatmul.mubr.bf16.gmra.mrb[0].mxu0 %v1119
        %v1979 = vpop.f32.mrb[0].mxu0
        %v1980 = vadd.f32 %v999, %v1979
        %v1981 = vpop.f32.mrb[0].mxu0
        %v1982 = vadd.f32 %v1003, %v1981
        %v1983 = vpop.f32.mrb[0].mxu0
        %v1984 = vadd.f32 %v999, %v1983
        %v1985 = vpop.f32.mrb[0].mxu0
        %v1986 = vadd.f32 %v1003, %v1985
        %1987 = vmatprep.mubr.bf16.mxu0 0
        %1988 = vmatmul.mubr.bf16.gmra.mrb[0].mxu0 %v1122
        %v1989 = vpop.f32.mrb[0].mxu0
        %v1990 = vadd.f32 %v999, %v1989
        %v1991 = vpop.f32.mrb[0].mxu0
        %v1992 = vadd.f32 %v1003, %v1991
        %v1993 = vpop.f32.mrb[0].mxu0
        %v1994 = vadd.f32 %v999, %v1993
        %v1995 = vpop.f32.mrb[0].mxu0
        %v1996 = vadd.f32 %v1003, %v1995
        %1997 = vmatprep.mubr.bf16.mxu0 0
        %1998 = vmatmul.mubr.bf16.gmra.mrb[0].mxu0 %v1125
        %v1999 = vpop.f32.mrb[0].mxu0
        %v2000 = vadd.f32 %v999, %v1999
        %v2001 = vpop.f32.mrb[0].mxu0
        %v2002 = vadd.f32 %v1003, %v2001
        %v2003 = vpop.f32.mrb[0].mxu0
        %v2004 = vadd.f32 %v999, %v2003
        %v2005 = vpop.f32.mrb[0].mxu0
        %v2006 = vadd.f32 %v1003, %v2005
        %2007 = vmatprep.mubr.bf16.mxu0 0
        %2008 = vmatmul.mubr.bf16.gmra.mrb[0].mxu0 %v1128
        %v2009 = vpop.f32.mrb[0].mxu0
        %v2010 = vadd.f32 %v999, %v2009
        %v2011 = vpop.f32.mrb[0].mxu0
        %v2012 = vadd.f32 %v1003, %v2011
        %v2013 = vpop.f32.mrb[0].mxu0
        %v2014 = vadd.f32 %v999, %v2013
        %v2015 = vpop.f32.mrb[0].mxu0
        %v2016 = vadd.f32 %v1003, %v2015
        %2017 = vmatprep.mubr.bf16.mxu0 0
        %2018 = vmatmul.mubr.bf16.gmra.mrb[0].mxu0 %v1131
        %v2019 = vpop.f32.mrb[0].mxu0
        %v2020 = vadd.f32 %v999, %v2019
        %v2021 = vpop.f32.mrb[0].mxu0
        %v2022 = vadd.f32 %v1003, %v2021
        %v2023 = vpop.f32.mrb[0].mxu0
        %v2024 = vadd.f32 %v999, %v2023
        %v2025 = vpop.f32.mrb[0].mxu0
        %v2026 = vadd.f32 %v1003, %v2025
        %2027 = vmatprep.mubr.bf16.mxu0 0
        %2028 = vmatmul.mubr.bf16.gmra.mrb[0].mxu0 %v1134
        %v2029 = vpop.f32.mrb[0].mxu0
        %v2030 = vadd.f32 %v999, %v2029
        %v2031 = vpop.f32.mrb[0].mxu0
        %v2032 = vadd.f32 %v1003, %v2031
        %v2033 = vpop.f32.mrb[0].mxu0
        %v2034 = vadd.f32 %v999, %v2033
        %v2035 = vpop.f32.mrb[0].mxu0
        %v2036 = vadd.f32 %v1003, %v2035
        %2037 = vmatprep.mubr.bf16.mxu0 0
        %2038 = vmatmul.mubr.bf16.gmra.mrb[0].mxu0 %v1137
        %v2039 = vpop.f32.mrb[0].mxu0
        %v2040 = vadd.f32 %v999, %v2039
        %v2041 = vpop.f32.mrb[0].mxu0
        %v2042 = vadd.f32 %v1003, %v2041
        %v2043 = vpop.f32.mrb[0].mxu0
        %v2044 = vadd.f32 %v999, %v2043
        %v2045 = vpop.f32.mrb[0].mxu0
        %v2046 = vadd.f32 %v1003, %v2045
        %2047 = vmatprep.mubr.bf16.mxu0 0
        %2048 = vmatmul.mubr.bf16.gmra.mrb[0].mxu0 %v1140
        %v2049 = vpop.f32.mrb[0].mxu0
        %v2050 = vadd.f32 %v999, %v2049
        %v2051 = vpop.f32.mrb[0].mxu0
        %v2052 = vadd.f32 %v1003, %v2051
        %v2053 = vpop.f32.mrb[0].mxu0
        %v2054 = vadd.f32 %v999, %v2053
        %v2055 = vpop.f32.mrb[0].mxu0
        %v2056 = vadd.f32 %v1003, %v2055
        %2057 = vmatprep.mubr.bf16.mxu0 0
        %2058 = vmatmul.mubr.bf16.gmra.mrb[0].mxu0 %v1143
        %v2059 = vpop.f32.mrb[0].mxu0
        %v2060 = vadd.f32 %v999, %v2059
        %v2061 = vpop.f32.mrb[0].mxu0
        %v2062 = vadd.f32 %v1003, %v2061
        %v2063 = vpop.f32.mrb[0].mxu0
        %v2064 = vadd.f32 %v999, %v2063
        %v2065 = vpop.f32.mrb[0].mxu0
        %v2066 = vadd.f32 %v1003, %v2065
        %2067 = vmatprep.mubr.bf16.mxu0 0
        %2068 = vmatmul.mubr.bf16.gmra.mrb[0].mxu0 %v1146
        %v2069 = vpop.f32.mrb[0].mxu0
        %v2070 = vadd.f32 %v999, %v2069
        %v2071 = vpop.f32.mrb[0].mxu0
        %v2072 = vadd.f32 %v1003, %v2071
        %v2073 = vpop.f32.mrb[0].mxu0
        %v2074 = vadd.f32 %v999, %v2073
        %v2075 = vpop.f32.mrb[0].mxu0
        %v2076 = vadd.f32 %v1003, %v2075
        %2077 = vmatprep.mubr.bf16.mxu0 0
        %2078 = vmatmul.mubr.bf16.gmra.mrb[0].mxu0 %v1149
        %v2079 = vpop.f32.mrb[0].mxu0
        %v2080 = vadd.f32 %v999, %v2079
        %v2081 = vpop.f32.mrb[0].mxu0
        %v2082 = vadd.f32 %v1003, %v2081
        %v2083 = vpop.f32.mrb[0].mxu0
        %v2084 = vadd.f32 %v999, %v2083
        %v2085 = vpop.f32.mrb[0].mxu0
        %v2086 = vadd.f32 %v1003, %v2085
        %2087 = vmatprep.mubr.bf16.mxu0 0
        %2088 = vmatmul.mubr.bf16.gmra.mrb[0].mxu0 %v1152
        %v2089 = vpop.f32.mrb[0].mxu0
        %v2090 = vadd.f32 %v999, %v2089
        %v2091 = vpop.f32.mrb[0].mxu0
        %v2092 = vadd.f32 %v1003, %v2091
        %v2093 = vpop.f32.mrb[0].mxu0
        %v2094 = vadd.f32 %v999, %v2093
        %v2095 = vpop.f32.mrb[0].mxu0
        %v2096 = vadd.f32 %v1003, %v2095
        %2097 = vmatprep.mubr.bf16.mxu0 0
        %2098 = vmatmul.mubr.bf16.gmra.mrb[0].mxu0 %v1155
        %v2099 = vpop.f32.mrb[0].mxu0
        %v2100 = vadd.f32 %v999, %v2099
        %v2101 = vpop.f32.mrb[0].mxu0
        %v2102 = vadd.f32 %v1003, %v2101
        %v2103 = vpop.f32.mrb[0].mxu0
        %v2104 = vadd.f32 %v999, %v2103
        %v2105 = vpop.f32.mrb[0].mxu0
        %v2106 = vadd.f32 %v1003, %v2105
        %2107 = vmatprep.mubr.bf16.mxu0 0
        %2108 = vmatmul.mubr.bf16.gmra.mrb[0].mxu0 %v1158
        %v2109 = vpop.f32.mrb[0].mxu0
        %v2110 = vadd.f32 %v999, %v2109
        %v2111 = vpop.f32.mrb[0].mxu0
        %v2112 = vadd.f32 %v1003, %v2111
        %v2113 = vpop.f32.mrb[0].mxu0
        %v2114 = vadd.f32 %v999, %v2113
        %v2115 = vpop.f32.mrb[0].mxu0
        %v2116 = vadd.f32 %v1003, %v2115
        %2117 = vmatprep.mubr.bf16.mxu0 0
        %2118 = vmatmul.mubr.bf16.gmra.mrb[0].mxu0 %v1161
        %v2119 = vpop.f32.mrb[0].mxu0
        %v2120 = vadd.f32 %v999, %v2119
        %v2121 = vpop.f32.mrb[0].mxu0
        %v2122 = vadd.f32 %v1003, %v2121
        %v2123 = vpop.f32.mrb[0].mxu0
        %v2124 = vadd.f32 %v999, %v2123
        %v2125 = vpop.f32.mrb[0].mxu0
        %v2126 = vadd.f32 %v1003, %v2125
        %2127 = vdwg.mxu0
        %v2128 = vxor.u32 %v1198, 2147483648
        %v2129 = vxor.u32 %v1200, 2147483648
        %v2130 = vxor.u32 %v1391, 2147483648
        %v2131 = vxor.u32 %v1393, 2147483648
        %v2132 = vxor.u32 %v1584, 2147483648
        %v2133 = vxor.u32 %v1586, 2147483648
        %v2134 = vxor.u32 %v1777, 2147483648
        %v2135 = vxor.u32 %v1779, 2147483648
        %v2136 = vxor.u32 %v1970, 2147483648
        %v2137 = vxor.u32 %v1972, 2147483648
        %v2138 = vxor.u32 %v1202, 2147483648
        %v2139 = vxor.u32 %v1204, 2147483648
        %v2140 = vxor.u32 %v1395, 2147483648
        %v2141 = vxor.u32 %v1397, 2147483648
        %v2142 = vxor.u32 %v1588, 2147483648
        %v2143 = vxor.u32 %v1590, 2147483648
        %v2144 = vxor.u32 %v1781, 2147483648
        %v2145 = vxor.u32 %v1783, 2147483648
        %v2146 = vxor.u32 %v1974, 2147483648
        %v2147 = vxor.u32 %v1976, 2147483648
        %v2148 = vxor.u32 %v1208, 2147483648
        %v2149 = vxor.u32 %v1210, 2147483648
        %v2150 = vxor.u32 %v1401, 2147483648
        %v2151 = vxor.u32 %v1403, 2147483648
        %v2152 = vxor.u32 %v1594, 2147483648
        %v2153 = vxor.u32 %v1596, 2147483648
        %v2154 = vxor.u32 %v1787, 2147483648
        %v2155 = vxor.u32 %v1789, 2147483648
        %v2156 = vxor.u32 %v1980, 2147483648
        %v2157 = vxor.u32 %v1982, 2147483648
        %v2158 = vxor.u32 %v1212, 2147483648
        %v2159 = vxor.u32 %v1214, 2147483648
        %v2160 = vxor.u32 %v1405, 2147483648
        %v2161 = vxor.u32 %v1407, 2147483648
        %v2162 = vxor.u32 %v1598, 2147483648
        %v2163 = vxor.u32 %v1600, 2147483648
        %v2164 = vxor.u32 %v1791, 2147483648
        %v2165 = vxor.u32 %v1793, 2147483648
        %v2166 = vxor.u32 %v1984, 2147483648
        %v2167 = vxor.u32 %v1986, 2147483648
        %v2168 = vxor.u32 %v1218, 2147483648
        %v2169 = vxor.u32 %v1220, 2147483648
        %v2170 = vxor.u32 %v1411, 2147483648
        %v2171 = vxor.u32 %v1413, 2147483648
        %v2172 = vxor.u32 %v1604, 2147483648
        %v2173 = vxor.u32 %v1606, 2147483648
        %v2174 = vxor.u32 %v1797, 2147483648
        %v2175 = vxor.u32 %v1799, 2147483648
        %v2176 = vxor.u32 %v1990, 2147483648
        %v2177 = vxor.u32 %v1992, 2147483648
        %v2178 = vxor.u32 %v1222, 2147483648
        %v2179 = vxor.u32 %v1224, 2147483648
        %v2180 = vxor.u32 %v1415, 2147483648
        %v2181 = vxor.u32 %v1417, 2147483648
        %v2182 = vxor.u32 %v1608, 2147483648
        %v2183 = vxor.u32 %v1610, 2147483648
        %v2184 = vxor.u32 %v1801, 2147483648
        %v2185 = vxor.u32 %v1803, 2147483648
        %v2186 = vxor.u32 %v1994, 2147483648
        %v2187 = vxor.u32 %v1996, 2147483648
        %v2188 = vxor.u32 %v1228, 2147483648
        %v2189 = vxor.u32 %v1230, 2147483648
        %v2190 = vxor.u32 %v1421, 2147483648
        %v2191 = vxor.u32 %v1423, 2147483648
        %v2192 = vxor.u32 %v1614, 2147483648
        %v2193 = vxor.u32 %v1616, 2147483648
        %v2194 = vxor.u32 %v1807, 2147483648
        %v2195 = vxor.u32 %v1809, 2147483648
        %v2196 = vxor.u32 %v2000, 2147483648
        %v2197 = vxor.u32 %v2002, 2147483648
        %v2198 = vxor.u32 %v1232, 2147483648
        %v2199 = vxor.u32 %v1234, 2147483648
        %v2200 = vxor.u32 %v1425, 2147483648
        %v2201 = vxor.u32 %v1427, 2147483648
        %v2202 = vxor.u32 %v1618, 2147483648
        %v2203 = vxor.u32 %v1620, 2147483648
        %v2204 = vxor.u32 %v1811, 2147483648
        %v2205 = vxor.u32 %v1813, 2147483648
        %v2206 = vxor.u32 %v2004, 2147483648
        %v2207 = vxor.u32 %v2006, 2147483648
        %v2208 = vxor.u32 %v1238, 2147483648
        %v2209 = vxor.u32 %v1240, 2147483648
        %v2210 = vxor.u32 %v1431, 2147483648
        %v2211 = vxor.u32 %v1433, 2147483648
        %v2212 = vxor.u32 %v1624, 2147483648
        %v2213 = vxor.u32 %v1626, 2147483648
        %v2214 = vxor.u32 %v1817, 2147483648
        %v2215 = vxor.u32 %v1819, 2147483648
        %v2216 = vxor.u32 %v2010, 2147483648
        %v2217 = vxor.u32 %v2012, 2147483648
        %v2218 = vxor.u32 %v1242, 2147483648
        %v2219 = vxor.u32 %v1244, 2147483648
        %v2220 = vxor.u32 %v1435, 2147483648
        %v2221 = vxor.u32 %v1437, 2147483648
        %v2222 = vxor.u32 %v1628, 2147483648
        %v2223 = vxor.u32 %v1630, 2147483648
        %v2224 = vxor.u32 %v1821, 2147483648
        %v2225 = vxor.u32 %v1823, 2147483648
        %v2226 = vxor.u32 %v2014, 2147483648
        %v2227 = vxor.u32 %v2016, 2147483648
        %v2228 = vxor.u32 %v1248, 2147483648
        %v2229 = vxor.u32 %v1250, 2147483648
        %v2230 = vxor.u32 %v1441, 2147483648
        %v2231 = vxor.u32 %v1443, 2147483648
        %v2232 = vxor.u32 %v1634, 2147483648
        %v2233 = vxor.u32 %v1636, 2147483648
        %v2234 = vxor.u32 %v1827, 2147483648
        %v2235 = vxor.u32 %v1829, 2147483648
        %v2236 = vxor.u32 %v2020, 2147483648
        %v2237 = vxor.u32 %v2022, 2147483648
        %v2238 = vxor.u32 %v1252, 2147483648
        %v2239 = vxor.u32 %v1254, 2147483648
        %v2240 = vxor.u32 %v1445, 2147483648
        %v2241 = vxor.u32 %v1447, 2147483648
        %v2242 = vxor.u32 %v1638, 2147483648
        %v2243 = vxor.u32 %v1640, 2147483648
        %v2244 = vxor.u32 %v1831, 2147483648
        %v2245 = vxor.u32 %v1833, 2147483648
        %v2246 = vxor.u32 %v2024, 2147483648
        %v2247 = vxor.u32 %v2026, 2147483648
        %v2248 = vxor.u32 %v1258, 2147483648
        %v2249 = vxor.u32 %v1260, 2147483648
        %v2250 = vxor.u32 %v1451, 2147483648
        %v2251 = vxor.u32 %v1453, 2147483648
        %v2252 = vxor.u32 %v1644, 2147483648
        %v2253 = vxor.u32 %v1646, 2147483648
        %v2254 = vxor.u32 %v1837, 2147483648
        %v2255 = vxor.u32 %v1839, 2147483648
        %v2256 = vxor.u32 %v2030, 2147483648
        %v2257 = vxor.u32 %v2032, 2147483648
        %v2258 = vxor.u32 %v1262, 2147483648
        %v2259 = vxor.u32 %v1264, 2147483648
        %v2260 = vxor.u32 %v1455, 2147483648
        %v2261 = vxor.u32 %v1457, 2147483648
        %v2262 = vxor.u32 %v1648, 2147483648
        %v2263 = vxor.u32 %v1650, 2147483648
        %v2264 = vxor.u32 %v1841, 2147483648
        %v2265 = vxor.u32 %v1843, 2147483648
        %v2266 = vxor.u32 %v2034, 2147483648
        %v2267 = vxor.u32 %v2036, 2147483648
        %v2268 = vxor.u32 %v1268, 2147483648
        %v2269 = vxor.u32 %v1270, 2147483648
        %v2270 = vxor.u32 %v1461, 2147483648
        %v2271 = vxor.u32 %v1463, 2147483648
        %v2272 = vxor.u32 %v1654, 2147483648
        %v2273 = vxor.u32 %v1656, 2147483648
        %v2274 = vxor.u32 %v1847, 2147483648
        %v2275 = vxor.u32 %v1849, 2147483648
        %v2276 = vxor.u32 %v2040, 2147483648
        %v2277 = vxor.u32 %v2042, 2147483648
        %v2278 = vxor.u32 %v1272, 2147483648
        %v2279 = vxor.u32 %v1274, 2147483648
        %v2280 = vxor.u32 %v1465, 2147483648
        %v2281 = vxor.u32 %v1467, 2147483648
        %v2282 = vxor.u32 %v1658, 2147483648
        %v2283 = vxor.u32 %v1660, 2147483648
        %v2284 = vxor.u32 %v1851, 2147483648
        %v2285 = vxor.u32 %v1853, 2147483648
        %v2286 = vxor.u32 %v2044, 2147483648
        %v2287 = vxor.u32 %v2046, 2147483648
        %v2288 = vxor.u32 %v1278, 2147483648
        %v2289 = vxor.u32 %v1280, 2147483648
        %v2290 = vxor.u32 %v1471, 2147483648
        %v2291 = vxor.u32 %v1473, 2147483648
        %v2292 = vxor.u32 %v1664, 2147483648
        %v2293 = vxor.u32 %v1666, 2147483648
        %v2294 = vxor.u32 %v1857, 2147483648
        %v2295 = vxor.u32 %v1859, 2147483648
        %v2296 = vxor.u32 %v2050, 2147483648
        %v2297 = vxor.u32 %v2052, 2147483648
        %v2298 = vxor.u32 %v1282, 2147483648
        %v2299 = vxor.u32 %v1284, 2147483648
        %v2300 = vxor.u32 %v1475, 2147483648
        %v2301 = vxor.u32 %v1477, 2147483648
        %v2302 = vxor.u32 %v1668, 2147483648
        %v2303 = vxor.u32 %v1670, 2147483648
        %v2304 = vxor.u32 %v1861, 2147483648
        %v2305 = vxor.u32 %v1863, 2147483648
        %v2306 = vxor.u32 %v2054, 2147483648
        %v2307 = vxor.u32 %v2056, 2147483648
        %v2308 = vxor.u32 %v1288, 2147483648
        %v2309 = vxor.u32 %v1290, 2147483648
        %v2310 = vxor.u32 %v1481, 2147483648
        %v2311 = vxor.u32 %v1483, 2147483648
        %v2312 = vxor.u32 %v1674, 2147483648
        %v2313 = vxor.u32 %v1676, 2147483648
        %v2314 = vxor.u32 %v1867, 2147483648
        %v2315 = vxor.u32 %v1869, 2147483648
        %v2316 = vxor.u32 %v2060, 2147483648
        %v2317 = vxor.u32 %v2062, 2147483648
        %v2318 = vxor.u32 %v1292, 2147483648
        %v2319 = vxor.u32 %v1294, 2147483648
        %v2320 = vxor.u32 %v1485, 2147483648
        %v2321 = vxor.u32 %v1487, 2147483648
        %v2322 = vxor.u32 %v1678, 2147483648
        %v2323 = vxor.u32 %v1680, 2147483648
        %v2324 = vxor.u32 %v1871, 2147483648
        %v2325 = vxor.u32 %v1873, 2147483648
        %v2326 = vxor.u32 %v2064, 2147483648
        %v2327 = vxor.u32 %v2066, 2147483648
        %v2328 = vxor.u32 %v1298, 2147483648
        %v2329 = vxor.u32 %v1300, 2147483648
        %v2330 = vxor.u32 %v1491, 2147483648
        %v2331 = vxor.u32 %v1493, 2147483648
        %v2332 = vxor.u32 %v1684, 2147483648
        %v2333 = vxor.u32 %v1686, 2147483648
        %v2334 = vxor.u32 %v1877, 2147483648
        %v2335 = vxor.u32 %v1879, 2147483648
        %v2336 = vxor.u32 %v2070, 2147483648
        %v2337 = vxor.u32 %v2072, 2147483648
        %v2338 = vxor.u32 %v1302, 2147483648
        %v2339 = vxor.u32 %v1304, 2147483648
        %v2340 = vxor.u32 %v1495, 2147483648
        %v2341 = vxor.u32 %v1497, 2147483648
        %v2342 = vxor.u32 %v1688, 2147483648
        %v2343 = vxor.u32 %v1690, 2147483648
        %v2344 = vxor.u32 %v1881, 2147483648
        %v2345 = vxor.u32 %v1883, 2147483648
        %v2346 = vxor.u32 %v2074, 2147483648
        %v2347 = vxor.u32 %v2076, 2147483648
        %v2348 = vxor.u32 %v1308, 2147483648
        %v2349 = vxor.u32 %v1310, 2147483648
        %v2350 = vxor.u32 %v1501, 2147483648
        %v2351 = vxor.u32 %v1503, 2147483648
        %v2352 = vxor.u32 %v1694, 2147483648
        %v2353 = vxor.u32 %v1696, 2147483648
        %v2354 = vxor.u32 %v1887, 2147483648
        %v2355 = vxor.u32 %v1889, 2147483648
        %v2356 = vxor.u32 %v2080, 2147483648
        %v2357 = vxor.u32 %v2082, 2147483648
        %v2358 = vxor.u32 %v1312, 2147483648
        %v2359 = vxor.u32 %v1314, 2147483648
        %v2360 = vxor.u32 %v1505, 2147483648
        %v2361 = vxor.u32 %v1507, 2147483648
        %v2362 = vxor.u32 %v1698, 2147483648
        %v2363 = vxor.u32 %v1700, 2147483648
        %v2364 = vxor.u32 %v1891, 2147483648
        %v2365 = vxor.u32 %v1893, 2147483648
        %v2366 = vxor.u32 %v2084, 2147483648
        %v2367 = vxor.u32 %v2086, 2147483648
        %v2368 = vxor.u32 %v1318, 2147483648
        %v2369 = vxor.u32 %v1320, 2147483648
        %v2370 = vxor.u32 %v1511, 2147483648
        %v2371 = vxor.u32 %v1513, 2147483648
        %v2372 = vxor.u32 %v1704, 2147483648
        %v2373 = vxor.u32 %v1706, 2147483648
        %v2374 = vxor.u32 %v1897, 2147483648
        %v2375 = vxor.u32 %v1899, 2147483648
        %v2376 = vxor.u32 %v2090, 2147483648
        %v2377 = vxor.u32 %v2092, 2147483648
        %v2378 = vxor.u32 %v1322, 2147483648
        %v2379 = vxor.u32 %v1324, 2147483648
        %v2380 = vxor.u32 %v1515, 2147483648
        %v2381 = vxor.u32 %v1517, 2147483648
        %v2382 = vxor.u32 %v1708, 2147483648
        %v2383 = vxor.u32 %v1710, 2147483648
        %v2384 = vxor.u32 %v1901, 2147483648
        %v2385 = vxor.u32 %v1903, 2147483648
        %v2386 = vxor.u32 %v2094, 2147483648
        %v2387 = vxor.u32 %v2096, 2147483648
        %v2388 = vxor.u32 %v1328, 2147483648
        %v2389 = vxor.u32 %v1330, 2147483648
        %v2390 = vxor.u32 %v1521, 2147483648
        %v2391 = vxor.u32 %v1523, 2147483648
        %v2392 = vxor.u32 %v1714, 2147483648
        %v2393 = vxor.u32 %v1716, 2147483648
        %v2394 = vxor.u32 %v1907, 2147483648
        %v2395 = vxor.u32 %v1909, 2147483648
        %v2396 = vxor.u32 %v2100, 2147483648
        %v2397 = vxor.u32 %v2102, 2147483648
        %v2398 = vxor.u32 %v1332, 2147483648
        %v2399 = vxor.u32 %v1334, 2147483648
        %v2400 = vxor.u32 %v1525, 2147483648
        %v2401 = vxor.u32 %v1527, 2147483648
        %v2402 = vxor.u32 %v1718, 2147483648
        %v2403 = vxor.u32 %v1720, 2147483648
        %v2404 = vxor.u32 %v1911, 2147483648
        %v2405 = vxor.u32 %v1913, 2147483648
        %v2406 = vxor.u32 %v2104, 2147483648
        %v2407 = vxor.u32 %v2106, 2147483648
        %v2408 = vxor.u32 %v1338, 2147483648
        %v2409 = vxor.u32 %v1340, 2147483648
        %v2410 = vxor.u32 %v1531, 2147483648
        %v2411 = vxor.u32 %v1533, 2147483648
        %v2412 = vxor.u32 %v1724, 2147483648
        %v2413 = vxor.u32 %v1726, 2147483648
        %v2414 = vxor.u32 %v1917, 2147483648
        %v2415 = vxor.u32 %v1919, 2147483648
        %v2416 = vxor.u32 %v2110, 2147483648
        %v2417 = vxor.u32 %v2112, 2147483648
        %v2418 = vxor.u32 %v1342, 2147483648
        %v2419 = vxor.u32 %v1344, 2147483648
        %v2420 = vxor.u32 %v1535, 2147483648
        %v2421 = vxor.u32 %v1537, 2147483648
        %v2422 = vxor.u32 %v1728, 2147483648
        %v2423 = vxor.u32 %v1730, 2147483648
        %v2424 = vxor.u32 %v1921, 2147483648
        %v2425 = vxor.u32 %v1923, 2147483648
        %v2426 = vxor.u32 %v2114, 2147483648
        %v2427 = vxor.u32 %v2116, 2147483648
        %v2428 = vxor.u32 %v1348, 2147483648
        %v2429 = vxor.u32 %v1350, 2147483648
        %v2430 = vxor.u32 %v1541, 2147483648
        %v2431 = vxor.u32 %v1543, 2147483648
        %v2432 = vxor.u32 %v1734, 2147483648
        %v2433 = vxor.u32 %v1736, 2147483648
        %v2434 = vxor.u32 %v1927, 2147483648
        %v2435 = vxor.u32 %v1929, 2147483648
        %v2436 = vxor.u32 %v2120, 2147483648
        %v2437 = vxor.u32 %v2122, 2147483648
        %v2438 = vxor.u32 %v1352, 2147483648
        %v2439 = vxor.u32 %v1354, 2147483648
        %v2440 = vxor.u32 %v1545, 2147483648
        %v2441 = vxor.u32 %v1547, 2147483648
        %v2442 = vxor.u32 %v1738, 2147483648
        %v2443 = vxor.u32 %v1740, 2147483648
        %v2444 = vxor.u32 %v1931, 2147483648
        %v2445 = vxor.u32 %v1933, 2147483648
        %v2446 = vxor.u32 %v2124, 2147483648
        %v2447 = vxor.u32 %v2126, 2147483648
        %v2448 = vmul.f32 %v2128, 1.442695
        %v2449 = vpow.pop %v2448
        %v2450 = vmul.f32 %v2129, 1.442695
        %v2451 = vpow.pop %v2450
        %v2452 = vmul.f32 %v2130, 1.442695
        %v2453 = vpow.pop %v2452
        %v2454 = vmul.f32 %v2131, 1.442695
        %v2455 = vpow.pop %v2454
        %v2456 = vmul.f32 %v2132, 1.442695
        %v2457 = vpow.pop %v2456
        %v2458 = vmul.f32 %v2133, 1.442695
        %v2459 = vpow.pop %v2458
        %v2460 = vmul.f32 %v2134, 1.442695
        %v2461 = vpow.pop %v2460
        %v2462 = vmul.f32 %v2135, 1.442695
        %v2463 = vpow.pop %v2462
        %v2464 = vmul.f32 %v2136, 1.442695
        %v2465 = vpow.pop %v2464
        %v2466 = vmul.f32 %v2137, 1.442695
        %v2467 = vpow.pop %v2466
        %v2468 = vmul.f32 %v2138, 1.442695
        %v2469 = vpow.pop %v2468
        %v2470 = vmul.f32 %v2139, 1.442695
        %v2471 = vpow.pop %v2470
        %v2472 = vmul.f32 %v2140, 1.442695
        %v2473 = vpow.pop %v2472
        %v2474 = vmul.f32 %v2141, 1.442695
        %v2475 = vpow.pop %v2474
        %v2476 = vmul.f32 %v2142, 1.442695
        %v2477 = vpow.pop %v2476
        %v2478 = vmul.f32 %v2143, 1.442695
        %v2479 = vpow.pop %v2478
        %v2480 = vmul.f32 %v2144, 1.442695
        %v2481 = vpow.pop %v2480
        %v2482 = vmul.f32 %v2145, 1.442695
        %v2483 = vpow.pop %v2482
        %v2484 = vmul.f32 %v2146, 1.442695
        %v2485 = vpow.pop %v2484
        %v2486 = vmul.f32 %v2147, 1.442695
        %v2487 = vpow.pop %v2486
        %v2488 = vmul.f32 %v2148, 1.442695
        %v2489 = vpow.pop %v2488
        %v2490 = vmul.f32 %v2149, 1.442695
        %v2491 = vpow.pop %v2490
        %v2492 = vmul.f32 %v2150, 1.442695
        %v2493 = vpow.pop %v2492
        %v2494 = vmul.f32 %v2151, 1.442695
        %v2495 = vpow.pop %v2494
        %v2496 = vmul.f32 %v2152, 1.442695
        %v2497 = vpow.pop %v2496
        %v2498 = vmul.f32 %v2153, 1.442695
        %v2499 = vpow.pop %v2498
        %v2500 = vmul.f32 %v2154, 1.442695
        %v2501 = vpow.pop %v2500
        %v2502 = vmul.f32 %v2155, 1.442695
        %v2503 = vpow.pop %v2502
        %v2504 = vmul.f32 %v2156, 1.442695
        %v2505 = vpow.pop %v2504
        %v2506 = vmul.f32 %v2157, 1.442695
        %v2507 = vpow.pop %v2506
        %v2508 = vmul.f32 %v2158, 1.442695
        %v2509 = vpow.pop %v2508
        %v2510 = vmul.f32 %v2159, 1.442695
        %v2511 = vpow.pop %v2510
        %v2512 = vmul.f32 %v2160, 1.442695
        %v2513 = vpow.pop %v2512
        %v2514 = vmul.f32 %v2161, 1.442695
        %v2515 = vpow.pop %v2514
        %v2516 = vmul.f32 %v2162, 1.442695
        %v2517 = vpow.pop %v2516
        %v2518 = vmul.f32 %v2163, 1.442695
        %v2519 = vpow.pop %v2518
        %v2520 = vmul.f32 %v2164, 1.442695
        %v2521 = vpow.pop %v2520
        %v2522 = vmul.f32 %v2165, 1.442695
        %v2523 = vpow.pop %v2522
        %v2524 = vmul.f32 %v2166, 1.442695
        %v2525 = vpow.pop %v2524
        %v2526 = vmul.f32 %v2167, 1.442695
        %v2527 = vpow.pop %v2526
        %v2528 = vmul.f32 %v2168, 1.442695
        %v2529 = vpow.pop %v2528
        %v2530 = vmul.f32 %v2169, 1.442695
        %v2531 = vpow.pop %v2530
        %v2532 = vmul.f32 %v2170, 1.442695
        %v2533 = vpow.pop %v2532
        %v2534 = vmul.f32 %v2171, 1.442695
        %v2535 = vpow.pop %v2534
        %v2536 = vmul.f32 %v2172, 1.442695
        %v2537 = vpow.pop %v2536
        %v2538 = vmul.f32 %v2173, 1.442695
        %v2539 = vpow.pop %v2538
        %v2540 = vmul.f32 %v2174, 1.442695
        %v2541 = vpow.pop %v2540
        %v2542 = vmul.f32 %v2175, 1.442695
        %v2543 = vpow.pop %v2542
        %v2544 = vmul.f32 %v2176, 1.442695
        %v2545 = vpow.pop %v2544
        %v2546 = vmul.f32 %v2177, 1.442695
        %v2547 = vpow.pop %v2546
        %v2548 = vmul.f32 %v2178, 1.442695
        %v2549 = vpow.pop %v2548
        %v2550 = vmul.f32 %v2179, 1.442695
        %v2551 = vpow.pop %v2550
        %v2552 = vmul.f32 %v2180, 1.442695
        %v2553 = vpow.pop %v2552
        %v2554 = vmul.f32 %v2181, 1.442695
        %v2555 = vpow.pop %v2554
        %v2556 = vmul.f32 %v2182, 1.442695
        %v2557 = vpow.pop %v2556
        %v2558 = vmul.f32 %v2183, 1.442695
        %v2559 = vpow.pop %v2558
        %v2560 = vmul.f32 %v2184, 1.442695
        %v2561 = vpow.pop %v2560
        %v2562 = vmul.f32 %v2185, 1.442695
        %v2563 = vpow.pop %v2562
        %v2564 = vmul.f32 %v2186, 1.442695
        %v2565 = vpow.pop %v2564
        %v2566 = vmul.f32 %v2187, 1.442695
        %v2567 = vpow.pop %v2566
        %v2568 = vmul.f32 %v2188, 1.442695
        %v2569 = vpow.pop %v2568
        %v2570 = vmul.f32 %v2189, 1.442695
        %v2571 = vpow.pop %v2570
        %v2572 = vmul.f32 %v2190, 1.442695
        %v2573 = vpow.pop %v2572
        %v2574 = vmul.f32 %v2191, 1.442695
        %v2575 = vpow.pop %v2574
        %v2576 = vmul.f32 %v2192, 1.442695
        %v2577 = vpow.pop %v2576
        %v2578 = vmul.f32 %v2193, 1.442695
        %v2579 = vpow.pop %v2578
        %v2580 = vmul.f32 %v2194, 1.442695
        %v2581 = vpow.pop %v2580
        %v2582 = vmul.f32 %v2195, 1.442695
        %v2583 = vpow.pop %v2582
        %v2584 = vmul.f32 %v2196, 1.442695
        %v2585 = vpow.pop %v2584
        %v2586 = vmul.f32 %v2197, 1.442695
        %v2587 = vpow.pop %v2586
        %v2588 = vmul.f32 %v2198, 1.442695
        %v2589 = vpow.pop %v2588
        %v2590 = vmul.f32 %v2199, 1.442695
        %v2591 = vpow.pop %v2590
        %v2592 = vmul.f32 %v2200, 1.442695
        %v2593 = vpow.pop %v2592
        %v2594 = vmul.f32 %v2201, 1.442695
        %v2595 = vpow.pop %v2594
        %v2596 = vmul.f32 %v2202, 1.442695
        %v2597 = vpow.pop %v2596
        %v2598 = vmul.f32 %v2203, 1.442695
        %v2599 = vpow.pop %v2598
        %v2600 = vmul.f32 %v2204, 1.442695
        %v2601 = vpow.pop %v2600
        %v2602 = vmul.f32 %v2205, 1.442695
        %v2603 = vpow.pop %v2602
        %v2604 = vmul.f32 %v2206, 1.442695
        %v2605 = vpow.pop %v2604
        %v2606 = vmul.f32 %v2207, 1.442695
        %v2607 = vpow.pop %v2606
        %v2608 = vmul.f32 %v2208, 1.442695
        %v2609 = vpow.pop %v2608
        %v2610 = vmul.f32 %v2209, 1.442695
        %v2611 = vpow.pop %v2610
        %v2612 = vmul.f32 %v2210, 1.442695
        %v2613 = vpow.pop %v2612
        %v2614 = vmul.f32 %v2211, 1.442695
        %v2615 = vpow.pop %v2614
        %v2616 = vmul.f32 %v2212, 1.442695
        %v2617 = vpow.pop %v2616
        %v2618 = vmul.f32 %v2213, 1.442695
        %v2619 = vpow.pop %v2618
        %v2620 = vmul.f32 %v2214, 1.442695
        %v2621 = vpow.pop %v2620
        %v2622 = vmul.f32 %v2215, 1.442695
        %v2623 = vpow.pop %v2622
        %v2624 = vmul.f32 %v2216, 1.442695
        %v2625 = vpow.pop %v2624
        %v2626 = vmul.f32 %v2217, 1.442695
        %v2627 = vpow.pop %v2626
        %v2628 = vmul.f32 %v2218, 1.442695
        %v2629 = vpow.pop %v2628
        %v2630 = vmul.f32 %v2219, 1.442695
        %v2631 = vpow.pop %v2630
        %v2632 = vmul.f32 %v2220, 1.442695
        %v2633 = vpow.pop %v2632
        %v2634 = vmul.f32 %v2221, 1.442695
        %v2635 = vpow.pop %v2634
        %v2636 = vmul.f32 %v2222, 1.442695
        %v2637 = vpow.pop %v2636
        %v2638 = vmul.f32 %v2223, 1.442695
        %v2639 = vpow.pop %v2638
        %v2640 = vmul.f32 %v2224, 1.442695
        %v2641 = vpow.pop %v2640
        %v2642 = vmul.f32 %v2225, 1.442695
        %v2643 = vpow.pop %v2642
        %v2644 = vmul.f32 %v2226, 1.442695
        %v2645 = vpow.pop %v2644
        %v2646 = vmul.f32 %v2227, 1.442695
        %v2647 = vpow.pop %v2646
        %v2648 = vmul.f32 %v2228, 1.442695
        %v2649 = vpow.pop %v2648
        %v2650 = vmul.f32 %v2229, 1.442695
        %v2651 = vpow.pop %v2650
        %v2652 = vmul.f32 %v2230, 1.442695
        %v2653 = vpow.pop %v2652
        %v2654 = vmul.f32 %v2231, 1.442695
        %v2655 = vpow.pop %v2654
        %v2656 = vmul.f32 %v2232, 1.442695
        %v2657 = vpow.pop %v2656
        %v2658 = vmul.f32 %v2233, 1.442695
        %v2659 = vpow.pop %v2658
        %v2660 = vmul.f32 %v2234, 1.442695
        %v2661 = vpow.pop %v2660
        %v2662 = vmul.f32 %v2235, 1.442695
        %v2663 = vpow.pop %v2662
        %v2664 = vmul.f32 %v2236, 1.442695
        %v2665 = vpow.pop %v2664
        %v2666 = vmul.f32 %v2237, 1.442695
        %v2667 = vpow.pop %v2666
        %v2668 = vmul.f32 %v2238, 1.442695
        %v2669 = vpow.pop %v2668
        %v2670 = vmul.f32 %v2239, 1.442695
        %v2671 = vpow.pop %v2670
        %v2672 = vmul.f32 %v2240, 1.442695
        %v2673 = vpow.pop %v2672
        %v2674 = vmul.f32 %v2241, 1.442695
        %v2675 = vpow.pop %v2674
        %v2676 = vmul.f32 %v2242, 1.442695
        %v2677 = vpow.pop %v2676
        %v2678 = vmul.f32 %v2243, 1.442695
        %v2679 = vpow.pop %v2678
        %v2680 = vmul.f32 %v2244, 1.442695
        %v2681 = vpow.pop %v2680
        %v2682 = vmul.f32 %v2245, 1.442695
        %v2683 = vpow.pop %v2682
        %v2684 = vmul.f32 %v2246, 1.442695
        %v2685 = vpow.pop %v2684
        %v2686 = vmul.f32 %v2247, 1.442695
        %v2687 = vpow.pop %v2686
        %v2688 = vmul.f32 %v2248, 1.442695
        %v2689 = vpow.pop %v2688
        %v2690 = vmul.f32 %v2249, 1.442695
        %v2691 = vpow.pop %v2690
        %v2692 = vmul.f32 %v2250, 1.442695
        %v2693 = vpow.pop %v2692
        %v2694 = vmul.f32 %v2251, 1.442695
        %v2695 = vpow.pop %v2694
        %v2696 = vmul.f32 %v2252, 1.442695
        %v2697 = vpow.pop %v2696
        %v2698 = vmul.f32 %v2253, 1.442695
        %v2699 = vpow.pop %v2698
        %v2700 = vmul.f32 %v2254, 1.442695
        %v2701 = vpow.pop %v2700
        %v2702 = vmul.f32 %v2255, 1.442695
        %v2703 = vpow.pop %v2702
        %v2704 = vmul.f32 %v2256, 1.442695
        %v2705 = vpow.pop %v2704
        %v2706 = vmul.f32 %v2257, 1.442695
        %v2707 = vpow.pop %v2706
        %v2708 = vmul.f32 %v2258, 1.442695
        %v2709 = vpow.pop %v2708
        %v2710 = vmul.f32 %v2259, 1.442695
        %v2711 = vpow.pop %v2710
        %v2712 = vmul.f32 %v2260, 1.442695
        %v2713 = vpow.pop %v2712
        %v2714 = vmul.f32 %v2261, 1.442695
        %v2715 = vpow.pop %v2714
        %v2716 = vmul.f32 %v2262, 1.442695
        %v2717 = vpow.pop %v2716
        %v2718 = vmul.f32 %v2263, 1.442695
        %v2719 = vpow.pop %v2718
        %v2720 = vmul.f32 %v2264, 1.442695
        %v2721 = vpow.pop %v2720
        %v2722 = vmul.f32 %v2265, 1.442695
        %v2723 = vpow.pop %v2722
        %v2724 = vmul.f32 %v2266, 1.442695
        %v2725 = vpow.pop %v2724
        %v2726 = vmul.f32 %v2267, 1.442695
        %v2727 = vpow.pop %v2726
        %v2728 = vmul.f32 %v2268, 1.442695
        %v2729 = vpow.pop %v2728
        %v2730 = vmul.f32 %v2269, 1.442695
        %v2731 = vpow.pop %v2730
        %v2732 = vmul.f32 %v2270, 1.442695
        %v2733 = vpow.pop %v2732
        %v2734 = vmul.f32 %v2271, 1.442695
        %v2735 = vpow.pop %v2734
        %v2736 = vmul.f32 %v2272, 1.442695
        %v2737 = vpow.pop %v2736
        %v2738 = vmul.f32 %v2273, 1.442695
        %v2739 = vpow.pop %v2738
        %v2740 = vmul.f32 %v2274, 1.442695
        %v2741 = vpow.pop %v2740
        %v2742 = vmul.f32 %v2275, 1.442695
        %v2743 = vpow.pop %v2742
        %v2744 = vmul.f32 %v2276, 1.442695
        %v2745 = vpow.pop %v2744
        %v2746 = vmul.f32 %v2277, 1.442695
        %v2747 = vpow.pop %v2746
        %v2748 = vmul.f32 %v2278, 1.442695
        %v2749 = vpow.pop %v2748
        %v2750 = vmul.f32 %v2279, 1.442695
        %v2751 = vpow.pop %v2750
        %v2752 = vmul.f32 %v2280, 1.442695
        %v2753 = vpow.pop %v2752
        %v2754 = vmul.f32 %v2281, 1.442695
        %v2755 = vpow.pop %v2754
        %v2756 = vmul.f32 %v2282, 1.442695
        %v2757 = vpow.pop %v2756
        %v2758 = vmul.f32 %v2283, 1.442695
        %v2759 = vpow.pop %v2758
        %v2760 = vmul.f32 %v2284, 1.442695
        %v2761 = vpow.pop %v2760
        %v2762 = vmul.f32 %v2285, 1.442695
        %v2763 = vpow.pop %v2762
        %v2764 = vmul.f32 %v2286, 1.442695
        %v2765 = vpow.pop %v2764
        %v2766 = vmul.f32 %v2287, 1.442695
        %v2767 = vpow.pop %v2766
        %v2768 = vmul.f32 %v2288, 1.442695
        %v2769 = vpow.pop %v2768
        %v2770 = vmul.f32 %v2289, 1.442695
        %v2771 = vpow.pop %v2770
        %v2772 = vmul.f32 %v2290, 1.442695
        %v2773 = vpow.pop %v2772
        %v2774 = vmul.f32 %v2291, 1.442695
        %v2775 = vpow.pop %v2774
        %v2776 = vmul.f32 %v2292, 1.442695
        %v2777 = vpow.pop %v2776
        %v2778 = vmul.f32 %v2293, 1.442695
        %v2779 = vpow.pop %v2778
        %v2780 = vmul.f32 %v2294, 1.442695
        %v2781 = vpow.pop %v2780
        %v2782 = vmul.f32 %v2295, 1.442695
        %v2783 = vpow.pop %v2782
        %v2784 = vmul.f32 %v2296, 1.442695
        %v2785 = vpow.pop %v2784
        %v2786 = vmul.f32 %v2297, 1.442695
        %v2787 = vpow.pop %v2786
        %v2788 = vmul.f32 %v2298, 1.442695
        %v2789 = vpow.pop %v2788
        %v2790 = vmul.f32 %v2299, 1.442695
        %v2791 = vpow.pop %v2790
        %v2792 = vmul.f32 %v2300, 1.442695
        %v2793 = vpow.pop %v2792
        %v2794 = vmul.f32 %v2301, 1.442695
        %v2795 = vpow.pop %v2794
        %v2796 = vmul.f32 %v2302, 1.442695
        %v2797 = vpow.pop %v2796
        %v2798 = vmul.f32 %v2303, 1.442695
        %v2799 = vpow.pop %v2798
        %v2800 = vmul.f32 %v2304, 1.442695
        %v2801 = vpow.pop %v2800
        %v2802 = vmul.f32 %v2305, 1.442695
        %v2803 = vpow.pop %v2802
        %v2804 = vmul.f32 %v2306, 1.442695
        %v2805 = vpow.pop %v2804
        %v2806 = vmul.f32 %v2307, 1.442695
        %v2807 = vpow.pop %v2806
        %v2808 = vmul.f32 %v2308, 1.442695
        %v2809 = vpow.pop %v2808
        %v2810 = vmul.f32 %v2309, 1.442695
        %v2811 = vpow.pop %v2810
        %v2812 = vmul.f32 %v2310, 1.442695
        %v2813 = vpow.pop %v2812
        %v2814 = vmul.f32 %v2311, 1.442695
        %v2815 = vpow.pop %v2814
        %v2816 = vmul.f32 %v2312, 1.442695
        %v2817 = vpow.pop %v2816
        %v2818 = vmul.f32 %v2313, 1.442695
        %v2819 = vpow.pop %v2818
        %v2820 = vmul.f32 %v2314, 1.442695
        %v2821 = vpow.pop %v2820
        %v2822 = vmul.f32 %v2315, 1.442695
        %v2823 = vpow.pop %v2822
        %v2824 = vmul.f32 %v2316, 1.442695
        %v2825 = vpow.pop %v2824
        %v2826 = vmul.f32 %v2317, 1.442695
        %v2827 = vpow.pop %v2826
        %v2828 = vmul.f32 %v2318, 1.442695
        %v2829 = vpow.pop %v2828
        %v2830 = vmul.f32 %v2319, 1.442695
        %v2831 = vpow.pop %v2830
        %v2832 = vmul.f32 %v2320, 1.442695
        %v2833 = vpow.pop %v2832
        %v2834 = vmul.f32 %v2321, 1.442695
        %v2835 = vpow.pop %v2834
        %v2836 = vmul.f32 %v2322, 1.442695
        %v2837 = vpow.pop %v2836
        %v2838 = vmul.f32 %v2323, 1.442695
        %v2839 = vpow.pop %v2838
        %v2840 = vmul.f32 %v2324, 1.442695
        %v2841 = vpow.pop %v2840
        %v2842 = vmul.f32 %v2325, 1.442695
        %v2843 = vpow.pop %v2842
        %v2844 = vmul.f32 %v2326, 1.442695
        %v2845 = vpow.pop %v2844
        %v2846 = vmul.f32 %v2327, 1.442695
        %v2847 = vpow.pop %v2846
        %v2848 = vmul.f32 %v2328, 1.442695
        %v2849 = vpow.pop %v2848
        %v2850 = vmul.f32 %v2329, 1.442695
        %v2851 = vpow.pop %v2850
        %v2852 = vmul.f32 %v2330, 1.442695
        %v2853 = vpow.pop %v2852
        %v2854 = vmul.f32 %v2331, 1.442695
        %v2855 = vpow.pop %v2854
        %v2856 = vmul.f32 %v2332, 1.442695
        %v2857 = vpow.pop %v2856
        %v2858 = vmul.f32 %v2333, 1.442695
        %v2859 = vpow.pop %v2858
        %v2860 = vmul.f32 %v2334, 1.442695
        %v2861 = vpow.pop %v2860
        %v2862 = vmul.f32 %v2335, 1.442695
        %v2863 = vpow.pop %v2862
        %v2864 = vmul.f32 %v2336, 1.442695
        %v2865 = vpow.pop %v2864
        %v2866 = vmul.f32 %v2337, 1.442695
        %v2867 = vpow.pop %v2866
        %v2868 = vmul.f32 %v2338, 1.442695
        %v2869 = vpow.pop %v2868
        %v2870 = vmul.f32 %v2339, 1.442695
        %v2871 = vpow.pop %v2870
        %v2872 = vmul.f32 %v2340, 1.442695
        %v2873 = vpow.pop %v2872
        %v2874 = vmul.f32 %v2341, 1.442695
        %v2875 = vpow.pop %v2874
        %v2876 = vmul.f32 %v2342, 1.442695
        %v2877 = vpow.pop %v2876
        %v2878 = vmul.f32 %v2343, 1.442695
        %v2879 = vpow.pop %v2878
        %v2880 = vmul.f32 %v2344, 1.442695
        %v2881 = vpow.pop %v2880
        %v2882 = vmul.f32 %v2345, 1.442695
        %v2883 = vpow.pop %v2882
        %v2884 = vmul.f32 %v2346, 1.442695
        %v2885 = vpow.pop %v2884
        %v2886 = vmul.f32 %v2347, 1.442695
        %v2887 = vpow.pop %v2886
        %v2888 = vmul.f32 %v2348, 1.442695
        %v2889 = vpow.pop %v2888
        %v2890 = vmul.f32 %v2349, 1.442695
        %v2891 = vpow.pop %v2890
        %v2892 = vmul.f32 %v2350, 1.442695
        %v2893 = vpow.pop %v2892
        %v2894 = vmul.f32 %v2351, 1.442695
        %v2895 = vpow.pop %v2894
        %v2896 = vmul.f32 %v2352, 1.442695
        %v2897 = vpow.pop %v2896
        %v2898 = vmul.f32 %v2353, 1.442695
        %v2899 = vpow.pop %v2898
        %v2900 = vmul.f32 %v2354, 1.442695
        %v2901 = vpow.pop %v2900
        %v2902 = vmul.f32 %v2355, 1.442695
        %v2903 = vpow.pop %v2902
        %v2904 = vmul.f32 %v2356, 1.442695
        %v2905 = vpow.pop %v2904
        %v2906 = vmul.f32 %v2357, 1.442695
        %v2907 = vpow.pop %v2906
        %v2908 = vmul.f32 %v2358, 1.442695
        %v2909 = vpow.pop %v2908
        %v2910 = vmul.f32 %v2359, 1.442695
        %v2911 = vpow.pop %v2910
        %v2912 = vmul.f32 %v2360, 1.442695
        %v2913 = vpow.pop %v2912
        %v2914 = vmul.f32 %v2361, 1.442695
        %v2915 = vpow.pop %v2914
        %v2916 = vmul.f32 %v2362, 1.442695
        %v2917 = vpow.pop %v2916
        %v2918 = vmul.f32 %v2363, 1.442695
        %v2919 = vpow.pop %v2918
        %v2920 = vmul.f32 %v2364, 1.442695
        %v2921 = vpow.pop %v2920
        %v2922 = vmul.f32 %v2365, 1.442695
        %v2923 = vpow.pop %v2922
        %v2924 = vmul.f32 %v2366, 1.442695
        %v2925 = vpow.pop %v2924
        %v2926 = vmul.f32 %v2367, 1.442695
        %v2927 = vpow.pop %v2926
        %v2928 = vmul.f32 %v2368, 1.442695
        %v2929 = vpow.pop %v2928
        %v2930 = vmul.f32 %v2369, 1.442695
        %v2931 = vpow.pop %v2930
        %v2932 = vmul.f32 %v2370, 1.442695
        %v2933 = vpow.pop %v2932
        %v2934 = vmul.f32 %v2371, 1.442695
        %v2935 = vpow.pop %v2934
        %v2936 = vmul.f32 %v2372, 1.442695
        %v2937 = vpow.pop %v2936
        %v2938 = vmul.f32 %v2373, 1.442695
        %v2939 = vpow.pop %v2938
        %v2940 = vmul.f32 %v2374, 1.442695
        %v2941 = vpow.pop %v2940
        %v2942 = vmul.f32 %v2375, 1.442695
        %v2943 = vpow.pop %v2942
        %v2944 = vmul.f32 %v2376, 1.442695
        %v2945 = vpow.pop %v2944
        %v2946 = vmul.f32 %v2377, 1.442695
        %v2947 = vpow.pop %v2946
        %v2948 = vmul.f32 %v2378, 1.442695
        %v2949 = vpow.pop %v2948
        %v2950 = vmul.f32 %v2379, 1.442695
        %v2951 = vpow.pop %v2950
        %v2952 = vmul.f32 %v2380, 1.442695
        %v2953 = vpow.pop %v2952
        %v2954 = vmul.f32 %v2381, 1.442695
        %v2955 = vpow.pop %v2954
        %v2956 = vmul.f32 %v2382, 1.442695
        %v2957 = vpow.pop %v2956
        %v2958 = vmul.f32 %v2383, 1.442695
        %v2959 = vpow.pop %v2958
        %v2960 = vmul.f32 %v2384, 1.442695
        %v2961 = vpow.pop %v2960
        %v2962 = vmul.f32 %v2385, 1.442695
        %v2963 = vpow.pop %v2962
        %v2964 = vmul.f32 %v2386, 1.442695
        %v2965 = vpow.pop %v2964
        %v2966 = vmul.f32 %v2387, 1.442695
        %v2967 = vpow.pop %v2966
        %v2968 = vmul.f32 %v2388, 1.442695
        %v2969 = vpow.pop %v2968
        %v2970 = vmul.f32 %v2389, 1.442695
        %v2971 = vpow.pop %v2970
        %v2972 = vmul.f32 %v2390, 1.442695
        %v2973 = vpow.pop %v2972
        %v2974 = vmul.f32 %v2391, 1.442695
        %v2975 = vpow.pop %v2974
        %v2976 = vmul.f32 %v2392, 1.442695
        %v2977 = vpow.pop %v2976
        %v2978 = vmul.f32 %v2393, 1.442695
        %v2979 = vpow.pop %v2978
        %v2980 = vmul.f32 %v2394, 1.442695
        %v2981 = vpow.pop %v2980
        %v2982 = vmul.f32 %v2395, 1.442695
        %v2983 = vpow.pop %v2982
        %v2984 = vmul.f32 %v2396, 1.442695
        %v2985 = vpow.pop %v2984
        %v2986 = vmul.f32 %v2397, 1.442695
        %v2987 = vpow.pop %v2986
        %v2988 = vmul.f32 %v2398, 1.442695
        %v2989 = vpow.pop %v2988
        %v2990 = vmul.f32 %v2399, 1.442695
        %v2991 = vpow.pop %v2990
        %v2992 = vmul.f32 %v2400, 1.442695
        %v2993 = vpow.pop %v2992
        %v2994 = vmul.f32 %v2401, 1.442695
        %v2995 = vpow.pop %v2994
        %v2996 = vmul.f32 %v2402, 1.442695
        %v2997 = vpow.pop %v2996
        %v2998 = vmul.f32 %v2403, 1.442695
        %v2999 = vpow.pop %v2998
        %v3000 = vmul.f32 %v2404, 1.442695
        %v3001 = vpow.pop %v3000
        %v3002 = vmul.f32 %v2405, 1.442695
        %v3003 = vpow.pop %v3002
        %v3004 = vmul.f32 %v2406, 1.442695
        %v3005 = vpow.pop %v3004
        %v3006 = vmul.f32 %v2407, 1.442695
        %v3007 = vpow.pop %v3006
        %v3008 = vmul.f32 %v2408, 1.442695
        %v3009 = vpow.pop %v3008
        %v3010 = vmul.f32 %v2409, 1.442695
        %v3011 = vpow.pop %v3010
        %v3012 = vmul.f32 %v2410, 1.442695
        %v3013 = vpow.pop %v3012
        %v3014 = vmul.f32 %v2411, 1.442695
        %v3015 = vpow.pop %v3014
        %v3016 = vmul.f32 %v2412, 1.442695
        %v3017 = vpow.pop %v3016
        %v3018 = vmul.f32 %v2413, 1.442695
        %v3019 = vpow.pop %v3018
        %v3020 = vmul.f32 %v2414, 1.442695
        %v3021 = vpow.pop %v3020
        %v3022 = vmul.f32 %v2415, 1.442695
        %v3023 = vpow.pop %v3022
        %v3024 = vmul.f32 %v2416, 1.442695
        %v3025 = vpow.pop %v3024
        %v3026 = vmul.f32 %v2417, 1.442695
        %v3027 = vpow.pop %v3026
        %v3028 = vmul.f32 %v2418, 1.442695
        %v3029 = vpow.pop %v3028
        %v3030 = vmul.f32 %v2419, 1.442695
        %v3031 = vpow.pop %v3030
        %v3032 = vmul.f32 %v2420, 1.442695
        %v3033 = vpow.pop %v3032
        %v3034 = vmul.f32 %v2421, 1.442695
        %v3035 = vpow.pop %v3034
        %v3036 = vmul.f32 %v2422, 1.442695
        %v3037 = vpow.pop %v3036
        %v3038 = vmul.f32 %v2423, 1.442695
        %v3039 = vpow.pop %v3038
        %v3040 = vmul.f32 %v2424, 1.442695
        %v3041 = vpow.pop %v3040
        %v3042 = vmul.f32 %v2425, 1.442695
        %v3043 = vpow.pop %v3042
        %v3044 = vmul.f32 %v2426, 1.442695
        %v3045 = vpow.pop %v3044
        %v3046 = vmul.f32 %v2427, 1.442695
        %v3047 = vpow.pop %v3046
        %v3048 = vmul.f32 %v2428, 1.442695
        %v3049 = vpow.pop %v3048
        %v3050 = vmul.f32 %v2429, 1.442695
        %v3051 = vpow.pop %v3050
        %v3052 = vmul.f32 %v2430, 1.442695
        %v3053 = vpow.pop %v3052
        %v3054 = vmul.f32 %v2431, 1.442695
        %v3055 = vpow.pop %v3054
        %v3056 = vmul.f32 %v2432, 1.442695
        %v3057 = vpow.pop %v3056
        %v3058 = vmul.f32 %v2433, 1.442695
        %v3059 = vpow.pop %v3058
        %v3060 = vmul.f32 %v2434, 1.442695
        %v3061 = vpow.pop %v3060
        %v3062 = vmul.f32 %v2435, 1.442695
        %v3063 = vpow.pop %v3062
        %v3064 = vmul.f32 %v2436, 1.442695
        %v3065 = vpow.pop %v3064
        %v3066 = vmul.f32 %v2437, 1.442695
        %v3067 = vpow.pop %v3066
        %v3068 = vmul.f32 %v2438, 1.442695
        %v3069 = vpow.pop %v3068
        %v3070 = vmul.f32 %v2439, 1.442695
        %v3071 = vpow.pop %v3070
        %v3072 = vmul.f32 %v2440, 1.442695
        %v3073 = vpow.pop %v3072
        %v3074 = vmul.f32 %v2441, 1.442695
        %v3075 = vpow.pop %v3074
        %v3076 = vmul.f32 %v2442, 1.442695
        %v3077 = vpow.pop %v3076
        %v3078 = vmul.f32 %v2443, 1.442695
        %v3079 = vpow.pop %v3078
        %v3080 = vmul.f32 %v2444, 1.442695
        %v3081 = vpow.pop %v3080
        %v3082 = vmul.f32 %v2445, 1.442695
        %v3083 = vpow.pop %v3082
        %v3084 = vmul.f32 %v2446, 1.442695
        %v3085 = vpow.pop %v3084
        %v3086 = vmul.f32 %v2447, 1.442695
        %v3087 = vpow.pop %v3086
        %v3088 = vadd.f32 %v2449, 1.0
        %v3089 = vadd.f32 %v2451, 1.0
        %v3090 = vadd.f32 %v2453, 1.0
        %v3091 = vadd.f32 %v2455, 1.0
        %v3092 = vadd.f32 %v2457, 1.0
        %v3093 = vadd.f32 %v2459, 1.0
        %v3094 = vadd.f32 %v2461, 1.0
        %v3095 = vadd.f32 %v2463, 1.0
        %v3096 = vadd.f32 %v2465, 1.0
        %v3097 = vadd.f32 %v2467, 1.0
        %v3098 = vadd.f32 %v2469, 1.0
        %v3099 = vadd.f32 %v2471, 1.0
        %v3100 = vadd.f32 %v2473, 1.0
        %v3101 = vadd.f32 %v2475, 1.0
        %v3102 = vadd.f32 %v2477, 1.0
        %v3103 = vadd.f32 %v2479, 1.0
        %v3104 = vadd.f32 %v2481, 1.0
        %v3105 = vadd.f32 %v2483, 1.0
        %v3106 = vadd.f32 %v2485, 1.0
        %v3107 = vadd.f32 %v2487, 1.0
        %v3108 = vadd.f32 %v2489, 1.0
        %v3109 = vadd.f32 %v2491, 1.0
        %v3110 = vadd.f32 %v2493, 1.0
        %v3111 = vadd.f32 %v2495, 1.0
        %v3112 = vadd.f32 %v2497, 1.0
        %v3113 = vadd.f32 %v2499, 1.0
        %v3114 = vadd.f32 %v2501, 1.0
        %v3115 = vadd.f32 %v2503, 1.0
        %v3116 = vadd.f32 %v2505, 1.0
        %v3117 = vadd.f32 %v2507, 1.0
        %v3118 = vadd.f32 %v2509, 1.0
        %v3119 = vadd.f32 %v2511, 1.0
        %v3120 = vadd.f32 %v2513, 1.0
        %v3121 = vadd.f32 %v2515, 1.0
        %v3122 = vadd.f32 %v2517, 1.0
        %v3123 = vadd.f32 %v2519, 1.0
        %v3124 = vadd.f32 %v2521, 1.0
        %v3125 = vadd.f32 %v2523, 1.0
        %v3126 = vadd.f32 %v2525, 1.0
        %v3127 = vadd.f32 %v2527, 1.0
        %v3128 = vadd.f32 %v2529, 1.0
        %v3129 = vadd.f32 %v2531, 1.0
        %v3130 = vadd.f32 %v2533, 1.0
        %v3131 = vadd.f32 %v2535, 1.0
        %v3132 = vadd.f32 %v2537, 1.0
        %v3133 = vadd.f32 %v2539, 1.0
        %v3134 = vadd.f32 %v2541, 1.0
        %v3135 = vadd.f32 %v2543, 1.0
        %v3136 = vadd.f32 %v2545, 1.0
        %v3137 = vadd.f32 %v2547, 1.0
        %v3138 = vadd.f32 %v2549, 1.0
        %v3139 = vadd.f32 %v2551, 1.0
        %v3140 = vadd.f32 %v2553, 1.0
        %v3141 = vadd.f32 %v2555, 1.0
        %v3142 = vadd.f32 %v2557, 1.0
        %v3143 = vadd.f32 %v2559, 1.0
        %v3144 = vadd.f32 %v2561, 1.0
        %v3145 = vadd.f32 %v2563, 1.0
        %v3146 = vadd.f32 %v2565, 1.0
        %v3147 = vadd.f32 %v2567, 1.0
        %v3148 = vadd.f32 %v2569, 1.0
        %v3149 = vadd.f32 %v2571, 1.0
        %v3150 = vadd.f32 %v2573, 1.0
        %v3151 = vadd.f32 %v2575, 1.0
        %v3152 = vadd.f32 %v2577, 1.0
        %v3153 = vadd.f32 %v2579, 1.0
        %v3154 = vadd.f32 %v2581, 1.0
        %v3155 = vadd.f32 %v2583, 1.0
        %v3156 = vadd.f32 %v2585, 1.0
        %v3157 = vadd.f32 %v2587, 1.0
        %v3158 = vadd.f32 %v2589, 1.0
        %v3159 = vadd.f32 %v2591, 1.0
        %v3160 = vadd.f32 %v2593, 1.0
        %v3161 = vadd.f32 %v2595, 1.0
        %v3162 = vadd.f32 %v2597, 1.0
        %v3163 = vadd.f32 %v2599, 1.0
        %v3164 = vadd.f32 %v2601, 1.0
        %v3165 = vadd.f32 %v2603, 1.0
        %v3166 = vadd.f32 %v2605, 1.0
        %v3167 = vadd.f32 %v2607, 1.0
        %v3168 = vadd.f32 %v2609, 1.0
        %v3169 = vadd.f32 %v2611, 1.0
        %v3170 = vadd.f32 %v2613, 1.0
        %v3171 = vadd.f32 %v2615, 1.0
        %v3172 = vadd.f32 %v2617, 1.0
        %v3173 = vadd.f32 %v2619, 1.0
        %v3174 = vadd.f32 %v2621, 1.0
        %v3175 = vadd.f32 %v2623, 1.0
        %v3176 = vadd.f32 %v2625, 1.0
        %v3177 = vadd.f32 %v2627, 1.0
        %v3178 = vadd.f32 %v2629, 1.0
        %v3179 = vadd.f32 %v2631, 1.0
        %v3180 = vadd.f32 %v2633, 1.0
        %v3181 = vadd.f32 %v2635, 1.0
        %v3182 = vadd.f32 %v2637, 1.0
        %v3183 = vadd.f32 %v2639, 1.0
        %v3184 = vadd.f32 %v2641, 1.0
        %v3185 = vadd.f32 %v2643, 1.0
        %v3186 = vadd.f32 %v2645, 1.0
        %v3187 = vadd.f32 %v2647, 1.0
        %v3188 = vadd.f32 %v2649, 1.0
        %v3189 = vadd.f32 %v2651, 1.0
        %v3190 = vadd.f32 %v2653, 1.0
        %v3191 = vadd.f32 %v2655, 1.0
        %v3192 = vadd.f32 %v2657, 1.0
        %v3193 = vadd.f32 %v2659, 1.0
        %v3194 = vadd.f32 %v2661, 1.0
        %v3195 = vadd.f32 %v2663, 1.0
        %v3196 = vadd.f32 %v2665, 1.0
        %v3197 = vadd.f32 %v2667, 1.0
        %v3198 = vadd.f32 %v2669, 1.0
        %v3199 = vadd.f32 %v2671, 1.0
        %v3200 = vadd.f32 %v2673, 1.0
        %v3201 = vadd.f32 %v2675, 1.0
        %v3202 = vadd.f32 %v2677, 1.0
        %v3203 = vadd.f32 %v2679, 1.0
        %v3204 = vadd.f32 %v2681, 1.0
        %v3205 = vadd.f32 %v2683, 1.0
        %v3206 = vadd.f32 %v2685, 1.0
        %v3207 = vadd.f32 %v2687, 1.0
        %v3208 = vadd.f32 %v2689, 1.0
        %v3209 = vadd.f32 %v2691, 1.0
        %v3210 = vadd.f32 %v2693, 1.0
        %v3211 = vadd.f32 %v2695, 1.0
        %v3212 = vadd.f32 %v2697, 1.0
        %v3213 = vadd.f32 %v2699, 1.0
        %v3214 = vadd.f32 %v2701, 1.0
        %v3215 = vadd.f32 %v2703, 1.0
        %v3216 = vadd.f32 %v2705, 1.0
        %v3217 = vadd.f32 %v2707, 1.0
        %v3218 = vadd.f32 %v2709, 1.0
        %v3219 = vadd.f32 %v2711, 1.0
        %v3220 = vadd.f32 %v2713, 1.0
        %v3221 = vadd.f32 %v2715, 1.0
        %v3222 = vadd.f32 %v2717, 1.0
        %v3223 = vadd.f32 %v2719, 1.0
        %v3224 = vadd.f32 %v2721, 1.0
        %v3225 = vadd.f32 %v2723, 1.0
        %v3226 = vadd.f32 %v2725, 1.0
        %v3227 = vadd.f32 %v2727, 1.0
        %v3228 = vadd.f32 %v2729, 1.0
        %v3229 = vadd.f32 %v2731, 1.0
        %v3230 = vadd.f32 %v2733, 1.0
        %v3231 = vadd.f32 %v2735, 1.0
        %v3232 = vadd.f32 %v2737, 1.0
        %v3233 = vadd.f32 %v2739, 1.0
        %v3234 = vadd.f32 %v2741, 1.0
        %v3235 = vadd.f32 %v2743, 1.0
        %v3236 = vadd.f32 %v2745, 1.0
        %v3237 = vadd.f32 %v2747, 1.0
        %v3238 = vadd.f32 %v2749, 1.0
        %v3239 = vadd.f32 %v2751, 1.0
        %v3240 = vadd.f32 %v2753, 1.0
        %v3241 = vadd.f32 %v2755, 1.0
        %v3242 = vadd.f32 %v2757, 1.0
        %v3243 = vadd.f32 %v2759, 1.0
        %v3244 = vadd.f32 %v2761, 1.0
        %v3245 = vadd.f32 %v2763, 1.0
        %v3246 = vadd.f32 %v2765, 1.0
        %v3247 = vadd.f32 %v2767, 1.0
        %v3248 = vadd.f32 %v2769, 1.0
        %v3249 = vadd.f32 %v2771, 1.0
        %v3250 = vadd.f32 %v2773, 1.0
        %v3251 = vadd.f32 %v2775, 1.0
        %v3252 = vadd.f32 %v2777, 1.0
        %v3253 = vadd.f32 %v2779, 1.0
        %v3254 = vadd.f32 %v2781, 1.0
        %v3255 = vadd.f32 %v2783, 1.0
        %v3256 = vadd.f32 %v2785, 1.0
        %v3257 = vadd.f32 %v2787, 1.0
        %v3258 = vadd.f32 %v2789, 1.0
        %v3259 = vadd.f32 %v2791, 1.0
        %v3260 = vadd.f32 %v2793, 1.0
        %v3261 = vadd.f32 %v2795, 1.0
        %v3262 = vadd.f32 %v2797, 1.0
        %v3263 = vadd.f32 %v2799, 1.0
        %v3264 = vadd.f32 %v2801, 1.0
        %v3265 = vadd.f32 %v2803, 1.0
        %v3266 = vadd.f32 %v2805, 1.0
        %v3267 = vadd.f32 %v2807, 1.0
        %v3268 = vadd.f32 %v2809, 1.0
        %v3269 = vadd.f32 %v2811, 1.0
        %v3270 = vadd.f32 %v2813, 1.0
        %v3271 = vadd.f32 %v2815, 1.0
        %v3272 = vadd.f32 %v2817, 1.0
        %v3273 = vadd.f32 %v2819, 1.0
        %v3274 = vadd.f32 %v2821, 1.0
        %v3275 = vadd.f32 %v2823, 1.0
        %v3276 = vadd.f32 %v2825, 1.0
        %v3277 = vadd.f32 %v2827, 1.0
        %v3278 = vadd.f32 %v2829, 1.0
        %v3279 = vadd.f32 %v2831, 1.0
        %v3280 = vadd.f32 %v2833, 1.0
        %v3281 = vadd.f32 %v2835, 1.0
        %v3282 = vadd.f32 %v2837, 1.0
        %v3283 = vadd.f32 %v2839, 1.0
        %v3284 = vadd.f32 %v2841, 1.0
        %v3285 = vadd.f32 %v2843, 1.0
        %v3286 = vadd.f32 %v2845, 1.0
        %v3287 = vadd.f32 %v2847, 1.0
        %v3288 = vadd.f32 %v2849, 1.0
        %v3289 = vadd.f32 %v2851, 1.0
        %v3290 = vadd.f32 %v2853, 1.0
        %v3291 = vadd.f32 %v2855, 1.0
        %v3292 = vadd.f32 %v2857, 1.0
        %v3293 = vadd.f32 %v2859, 1.0
        %v3294 = vadd.f32 %v2861, 1.0
        %v3295 = vadd.f32 %v2863, 1.0
        %v3296 = vadd.f32 %v2865, 1.0
        %v3297 = vadd.f32 %v2867, 1.0
        %v3298 = vadd.f32 %v2869, 1.0
        %v3299 = vadd.f32 %v2871, 1.0
        %v3300 = vadd.f32 %v2873, 1.0
        %v3301 = vadd.f32 %v2875, 1.0
        %v3302 = vadd.f32 %v2877, 1.0
        %v3303 = vadd.f32 %v2879, 1.0
        %v3304 = vadd.f32 %v2881, 1.0
        %v3305 = vadd.f32 %v2883, 1.0
        %v3306 = vadd.f32 %v2885, 1.0
        %v3307 = vadd.f32 %v2887, 1.0
        %v3308 = vadd.f32 %v2889, 1.0
        %v3309 = vadd.f32 %v2891, 1.0
        %v3310 = vadd.f32 %v2893, 1.0
        %v3311 = vadd.f32 %v2895, 1.0
        %v3312 = vadd.f32 %v2897, 1.0
        %v3313 = vadd.f32 %v2899, 1.0
        %v3314 = vadd.f32 %v2901, 1.0
        %v3315 = vadd.f32 %v2903, 1.0
        %v3316 = vadd.f32 %v2905, 1.0
        %v3317 = vadd.f32 %v2907, 1.0
        %v3318 = vadd.f32 %v2909, 1.0
        %v3319 = vadd.f32 %v2911, 1.0
        %v3320 = vadd.f32 %v2913, 1.0
        %v3321 = vadd.f32 %v2915, 1.0
        %v3322 = vadd.f32 %v2917, 1.0
        %v3323 = vadd.f32 %v2919, 1.0
        %v3324 = vadd.f32 %v2921, 1.0
        %v3325 = vadd.f32 %v2923, 1.0
        %v3326 = vadd.f32 %v2925, 1.0
        %v3327 = vadd.f32 %v2927, 1.0
        %v3328 = vadd.f32 %v2929, 1.0
        %v3329 = vadd.f32 %v2931, 1.0
        %v3330 = vadd.f32 %v2933, 1.0
        %v3331 = vadd.f32 %v2935, 1.0
        %v3332 = vadd.f32 %v2937, 1.0
        %v3333 = vadd.f32 %v2939, 1.0
        %v3334 = vadd.f32 %v2941, 1.0
        %v3335 = vadd.f32 %v2943, 1.0
        %v3336 = vadd.f32 %v2945, 1.0
        %v3337 = vadd.f32 %v2947, 1.0
        %v3338 = vadd.f32 %v2949, 1.0
        %v3339 = vadd.f32 %v2951, 1.0
        %v3340 = vadd.f32 %v2953, 1.0
        %v3341 = vadd.f32 %v2955, 1.0
        %v3342 = vadd.f32 %v2957, 1.0
        %v3343 = vadd.f32 %v2959, 1.0
        %v3344 = vadd.f32 %v2961, 1.0
        %v3345 = vadd.f32 %v2963, 1.0
        %v3346 = vadd.f32 %v2965, 1.0
        %v3347 = vadd.f32 %v2967, 1.0
        %v3348 = vadd.f32 %v2969, 1.0
        %v3349 = vadd.f32 %v2971, 1.0
        %v3350 = vadd.f32 %v2973, 1.0
        %v3351 = vadd.f32 %v2975, 1.0
        %v3352 = vadd.f32 %v2977, 1.0
        %v3353 = vadd.f32 %v2979, 1.0
        %v3354 = vadd.f32 %v2981, 1.0
        %v3355 = vadd.f32 %v2983, 1.0
        %v3356 = vadd.f32 %v2985, 1.0
        %v3357 = vadd.f32 %v2987, 1.0
        %v3358 = vadd.f32 %v2989, 1.0
        %v3359 = vadd.f32 %v2991, 1.0
        %v3360 = vadd.f32 %v2993, 1.0
        %v3361 = vadd.f32 %v2995, 1.0
        %v3362 = vadd.f32 %v2997, 1.0
        %v3363 = vadd.f32 %v2999, 1.0
        %v3364 = vadd.f32 %v3001, 1.0
        %v3365 = vadd.f32 %v3003, 1.0
        %v3366 = vadd.f32 %v3005, 1.0
        %v3367 = vadd.f32 %v3007, 1.0
        %v3368 = vadd.f32 %v3009, 1.0
        %v3369 = vadd.f32 %v3011, 1.0
        %v3370 = vadd.f32 %v3013, 1.0
        %v3371 = vadd.f32 %v3015, 1.0
        %v3372 = vadd.f32 %v3017, 1.0
        %v3373 = vadd.f32 %v3019, 1.0
        %v3374 = vadd.f32 %v3021, 1.0
        %v3375 = vadd.f32 %v3023, 1.0
        %v3376 = vadd.f32 %v3025, 1.0
        %v3377 = vadd.f32 %v3027, 1.0
        %v3378 = vadd.f32 %v3029, 1.0
        %v3379 = vadd.f32 %v3031, 1.0
        %v3380 = vadd.f32 %v3033, 1.0
        %v3381 = vadd.f32 %v3035, 1.0
        %v3382 = vadd.f32 %v3037, 1.0
        %v3383 = vadd.f32 %v3039, 1.0
        %v3384 = vadd.f32 %v3041, 1.0
        %v3385 = vadd.f32 %v3043, 1.0
        %v3386 = vadd.f32 %v3045, 1.0
        %v3387 = vadd.f32 %v3047, 1.0
        %v3388 = vadd.f32 %v3049, 1.0
        %v3389 = vadd.f32 %v3051, 1.0
        %v3390 = vadd.f32 %v3053, 1.0
        %v3391 = vadd.f32 %v3055, 1.0
        %v3392 = vadd.f32 %v3057, 1.0
        %v3393 = vadd.f32 %v3059, 1.0
        %v3394 = vadd.f32 %v3061, 1.0
        %v3395 = vadd.f32 %v3063, 1.0
        %v3396 = vadd.f32 %v3065, 1.0
        %v3397 = vadd.f32 %v3067, 1.0
        %v3398 = vadd.f32 %v3069, 1.0
        %v3399 = vadd.f32 %v3071, 1.0
        %v3400 = vadd.f32 %v3073, 1.0
        %v3401 = vadd.f32 %v3075, 1.0
        %v3402 = vadd.f32 %v3077, 1.0
        %v3403 = vadd.f32 %v3079, 1.0
        %v3404 = vadd.f32 %v3081, 1.0
        %v3405 = vadd.f32 %v3083, 1.0
        %v3406 = vadd.f32 %v3085, 1.0
        %v3407 = vadd.f32 %v3087, 1.0
        %v3408 = vrcp.pop %v3088
        %v3409 = vmul.f32 1.0, %v3408
        %v3410 = vrcp.pop %v3089
        %v3411 = vmul.f32 1.0, %v3410
        %v3412 = vrcp.pop %v3090
        %v3413 = vmul.f32 1.0, %v3412
        %v3414 = vrcp.pop %v3091
        %v3415 = vmul.f32 1.0, %v3414
        %v3416 = vrcp.pop %v3092
        %v3417 = vmul.f32 1.0, %v3416
        %v3418 = vrcp.pop %v3093
        %v3419 = vmul.f32 1.0, %v3418
        %v3420 = vrcp.pop %v3094
        %v3421 = vmul.f32 1.0, %v3420
        %v3422 = vrcp.pop %v3095
        %v3423 = vmul.f32 1.0, %v3422
        %v3424 = vrcp.pop %v3096
        %v3425 = vmul.f32 1.0, %v3424
        %v3426 = vrcp.pop %v3097
        %v3427 = vmul.f32 1.0, %v3426
        %v3428 = vrcp.pop %v3098
        %v3429 = vmul.f32 1.0, %v3428
        %v3430 = vrcp.pop %v3099
        %v3431 = vmul.f32 1.0, %v3430
        %v3432 = vrcp.pop %v3100
        %v3433 = vmul.f32 1.0, %v3432
        %v3434 = vrcp.pop %v3101
        %v3435 = vmul.f32 1.0, %v3434
        %v3436 = vrcp.pop %v3102
        %v3437 = vmul.f32 1.0, %v3436
        %v3438 = vrcp.pop %v3103
        %v3439 = vmul.f32 1.0, %v3438
        %v3440 = vrcp.pop %v3104
        %v3441 = vmul.f32 1.0, %v3440
        %v3442 = vrcp.pop %v3105
        %v3443 = vmul.f32 1.0, %v3442
        %v3444 = vrcp.pop %v3106
        %v3445 = vmul.f32 1.0, %v3444
        %v3446 = vrcp.pop %v3107
        %v3447 = vmul.f32 1.0, %v3446
        %v3448 = vrcp.pop %v3108
        %v3449 = vmul.f32 1.0, %v3448
        %v3450 = vrcp.pop %v3109
        %v3451 = vmul.f32 1.0, %v3450
        %v3452 = vrcp.pop %v3110
        %v3453 = vmul.f32 1.0, %v3452
        %v3454 = vrcp.pop %v3111
        %v3455 = vmul.f32 1.0, %v3454
        %v3456 = vrcp.pop %v3112
        %v3457 = vmul.f32 1.0, %v3456
        %v3458 = vrcp.pop %v3113
        %v3459 = vmul.f32 1.0, %v3458
        %v3460 = vrcp.pop %v3114
        %v3461 = vmul.f32 1.0, %v3460
        %v3462 = vrcp.pop %v3115
        %v3463 = vmul.f32 1.0, %v3462
        %v3464 = vrcp.pop %v3116
        %v3465 = vmul.f32 1.0, %v3464
        %v3466 = vrcp.pop %v3117
        %v3467 = vmul.f32 1.0, %v3466
        %v3468 = vrcp.pop %v3118
        %v3469 = vmul.f32 1.0, %v3468
        %v3470 = vrcp.pop %v3119
        %v3471 = vmul.f32 1.0, %v3470
        %v3472 = vrcp.pop %v3120
        %v3473 = vmul.f32 1.0, %v3472
        %v3474 = vrcp.pop %v3121
        %v3475 = vmul.f32 1.0, %v3474
        %v3476 = vrcp.pop %v3122
        %v3477 = vmul.f32 1.0, %v3476
        %v3478 = vrcp.pop %v3123
        %v3479 = vmul.f32 1.0, %v3478
        %v3480 = vrcp.pop %v3124
        %v3481 = vmul.f32 1.0, %v3480
        %v3482 = vrcp.pop %v3125
        %v3483 = vmul.f32 1.0, %v3482
        %v3484 = vrcp.pop %v3126
        %v3485 = vmul.f32 1.0, %v3484
        %v3486 = vrcp.pop %v3127
        %v3487 = vmul.f32 1.0, %v3486
        %v3488 = vrcp.pop %v3128
        %v3489 = vmul.f32 1.0, %v3488
        %v3490 = vrcp.pop %v3129
        %v3491 = vmul.f32 1.0, %v3490
        %v3492 = vrcp.pop %v3130
        %v3493 = vmul.f32 1.0, %v3492
        %v3494 = vrcp.pop %v3131
        %v3495 = vmul.f32 1.0, %v3494
        %v3496 = vrcp.pop %v3132
        %v3497 = vmul.f32 1.0, %v3496
        %v3498 = vrcp.pop %v3133
        %v3499 = vmul.f32 1.0, %v3498
        %v3500 = vrcp.pop %v3134
        %v3501 = vmul.f32 1.0, %v3500
        %v3502 = vrcp.pop %v3135
        %v3503 = vmul.f32 1.0, %v3502
        %v3504 = vrcp.pop %v3136
        %v3505 = vmul.f32 1.0, %v3504
        %v3506 = vrcp.pop %v3137
        %v3507 = vmul.f32 1.0, %v3506
        %v3508 = vrcp.pop %v3138
        %v3509 = vmul.f32 1.0, %v3508
        %v3510 = vrcp.pop %v3139
        %v3511 = vmul.f32 1.0, %v3510
        %v3512 = vrcp.pop %v3140
        %v3513 = vmul.f32 1.0, %v3512
        %v3514 = vrcp.pop %v3141
        %v3515 = vmul.f32 1.0, %v3514
        %v3516 = vrcp.pop %v3142
        %v3517 = vmul.f32 1.0, %v3516
        %v3518 = vrcp.pop %v3143
        %v3519 = vmul.f32 1.0, %v3518
        %v3520 = vrcp.pop %v3144
        %v3521 = vmul.f32 1.0, %v3520
        %v3522 = vrcp.pop %v3145
        %v3523 = vmul.f32 1.0, %v3522
        %v3524 = vrcp.pop %v3146
        %v3525 = vmul.f32 1.0, %v3524
        %v3526 = vrcp.pop %v3147
        %v3527 = vmul.f32 1.0, %v3526
        %v3528 = vrcp.pop %v3148
        %v3529 = vmul.f32 1.0, %v3528
        %v3530 = vrcp.pop %v3149
        %v3531 = vmul.f32 1.0, %v3530
        %v3532 = vrcp.pop %v3150
        %v3533 = vmul.f32 1.0, %v3532
        %v3534 = vrcp.pop %v3151
        %v3535 = vmul.f32 1.0, %v3534
        %v3536 = vrcp.pop %v3152
        %v3537 = vmul.f32 1.0, %v3536
        %v3538 = vrcp.pop %v3153
        %v3539 = vmul.f32 1.0, %v3538
        %v3540 = vrcp.pop %v3154
        %v3541 = vmul.f32 1.0, %v3540
        %v3542 = vrcp.pop %v3155
        %v3543 = vmul.f32 1.0, %v3542
        %v3544 = vrcp.pop %v3156
        %v3545 = vmul.f32 1.0, %v3544
        %v3546 = vrcp.pop %v3157
        %v3547 = vmul.f32 1.0, %v3546
        %v3548 = vrcp.pop %v3158
        %v3549 = vmul.f32 1.0, %v3548
        %v3550 = vrcp.pop %v3159
        %v3551 = vmul.f32 1.0, %v3550
        %v3552 = vrcp.pop %v3160
        %v3553 = vmul.f32 1.0, %v3552
        %v3554 = vrcp.pop %v3161
        %v3555 = vmul.f32 1.0, %v3554
        %v3556 = vrcp.pop %v3162
        %v3557 = vmul.f32 1.0, %v3556
        %v3558 = vrcp.pop %v3163
        %v3559 = vmul.f32 1.0, %v3558
        %v3560 = vrcp.pop %v3164
        %v3561 = vmul.f32 1.0, %v3560
        %v3562 = vrcp.pop %v3165
        %v3563 = vmul.f32 1.0, %v3562
        %v3564 = vrcp.pop %v3166
        %v3565 = vmul.f32 1.0, %v3564
        %v3566 = vrcp.pop %v3167
        %v3567 = vmul.f32 1.0, %v3566
        %v3568 = vrcp.pop %v3168
        %v3569 = vmul.f32 1.0, %v3568
        %v3570 = vrcp.pop %v3169
        %v3571 = vmul.f32 1.0, %v3570
        %v3572 = vrcp.pop %v3170
        %v3573 = vmul.f32 1.0, %v3572
        %v3574 = vrcp.pop %v3171
        %v3575 = vmul.f32 1.0, %v3574
        %v3576 = vrcp.pop %v3172
        %v3577 = vmul.f32 1.0, %v3576
        %v3578 = vrcp.pop %v3173
        %v3579 = vmul.f32 1.0, %v3578
        %v3580 = vrcp.pop %v3174
        %v3581 = vmul.f32 1.0, %v3580
        %v3582 = vrcp.pop %v3175
        %v3583 = vmul.f32 1.0, %v3582
        %v3584 = vrcp.pop %v3176
        %v3585 = vmul.f32 1.0, %v3584
        %v3586 = vrcp.pop %v3177
        %v3587 = vmul.f32 1.0, %v3586
        %v3588 = vrcp.pop %v3178
        %v3589 = vmul.f32 1.0, %v3588
        %v3590 = vrcp.pop %v3179
        %v3591 = vmul.f32 1.0, %v3590
        %v3592 = vrcp.pop %v3180
        %v3593 = vmul.f32 1.0, %v3592
        %v3594 = vrcp.pop %v3181
        %v3595 = vmul.f32 1.0, %v3594
        %v3596 = vrcp.pop %v3182
        %v3597 = vmul.f32 1.0, %v3596
        %v3598 = vrcp.pop %v3183
        %v3599 = vmul.f32 1.0, %v3598
        %v3600 = vrcp.pop %v3184
        %v3601 = vmul.f32 1.0, %v3600
        %v3602 = vrcp.pop %v3185
        %v3603 = vmul.f32 1.0, %v3602
        %v3604 = vrcp.pop %v3186
        %v3605 = vmul.f32 1.0, %v3604
        %v3606 = vrcp.pop %v3187
        %v3607 = vmul.f32 1.0, %v3606
        %v3608 = vrcp.pop %v3188
        %v3609 = vmul.f32 1.0, %v3608
        %v3610 = vrcp.pop %v3189
        %v3611 = vmul.f32 1.0, %v3610
        %v3612 = vrcp.pop %v3190
        %v3613 = vmul.f32 1.0, %v3612
        %v3614 = vrcp.pop %v3191
        %v3615 = vmul.f32 1.0, %v3614
        %v3616 = vrcp.pop %v3192
        %v3617 = vmul.f32 1.0, %v3616
        %v3618 = vrcp.pop %v3193
        %v3619 = vmul.f32 1.0, %v3618
        %v3620 = vrcp.pop %v3194
        %v3621 = vmul.f32 1.0, %v3620
        %v3622 = vrcp.pop %v3195
        %v3623 = vmul.f32 1.0, %v3622
        %v3624 = vrcp.pop %v3196
        %v3625 = vmul.f32 1.0, %v3624
        %v3626 = vrcp.pop %v3197
        %v3627 = vmul.f32 1.0, %v3626
        %v3628 = vrcp.pop %v3198
        %v3629 = vmul.f32 1.0, %v3628
        %v3630 = vrcp.pop %v3199
        %v3631 = vmul.f32 1.0, %v3630
        %v3632 = vrcp.pop %v3200
        %v3633 = vmul.f32 1.0, %v3632
        %v3634 = vrcp.pop %v3201
        %v3635 = vmul.f32 1.0, %v3634
        %v3636 = vrcp.pop %v3202
        %v3637 = vmul.f32 1.0, %v3636
        %v3638 = vrcp.pop %v3203
        %v3639 = vmul.f32 1.0, %v3638
        %v3640 = vrcp.pop %v3204
        %v3641 = vmul.f32 1.0, %v3640
        %v3642 = vrcp.pop %v3205
        %v3643 = vmul.f32 1.0, %v3642
        %v3644 = vrcp.pop %v3206
        %v3645 = vmul.f32 1.0, %v3644
        %v3646 = vrcp.pop %v3207
        %v3647 = vmul.f32 1.0, %v3646
        %v3648 = vrcp.pop %v3208
        %v3649 = vmul.f32 1.0, %v3648
        %v3650 = vrcp.pop %v3209
        %v3651 = vmul.f32 1.0, %v3650
        %v3652 = vrcp.pop %v3210
        %v3653 = vmul.f32 1.0, %v3652
        %v3654 = vrcp.pop %v3211
        %v3655 = vmul.f32 1.0, %v3654
        %v3656 = vrcp.pop %v3212
        %v3657 = vmul.f32 1.0, %v3656
        %v3658 = vrcp.pop %v3213
        %v3659 = vmul.f32 1.0, %v3658
        %v3660 = vrcp.pop %v3214
        %v3661 = vmul.f32 1.0, %v3660
        %v3662 = vrcp.pop %v3215
        %v3663 = vmul.f32 1.0, %v3662
        %v3664 = vrcp.pop %v3216
        %v3665 = vmul.f32 1.0, %v3664
        %v3666 = vrcp.pop %v3217
        %v3667 = vmul.f32 1.0, %v3666
        %v3668 = vrcp.pop %v3218
        %v3669 = vmul.f32 1.0, %v3668
        %v3670 = vrcp.pop %v3219
        %v3671 = vmul.f32 1.0, %v3670
        %v3672 = vrcp.pop %v3220
        %v3673 = vmul.f32 1.0, %v3672
        %v3674 = vrcp.pop %v3221
        %v3675 = vmul.f32 1.0, %v3674
        %v3676 = vrcp.pop %v3222
        %v3677 = vmul.f32 1.0, %v3676
        %v3678 = vrcp.pop %v3223
        %v3679 = vmul.f32 1.0, %v3678
        %v3680 = vrcp.pop %v3224
        %v3681 = vmul.f32 1.0, %v3680
        %v3682 = vrcp.pop %v3225
        %v3683 = vmul.f32 1.0, %v3682
        %v3684 = vrcp.pop %v3226
        %v3685 = vmul.f32 1.0, %v3684
        %v3686 = vrcp.pop %v3227
        %v3687 = vmul.f32 1.0, %v3686
        %v3688 = vrcp.pop %v3228
        %v3689 = vmul.f32 1.0, %v3688
        %v3690 = vrcp.pop %v3229
        %v3691 = vmul.f32 1.0, %v3690
        %v3692 = vrcp.pop %v3230
        %v3693 = vmul.f32 1.0, %v3692
        %v3694 = vrcp.pop %v3231
        %v3695 = vmul.f32 1.0, %v3694
        %v3696 = vrcp.pop %v3232
        %v3697 = vmul.f32 1.0, %v3696
        %v3698 = vrcp.pop %v3233
        %v3699 = vmul.f32 1.0, %v3698
        %v3700 = vrcp.pop %v3234
        %v3701 = vmul.f32 1.0, %v3700
        %v3702 = vrcp.pop %v3235
        %v3703 = vmul.f32 1.0, %v3702
        %v3704 = vrcp.pop %v3236
        %v3705 = vmul.f32 1.0, %v3704
        %v3706 = vrcp.pop %v3237
        %v3707 = vmul.f32 1.0, %v3706
        %v3708 = vrcp.pop %v3238
        %v3709 = vmul.f32 1.0, %v3708
        %v3710 = vrcp.pop %v3239
        %v3711 = vmul.f32 1.0, %v3710
        %v3712 = vrcp.pop %v3240
        %v3713 = vmul.f32 1.0, %v3712
        %v3714 = vrcp.pop %v3241
        %v3715 = vmul.f32 1.0, %v3714
        %v3716 = vrcp.pop %v3242
        %v3717 = vmul.f32 1.0, %v3716
        %v3718 = vrcp.pop %v3243
        %v3719 = vmul.f32 1.0, %v3718
        %v3720 = vrcp.pop %v3244
        %v3721 = vmul.f32 1.0, %v3720
        %v3722 = vrcp.pop %v3245
        %v3723 = vmul.f32 1.0, %v3722
        %v3724 = vrcp.pop %v3246
        %v3725 = vmul.f32 1.0, %v3724
        %v3726 = vrcp.pop %v3247
        %v3727 = vmul.f32 1.0, %v3726
        %v3728 = vrcp.pop %v3248
        %v3729 = vmul.f32 1.0, %v3728
        %v3730 = vrcp.pop %v3249
        %v3731 = vmul.f32 1.0, %v3730
        %v3732 = vrcp.pop %v3250
        %v3733 = vmul.f32 1.0, %v3732
        %v3734 = vrcp.pop %v3251
        %v3735 = vmul.f32 1.0, %v3734
        %v3736 = vrcp.pop %v3252
        %v3737 = vmul.f32 1.0, %v3736
        %v3738 = vrcp.pop %v3253
        %v3739 = vmul.f32 1.0, %v3738
        %v3740 = vrcp.pop %v3254
        %v3741 = vmul.f32 1.0, %v3740
        %v3742 = vrcp.pop %v3255
        %v3743 = vmul.f32 1.0, %v3742
        %v3744 = vrcp.pop %v3256
        %v3745 = vmul.f32 1.0, %v3744
        %v3746 = vrcp.pop %v3257
        %v3747 = vmul.f32 1.0, %v3746
        %v3748 = vrcp.pop %v3258
        %v3749 = vmul.f32 1.0, %v3748
        %v3750 = vrcp.pop %v3259
        %v3751 = vmul.f32 1.0, %v3750
        %v3752 = vrcp.pop %v3260
        %v3753 = vmul.f32 1.0, %v3752
        %v3754 = vrcp.pop %v3261
        %v3755 = vmul.f32 1.0, %v3754
        %v3756 = vrcp.pop %v3262
        %v3757 = vmul.f32 1.0, %v3756
        %v3758 = vrcp.pop %v3263
        %v3759 = vmul.f32 1.0, %v3758
        %v3760 = vrcp.pop %v3264
        %v3761 = vmul.f32 1.0, %v3760
        %v3762 = vrcp.pop %v3265
        %v3763 = vmul.f32 1.0, %v3762
        %v3764 = vrcp.pop %v3266
        %v3765 = vmul.f32 1.0, %v3764
        %v3766 = vrcp.pop %v3267
        %v3767 = vmul.f32 1.0, %v3766
        %v3768 = vrcp.pop %v3268
        %v3769 = vmul.f32 1.0, %v3768
        %v3770 = vrcp.pop %v3269
        %v3771 = vmul.f32 1.0, %v3770
        %v3772 = vrcp.pop %v3270
        %v3773 = vmul.f32 1.0, %v3772
        %v3774 = vrcp.pop %v3271
        %v3775 = vmul.f32 1.0, %v3774
        %v3776 = vrcp.pop %v3272
        %v3777 = vmul.f32 1.0, %v3776
        %v3778 = vrcp.pop %v3273
        %v3779 = vmul.f32 1.0, %v3778
        %v3780 = vrcp.pop %v3274
        %v3781 = vmul.f32 1.0, %v3780
        %v3782 = vrcp.pop %v3275
        %v3783 = vmul.f32 1.0, %v3782
        %v3784 = vrcp.pop %v3276
        %v3785 = vmul.f32 1.0, %v3784
        %v3786 = vrcp.pop %v3277
        %v3787 = vmul.f32 1.0, %v3786
        %v3788 = vrcp.pop %v3278
        %v3789 = vmul.f32 1.0, %v3788
        %v3790 = vrcp.pop %v3279
        %v3791 = vmul.f32 1.0, %v3790
        %v3792 = vrcp.pop %v3280
        %v3793 = vmul.f32 1.0, %v3792
        %v3794 = vrcp.pop %v3281
        %v3795 = vmul.f32 1.0, %v3794
        %v3796 = vrcp.pop %v3282
        %v3797 = vmul.f32 1.0, %v3796
        %v3798 = vrcp.pop %v3283
        %v3799 = vmul.f32 1.0, %v3798
        %v3800 = vrcp.pop %v3284
        %v3801 = vmul.f32 1.0, %v3800
        %v3802 = vrcp.pop %v3285
        %v3803 = vmul.f32 1.0, %v3802
        %v3804 = vrcp.pop %v3286
        %v3805 = vmul.f32 1.0, %v3804
        %v3806 = vrcp.pop %v3287
        %v3807 = vmul.f32 1.0, %v3806
        %v3808 = vrcp.pop %v3288
        %v3809 = vmul.f32 1.0, %v3808
        %v3810 = vrcp.pop %v3289
        %v3811 = vmul.f32 1.0, %v3810
        %v3812 = vrcp.pop %v3290
        %v3813 = vmul.f32 1.0, %v3812
        %v3814 = vrcp.pop %v3291
        %v3815 = vmul.f32 1.0, %v3814
        %v3816 = vrcp.pop %v3292
        %v3817 = vmul.f32 1.0, %v3816
        %v3818 = vrcp.pop %v3293
        %v3819 = vmul.f32 1.0, %v3818
        %v3820 = vrcp.pop %v3294
        %v3821 = vmul.f32 1.0, %v3820
        %v3822 = vrcp.pop %v3295
        %v3823 = vmul.f32 1.0, %v3822
        %v3824 = vrcp.pop %v3296
        %v3825 = vmul.f32 1.0, %v3824
        %v3826 = vrcp.pop %v3297
        %v3827 = vmul.f32 1.0, %v3826
        %v3828 = vrcp.pop %v3298
        %v3829 = vmul.f32 1.0, %v3828
        %v3830 = vrcp.pop %v3299
        %v3831 = vmul.f32 1.0, %v3830
        %v3832 = vrcp.pop %v3300
        %v3833 = vmul.f32 1.0, %v3832
        %v3834 = vrcp.pop %v3301
        %v3835 = vmul.f32 1.0, %v3834
        %v3836 = vrcp.pop %v3302
        %v3837 = vmul.f32 1.0, %v3836
        %v3838 = vrcp.pop %v3303
        %v3839 = vmul.f32 1.0, %v3838
        %v3840 = vrcp.pop %v3304
        %v3841 = vmul.f32 1.0, %v3840
        %v3842 = vrcp.pop %v3305
        %v3843 = vmul.f32 1.0, %v3842
        %v3844 = vrcp.pop %v3306
        %v3845 = vmul.f32 1.0, %v3844
        %v3846 = vrcp.pop %v3307
        %v3847 = vmul.f32 1.0, %v3846
        %v3848 = vrcp.pop %v3308
        %v3849 = vmul.f32 1.0, %v3848
        %v3850 = vrcp.pop %v3309
        %v3851 = vmul.f32 1.0, %v3850
        %v3852 = vrcp.pop %v3310
        %v3853 = vmul.f32 1.0, %v3852
        %v3854 = vrcp.pop %v3311
        %v3855 = vmul.f32 1.0, %v3854
        %v3856 = vrcp.pop %v3312
        %v3857 = vmul.f32 1.0, %v3856
        %v3858 = vrcp.pop %v3313
        %v3859 = vmul.f32 1.0, %v3858
        %v3860 = vrcp.pop %v3314
        %v3861 = vmul.f32 1.0, %v3860
        %v3862 = vrcp.pop %v3315
        %v3863 = vmul.f32 1.0, %v3862
        %v3864 = vrcp.pop %v3316
        %v3865 = vmul.f32 1.0, %v3864
        %v3866 = vrcp.pop %v3317
        %v3867 = vmul.f32 1.0, %v3866
        %v3868 = vrcp.pop %v3318
        %v3869 = vmul.f32 1.0, %v3868
        %v3870 = vrcp.pop %v3319
        %v3871 = vmul.f32 1.0, %v3870
        %v3872 = vrcp.pop %v3320
        %v3873 = vmul.f32 1.0, %v3872
        %v3874 = vrcp.pop %v3321
        %v3875 = vmul.f32 1.0, %v3874
        %v3876 = vrcp.pop %v3322
        %v3877 = vmul.f32 1.0, %v3876
        %v3878 = vrcp.pop %v3323
        %v3879 = vmul.f32 1.0, %v3878
        %v3880 = vrcp.pop %v3324
        %v3881 = vmul.f32 1.0, %v3880
        %v3882 = vrcp.pop %v3325
        %v3883 = vmul.f32 1.0, %v3882
        %v3884 = vrcp.pop %v3326
        %v3885 = vmul.f32 1.0, %v3884
        %v3886 = vrcp.pop %v3327
        %v3887 = vmul.f32 1.0, %v3886
        %v3888 = vrcp.pop %v3328
        %v3889 = vmul.f32 1.0, %v3888
        %v3890 = vrcp.pop %v3329
        %v3891 = vmul.f32 1.0, %v3890
        %v3892 = vrcp.pop %v3330
        %v3893 = vmul.f32 1.0, %v3892
        %v3894 = vrcp.pop %v3331
        %v3895 = vmul.f32 1.0, %v3894
        %v3896 = vrcp.pop %v3332
        %v3897 = vmul.f32 1.0, %v3896
        %v3898 = vrcp.pop %v3333
        %v3899 = vmul.f32 1.0, %v3898
        %v3900 = vrcp.pop %v3334
        %v3901 = vmul.f32 1.0, %v3900
        %v3902 = vrcp.pop %v3335
        %v3903 = vmul.f32 1.0, %v3902
        %v3904 = vrcp.pop %v3336
        %v3905 = vmul.f32 1.0, %v3904
        %v3906 = vrcp.pop %v3337
        %v3907 = vmul.f32 1.0, %v3906
        %v3908 = vrcp.pop %v3338
        %v3909 = vmul.f32 1.0, %v3908
        %v3910 = vrcp.pop %v3339
        %v3911 = vmul.f32 1.0, %v3910
        %v3912 = vrcp.pop %v3340
        %v3913 = vmul.f32 1.0, %v3912
        %v3914 = vrcp.pop %v3341
        %v3915 = vmul.f32 1.0, %v3914
        %v3916 = vrcp.pop %v3342
        %v3917 = vmul.f32 1.0, %v3916
        %v3918 = vrcp.pop %v3343
        %v3919 = vmul.f32 1.0, %v3918
        %v3920 = vrcp.pop %v3344
        %v3921 = vmul.f32 1.0, %v3920
        %v3922 = vrcp.pop %v3345
        %v3923 = vmul.f32 1.0, %v3922
        %v3924 = vrcp.pop %v3346
        %v3925 = vmul.f32 1.0, %v3924
        %v3926 = vrcp.pop %v3347
        %v3927 = vmul.f32 1.0, %v3926
        %v3928 = vrcp.pop %v3348
        %v3929 = vmul.f32 1.0, %v3928
        %v3930 = vrcp.pop %v3349
        %v3931 = vmul.f32 1.0, %v3930
        %v3932 = vrcp.pop %v3350
        %v3933 = vmul.f32 1.0, %v3932
        %v3934 = vrcp.pop %v3351
        %v3935 = vmul.f32 1.0, %v3934
        %v3936 = vrcp.pop %v3352
        %v3937 = vmul.f32 1.0, %v3936
        %v3938 = vrcp.pop %v3353
        %v3939 = vmul.f32 1.0, %v3938
        %v3940 = vrcp.pop %v3354
        %v3941 = vmul.f32 1.0, %v3940
        %v3942 = vrcp.pop %v3355
        %v3943 = vmul.f32 1.0, %v3942
        %v3944 = vrcp.pop %v3356
        %v3945 = vmul.f32 1.0, %v3944
        %v3946 = vrcp.pop %v3357
        %v3947 = vmul.f32 1.0, %v3946
        %v3948 = vrcp.pop %v3358
        %v3949 = vmul.f32 1.0, %v3948
        %v3950 = vrcp.pop %v3359
        %v3951 = vmul.f32 1.0, %v3950
        %v3952 = vrcp.pop %v3360
        %v3953 = vmul.f32 1.0, %v3952
        %v3954 = vrcp.pop %v3361
        %v3955 = vmul.f32 1.0, %v3954
        %v3956 = vrcp.pop %v3362
        %v3957 = vmul.f32 1.0, %v3956
        %v3958 = vrcp.pop %v3363
        %v3959 = vmul.f32 1.0, %v3958
        %v3960 = vrcp.pop %v3364
        %v3961 = vmul.f32 1.0, %v3960
        %v3962 = vrcp.pop %v3365
        %v3963 = vmul.f32 1.0, %v3962
        %v3964 = vrcp.pop %v3366
        %v3965 = vmul.f32 1.0, %v3964
        %v3966 = vrcp.pop %v3367
        %v3967 = vmul.f32 1.0, %v3966
        %v3968 = vrcp.pop %v3368
        %v3969 = vmul.f32 1.0, %v3968
        %v3970 = vrcp.pop %v3369
        %v3971 = vmul.f32 1.0, %v3970
        %v3972 = vrcp.pop %v3370
        %v3973 = vmul.f32 1.0, %v3972
        %v3974 = vrcp.pop %v3371
        %v3975 = vmul.f32 1.0, %v3974
        %v3976 = vrcp.pop %v3372
        %v3977 = vmul.f32 1.0, %v3976
        %v3978 = vrcp.pop %v3373
        %v3979 = vmul.f32 1.0, %v3978
        %v3980 = vrcp.pop %v3374
        %v3981 = vmul.f32 1.0, %v3980
        %v3982 = vrcp.pop %v3375
        %v3983 = vmul.f32 1.0, %v3982
        %v3984 = vrcp.pop %v3376
        %v3985 = vmul.f32 1.0, %v3984
        %v3986 = vrcp.pop %v3377
        %v3987 = vmul.f32 1.0, %v3986
        %v3988 = vrcp.pop %v3378
        %v3989 = vmul.f32 1.0, %v3988
        %v3990 = vrcp.pop %v3379
        %v3991 = vmul.f32 1.0, %v3990
        %v3992 = vrcp.pop %v3380
        %v3993 = vmul.f32 1.0, %v3992
        %v3994 = vrcp.pop %v3381
        %v3995 = vmul.f32 1.0, %v3994
        %v3996 = vrcp.pop %v3382
        %v3997 = vmul.f32 1.0, %v3996
        %v3998 = vrcp.pop %v3383
        %v3999 = vmul.f32 1.0, %v3998
        %v4000 = vrcp.pop %v3384
        %v4001 = vmul.f32 1.0, %v4000
        %v4002 = vrcp.pop %v3385
        %v4003 = vmul.f32 1.0, %v4002
        %v4004 = vrcp.pop %v3386
        %v4005 = vmul.f32 1.0, %v4004
        %v4006 = vrcp.pop %v3387
        %v4007 = vmul.f32 1.0, %v4006
        %v4008 = vrcp.pop %v3388
        %v4009 = vmul.f32 1.0, %v4008
        %v4010 = vrcp.pop %v3389
        %v4011 = vmul.f32 1.0, %v4010
        %v4012 = vrcp.pop %v3390
        %v4013 = vmul.f32 1.0, %v4012
        %v4014 = vrcp.pop %v3391
        %v4015 = vmul.f32 1.0, %v4014
        %v4016 = vrcp.pop %v3392
        %v4017 = vmul.f32 1.0, %v4016
        %v4018 = vrcp.pop %v3393
        %v4019 = vmul.f32 1.0, %v4018
        %v4020 = vrcp.pop %v3394
        %v4021 = vmul.f32 1.0, %v4020
        %v4022 = vrcp.pop %v3395
        %v4023 = vmul.f32 1.0, %v4022
        %v4024 = vrcp.pop %v3396
        %v4025 = vmul.f32 1.0, %v4024
        %v4026 = vrcp.pop %v3397
        %v4027 = vmul.f32 1.0, %v4026
        %v4028 = vrcp.pop %v3398
        %v4029 = vmul.f32 1.0, %v4028
        %v4030 = vrcp.pop %v3399
        %v4031 = vmul.f32 1.0, %v4030
        %v4032 = vrcp.pop %v3400
        %v4033 = vmul.f32 1.0, %v4032
        %v4034 = vrcp.pop %v3401
        %v4035 = vmul.f32 1.0, %v4034
        %v4036 = vrcp.pop %v3402
        %v4037 = vmul.f32 1.0, %v4036
        %v4038 = vrcp.pop %v3403
        %v4039 = vmul.f32 1.0, %v4038
        %v4040 = vrcp.pop %v3404
        %v4041 = vmul.f32 1.0, %v4040
        %v4042 = vrcp.pop %v3405
        %v4043 = vmul.f32 1.0, %v4042
        %v4044 = vrcp.pop %v3406
        %v4045 = vmul.f32 1.0, %v4044
        %v4046 = vrcp.pop %v3407
        %v4047 = vmul.f32 1.0, %v4046
        %v4048 = vmul.f32 %v1198, %v3409
        %v4049 = vmul.f32 %v1200, %v3411
        %v4050 = vmul.f32 %v1391, %v3413
        %v4051 = vmul.f32 %v1393, %v3415
        %v4052 = vmul.f32 %v1584, %v3417
        %v4053 = vmul.f32 %v1586, %v3419
        %v4054 = vmul.f32 %v1777, %v3421
        %v4055 = vmul.f32 %v1779, %v3423
        %v4056 = vmul.f32 %v1970, %v3425
        %v4057 = vmul.f32 %v1972, %v3427
        %v4058 = vmul.f32 %v1202, %v3429
        %v4059 = vmul.f32 %v1204, %v3431
        %v4060 = vmul.f32 %v1395, %v3433
        %v4061 = vmul.f32 %v1397, %v3435
        %v4062 = vmul.f32 %v1588, %v3437
        %v4063 = vmul.f32 %v1590, %v3439
        %v4064 = vmul.f32 %v1781, %v3441
        %v4065 = vmul.f32 %v1783, %v3443
        %v4066 = vmul.f32 %v1974, %v3445
        %v4067 = vmul.f32 %v1976, %v3447
        %v4068 = vmul.f32 %v1208, %v3449
        %v4069 = vmul.f32 %v1210, %v3451
        %v4070 = vmul.f32 %v1401, %v3453
        %v4071 = vmul.f32 %v1403, %v3455
        %v4072 = vmul.f32 %v1594, %v3457
        %v4073 = vmul.f32 %v1596, %v3459
        %v4074 = vmul.f32 %v1787, %v3461
        %v4075 = vmul.f32 %v1789, %v3463
        %v4076 = vmul.f32 %v1980, %v3465
        %v4077 = vmul.f32 %v1982, %v3467
        %v4078 = vmul.f32 %v1212, %v3469
        %v4079 = vmul.f32 %v1214, %v3471
        %v4080 = vmul.f32 %v1405, %v3473
        %v4081 = vmul.f32 %v1407, %v3475
        %v4082 = vmul.f32 %v1598, %v3477
        %v4083 = vmul.f32 %v1600, %v3479
        %v4084 = vmul.f32 %v1791, %v3481
        %v4085 = vmul.f32 %v1793, %v3483
        %v4086 = vmul.f32 %v1984, %v3485
        %v4087 = vmul.f32 %v1986, %v3487
        %v4088 = vmul.f32 %v1218, %v3489
        %v4089 = vmul.f32 %v1220, %v3491
        %v4090 = vmul.f32 %v1411, %v3493
        %v4091 = vmul.f32 %v1413, %v3495
        %v4092 = vmul.f32 %v1604, %v3497
        %v4093 = vmul.f32 %v1606, %v3499
        %v4094 = vmul.f32 %v1797, %v3501
        %v4095 = vmul.f32 %v1799, %v3503
        %v4096 = vmul.f32 %v1990, %v3505
        %v4097 = vmul.f32 %v1992, %v3507
        %v4098 = vmul.f32 %v1222, %v3509
        %v4099 = vmul.f32 %v1224, %v3511
        %v4100 = vmul.f32 %v1415, %v3513
        %v4101 = vmul.f32 %v1417, %v3515
        %v4102 = vmul.f32 %v1608, %v3517
        %v4103 = vmul.f32 %v1610, %v3519
        %v4104 = vmul.f32 %v1801, %v3521
        %v4105 = vmul.f32 %v1803, %v3523
        %v4106 = vmul.f32 %v1994, %v3525
        %v4107 = vmul.f32 %v1996, %v3527
        %v4108 = vmul.f32 %v1228, %v3529
        %v4109 = vmul.f32 %v1230, %v3531
        %v4110 = vmul.f32 %v1421, %v3533
        %v4111 = vmul.f32 %v1423, %v3535
        %v4112 = vmul.f32 %v1614, %v3537
        %v4113 = vmul.f32 %v1616, %v3539
        %v4114 = vmul.f32 %v1807, %v3541
        %v4115 = vmul.f32 %v1809, %v3543
        %v4116 = vmul.f32 %v2000, %v3545
        %v4117 = vmul.f32 %v2002, %v3547
        %v4118 = vmul.f32 %v1232, %v3549
        %v4119 = vmul.f32 %v1234, %v3551
        %v4120 = vmul.f32 %v1425, %v3553
        %v4121 = vmul.f32 %v1427, %v3555
        %v4122 = vmul.f32 %v1618, %v3557
        %v4123 = vmul.f32 %v1620, %v3559
        %v4124 = vmul.f32 %v1811, %v3561
        %v4125 = vmul.f32 %v1813, %v3563
        %v4126 = vmul.f32 %v2004, %v3565
        %v4127 = vmul.f32 %v2006, %v3567
        %v4128 = vmul.f32 %v1238, %v3569
        %v4129 = vmul.f32 %v1240, %v3571
        %v4130 = vmul.f32 %v1431, %v3573
        %v4131 = vmul.f32 %v1433, %v3575
        %v4132 = vmul.f32 %v1624, %v3577
        %v4133 = vmul.f32 %v1626, %v3579
        %v4134 = vmul.f32 %v1817, %v3581
        %v4135 = vmul.f32 %v1819, %v3583
        %v4136 = vmul.f32 %v2010, %v3585
        %v4137 = vmul.f32 %v2012, %v3587
        %v4138 = vmul.f32 %v1242, %v3589
        %v4139 = vmul.f32 %v1244, %v3591
        %v4140 = vmul.f32 %v1435, %v3593
        %v4141 = vmul.f32 %v1437, %v3595
        %v4142 = vmul.f32 %v1628, %v3597
        %v4143 = vmul.f32 %v1630, %v3599
        %v4144 = vmul.f32 %v1821, %v3601
        %v4145 = vmul.f32 %v1823, %v3603
        %v4146 = vmul.f32 %v2014, %v3605
        %v4147 = vmul.f32 %v2016, %v3607
        %v4148 = vmul.f32 %v1248, %v3609
        %v4149 = vmul.f32 %v1250, %v3611
        %v4150 = vmul.f32 %v1441, %v3613
        %v4151 = vmul.f32 %v1443, %v3615
        %v4152 = vmul.f32 %v1634, %v3617
        %v4153 = vmul.f32 %v1636, %v3619
        %v4154 = vmul.f32 %v1827, %v3621
        %v4155 = vmul.f32 %v1829, %v3623
        %v4156 = vmul.f32 %v2020, %v3625
        %v4157 = vmul.f32 %v2022, %v3627
        %v4158 = vmul.f32 %v1252, %v3629
        %v4159 = vmul.f32 %v1254, %v3631
        %v4160 = vmul.f32 %v1445, %v3633
        %v4161 = vmul.f32 %v1447, %v3635
        %v4162 = vmul.f32 %v1638, %v3637
        %v4163 = vmul.f32 %v1640, %v3639
        %v4164 = vmul.f32 %v1831, %v3641
        %v4165 = vmul.f32 %v1833, %v3643
        %v4166 = vmul.f32 %v2024, %v3645
        %v4167 = vmul.f32 %v2026, %v3647
        %v4168 = vmul.f32 %v1258, %v3649
        %v4169 = vmul.f32 %v1260, %v3651
        %v4170 = vmul.f32 %v1451, %v3653
        %v4171 = vmul.f32 %v1453, %v3655
        %v4172 = vmul.f32 %v1644, %v3657
        %v4173 = vmul.f32 %v1646, %v3659
        %v4174 = vmul.f32 %v1837, %v3661
        %v4175 = vmul.f32 %v1839, %v3663
        %v4176 = vmul.f32 %v2030, %v3665
        %v4177 = vmul.f32 %v2032, %v3667
        %v4178 = vmul.f32 %v1262, %v3669
        %v4179 = vmul.f32 %v1264, %v3671
        %v4180 = vmul.f32 %v1455, %v3673
        %v4181 = vmul.f32 %v1457, %v3675
        %v4182 = vmul.f32 %v1648, %v3677
        %v4183 = vmul.f32 %v1650, %v3679
        %v4184 = vmul.f32 %v1841, %v3681
        %v4185 = vmul.f32 %v1843, %v3683
        %v4186 = vmul.f32 %v2034, %v3685
        %v4187 = vmul.f32 %v2036, %v3687
        %v4188 = vmul.f32 %v1268, %v3689
        %v4189 = vmul.f32 %v1270, %v3691
        %v4190 = vmul.f32 %v1461, %v3693
        %v4191 = vmul.f32 %v1463, %v3695
        %v4192 = vmul.f32 %v1654, %v3697
        %v4193 = vmul.f32 %v1656, %v3699
        %v4194 = vmul.f32 %v1847, %v3701
        %v4195 = vmul.f32 %v1849, %v3703
        %v4196 = vmul.f32 %v2040, %v3705
        %v4197 = vmul.f32 %v2042, %v3707
        %v4198 = vmul.f32 %v1272, %v3709
        %v4199 = vmul.f32 %v1274, %v3711
        %v4200 = vmul.f32 %v1465, %v3713
        %v4201 = vmul.f32 %v1467, %v3715
        %v4202 = vmul.f32 %v1658, %v3717
        %v4203 = vmul.f32 %v1660, %v3719
        %v4204 = vmul.f32 %v1851, %v3721
        %v4205 = vmul.f32 %v1853, %v3723
        %v4206 = vmul.f32 %v2044, %v3725
        %v4207 = vmul.f32 %v2046, %v3727
        %v4208 = vmul.f32 %v1278, %v3729
        %v4209 = vmul.f32 %v1280, %v3731
        %v4210 = vmul.f32 %v1471, %v3733
        %v4211 = vmul.f32 %v1473, %v3735
        %v4212 = vmul.f32 %v1664, %v3737
        %v4213 = vmul.f32 %v1666, %v3739
        %v4214 = vmul.f32 %v1857, %v3741
        %v4215 = vmul.f32 %v1859, %v3743
        %v4216 = vmul.f32 %v2050, %v3745
        %v4217 = vmul.f32 %v2052, %v3747
        %v4218 = vmul.f32 %v1282, %v3749
        %v4219 = vmul.f32 %v1284, %v3751
        %v4220 = vmul.f32 %v1475, %v3753
        %v4221 = vmul.f32 %v1477, %v3755
        %v4222 = vmul.f32 %v1668, %v3757
        %v4223 = vmul.f32 %v1670, %v3759
        %v4224 = vmul.f32 %v1861, %v3761
        %v4225 = vmul.f32 %v1863, %v3763
        %v4226 = vmul.f32 %v2054, %v3765
        %v4227 = vmul.f32 %v2056, %v3767
        %v4228 = vmul.f32 %v1288, %v3769
        %v4229 = vmul.f32 %v1290, %v3771
        %v4230 = vmul.f32 %v1481, %v3773
        %v4231 = vmul.f32 %v1483, %v3775
        %v4232 = vmul.f32 %v1674, %v3777
        %v4233 = vmul.f32 %v1676, %v3779
        %v4234 = vmul.f32 %v1867, %v3781
        %v4235 = vmul.f32 %v1869, %v3783
        %v4236 = vmul.f32 %v2060, %v3785
        %v4237 = vmul.f32 %v2062, %v3787
        %v4238 = vmul.f32 %v1292, %v3789
        %v4239 = vmul.f32 %v1294, %v3791
        %v4240 = vmul.f32 %v1485, %v3793
        %v4241 = vmul.f32 %v1487, %v3795
        %v4242 = vmul.f32 %v1678, %v3797
        %v4243 = vmul.f32 %v1680, %v3799
        %v4244 = vmul.f32 %v1871, %v3801
        %v4245 = vmul.f32 %v1873, %v3803
        %v4246 = vmul.f32 %v2064, %v3805
        %v4247 = vmul.f32 %v2066, %v3807
        %v4248 = vmul.f32 %v1298, %v3809
        %v4249 = vmul.f32 %v1300, %v3811
        %v4250 = vmul.f32 %v1491, %v3813
        %v4251 = vmul.f32 %v1493, %v3815
        %v4252 = vmul.f32 %v1684, %v3817
        %v4253 = vmul.f32 %v1686, %v3819
        %v4254 = vmul.f32 %v1877, %v3821
        %v4255 = vmul.f32 %v1879, %v3823
        %v4256 = vmul.f32 %v2070, %v3825
        %v4257 = vmul.f32 %v2072, %v3827
        %v4258 = vmul.f32 %v1302, %v3829
        %v4259 = vmul.f32 %v1304, %v3831
        %v4260 = vmul.f32 %v1495, %v3833
        %v4261 = vmul.f32 %v1497, %v3835
        %v4262 = vmul.f32 %v1688, %v3837
        %v4263 = vmul.f32 %v1690, %v3839
        %v4264 = vmul.f32 %v1881, %v3841
        %v4265 = vmul.f32 %v1883, %v3843
        %v4266 = vmul.f32 %v2074, %v3845
        %v4267 = vmul.f32 %v2076, %v3847
        %v4268 = vmul.f32 %v1308, %v3849
        %v4269 = vmul.f32 %v1310, %v3851
        %v4270 = vmul.f32 %v1501, %v3853
        %v4271 = vmul.f32 %v1503, %v3855
        %v4272 = vmul.f32 %v1694, %v3857
        %v4273 = vmul.f32 %v1696, %v3859
        %v4274 = vmul.f32 %v1887, %v3861
        %v4275 = vmul.f32 %v1889, %v3863
        %v4276 = vmul.f32 %v2080, %v3865
        %v4277 = vmul.f32 %v2082, %v3867
        %v4278 = vmul.f32 %v1312, %v3869
        %v4279 = vmul.f32 %v1314, %v3871
        %v4280 = vmul.f32 %v1505, %v3873
        %v4281 = vmul.f32 %v1507, %v3875
        %v4282 = vmul.f32 %v1698, %v3877
        %v4283 = vmul.f32 %v1700, %v3879
        %v4284 = vmul.f32 %v1891, %v3881
        %v4285 = vmul.f32 %v1893, %v3883
        %v4286 = vmul.f32 %v2084, %v3885
        %v4287 = vmul.f32 %v2086, %v3887
        %v4288 = vmul.f32 %v1318, %v3889
        %v4289 = vmul.f32 %v1320, %v3891
        %v4290 = vmul.f32 %v1511, %v3893
        %v4291 = vmul.f32 %v1513, %v3895
        %v4292 = vmul.f32 %v1704, %v3897
        %v4293 = vmul.f32 %v1706, %v3899
        %v4294 = vmul.f32 %v1897, %v3901
        %v4295 = vmul.f32 %v1899, %v3903
        %v4296 = vmul.f32 %v2090, %v3905
        %v4297 = vmul.f32 %v2092, %v3907
        %v4298 = vmul.f32 %v1322, %v3909
        %v4299 = vmul.f32 %v1324, %v3911
        %v4300 = vmul.f32 %v1515, %v3913
        %v4301 = vmul.f32 %v1517, %v3915
        %v4302 = vmul.f32 %v1708, %v3917
        %v4303 = vmul.f32 %v1710, %v3919
        %v4304 = vmul.f32 %v1901, %v3921
        %v4305 = vmul.f32 %v1903, %v3923
        %v4306 = vmul.f32 %v2094, %v3925
        %v4307 = vmul.f32 %v2096, %v3927
        %v4308 = vmul.f32 %v1328, %v3929
        %v4309 = vmul.f32 %v1330, %v3931
        %v4310 = vmul.f32 %v1521, %v3933
        %v4311 = vmul.f32 %v1523, %v3935
        %v4312 = vmul.f32 %v1714, %v3937
        %v4313 = vmul.f32 %v1716, %v3939
        %v4314 = vmul.f32 %v1907, %v3941
        %v4315 = vmul.f32 %v1909, %v3943
        %v4316 = vmul.f32 %v2100, %v3945
        %v4317 = vmul.f32 %v2102, %v3947
        %v4318 = vmul.f32 %v1332, %v3949
        %v4319 = vmul.f32 %v1334, %v3951
        %v4320 = vmul.f32 %v1525, %v3953
        %v4321 = vmul.f32 %v1527, %v3955
        %v4322 = vmul.f32 %v1718, %v3957
        %v4323 = vmul.f32 %v1720, %v3959
        %v4324 = vmul.f32 %v1911, %v3961
        %v4325 = vmul.f32 %v1913, %v3963
        %v4326 = vmul.f32 %v2104, %v3965
        %v4327 = vmul.f32 %v2106, %v3967
        %v4328 = vmul.f32 %v1338, %v3969
        %v4329 = vmul.f32 %v1340, %v3971
        %v4330 = vmul.f32 %v1531, %v3973
        %v4331 = vmul.f32 %v1533, %v3975
        %v4332 = vmul.f32 %v1724, %v3977
        %v4333 = vmul.f32 %v1726, %v3979
        %v4334 = vmul.f32 %v1917, %v3981
        %v4335 = vmul.f32 %v1919, %v3983
        %v4336 = vmul.f32 %v2110, %v3985
        %v4337 = vmul.f32 %v2112, %v3987
        %v4338 = vmul.f32 %v1342, %v3989
        %v4339 = vmul.f32 %v1344, %v3991
        %v4340 = vmul.f32 %v1535, %v3993
        %v4341 = vmul.f32 %v1537, %v3995
        %v4342 = vmul.f32 %v1728, %v3997
        %v4343 = vmul.f32 %v1730, %v3999
        %v4344 = vmul.f32 %v1921, %v4001
        %v4345 = vmul.f32 %v1923, %v4003
        %v4346 = vmul.f32 %v2114, %v4005
        %v4347 = vmul.f32 %v2116, %v4007
        %v4348 = vmul.f32 %v1348, %v4009
        %v4349 = vmul.f32 %v1350, %v4011
        %v4350 = vmul.f32 %v1541, %v4013
        %v4351 = vmul.f32 %v1543, %v4015
        %v4352 = vmul.f32 %v1734, %v4017
        %v4353 = vmul.f32 %v1736, %v4019
        %v4354 = vmul.f32 %v1927, %v4021
        %v4355 = vmul.f32 %v1929, %v4023
        %v4356 = vmul.f32 %v2120, %v4025
        %v4357 = vmul.f32 %v2122, %v4027
        %v4358 = vmul.f32 %v1352, %v4029
        %v4359 = vmul.f32 %v1354, %v4031
        %v4360 = vmul.f32 %v1545, %v4033
        %v4361 = vmul.f32 %v1547, %v4035
        %v4362 = vmul.f32 %v1738, %v4037
        %v4363 = vmul.f32 %v1740, %v4039
        %v4364 = vmul.f32 %v1931, %v4041
        %v4365 = vmul.f32 %v1933, %v4043
        %v4366 = vmul.f32 %v2124, %v4045
        %v4367 = vmul.f32 %v2126, %v4047
        %v4368 = vadd.f32 %v4048, %v4058
        %v4369 = vadd.f32 %v4368, %v4068
        %v4370 = vadd.f32 %v4369, %v4078
        %v4371 = vadd.f32 %v4370, %v4088
        %v4372 = vadd.f32 %v4371, %v4098
        %v4373 = vadd.f32 %v4372, %v4108
        %v4374 = vadd.f32 %v4373, %v4118
        %v4375 = vadd.f32 %v4374, %v4128
        %v4376 = vadd.f32 %v4375, %v4138
        %v4377 = vadd.f32 %v4376, %v4148
        %v4378 = vadd.f32 %v4377, %v4158
        %v4379 = vadd.f32 %v4378, %v4168
        %v4380 = vadd.f32 %v4379, %v4178
        %v4381 = vadd.f32 %v4380, %v4188
        %v4382 = vadd.f32 %v4381, %v4198
        %v4383 = vadd.f32 %v4382, %v4208
        %v4384 = vadd.f32 %v4383, %v4218
        %v4385 = vadd.f32 %v4384, %v4228
        %v4386 = vadd.f32 %v4385, %v4238
        %v4387 = vadd.f32 %v4386, %v4248
        %v4388 = vadd.f32 %v4387, %v4258
        %v4389 = vadd.f32 %v4388, %v4268
        %v4390 = vadd.f32 %v4389, %v4278
        %v4391 = vadd.f32 %v4390, %v4288
        %v4392 = vadd.f32 %v4391, %v4298
        %v4393 = vadd.f32 %v4392, %v4308
        %v4394 = vadd.f32 %v4393, %v4318
        %v4395 = vadd.f32 %v4394, %v4328
        %v4396 = vadd.f32 %v4395, %v4338
        %v4397 = vadd.f32 %v4396, %v4348
        %v4398 = vadd.f32 %v4397, %v4358
        %v4399 = vrot.slane %v4398, 4
        %v4400 = vadd.f32 %v4398, %v4399
        %v4401 = vrot.slane %v4400, 2
        %v4402 = vadd.f32 %v4400, %v4401
        %v4403 = vrot.slane %v4402, 1
        %v4404 = vadd.f32 %v4402, %v4403
        %v4405 = vadd.f32 %v4049, %v4059
        %v4406 = vadd.f32 %v4405, %v4069
        %v4407 = vadd.f32 %v4406, %v4079
        %v4408 = vadd.f32 %v4407, %v4089
        %v4409 = vadd.f32 %v4408, %v4099
        %v4410 = vadd.f32 %v4409, %v4109
        %v4411 = vadd.f32 %v4410, %v4119
        %v4412 = vadd.f32 %v4411, %v4129
        %v4413 = vadd.f32 %v4412, %v4139
        %v4414 = vadd.f32 %v4413, %v4149
        %v4415 = vadd.f32 %v4414, %v4159
        %v4416 = vadd.f32 %v4415, %v4169
        %v4417 = vadd.f32 %v4416, %v4179
        %v4418 = vadd.f32 %v4417, %v4189
        %v4419 = vadd.f32 %v4418, %v4199
        %v4420 = vadd.f32 %v4419, %v4209
        %v4421 = vadd.f32 %v4420, %v4219
        %v4422 = vadd.f32 %v4421, %v4229
        %v4423 = vadd.f32 %v4422, %v4239
        %v4424 = vadd.f32 %v4423, %v4249
        %v4425 = vadd.f32 %v4424, %v4259
        %v4426 = vadd.f32 %v4425, %v4269
        %v4427 = vadd.f32 %v4426, %v4279
        %v4428 = vadd.f32 %v4427, %v4289
        %v4429 = vadd.f32 %v4428, %v4299
        %v4430 = vadd.f32 %v4429, %v4309
        %v4431 = vadd.f32 %v4430, %v4319
        %v4432 = vadd.f32 %v4431, %v4329
        %v4433 = vadd.f32 %v4432, %v4339
        %v4434 = vadd.f32 %v4433, %v4349
        %v4435 = vadd.f32 %v4434, %v4359
        %v4436 = vrot.slane %v4435, 4
        %v4437 = vadd.f32 %v4435, %v4436
        %v4438 = vrot.slane %v4437, 2
        %v4439 = vadd.f32 %v4437, %v4438
        %v4440 = vrot.slane %v4439, 1
        %v4441 = vadd.f32 %v4439, %v4440
        %v4442 = vadd.f32 %v4050, %v4060
        %v4443 = vadd.f32 %v4442, %v4070
        %v4444 = vadd.f32 %v4443, %v4080
        %v4445 = vadd.f32 %v4444, %v4090
        %v4446 = vadd.f32 %v4445, %v4100
        %v4447 = vadd.f32 %v4446, %v4110
        %v4448 = vadd.f32 %v4447, %v4120
        %v4449 = vadd.f32 %v4448, %v4130
        %v4450 = vadd.f32 %v4449, %v4140
        %v4451 = vadd.f32 %v4450, %v4150
        %v4452 = vadd.f32 %v4451, %v4160
        %v4453 = vadd.f32 %v4452, %v4170
        %v4454 = vadd.f32 %v4453, %v4180
        %v4455 = vadd.f32 %v4454, %v4190
        %v4456 = vadd.f32 %v4455, %v4200
        %v4457 = vadd.f32 %v4456, %v4210
        %v4458 = vadd.f32 %v4457, %v4220
        %v4459 = vadd.f32 %v4458, %v4230
        %v4460 = vadd.f32 %v4459, %v4240
        %v4461 = vadd.f32 %v4460, %v4250
        %v4462 = vadd.f32 %v4461, %v4260
        %v4463 = vadd.f32 %v4462, %v4270
        %v4464 = vadd.f32 %v4463, %v4280
        %v4465 = vadd.f32 %v4464, %v4290
        %v4466 = vadd.f32 %v4465, %v4300
        %v4467 = vadd.f32 %v4466, %v4310
        %v4468 = vadd.f32 %v4467, %v4320
        %v4469 = vadd.f32 %v4468, %v4330
        %v4470 = vadd.f32 %v4469, %v4340
        %v4471 = vadd.f32 %v4470, %v4350
        %v4472 = vadd.f32 %v4471, %v4360
        %v4473 = vrot.slane %v4472, 4
        %v4474 = vadd.f32 %v4472, %v4473
        %v4475 = vrot.slane %v4474, 2
        %v4476 = vadd.f32 %v4474, %v4475
        %v4477 = vrot.slane %v4476, 1
        %v4478 = vadd.f32 %v4476, %v4477
        %v4479 = vadd.f32 %v4051, %v4061
        %v4480 = vadd.f32 %v4479, %v4071
        %v4481 = vadd.f32 %v4480, %v4081
        %v4482 = vadd.f32 %v4481, %v4091
        %v4483 = vadd.f32 %v4482, %v4101
        %v4484 = vadd.f32 %v4483, %v4111
        %v4485 = vadd.f32 %v4484, %v4121
        %v4486 = vadd.f32 %v4485, %v4131
        %v4487 = vadd.f32 %v4486, %v4141
        %v4488 = vadd.f32 %v4487, %v4151
        %v4489 = vadd.f32 %v4488, %v4161
        %v4490 = vadd.f32 %v4489, %v4171
        %v4491 = vadd.f32 %v4490, %v4181
        %v4492 = vadd.f32 %v4491, %v4191
        %v4493 = vadd.f32 %v4492, %v4201
        %v4494 = vadd.f32 %v4493, %v4211
        %v4495 = vadd.f32 %v4494, %v4221
        %v4496 = vadd.f32 %v4495, %v4231
        %v4497 = vadd.f32 %v4496, %v4241
        %v4498 = vadd.f32 %v4497, %v4251
        %v4499 = vadd.f32 %v4498, %v4261
        %v4500 = vadd.f32 %v4499, %v4271
        %v4501 = vadd.f32 %v4500, %v4281
        %v4502 = vadd.f32 %v4501, %v4291
        %v4503 = vadd.f32 %v4502, %v4301
        %v4504 = vadd.f32 %v4503, %v4311
        %v4505 = vadd.f32 %v4504, %v4321
        %v4506 = vadd.f32 %v4505, %v4331
        %v4507 = vadd.f32 %v4506, %v4341
        %v4508 = vadd.f32 %v4507, %v4351
        %v4509 = vadd.f32 %v4508, %v4361
        %v4510 = vrot.slane %v4509, 4
        %v4511 = vadd.f32 %v4509, %v4510
        %v4512 = vrot.slane %v4511, 2
        %v4513 = vadd.f32 %v4511, %v4512
        %v4514 = vrot.slane %v4513, 1
        %v4515 = vadd.f32 %v4513, %v4514
        %v4516 = vadd.f32 %v4052, %v4062
        %v4517 = vadd.f32 %v4516, %v4072
        %v4518 = vadd.f32 %v4517, %v4082
        %v4519 = vadd.f32 %v4518, %v4092
        %v4520 = vadd.f32 %v4519, %v4102
        %v4521 = vadd.f32 %v4520, %v4112
        %v4522 = vadd.f32 %v4521, %v4122
        %v4523 = vadd.f32 %v4522, %v4132
        %v4524 = vadd.f32 %v4523, %v4142
        %v4525 = vadd.f32 %v4524, %v4152
        %v4526 = vadd.f32 %v4525, %v4162
        %v4527 = vadd.f32 %v4526, %v4172
        %v4528 = vadd.f32 %v4527, %v4182
        %v4529 = vadd.f32 %v4528, %v4192
        %v4530 = vadd.f32 %v4529, %v4202
        %v4531 = vadd.f32 %v4530, %v4212
        %v4532 = vadd.f32 %v4531, %v4222
        %v4533 = vadd.f32 %v4532, %v4232
        %v4534 = vadd.f32 %v4533, %v4242
        %v4535 = vadd.f32 %v4534, %v4252
        %v4536 = vadd.f32 %v4535, %v4262
        %v4537 = vadd.f32 %v4536, %v4272
        %v4538 = vadd.f32 %v4537, %v4282
        %v4539 = vadd.f32 %v4538, %v4292
        %v4540 = vadd.f32 %v4539, %v4302
        %v4541 = vadd.f32 %v4540, %v4312
        %v4542 = vadd.f32 %v4541, %v4322
        %v4543 = vadd.f32 %v4542, %v4332
        %v4544 = vadd.f32 %v4543, %v4342
        %v4545 = vadd.f32 %v4544, %v4352
        %v4546 = vadd.f32 %v4545, %v4362
        %v4547 = vrot.slane %v4546, 4
        %v4548 = vadd.f32 %v4546, %v4547
        %v4549 = vrot.slane %v4548, 2
        %v4550 = vadd.f32 %v4548, %v4549
        %v4551 = vrot.slane %v4550, 1
        %v4552 = vadd.f32 %v4550, %v4551
        %v4553 = vadd.f32 %v4053, %v4063
        %v4554 = vadd.f32 %v4553, %v4073
        %v4555 = vadd.f32 %v4554, %v4083
        %v4556 = vadd.f32 %v4555, %v4093
        %v4557 = vadd.f32 %v4556, %v4103
        %v4558 = vadd.f32 %v4557, %v4113
        %v4559 = vadd.f32 %v4558, %v4123
        %v4560 = vadd.f32 %v4559, %v4133
        %v4561 = vadd.f32 %v4560, %v4143
        %v4562 = vadd.f32 %v4561, %v4153
        %v4563 = vadd.f32 %v4562, %v4163
        %v4564 = vadd.f32 %v4563, %v4173
        %v4565 = vadd.f32 %v4564, %v4183
        %v4566 = vadd.f32 %v4565, %v4193
        %v4567 = vadd.f32 %v4566, %v4203
        %v4568 = vadd.f32 %v4567, %v4213
        %v4569 = vadd.f32 %v4568, %v4223
        %v4570 = vadd.f32 %v4569, %v4233
        %v4571 = vadd.f32 %v4570, %v4243
        %v4572 = vadd.f32 %v4571, %v4253
        %v4573 = vadd.f32 %v4572, %v4263
        %v4574 = vadd.f32 %v4573, %v4273
        %v4575 = vadd.f32 %v4574, %v4283
        %v4576 = vadd.f32 %v4575, %v4293
        %v4577 = vadd.f32 %v4576, %v4303
        %v4578 = vadd.f32 %v4577, %v4313
        %v4579 = vadd.f32 %v4578, %v4323
        %v4580 = vadd.f32 %v4579, %v4333
        %v4581 = vadd.f32 %v4580, %v4343
        %v4582 = vadd.f32 %v4581, %v4353
        %v4583 = vadd.f32 %v4582, %v4363
        %v4584 = vrot.slane %v4583, 4
        %v4585 = vadd.f32 %v4583, %v4584
        %v4586 = vrot.slane %v4585, 2
        %v4587 = vadd.f32 %v4585, %v4586
        %v4588 = vrot.slane %v4587, 1
        %v4589 = vadd.f32 %v4587, %v4588
        %v4590 = vadd.f32 %v4054, %v4064
        %v4591 = vadd.f32 %v4590, %v4074
        %v4592 = vadd.f32 %v4591, %v4084
        %v4593 = vadd.f32 %v4592, %v4094
        %v4594 = vadd.f32 %v4593, %v4104
        %v4595 = vadd.f32 %v4594, %v4114
        %v4596 = vadd.f32 %v4595, %v4124
        %v4597 = vadd.f32 %v4596, %v4134
        %v4598 = vadd.f32 %v4597, %v4144
        %v4599 = vadd.f32 %v4598, %v4154
        %v4600 = vadd.f32 %v4599, %v4164
        %v4601 = vadd.f32 %v4600, %v4174
        %v4602 = vadd.f32 %v4601, %v4184
        %v4603 = vadd.f32 %v4602, %v4194
        %v4604 = vadd.f32 %v4603, %v4204
        %v4605 = vadd.f32 %v4604, %v4214
        %v4606 = vadd.f32 %v4605, %v4224
        %v4607 = vadd.f32 %v4606, %v4234
        %v4608 = vadd.f32 %v4607, %v4244
        %v4609 = vadd.f32 %v4608, %v4254
        %v4610 = vadd.f32 %v4609, %v4264
        %v4611 = vadd.f32 %v4610, %v4274
        %v4612 = vadd.f32 %v4611, %v4284
        %v4613 = vadd.f32 %v4612, %v4294
        %v4614 = vadd.f32 %v4613, %v4304
        %v4615 = vadd.f32 %v4614, %v4314
        %v4616 = vadd.f32 %v4615, %v4324
        %v4617 = vadd.f32 %v4616, %v4334
        %v4618 = vadd.f32 %v4617, %v4344
        %v4619 = vadd.f32 %v4618, %v4354
        %v4620 = vadd.f32 %v4619, %v4364
        %v4621 = vrot.slane %v4620, 4
        %v4622 = vadd.f32 %v4620, %v4621
        %v4623 = vrot.slane %v4622, 2
        %v4624 = vadd.f32 %v4622, %v4623
        %v4625 = vrot.slane %v4624, 1
        %v4626 = vadd.f32 %v4624, %v4625
        %v4627 = vadd.f32 %v4055, %v4065
        %v4628 = vadd.f32 %v4627, %v4075
        %v4629 = vadd.f32 %v4628, %v4085
        %v4630 = vadd.f32 %v4629, %v4095
        %v4631 = vadd.f32 %v4630, %v4105
        %v4632 = vadd.f32 %v4631, %v4115
        %v4633 = vadd.f32 %v4632, %v4125
        %v4634 = vadd.f32 %v4633, %v4135
        %v4635 = vadd.f32 %v4634, %v4145
        %v4636 = vadd.f32 %v4635, %v4155
        %v4637 = vadd.f32 %v4636, %v4165
        %v4638 = vadd.f32 %v4637, %v4175
        %v4639 = vadd.f32 %v4638, %v4185
        %v4640 = vadd.f32 %v4639, %v4195
        %v4641 = vadd.f32 %v4640, %v4205
        %v4642 = vadd.f32 %v4641, %v4215
        %v4643 = vadd.f32 %v4642, %v4225
        %v4644 = vadd.f32 %v4643, %v4235
        %v4645 = vadd.f32 %v4644, %v4245
        %v4646 = vadd.f32 %v4645, %v4255
        %v4647 = vadd.f32 %v4646, %v4265
        %v4648 = vadd.f32 %v4647, %v4275
        %v4649 = vadd.f32 %v4648, %v4285
        %v4650 = vadd.f32 %v4649, %v4295
        %v4651 = vadd.f32 %v4650, %v4305
        %v4652 = vadd.f32 %v4651, %v4315
        %v4653 = vadd.f32 %v4652, %v4325
        %v4654 = vadd.f32 %v4653, %v4335
        %v4655 = vadd.f32 %v4654, %v4345
        %v4656 = vadd.f32 %v4655, %v4355
        %v4657 = vadd.f32 %v4656, %v4365
        %v4658 = vrot.slane %v4657, 4
        %v4659 = vadd.f32 %v4657, %v4658
        %v4660 = vrot.slane %v4659, 2
        %v4661 = vadd.f32 %v4659, %v4660
        %v4662 = vrot.slane %v4661, 1
        %v4663 = vadd.f32 %v4661, %v4662
        %v4664 = vadd.f32 %v4056, %v4066
        %v4665 = vadd.f32 %v4664, %v4076
        %v4666 = vadd.f32 %v4665, %v4086
        %v4667 = vadd.f32 %v4666, %v4096
        %v4668 = vadd.f32 %v4667, %v4106
        %v4669 = vadd.f32 %v4668, %v4116
        %v4670 = vadd.f32 %v4669, %v4126
        %v4671 = vadd.f32 %v4670, %v4136
        %v4672 = vadd.f32 %v4671, %v4146
        %v4673 = vadd.f32 %v4672, %v4156
        %v4674 = vadd.f32 %v4673, %v4166
        %v4675 = vadd.f32 %v4674, %v4176
        %v4676 = vadd.f32 %v4675, %v4186
        %v4677 = vadd.f32 %v4676, %v4196
        %v4678 = vadd.f32 %v4677, %v4206
        %v4679 = vadd.f32 %v4678, %v4216
        %v4680 = vadd.f32 %v4679, %v4226
        %v4681 = vadd.f32 %v4680, %v4236
        %v4682 = vadd.f32 %v4681, %v4246
        %v4683 = vadd.f32 %v4682, %v4256
        %v4684 = vadd.f32 %v4683, %v4266
        %v4685 = vadd.f32 %v4684, %v4276
        %v4686 = vadd.f32 %v4685, %v4286
        %v4687 = vadd.f32 %v4686, %v4296
        %v4688 = vadd.f32 %v4687, %v4306
        %v4689 = vadd.f32 %v4688, %v4316
        %v4690 = vadd.f32 %v4689, %v4326
        %v4691 = vadd.f32 %v4690, %v4336
        %v4692 = vadd.f32 %v4691, %v4346
        %v4693 = vadd.f32 %v4692, %v4356
        %v4694 = vadd.f32 %v4693, %v4366
        %v4695 = vrot.slane %v4694, 4
        %v4696 = vadd.f32 %v4694, %v4695
        %v4697 = vrot.slane %v4696, 2
        %v4698 = vadd.f32 %v4696, %v4697
        %v4699 = vrot.slane %v4698, 1
        %v4700 = vadd.f32 %v4698, %v4699
        %v4701 = vadd.f32 %v4057, %v4067
        %v4702 = vadd.f32 %v4701, %v4077
        %v4703 = vadd.f32 %v4702, %v4087
        %v4704 = vadd.f32 %v4703, %v4097
        %v4705 = vadd.f32 %v4704, %v4107
        %v4706 = vadd.f32 %v4705, %v4117
        %v4707 = vadd.f32 %v4706, %v4127
        %v4708 = vadd.f32 %v4707, %v4137
        %v4709 = vadd.f32 %v4708, %v4147
        %v4710 = vadd.f32 %v4709, %v4157
        %v4711 = vadd.f32 %v4710, %v4167
        %v4712 = vadd.f32 %v4711, %v4177
        %v4713 = vadd.f32 %v4712, %v4187
        %v4714 = vadd.f32 %v4713, %v4197
        %v4715 = vadd.f32 %v4714, %v4207
        %v4716 = vadd.f32 %v4715, %v4217
        %v4717 = vadd.f32 %v4716, %v4227
        %v4718 = vadd.f32 %v4717, %v4237
        %v4719 = vadd.f32 %v4718, %v4247
        %v4720 = vadd.f32 %v4719, %v4257
        %v4721 = vadd.f32 %v4720, %v4267
        %v4722 = vadd.f32 %v4721, %v4277
        %v4723 = vadd.f32 %v4722, %v4287
        %v4724 = vadd.f32 %v4723, %v4297
        %v4725 = vadd.f32 %v4724, %v4307
        %v4726 = vadd.f32 %v4725, %v4317
        %v4727 = vadd.f32 %v4726, %v4327
        %v4728 = vadd.f32 %v4727, %v4337
        %v4729 = vadd.f32 %v4728, %v4347
        %v4730 = vadd.f32 %v4729, %v4357
        %v4731 = vadd.f32 %v4730, %v4367
        %v4732 = vrot.slane %v4731, 4
        %v4733 = vadd.f32 %v4731, %v4732
        %v4734 = vrot.slane %v4733, 2
        %v4735 = vadd.f32 %v4733, %v4734
        %v4736 = vrot.slane %v4735, 1
        %v4737 = vadd.f32 %v4735, %v4736
        %v4738 = vrcp.pop 256.0
        %v4739 = vmul.f32 %v4404, %v4738
        %v4740 = vmul.f32 %v4441, %v4738
        %v4741 = vmul.f32 %v4478, %v4738
        %v4742 = vmul.f32 %v4515, %v4738
        %v4743 = vmul.f32 %v4552, %v4738
        %v4744 = vmul.f32 %v4589, %v4738
        %v4745 = vmul.f32 %v4626, %v4738
        %v4746 = vmul.f32 %v4663, %v4738
        %v4747 = vmul.f32 %v4700, %v4738
        %v4748 = vmul.f32 %v4737, %v4738
        %v4749 = vpack.c.bf16 %v4739, %v4739
        %v4750 = vpack.c.bf16 %v4740, %v4740
        %v4751 = vpack.c.bf16 %v4741, %v4741
        %v4752 = vpack.c.bf16 %v4742, %v4742
        %v4753 = vpack.c.bf16 %v4743, %v4743
        %v4754 = vpack.c.bf16 %v4744, %v4744
        %v4755 = vpack.c.bf16 %v4745, %v4745
        %v4756 = vpack.c.bf16 %v4746, %v4746
        %v4757 = vpack.c.bf16 %v4747, %v4747
        %v4758 = vpack.c.bf16 %v4748, %v4748
        %v4759 = vld [vmem:[%s5] sm:$0xff]
        %v4760 = vld [vmem:[%s5 + $0x8] sm:$0xff]
        %v4761 = vld [vmem:[%s5 + $0x10] sm:$0xff]
        %v4762 = vld [vmem:[%s5 + $0x18] sm:$0xff]
        %v4763 = vld [vmem:[%s5 + $0x20] sm:$0xff]
        %v4764 = vld [vmem:[%s5 + $0x28] sm:$0xff]
        %v4765 = vld [vmem:[%s5 + $0x30] sm:$0xff]
        %v4766 = vld [vmem:[%s5 + $0x38] sm:$0xff]
        %v4767 = vld [vmem:[%s5 + $0x40] sm:$0xff]
        %v4768 = vld [vmem:[%s5 + $0x48] sm:$0xff]
        %v4769 = vld [vmem:[%s5 + $0x50] sm:$0xff]
        %v4770 = vld [vmem:[%s5 + $0x58] sm:$0xff]
        %v4771 = vld [vmem:[%s5 + $0x60] sm:$0xff]
        %v4772 = vld [vmem:[%s5 + $0x68] sm:$0xff]
        %v4773 = vld [vmem:[%s5 + $0x70] sm:$0xff]
        %v4774 = vld [vmem:[%s5 + $0x78] sm:$0xff]
        %v4775 = vld [vmem:[%s5 + $0x80] sm:$0xff]
        %v4776 = vld [vmem:[%s5 + $0x88] sm:$0xff]
        %v4777 = vld [vmem:[%s5 + $0x90] sm:$0xff]
        %v4778 = vld [vmem:[%s5 + $0x98] sm:$0xff]
        %v4779 = vld [vmem:[%s5 + $0xa0] sm:$0xff]
        %v4780 = vld [vmem:[%s5 + $0xa8] sm:$0xff]
        %v4781 = vld [vmem:[%s5 + $0xb0] sm:$0xff]
        %v4782 = vld [vmem:[%s5 + $0xb8] sm:$0xff]
        %v4783 = vld [vmem:[%s5 + $0xc0] sm:$0xff]
        %v4784 = vld [vmem:[%s5 + $0xc8] sm:$0xff]
        %v4785 = vld [vmem:[%s5 + $0xd0] sm:$0xff]
        %v4786 = vld [vmem:[%s5 + $0xd8] sm:$0xff]
        %v4787 = vld [vmem:[%s5 + $0xe0] sm:$0xff]
        %v4788 = vld [vmem:[%s5 + $0xe8] sm:$0xff]
        %v4789 = vld [vmem:[%s5 + $0xf0] sm:$0xff]
        %v4790 = vld [vmem:[%s5 + $0xf8] sm:$0xff]
        %v4791 = vld [vmem:[%s5 + $0x100] sm:$0xff]
        %v4792 = vld [vmem:[%s5 + $0x108] sm:$0xff]
        %v4793 = vld [vmem:[%s5 + $0x110] sm:$0xff]
        %v4794 = vld [vmem:[%s5 + $0x118] sm:$0xff]
        %v4795 = vld [vmem:[%s5 + $0x120] sm:$0xff]
        %v4796 = vld [vmem:[%s5 + $0x128] sm:$0xff]
        %v4797 = vld [vmem:[%s5 + $0x130] sm:$0xff]
        %v4798 = vld [vmem:[%s5 + $0x138] sm:$0xff]
        %v4799 = vld [vmem:[%s5 + $0x140] sm:$0xff]
        %v4800 = vld [vmem:[%s5 + $0x148] sm:$0xff]
        %v4801 = vld [vmem:[%s5 + $0x150] sm:$0xff]
        %v4802 = vld [vmem:[%s5 + $0x158] sm:$0xff]
        %v4803 = vld [vmem:[%s5 + $0x160] sm:$0xff]
        %v4804 = vld [vmem:[%s5 + $0x168] sm:$0xff]
        %v4805 = vld [vmem:[%s5 + $0x170] sm:$0xff]
        %v4806 = vld [vmem:[%s5 + $0x178] sm:$0xff]
        %v4807 = vld [vmem:[%s5 + $0x180] sm:$0xff]
        %v4808 = vld [vmem:[%s5 + $0x188] sm:$0xff]
        %v4809 = vld [vmem:[%s5 + $0x190] sm:$0xff]
        %v4810 = vld [vmem:[%s5 + $0x198] sm:$0xff]
        %v4811 = vld [vmem:[%s5 + $0x1a0] sm:$0xff]
        %v4812 = vld [vmem:[%s5 + $0x1a8] sm:$0xff]
        %v4813 = vld [vmem:[%s5 + $0x1b0] sm:$0xff]
        %v4814 = vld [vmem:[%s5 + $0x1b8] sm:$0xff]
        %v4815 = vld [vmem:[%s5 + $0x1c0] sm:$0xff]
        %v4816 = vld [vmem:[%s5 + $0x1c8] sm:$0xff]
        %v4817 = vld [vmem:[%s5 + $0x1d0] sm:$0xff]
        %v4818 = vld [vmem:[%s5 + $0x1d8] sm:$0xff]
        %v4819 = vld [vmem:[%s5 + $0x1e0] sm:$0xff]
        %v4820 = vld [vmem:[%s5 + $0x1e8] sm:$0xff]
        %v4821 = vld [vmem:[%s5 + $0x1f0] sm:$0xff]
        %v4822 = vld [vmem:[%s5 + $0x1f8] sm:$0xff]
        %v4823 = vld [vmem:[%s5 + $0x200] sm:$0xff]
        %v4824 = vld [vmem:[%s5 + $0x208] sm:$0xff]
        %v4825 = vld [vmem:[%s5 + $0x210] sm:$0xff]
        %v4826 = vld [vmem:[%s5 + $0x218] sm:$0xff]
        %v4827 = vld [vmem:[%s5 + $0x220] sm:$0xff]
        %v4828 = vld [vmem:[%s5 + $0x228] sm:$0xff]
        %v4829 = vld [vmem:[%s5 + $0x230] sm:$0xff]
        %v4830 = vld [vmem:[%s5 + $0x238] sm:$0xff]
        %v4831 = vld [vmem:[%s5 + $0x240] sm:$0xff]
        %v4832 = vld [vmem:[%s5 + $0x248] sm:$0xff]
        %v4833 = vld [vmem:[%s5 + $0x250] sm:$0xff]
        %v4834 = vld [vmem:[%s5 + $0x258] sm:$0xff]
        %v4835 = vld [vmem:[%s5 + $0x260] sm:$0xff]
        %v4836 = vld [vmem:[%s5 + $0x268] sm:$0xff]
        %v4837 = vld [vmem:[%s5 + $0x270] sm:$0xff]
        %v4838 = vld [vmem:[%s5 + $0x278] sm:$0xff]
        %v4839 = vld [vmem:[%s5 + $0x280] sm:$0xff]
        %v4840 = vld [vmem:[%s5 + $0x288] sm:$0xff]
        %v4841 = vld [vmem:[%s5 + $0x290] sm:$0xff]
        %v4842 = vld [vmem:[%s5 + $0x298] sm:$0xff]
        %v4843 = vld [vmem:[%s5 + $0x2a0] sm:$0xff]
        %v4844 = vld [vmem:[%s5 + $0x2a8] sm:$0xff]
        %v4845 = vld [vmem:[%s5 + $0x2b0] sm:$0xff]
        %v4846 = vld [vmem:[%s5 + $0x2b8] sm:$0xff]
        %v4847 = vld [vmem:[%s5 + $0x2c0] sm:$0xff]
        %v4848 = vld [vmem:[%s5 + $0x2c8] sm:$0xff]
        %v4849 = vld [vmem:[%s5 + $0x2d0] sm:$0xff]
        %v4850 = vld [vmem:[%s5 + $0x2d8] sm:$0xff]
        %v4851 = vld [vmem:[%s5 + $0x2e0] sm:$0xff]
        %v4852 = vld [vmem:[%s5 + $0x2e8] sm:$0xff]
        %v4853 = vld [vmem:[%s5 + $0x2f0] sm:$0xff]
        %v4854 = vld [vmem:[%s5 + $0x2f8] sm:$0xff]
        %v4855 = vld [vmem:[%s5 + $0x300] sm:$0xff]
        %v4856 = vld [vmem:[%s5 + $0x308] sm:$0xff]
        %v4857 = vld [vmem:[%s5 + $0x310] sm:$0xff]
        %v4858 = vld [vmem:[%s5 + $0x318] sm:$0xff]
        %v4859 = vld [vmem:[%s5 + $0x320] sm:$0xff]
        %v4860 = vld [vmem:[%s5 + $0x328] sm:$0xff]
        %v4861 = vld [vmem:[%s5 + $0x330] sm:$0xff]
        %v4862 = vld [vmem:[%s5 + $0x338] sm:$0xff]
        %v4863 = vld [vmem:[%s5 + $0x340] sm:$0xff]
        %v4864 = vld [vmem:[%s5 + $0x348] sm:$0xff]
        %v4865 = vld [vmem:[%s5 + $0x350] sm:$0xff]
        %v4866 = vld [vmem:[%s5 + $0x358] sm:$0xff]
        %v4867 = vld [vmem:[%s5 + $0x360] sm:$0xff]
        %v4868 = vld [vmem:[%s5 + $0x368] sm:$0xff]
        %v4869 = vld [vmem:[%s5 + $0x370] sm:$0xff]
        %v4870 = vld [vmem:[%s5 + $0x378] sm:$0xff]
        %v4871 = vld [vmem:[%s5 + $0x380] sm:$0xff]
        %v4872 = vld [vmem:[%s5 + $0x388] sm:$0xff]
        %v4873 = vld [vmem:[%s5 + $0x390] sm:$0xff]
        %v4874 = vld [vmem:[%s5 + $0x398] sm:$0xff]
        %v4875 = vld [vmem:[%s5 + $0x3a0] sm:$0xff]
        %v4876 = vld [vmem:[%s5 + $0x3a8] sm:$0xff]
        %v4877 = vld [vmem:[%s5 + $0x3b0] sm:$0xff]
        %v4878 = vld [vmem:[%s5 + $0x3b8] sm:$0xff]
        %v4879 = vld [vmem:[%s5 + $0x3c0] sm:$0xff]
        %v4880 = vld [vmem:[%s5 + $0x3c8] sm:$0xff]
        %v4881 = vld [vmem:[%s5 + $0x3d0] sm:$0xff]
        %v4882 = vld [vmem:[%s5 + $0x3d8] sm:$0xff]
        %v4883 = vld [vmem:[%s5 + $0x3e0] sm:$0xff]
        %v4884 = vld [vmem:[%s5 + $0x3e8] sm:$0xff]
        %v4885 = vld [vmem:[%s5 + $0x3f0] sm:$0xff]
        %v4886 = vld [vmem:[%s5 + $0x3f8] sm:$0xff]
        %v4887 = vld [vmem:[%s5 + $0x400] sm:$0xff]
        %v4888 = vld [vmem:[%s5 + $0x408] sm:$0xff]
        %v4889 = vld [vmem:[%s5 + $0x410] sm:$0xff]
        %v4890 = vld [vmem:[%s5 + $0x418] sm:$0xff]
        %v4891 = vld [vmem:[%s5 + $0x420] sm:$0xff]
        %v4892 = vld [vmem:[%s5 + $0x428] sm:$0xff]
        %v4893 = vld [vmem:[%s5 + $0x430] sm:$0xff]
        %v4894 = vld [vmem:[%s5 + $0x438] sm:$0xff]
        %v4895 = vld [vmem:[%s5 + $0x440] sm:$0xff]
        %v4896 = vld [vmem:[%s5 + $0x448] sm:$0xff]
        %v4897 = vld [vmem:[%s5 + $0x450] sm:$0xff]
        %v4898 = vld [vmem:[%s5 + $0x458] sm:$0xff]
        %v4899 = vld [vmem:[%s5 + $0x460] sm:$0xff]
        %v4900 = vld [vmem:[%s5 + $0x468] sm:$0xff]
        %v4901 = vld [vmem:[%s5 + $0x470] sm:$0xff]
        %v4902 = vld [vmem:[%s5 + $0x478] sm:$0xff]
        %v4903 = vld [vmem:[%s5 + $0x480] sm:$0xff]
        %v4904 = vld [vmem:[%s5 + $0x488] sm:$0xff]
        %v4905 = vld [vmem:[%s5 + $0x490] sm:$0xff]
        %v4906 = vld [vmem:[%s5 + $0x498] sm:$0xff]
        %v4907 = vld [vmem:[%s5 + $0x4a0] sm:$0xff]
        %v4908 = vld [vmem:[%s5 + $0x4a8] sm:$0xff]
        %v4909 = vld [vmem:[%s5 + $0x4b0] sm:$0xff]
        %v4910 = vld [vmem:[%s5 + $0x4b8] sm:$0xff]
        %v4911 = vld [vmem:[%s5 + $0x4c0] sm:$0xff]
        %v4912 = vld [vmem:[%s5 + $0x4c8] sm:$0xff]
        %v4913 = vld [vmem:[%s5 + $0x4d0] sm:$0xff]
        %v4914 = vld [vmem:[%s5 + $0x4d8] sm:$0xff]
        %v4915 = vld [vmem:[%s5 + $0x4e0] sm:$0xff]
        %v4916 = vld [vmem:[%s5 + $0x4e8] sm:$0xff]
        %v4917 = vld [vmem:[%s5 + $0x4f0] sm:$0xff]
        %v4918 = vld [vmem:[%s5 + $0x4f8] sm:$0xff]
        %v4919 = vld [vmem:[%s5 + $0x500] sm:$0xff]
        %v4920 = vld [vmem:[%s5 + $0x508] sm:$0xff]
        %v4921 = vld [vmem:[%s5 + $0x510] sm:$0xff]
        %v4922 = vld [vmem:[%s5 + $0x518] sm:$0xff]
        %v4923 = vld [vmem:[%s5 + $0x520] sm:$0xff]
        %v4924 = vld [vmem:[%s5 + $0x528] sm:$0xff]
        %v4925 = vld [vmem:[%s5 + $0x530] sm:$0xff]
        %v4926 = vld [vmem:[%s5 + $0x538] sm:$0xff]
        %v4927 = vld [vmem:[%s5 + $0x540] sm:$0xff]
        %v4928 = vld [vmem:[%s5 + $0x548] sm:$0xff]
        %v4929 = vld [vmem:[%s5 + $0x550] sm:$0xff]
        %v4930 = vld [vmem:[%s5 + $0x558] sm:$0xff]
        %v4931 = vld [vmem:[%s5 + $0x560] sm:$0xff]
        %v4932 = vld [vmem:[%s5 + $0x568] sm:$0xff]
        %v4933 = vld [vmem:[%s5 + $0x570] sm:$0xff]
        %v4934 = vld [vmem:[%s5 + $0x578] sm:$0xff]
        %v4935 = vld [vmem:[%s5 + $0x580] sm:$0xff]
        %v4936 = vld [vmem:[%s5 + $0x588] sm:$0xff]
        %v4937 = vld [vmem:[%s5 + $0x590] sm:$0xff]
        %v4938 = vld [vmem:[%s5 + $0x598] sm:$0xff]
        %v4939 = vld [vmem:[%s5 + $0x5a0] sm:$0xff]
        %v4940 = vld [vmem:[%s5 + $0x5a8] sm:$0xff]
        %v4941 = vld [vmem:[%s5 + $0x5b0] sm:$0xff]
        %v4942 = vld [vmem:[%s5 + $0x5b8] sm:$0xff]
        %v4943 = vld [vmem:[%s5 + $0x5c0] sm:$0xff]
        %v4944 = vld [vmem:[%s5 + $0x5c8] sm:$0xff]
        %v4945 = vld [vmem:[%s5 + $0x5d0] sm:$0xff]
        %v4946 = vld [vmem:[%s5 + $0x5d8] sm:$0xff]
        %v4947 = vld [vmem:[%s5 + $0x5e0] sm:$0xff]
        %v4948 = vld [vmem:[%s5 + $0x5e8] sm:$0xff]
        %v4949 = vld [vmem:[%s5 + $0x5f0] sm:$0xff]
        %v4950 = vld [vmem:[%s5 + $0x5f8] sm:$0xff]
        %v4951 = vld [vmem:[%s5 + $0x600] sm:$0xff]
        %v4952 = vld [vmem:[%s5 + $0x608] sm:$0xff]
        %v4953 = vld [vmem:[%s5 + $0x610] sm:$0xff]
        %v4954 = vld [vmem:[%s5 + $0x618] sm:$0xff]
        %v4955 = vld [vmem:[%s5 + $0x620] sm:$0xff]
        %v4956 = vld [vmem:[%s5 + $0x628] sm:$0xff]
        %v4957 = vld [vmem:[%s5 + $0x630] sm:$0xff]
        %v4958 = vld [vmem:[%s5 + $0x638] sm:$0xff]
        %v4959 = vld [vmem:[%s5 + $0x640] sm:$0xff]
        %v4960 = vld [vmem:[%s5 + $0x648] sm:$0xff]
        %v4961 = vld [vmem:[%s5 + $0x650] sm:$0xff]
        %v4962 = vld [vmem:[%s5 + $0x658] sm:$0xff]
        %v4963 = vld [vmem:[%s5 + $0x660] sm:$0xff]
        %v4964 = vld [vmem:[%s5 + $0x668] sm:$0xff]
        %v4965 = vld [vmem:[%s5 + $0x670] sm:$0xff]
        %v4966 = vld [vmem:[%s5 + $0x678] sm:$0xff]
        %v4967 = vld [vmem:[%s5 + $0x680] sm:$0xff]
        %v4968 = vld [vmem:[%s5 + $0x688] sm:$0xff]
        %v4969 = vld [vmem:[%s5 + $0x690] sm:$0xff]
        %v4970 = vld [vmem:[%s5 + $0x698] sm:$0xff]
        %v4971 = vld [vmem:[%s5 + $0x6a0] sm:$0xff]
        %v4972 = vld [vmem:[%s5 + $0x6a8] sm:$0xff]
        %v4973 = vld [vmem:[%s5 + $0x6b0] sm:$0xff]
        %v4974 = vld [vmem:[%s5 + $0x6b8] sm:$0xff]
        %v4975 = vld [vmem:[%s5 + $0x6c0] sm:$0xff]
        %v4976 = vld [vmem:[%s5 + $0x6c8] sm:$0xff]
        %v4977 = vld [vmem:[%s5 + $0x6d0] sm:$0xff]
        %v4978 = vld [vmem:[%s5 + $0x6d8] sm:$0xff]
        %v4979 = vld [vmem:[%s5 + $0x6e0] sm:$0xff]
        %v4980 = vld [vmem:[%s5 + $0x6e8] sm:$0xff]
        %v4981 = vld [vmem:[%s5 + $0x6f0] sm:$0xff]
        %v4982 = vld [vmem:[%s5 + $0x6f8] sm:$0xff]
        %v4983 = vld [vmem:[%s5 + $0x700] sm:$0xff]
        %v4984 = vld [vmem:[%s5 + $0x708] sm:$0xff]
        %v4985 = vld [vmem:[%s5 + $0x710] sm:$0xff]
        %v4986 = vld [vmem:[%s5 + $0x718] sm:$0xff]
        %v4987 = vld [vmem:[%s5 + $0x720] sm:$0xff]
        %v4988 = vld [vmem:[%s5 + $0x728] sm:$0xff]
        %v4989 = vld [vmem:[%s5 + $0x730] sm:$0xff]
        %v4990 = vld [vmem:[%s5 + $0x738] sm:$0xff]
        %v4991 = vld [vmem:[%s5 + $0x740] sm:$0xff]
        %v4992 = vld [vmem:[%s5 + $0x748] sm:$0xff]
        %v4993 = vld [vmem:[%s5 + $0x750] sm:$0xff]
        %v4994 = vld [vmem:[%s5 + $0x758] sm:$0xff]
        %v4995 = vld [vmem:[%s5 + $0x760] sm:$0xff]
        %v4996 = vld [vmem:[%s5 + $0x768] sm:$0xff]
        %v4997 = vld [vmem:[%s5 + $0x770] sm:$0xff]
        %v4998 = vld [vmem:[%s5 + $0x778] sm:$0xff]
        %v4999 = vld [vmem:[%s5 + $0x780] sm:$0xff]
        %v5000 = vld [vmem:[%s5 + $0x788] sm:$0xff]
        %v5001 = vld [vmem:[%s5 + $0x790] sm:$0xff]
        %v5002 = vld [vmem:[%s5 + $0x798] sm:$0xff]
        %v5003 = vld [vmem:[%s5 + $0x7a0] sm:$0xff]
        %v5004 = vld [vmem:[%s5 + $0x7a8] sm:$0xff]
        %v5005 = vld [vmem:[%s5 + $0x7b0] sm:$0xff]
        %v5006 = vld [vmem:[%s5 + $0x7b8] sm:$0xff]
        %v5007 = vld [vmem:[%s5 + $0x7c0] sm:$0xff]
        %v5008 = vld [vmem:[%s5 + $0x7c8] sm:$0xff]
        %v5009 = vld [vmem:[%s5 + $0x7d0] sm:$0xff]
        %v5010 = vld [vmem:[%s5 + $0x7d8] sm:$0xff]
        %v5011 = vld [vmem:[%s5 + $0x7e0] sm:$0xff]
        %v5012 = vld [vmem:[%s5 + $0x7e8] sm:$0xff]
        %v5013 = vld [vmem:[%s5 + $0x7f0] sm:$0xff]
        %v5014 = vld [vmem:[%s5 + $0x7f8] sm:$0xff]
        %v5015 = vld [vmem:[%s5 + $0x800] sm:$0xff]
        %v5016 = vld [vmem:[%s5 + $0x808] sm:$0xff]
        %v5017 = vld [vmem:[%s5 + $0x810] sm:$0xff]
        %v5018 = vld [vmem:[%s5 + $0x818] sm:$0xff]
        %v5019 = vld [vmem:[%s5 + $0x820] sm:$0xff]
        %v5020 = vld [vmem:[%s5 + $0x828] sm:$0xff]
        %v5021 = vld [vmem:[%s5 + $0x830] sm:$0xff]
        %v5022 = vld [vmem:[%s5 + $0x838] sm:$0xff]
        %v5023 = vld [vmem:[%s5 + $0x840] sm:$0xff]
        %v5024 = vld [vmem:[%s5 + $0x848] sm:$0xff]
        %v5025 = vld [vmem:[%s5 + $0x850] sm:$0xff]
        %v5026 = vld [vmem:[%s5 + $0x858] sm:$0xff]
        %v5027 = vld [vmem:[%s5 + $0x860] sm:$0xff]
        %v5028 = vld [vmem:[%s5 + $0x868] sm:$0xff]
        %v5029 = vld [vmem:[%s5 + $0x870] sm:$0xff]
        %v5030 = vld [vmem:[%s5 + $0x878] sm:$0xff]
        %v5031 = vld [vmem:[%s5 + $0x880] sm:$0xff]
        %v5032 = vld [vmem:[%s5 + $0x888] sm:$0xff]
        %v5033 = vld [vmem:[%s5 + $0x890] sm:$0xff]
        %v5034 = vld [vmem:[%s5 + $0x898] sm:$0xff]
        %v5035 = vld [vmem:[%s5 + $0x8a0] sm:$0xff]
        %v5036 = vld [vmem:[%s5 + $0x8a8] sm:$0xff]
        %v5037 = vld [vmem:[%s5 + $0x8b0] sm:$0xff]
        %v5038 = vld [vmem:[%s5 + $0x8b8] sm:$0xff]
        %v5039 = vld [vmem:[%s5 + $0x8c0] sm:$0xff]
        %v5040 = vld [vmem:[%s5 + $0x8c8] sm:$0xff]
        %v5041 = vld [vmem:[%s5 + $0x8d0] sm:$0xff]
        %v5042 = vld [vmem:[%s5 + $0x8d8] sm:$0xff]
        %v5043 = vld [vmem:[%s5 + $0x8e0] sm:$0xff]
        %v5044 = vld [vmem:[%s5 + $0x8e8] sm:$0xff]
        %v5045 = vld [vmem:[%s5 + $0x8f0] sm:$0xff]
        %v5046 = vld [vmem:[%s5 + $0x8f8] sm:$0xff]
        %v5047 = vld [vmem:[%s5 + $0x900] sm:$0xff]
        %v5048 = vld [vmem:[%s5 + $0x908] sm:$0xff]
        %v5049 = vld [vmem:[%s5 + $0x910] sm:$0xff]
        %v5050 = vld [vmem:[%s5 + $0x918] sm:$0xff]
        %v5051 = vld [vmem:[%s5 + $0x920] sm:$0xff]
        %v5052 = vld [vmem:[%s5 + $0x928] sm:$0xff]
        %v5053 = vld [vmem:[%s5 + $0x930] sm:$0xff]
        %v5054 = vld [vmem:[%s5 + $0x938] sm:$0xff]
        %v5055 = vld [vmem:[%s5 + $0x940] sm:$0xff]
        %v5056 = vld [vmem:[%s5 + $0x948] sm:$0xff]
        %v5057 = vld [vmem:[%s5 + $0x950] sm:$0xff]
        %v5058 = vld [vmem:[%s5 + $0x958] sm:$0xff]
        %v5059 = vld [vmem:[%s5 + $0x960] sm:$0xff]
        %v5060 = vld [vmem:[%s5 + $0x968] sm:$0xff]
        %v5061 = vld [vmem:[%s5 + $0x970] sm:$0xff]
        %v5062 = vld [vmem:[%s5 + $0x978] sm:$0xff]
        %v5063 = vld [vmem:[%s5 + $0x980] sm:$0xff]
        %v5064 = vld [vmem:[%s5 + $0x988] sm:$0xff]
        %v5065 = vld [vmem:[%s5 + $0x990] sm:$0xff]
        %v5066 = vld [vmem:[%s5 + $0x998] sm:$0xff]
        %v5067 = vld [vmem:[%s5 + $0x9a0] sm:$0xff]
        %v5068 = vld [vmem:[%s5 + $0x9a8] sm:$0xff]
        %v5069 = vld [vmem:[%s5 + $0x9b0] sm:$0xff]
        %v5070 = vld [vmem:[%s5 + $0x9b8] sm:$0xff]
        %v5071 = vld [vmem:[%s5 + $0x9c0] sm:$0xff]
        %v5072 = vld [vmem:[%s5 + $0x9c8] sm:$0xff]
        %v5073 = vld [vmem:[%s5 + $0x9d0] sm:$0xff]
        %v5074 = vld [vmem:[%s5 + $0x9d8] sm:$0xff]
        %v5075 = vld [vmem:[%s5 + $0x9e0] sm:$0xff]
        %v5076 = vld [vmem:[%s5 + $0x9e8] sm:$0xff]
        %v5077 = vld [vmem:[%s5 + $0x9f0] sm:$0xff]
        %v5078 = vld [vmem:[%s5 + $0x9f8] sm:$0xff]
        %v5079 = vld [vmem:[%s6] sm:$0xf]
        %v5400 = vunpack.c.l.b16 %v4759
        %v5401 = vunpack.c.h.b16 %v4759
        %v5402 = vunpack.c.l.b16 %v4760
        %v5403 = vunpack.c.h.b16 %v4760
        %v5404 = vunpack.c.l.b16 %v4761
        %v5405 = vunpack.c.h.b16 %v4761
        %v5406 = vunpack.c.l.b16 %v4762
        %v5407 = vunpack.c.h.b16 %v4762
        %v5408 = vunpack.c.l.b16 %v4763
        %v5409 = vunpack.c.h.b16 %v4763
        %v5410 = vunpack.c.l.b16 %v4764
        %v5411 = vunpack.c.h.b16 %v4764
        %v5412 = vunpack.c.l.b16 %v4765
        %v5413 = vunpack.c.h.b16 %v4765
        %v5414 = vunpack.c.l.b16 %v4766
        %v5415 = vunpack.c.h.b16 %v4766
        %v5416 = vunpack.c.l.b16 %v4767
        %v5417 = vunpack.c.h.b16 %v4767
        %v5418 = vunpack.c.l.b16 %v4768
        %v5419 = vunpack.c.h.b16 %v4768
        %v5420 = vunpack.c.l.b16 %v4769
        %v5421 = vunpack.c.h.b16 %v4769
        %v5422 = vunpack.c.l.b16 %v4770
        %v5423 = vunpack.c.h.b16 %v4770
        %v5424 = vunpack.c.l.b16 %v4771
        %v5425 = vunpack.c.h.b16 %v4771
        %v5426 = vunpack.c.l.b16 %v4772
        %v5427 = vunpack.c.h.b16 %v4772
        %v5428 = vunpack.c.l.b16 %v4773
        %v5429 = vunpack.c.h.b16 %v4773
        %v5430 = vunpack.c.l.b16 %v4774
        %v5431 = vunpack.c.h.b16 %v4774
        %v5432 = vunpack.c.l.b16 %v4775
        %v5433 = vunpack.c.h.b16 %v4775
        %v5434 = vunpack.c.l.b16 %v4776
        %v5435 = vunpack.c.h.b16 %v4776
        %v5436 = vunpack.c.l.b16 %v4777
        %v5437 = vunpack.c.h.b16 %v4777
        %v5438 = vunpack.c.l.b16 %v4778
        %v5439 = vunpack.c.h.b16 %v4778
        %v5440 = vunpack.c.l.b16 %v4779
        %v5441 = vunpack.c.h.b16 %v4779
        %v5442 = vunpack.c.l.b16 %v4780
        %v5443 = vunpack.c.h.b16 %v4780
        %v5444 = vunpack.c.l.b16 %v4781
        %v5445 = vunpack.c.h.b16 %v4781
        %v5446 = vunpack.c.l.b16 %v4782
        %v5447 = vunpack.c.h.b16 %v4782
        %v5448 = vunpack.c.l.b16 %v4783
        %v5449 = vunpack.c.h.b16 %v4783
        %v5450 = vunpack.c.l.b16 %v4784
        %v5451 = vunpack.c.h.b16 %v4784
        %v5452 = vunpack.c.l.b16 %v4785
        %v5453 = vunpack.c.h.b16 %v4785
        %v5454 = vunpack.c.l.b16 %v4786
        %v5455 = vunpack.c.h.b16 %v4786
        %v5456 = vunpack.c.l.b16 %v4787
        %v5457 = vunpack.c.h.b16 %v4787
        %v5458 = vunpack.c.l.b16 %v4788
        %v5459 = vunpack.c.h.b16 %v4788
        %v5460 = vunpack.c.l.b16 %v4789
        %v5461 = vunpack.c.h.b16 %v4789
        %v5462 = vunpack.c.l.b16 %v4790
        %v5463 = vunpack.c.h.b16 %v4790
        %v5464 = vunpack.c.l.b16 %v4791
        %v5465 = vunpack.c.h.b16 %v4791
        %v5466 = vunpack.c.l.b16 %v4792
        %v5467 = vunpack.c.h.b16 %v4792
        %v5468 = vunpack.c.l.b16 %v4793
        %v5469 = vunpack.c.h.b16 %v4793
        %v5470 = vunpack.c.l.b16 %v4794
        %v5471 = vunpack.c.h.b16 %v4794
        %v5472 = vunpack.c.l.b16 %v4795
        %v5473 = vunpack.c.h.b16 %v4795
        %v5474 = vunpack.c.l.b16 %v4796
        %v5475 = vunpack.c.h.b16 %v4796
        %v5476 = vunpack.c.l.b16 %v4797
        %v5477 = vunpack.c.h.b16 %v4797
        %v5478 = vunpack.c.l.b16 %v4798
        %v5479 = vunpack.c.h.b16 %v4798
        %v5480 = vunpack.c.l.b16 %v4799
        %v5481 = vunpack.c.h.b16 %v4799
        %v5482 = vunpack.c.l.b16 %v4800
        %v5483 = vunpack.c.h.b16 %v4800
        %v5484 = vunpack.c.l.b16 %v4801
        %v5485 = vunpack.c.h.b16 %v4801
        %v5486 = vunpack.c.l.b16 %v4802
        %v5487 = vunpack.c.h.b16 %v4802
        %v5488 = vunpack.c.l.b16 %v4803
        %v5489 = vunpack.c.h.b16 %v4803
        %v5490 = vunpack.c.l.b16 %v4804
        %v5491 = vunpack.c.h.b16 %v4804
        %v5492 = vunpack.c.l.b16 %v4805
        %v5493 = vunpack.c.h.b16 %v4805
        %v5494 = vunpack.c.l.b16 %v4806
        %v5495 = vunpack.c.h.b16 %v4806
        %v5496 = vunpack.c.l.b16 %v4807
        %v5497 = vunpack.c.h.b16 %v4807
        %v5498 = vunpack.c.l.b16 %v4808
        %v5499 = vunpack.c.h.b16 %v4808
        %v5500 = vunpack.c.l.b16 %v4809
        %v5501 = vunpack.c.h.b16 %v4809
        %v5502 = vunpack.c.l.b16 %v4810
        %v5503 = vunpack.c.h.b16 %v4810
        %v5504 = vunpack.c.l.b16 %v4811
        %v5505 = vunpack.c.h.b16 %v4811
        %v5506 = vunpack.c.l.b16 %v4812
        %v5507 = vunpack.c.h.b16 %v4812
        %v5508 = vunpack.c.l.b16 %v4813
        %v5509 = vunpack.c.h.b16 %v4813
        %v5510 = vunpack.c.l.b16 %v4814
        %v5511 = vunpack.c.h.b16 %v4814
        %v5512 = vunpack.c.l.b16 %v4815
        %v5513 = vunpack.c.h.b16 %v4815
        %v5514 = vunpack.c.l.b16 %v4816
        %v5515 = vunpack.c.h.b16 %v4816
        %v5516 = vunpack.c.l.b16 %v4817
        %v5517 = vunpack.c.h.b16 %v4817
        %v5518 = vunpack.c.l.b16 %v4818
        %v5519 = vunpack.c.h.b16 %v4818
        %v5520 = vunpack.c.l.b16 %v4819
        %v5521 = vunpack.c.h.b16 %v4819
        %v5522 = vunpack.c.l.b16 %v4820
        %v5523 = vunpack.c.h.b16 %v4820
        %v5524 = vunpack.c.l.b16 %v4821
        %v5525 = vunpack.c.h.b16 %v4821
        %v5526 = vunpack.c.l.b16 %v4822
        %v5527 = vunpack.c.h.b16 %v4822
        %v5528 = vunpack.c.l.b16 %v4823
        %v5529 = vunpack.c.h.b16 %v4823
        %v5530 = vunpack.c.l.b16 %v4824
        %v5531 = vunpack.c.h.b16 %v4824
        %v5532 = vunpack.c.l.b16 %v4825
        %v5533 = vunpack.c.h.b16 %v4825
        %v5534 = vunpack.c.l.b16 %v4826
        %v5535 = vunpack.c.h.b16 %v4826
        %v5536 = vunpack.c.l.b16 %v4827
        %v5537 = vunpack.c.h.b16 %v4827
        %v5538 = vunpack.c.l.b16 %v4828
        %v5539 = vunpack.c.h.b16 %v4828
        %v5540 = vunpack.c.l.b16 %v4829
        %v5541 = vunpack.c.h.b16 %v4829
        %v5542 = vunpack.c.l.b16 %v4830
        %v5543 = vunpack.c.h.b16 %v4830
        %v5544 = vunpack.c.l.b16 %v4831
        %v5545 = vunpack.c.h.b16 %v4831
        %v5546 = vunpack.c.l.b16 %v4832
        %v5547 = vunpack.c.h.b16 %v4832
        %v5548 = vunpack.c.l.b16 %v4833
        %v5549 = vunpack.c.h.b16 %v4833
        %v5550 = vunpack.c.l.b16 %v4834
        %v5551 = vunpack.c.h.b16 %v4834
        %v5552 = vunpack.c.l.b16 %v4835
        %v5553 = vunpack.c.h.b16 %v4835
        %v5554 = vunpack.c.l.b16 %v4836
        %v5555 = vunpack.c.h.b16 %v4836
        %v5556 = vunpack.c.l.b16 %v4837
        %v5557 = vunpack.c.h.b16 %v4837
        %v5558 = vunpack.c.l.b16 %v4838
        %v5559 = vunpack.c.h.b16 %v4838
        %v5560 = vunpack.c.l.b16 %v4839
        %v5561 = vunpack.c.h.b16 %v4839
        %v5562 = vunpack.c.l.b16 %v4840
        %v5563 = vunpack.c.h.b16 %v4840
        %v5564 = vunpack.c.l.b16 %v4841
        %v5565 = vunpack.c.h.b16 %v4841
        %v5566 = vunpack.c.l.b16 %v4842
        %v5567 = vunpack.c.h.b16 %v4842
        %v5568 = vunpack.c.l.b16 %v4843
        %v5569 = vunpack.c.h.b16 %v4843
        %v5570 = vunpack.c.l.b16 %v4844
        %v5571 = vunpack.c.h.b16 %v4844
        %v5572 = vunpack.c.l.b16 %v4845
        %v5573 = vunpack.c.h.b16 %v4845
        %v5574 = vunpack.c.l.b16 %v4846
        %v5575 = vunpack.c.h.b16 %v4846
        %v5576 = vunpack.c.l.b16 %v4847
        %v5577 = vunpack.c.h.b16 %v4847
        %v5578 = vunpack.c.l.b16 %v4848
        %v5579 = vunpack.c.h.b16 %v4848
        %v5580 = vunpack.c.l.b16 %v4849
        %v5581 = vunpack.c.h.b16 %v4849
        %v5582 = vunpack.c.l.b16 %v4850
        %v5583 = vunpack.c.h.b16 %v4850
        %v5584 = vunpack.c.l.b16 %v4851
        %v5585 = vunpack.c.h.b16 %v4851
        %v5586 = vunpack.c.l.b16 %v4852
        %v5587 = vunpack.c.h.b16 %v4852
        %v5588 = vunpack.c.l.b16 %v4853
        %v5589 = vunpack.c.h.b16 %v4853
        %v5590 = vunpack.c.l.b16 %v4854
        %v5591 = vunpack.c.h.b16 %v4854
        %v5592 = vunpack.c.l.b16 %v4855
        %v5593 = vunpack.c.h.b16 %v4855
        %v5594 = vunpack.c.l.b16 %v4856
        %v5595 = vunpack.c.h.b16 %v4856
        %v5596 = vunpack.c.l.b16 %v4857
        %v5597 = vunpack.c.h.b16 %v4857
        %v5598 = vunpack.c.l.b16 %v4858
        %v5599 = vunpack.c.h.b16 %v4858
        %v5600 = vunpack.c.l.b16 %v4859
        %v5601 = vunpack.c.h.b16 %v4859
        %v5602 = vunpack.c.l.b16 %v4860
        %v5603 = vunpack.c.h.b16 %v4860
        %v5604 = vunpack.c.l.b16 %v4861
        %v5605 = vunpack.c.h.b16 %v4861
        %v5606 = vunpack.c.l.b16 %v4862
        %v5607 = vunpack.c.h.b16 %v4862
        %v5608 = vunpack.c.l.b16 %v4863
        %v5609 = vunpack.c.h.b16 %v4863
        %v5610 = vunpack.c.l.b16 %v4864
        %v5611 = vunpack.c.h.b16 %v4864
        %v5612 = vunpack.c.l.b16 %v4865
        %v5613 = vunpack.c.h.b16 %v4865
        %v5614 = vunpack.c.l.b16 %v4866
        %v5615 = vunpack.c.h.b16 %v4866
        %v5616 = vunpack.c.l.b16 %v4867
        %v5617 = vunpack.c.h.b16 %v4867
        %v5618 = vunpack.c.l.b16 %v4868
        %v5619 = vunpack.c.h.b16 %v4868
        %v5620 = vunpack.c.l.b16 %v4869
        %v5621 = vunpack.c.h.b16 %v4869
        %v5622 = vunpack.c.l.b16 %v4870
        %v5623 = vunpack.c.h.b16 %v4870
        %v5624 = vunpack.c.l.b16 %v4871
        %v5625 = vunpack.c.h.b16 %v4871
        %v5626 = vunpack.c.l.b16 %v4872
        %v5627 = vunpack.c.h.b16 %v4872
        %v5628 = vunpack.c.l.b16 %v4873
        %v5629 = vunpack.c.h.b16 %v4873
        %v5630 = vunpack.c.l.b16 %v4874
        %v5631 = vunpack.c.h.b16 %v4874
        %v5632 = vunpack.c.l.b16 %v4875
        %v5633 = vunpack.c.h.b16 %v4875
        %v5634 = vunpack.c.l.b16 %v4876
        %v5635 = vunpack.c.h.b16 %v4876
        %v5636 = vunpack.c.l.b16 %v4877
        %v5637 = vunpack.c.h.b16 %v4877
        %v5638 = vunpack.c.l.b16 %v4878
        %v5639 = vunpack.c.h.b16 %v4878
        %v5640 = vunpack.c.l.b16 %v4879
        %v5641 = vunpack.c.h.b16 %v4879
        %v5642 = vunpack.c.l.b16 %v4880
        %v5643 = vunpack.c.h.b16 %v4880
        %v5644 = vunpack.c.l.b16 %v4881
        %v5645 = vunpack.c.h.b16 %v4881
        %v5646 = vunpack.c.l.b16 %v4882
        %v5647 = vunpack.c.h.b16 %v4882
        %v5648 = vunpack.c.l.b16 %v4883
        %v5649 = vunpack.c.h.b16 %v4883
        %v5650 = vunpack.c.l.b16 %v4884
        %v5651 = vunpack.c.h.b16 %v4884
        %v5652 = vunpack.c.l.b16 %v4885
        %v5653 = vunpack.c.h.b16 %v4885
        %v5654 = vunpack.c.l.b16 %v4886
        %v5655 = vunpack.c.h.b16 %v4886
        %v5656 = vunpack.c.l.b16 %v4887
        %v5657 = vunpack.c.h.b16 %v4887
        %v5658 = vunpack.c.l.b16 %v4888
        %v5659 = vunpack.c.h.b16 %v4888
        %v5660 = vunpack.c.l.b16 %v4889
        %v5661 = vunpack.c.h.b16 %v4889
        %v5662 = vunpack.c.l.b16 %v4890
        %v5663 = vunpack.c.h.b16 %v4890
        %v5664 = vunpack.c.l.b16 %v4891
        %v5665 = vunpack.c.h.b16 %v4891
        %v5666 = vunpack.c.l.b16 %v4892
        %v5667 = vunpack.c.h.b16 %v4892
        %v5668 = vunpack.c.l.b16 %v4893
        %v5669 = vunpack.c.h.b16 %v4893
        %v5670 = vunpack.c.l.b16 %v4894
        %v5671 = vunpack.c.h.b16 %v4894
        %v5672 = vunpack.c.l.b16 %v4895
        %v5673 = vunpack.c.h.b16 %v4895
        %v5674 = vunpack.c.l.b16 %v4896
        %v5675 = vunpack.c.h.b16 %v4896
        %v5676 = vunpack.c.l.b16 %v4897
        %v5677 = vunpack.c.h.b16 %v4897
        %v5678 = vunpack.c.l.b16 %v4898
        %v5679 = vunpack.c.h.b16 %v4898
        %v5680 = vunpack.c.l.b16 %v4899
        %v5681 = vunpack.c.h.b16 %v4899
        %v5682 = vunpack.c.l.b16 %v4900
        %v5683 = vunpack.c.h.b16 %v4900
        %v5684 = vunpack.c.l.b16 %v4901
        %v5685 = vunpack.c.h.b16 %v4901
        %v5686 = vunpack.c.l.b16 %v4902
        %v5687 = vunpack.c.h.b16 %v4902
        %v5688 = vunpack.c.l.b16 %v4903
        %v5689 = vunpack.c.h.b16 %v4903
        %v5690 = vunpack.c.l.b16 %v4904
        %v5691 = vunpack.c.h.b16 %v4904
        %v5692 = vunpack.c.l.b16 %v4905
        %v5693 = vunpack.c.h.b16 %v4905
        %v5694 = vunpack.c.l.b16 %v4906
        %v5695 = vunpack.c.h.b16 %v4906
        %v5696 = vunpack.c.l.b16 %v4907
        %v5697 = vunpack.c.h.b16 %v4907
        %v5698 = vunpack.c.l.b16 %v4908
        %v5699 = vunpack.c.h.b16 %v4908
        %v5700 = vunpack.c.l.b16 %v4909
        %v5701 = vunpack.c.h.b16 %v4909
        %v5702 = vunpack.c.l.b16 %v4910
        %v5703 = vunpack.c.h.b16 %v4910
        %v5704 = vunpack.c.l.b16 %v4911
        %v5705 = vunpack.c.h.b16 %v4911
        %v5706 = vunpack.c.l.b16 %v4912
        %v5707 = vunpack.c.h.b16 %v4912
        %v5708 = vunpack.c.l.b16 %v4913
        %v5709 = vunpack.c.h.b16 %v4913
        %v5710 = vunpack.c.l.b16 %v4914
        %v5711 = vunpack.c.h.b16 %v4914
        %v5712 = vunpack.c.l.b16 %v4915
        %v5713 = vunpack.c.h.b16 %v4915
        %v5714 = vunpack.c.l.b16 %v4916
        %v5715 = vunpack.c.h.b16 %v4916
        %v5716 = vunpack.c.l.b16 %v4917
        %v5717 = vunpack.c.h.b16 %v4917
        %v5718 = vunpack.c.l.b16 %v4918
        %v5719 = vunpack.c.h.b16 %v4918
        %v5720 = vunpack.c.l.b16 %v4919
        %v5721 = vunpack.c.h.b16 %v4919
        %v5722 = vunpack.c.l.b16 %v4920
        %v5723 = vunpack.c.h.b16 %v4920
        %v5724 = vunpack.c.l.b16 %v4921
        %v5725 = vunpack.c.h.b16 %v4921
        %v5726 = vunpack.c.l.b16 %v4922
        %v5727 = vunpack.c.h.b16 %v4922
        %v5728 = vunpack.c.l.b16 %v4923
        %v5729 = vunpack.c.h.b16 %v4923
        %v5730 = vunpack.c.l.b16 %v4924
        %v5731 = vunpack.c.h.b16 %v4924
        %v5732 = vunpack.c.l.b16 %v4925
        %v5733 = vunpack.c.h.b16 %v4925
        %v5734 = vunpack.c.l.b16 %v4926
        %v5735 = vunpack.c.h.b16 %v4926
        %v5736 = vunpack.c.l.b16 %v4927
        %v5737 = vunpack.c.h.b16 %v4927
        %v5738 = vunpack.c.l.b16 %v4928
        %v5739 = vunpack.c.h.b16 %v4928
        %v5740 = vunpack.c.l.b16 %v4929
        %v5741 = vunpack.c.h.b16 %v4929
        %v5742 = vunpack.c.l.b16 %v4930
        %v5743 = vunpack.c.h.b16 %v4930
        %v5744 = vunpack.c.l.b16 %v4931
        %v5745 = vunpack.c.h.b16 %v4931
        %v5746 = vunpack.c.l.b16 %v4932
        %v5747 = vunpack.c.h.b16 %v4932
        %v5748 = vunpack.c.l.b16 %v4933
        %v5749 = vunpack.c.h.b16 %v4933
        %v5750 = vunpack.c.l.b16 %v4934
        %v5751 = vunpack.c.h.b16 %v4934
        %v5752 = vunpack.c.l.b16 %v4935
        %v5753 = vunpack.c.h.b16 %v4935
        %v5754 = vunpack.c.l.b16 %v4936
        %v5755 = vunpack.c.h.b16 %v4936
        %v5756 = vunpack.c.l.b16 %v4937
        %v5757 = vunpack.c.h.b16 %v4937
        %v5758 = vunpack.c.l.b16 %v4938
        %v5759 = vunpack.c.h.b16 %v4938
        %v5760 = vunpack.c.l.b16 %v4939
        %v5761 = vunpack.c.h.b16 %v4939
        %v5762 = vunpack.c.l.b16 %v4940
        %v5763 = vunpack.c.h.b16 %v4940
        %v5764 = vunpack.c.l.b16 %v4941
        %v5765 = vunpack.c.h.b16 %v4941
        %v5766 = vunpack.c.l.b16 %v4942
        %v5767 = vunpack.c.h.b16 %v4942
        %v5768 = vunpack.c.l.b16 %v4943
        %v5769 = vunpack.c.h.b16 %v4943
        %v5770 = vunpack.c.l.b16 %v4944
        %v5771 = vunpack.c.h.b16 %v4944
        %v5772 = vunpack.c.l.b16 %v4945
        %v5773 = vunpack.c.h.b16 %v4945
        %v5774 = vunpack.c.l.b16 %v4946
        %v5775 = vunpack.c.h.b16 %v4946
        %v5776 = vunpack.c.l.b16 %v4947
        %v5777 = vunpack.c.h.b16 %v4947
        %v5778 = vunpack.c.l.b16 %v4948
        %v5779 = vunpack.c.h.b16 %v4948
        %v5780 = vunpack.c.l.b16 %v4949
        %v5781 = vunpack.c.h.b16 %v4949
        %v5782 = vunpack.c.l.b16 %v4950
        %v5783 = vunpack.c.h.b16 %v4950
        %v5784 = vunpack.c.l.b16 %v4951
        %v5785 = vunpack.c.h.b16 %v4951
        %v5786 = vunpack.c.l.b16 %v4952
        %v5787 = vunpack.c.h.b16 %v4952
        %v5788 = vunpack.c.l.b16 %v4953
        %v5789 = vunpack.c.h.b16 %v4953
        %v5790 = vunpack.c.l.b16 %v4954
        %v5791 = vunpack.c.h.b16 %v4954
        %v5792 = vunpack.c.l.b16 %v4955
        %v5793 = vunpack.c.h.b16 %v4955
        %v5794 = vunpack.c.l.b16 %v4956
        %v5795 = vunpack.c.h.b16 %v4956
        %v5796 = vunpack.c.l.b16 %v4957
        %v5797 = vunpack.c.h.b16 %v4957
        %v5798 = vunpack.c.l.b16 %v4958
        %v5799 = vunpack.c.h.b16 %v4958
        %v5800 = vunpack.c.l.b16 %v4959
        %v5801 = vunpack.c.h.b16 %v4959
        %v5802 = vunpack.c.l.b16 %v4960
        %v5803 = vunpack.c.h.b16 %v4960
        %v5804 = vunpack.c.l.b16 %v4961
        %v5805 = vunpack.c.h.b16 %v4961
        %v5806 = vunpack.c.l.b16 %v4962
        %v5807 = vunpack.c.h.b16 %v4962
        %v5808 = vunpack.c.l.b16 %v4963
        %v5809 = vunpack.c.h.b16 %v4963
        %v5810 = vunpack.c.l.b16 %v4964
        %v5811 = vunpack.c.h.b16 %v4964
        %v5812 = vunpack.c.l.b16 %v4965
        %v5813 = vunpack.c.h.b16 %v4965
        %v5814 = vunpack.c.l.b16 %v4966
        %v5815 = vunpack.c.h.b16 %v4966
        %v5816 = vunpack.c.l.b16 %v4967
        %v5817 = vunpack.c.h.b16 %v4967
        %v5818 = vunpack.c.l.b16 %v4968
        %v5819 = vunpack.c.h.b16 %v4968
        %v5820 = vunpack.c.l.b16 %v4969
        %v5821 = vunpack.c.h.b16 %v4969
        %v5822 = vunpack.c.l.b16 %v4970
        %v5823 = vunpack.c.h.b16 %v4970
        %v5824 = vunpack.c.l.b16 %v4971
        %v5825 = vunpack.c.h.b16 %v4971
        %v5826 = vunpack.c.l.b16 %v4972
        %v5827 = vunpack.c.h.b16 %v4972
        %v5828 = vunpack.c.l.b16 %v4973
        %v5829 = vunpack.c.h.b16 %v4973
        %v5830 = vunpack.c.l.b16 %v4974
        %v5831 = vunpack.c.h.b16 %v4974
        %v5832 = vunpack.c.l.b16 %v4975
        %v5833 = vunpack.c.h.b16 %v4975
        %v5834 = vunpack.c.l.b16 %v4976
        %v5835 = vunpack.c.h.b16 %v4976
        %v5836 = vunpack.c.l.b16 %v4977
        %v5837 = vunpack.c.h.b16 %v4977
        %v5838 = vunpack.c.l.b16 %v4978
        %v5839 = vunpack.c.h.b16 %v4978
        %v5840 = vunpack.c.l.b16 %v4979
        %v5841 = vunpack.c.h.b16 %v4979
        %v5842 = vunpack.c.l.b16 %v4980
        %v5843 = vunpack.c.h.b16 %v4980
        %v5844 = vunpack.c.l.b16 %v4981
        %v5845 = vunpack.c.h.b16 %v4981
        %v5846 = vunpack.c.l.b16 %v4982
        %v5847 = vunpack.c.h.b16 %v4982
        %v5848 = vunpack.c.l.b16 %v4983
        %v5849 = vunpack.c.h.b16 %v4983
        %v5850 = vunpack.c.l.b16 %v4984
        %v5851 = vunpack.c.h.b16 %v4984
        %v5852 = vunpack.c.l.b16 %v4985
        %v5853 = vunpack.c.h.b16 %v4985
        %v5854 = vunpack.c.l.b16 %v4986
        %v5855 = vunpack.c.h.b16 %v4986
        %v5856 = vunpack.c.l.b16 %v4987
        %v5857 = vunpack.c.h.b16 %v4987
        %v5858 = vunpack.c.l.b16 %v4988
        %v5859 = vunpack.c.h.b16 %v4988
        %v5860 = vunpack.c.l.b16 %v4989
        %v5861 = vunpack.c.h.b16 %v4989
        %v5862 = vunpack.c.l.b16 %v4990
        %v5863 = vunpack.c.h.b16 %v4990
        %v5864 = vunpack.c.l.b16 %v4991
        %v5865 = vunpack.c.h.b16 %v4991
        %v5866 = vunpack.c.l.b16 %v4992
        %v5867 = vunpack.c.h.b16 %v4992
        %v5868 = vunpack.c.l.b16 %v4993
        %v5869 = vunpack.c.h.b16 %v4993
        %v5870 = vunpack.c.l.b16 %v4994
        %v5871 = vunpack.c.h.b16 %v4994
        %v5872 = vunpack.c.l.b16 %v4995
        %v5873 = vunpack.c.h.b16 %v4995
        %v5874 = vunpack.c.l.b16 %v4996
        %v5875 = vunpack.c.h.b16 %v4996
        %v5876 = vunpack.c.l.b16 %v4997
        %v5877 = vunpack.c.h.b16 %v4997
        %v5878 = vunpack.c.l.b16 %v4998
        %v5879 = vunpack.c.h.b16 %v4998
        %v5880 = vunpack.c.l.b16 %v4999
        %v5881 = vunpack.c.h.b16 %v4999
        %v5882 = vunpack.c.l.b16 %v5000
        %v5883 = vunpack.c.h.b16 %v5000
        %v5884 = vunpack.c.l.b16 %v5001
        %v5885 = vunpack.c.h.b16 %v5001
        %v5886 = vunpack.c.l.b16 %v5002
        %v5887 = vunpack.c.h.b16 %v5002
        %v5888 = vunpack.c.l.b16 %v5003
        %v5889 = vunpack.c.h.b16 %v5003
        %v5890 = vunpack.c.l.b16 %v5004
        %v5891 = vunpack.c.h.b16 %v5004
        %v5892 = vunpack.c.l.b16 %v5005
        %v5893 = vunpack.c.h.b16 %v5005
        %v5894 = vunpack.c.l.b16 %v5006
        %v5895 = vunpack.c.h.b16 %v5006
        %v5896 = vunpack.c.l.b16 %v5007
        %v5897 = vunpack.c.h.b16 %v5007
        %v5898 = vunpack.c.l.b16 %v5008
        %v5899 = vunpack.c.h.b16 %v5008
        %v5900 = vunpack.c.l.b16 %v5009
        %v5901 = vunpack.c.h.b16 %v5009
        %v5902 = vunpack.c.l.b16 %v5010
        %v5903 = vunpack.c.h.b16 %v5010
        %v5904 = vunpack.c.l.b16 %v5011
        %v5905 = vunpack.c.h.b16 %v5011
        %v5906 = vunpack.c.l.b16 %v5012
        %v5907 = vunpack.c.h.b16 %v5012
        %v5908 = vunpack.c.l.b16 %v5013
        %v5909 = vunpack.c.h.b16 %v5013
        %v5910 = vunpack.c.l.b16 %v5014
        %v5911 = vunpack.c.h.b16 %v5014
        %v5912 = vunpack.c.l.b16 %v5015
        %v5913 = vunpack.c.h.b16 %v5015
        %v5914 = vunpack.c.l.b16 %v5016
        %v5915 = vunpack.c.h.b16 %v5016
        %v5916 = vunpack.c.l.b16 %v5017
        %v5917 = vunpack.c.h.b16 %v5017
        %v5918 = vunpack.c.l.b16 %v5018
        %v5919 = vunpack.c.h.b16 %v5018
        %v5920 = vunpack.c.l.b16 %v5019
        %v5921 = vunpack.c.h.b16 %v5019
        %v5922 = vunpack.c.l.b16 %v5020
        %v5923 = vunpack.c.h.b16 %v5020
        %v5924 = vunpack.c.l.b16 %v5021
        %v5925 = vunpack.c.h.b16 %v5021
        %v5926 = vunpack.c.l.b16 %v5022
        %v5927 = vunpack.c.h.b16 %v5022
        %v5928 = vunpack.c.l.b16 %v5023
        %v5929 = vunpack.c.h.b16 %v5023
        %v5930 = vunpack.c.l.b16 %v5024
        %v5931 = vunpack.c.h.b16 %v5024
        %v5932 = vunpack.c.l.b16 %v5025
        %v5933 = vunpack.c.h.b16 %v5025
        %v5934 = vunpack.c.l.b16 %v5026
        %v5935 = vunpack.c.h.b16 %v5026
        %v5936 = vunpack.c.l.b16 %v5027
        %v5937 = vunpack.c.h.b16 %v5027
        %v5938 = vunpack.c.l.b16 %v5028
        %v5939 = vunpack.c.h.b16 %v5028
        %v5940 = vunpack.c.l.b16 %v5029
        %v5941 = vunpack.c.h.b16 %v5029
        %v5942 = vunpack.c.l.b16 %v5030
        %v5943 = vunpack.c.h.b16 %v5030
        %v5944 = vunpack.c.l.b16 %v5031
        %v5945 = vunpack.c.h.b16 %v5031
        %v5946 = vunpack.c.l.b16 %v5032
        %v5947 = vunpack.c.h.b16 %v5032
        %v5948 = vunpack.c.l.b16 %v5033
        %v5949 = vunpack.c.h.b16 %v5033
        %v5950 = vunpack.c.l.b16 %v5034
        %v5951 = vunpack.c.h.b16 %v5034
        %v5952 = vunpack.c.l.b16 %v5035
        %v5953 = vunpack.c.h.b16 %v5035
        %v5954 = vunpack.c.l.b16 %v5036
        %v5955 = vunpack.c.h.b16 %v5036
        %v5956 = vunpack.c.l.b16 %v5037
        %v5957 = vunpack.c.h.b16 %v5037
        %v5958 = vunpack.c.l.b16 %v5038
        %v5959 = vunpack.c.h.b16 %v5038
        %v5960 = vunpack.c.l.b16 %v5039
        %v5961 = vunpack.c.h.b16 %v5039
        %v5962 = vunpack.c.l.b16 %v5040
        %v5963 = vunpack.c.h.b16 %v5040
        %v5964 = vunpack.c.l.b16 %v5041
        %v5965 = vunpack.c.h.b16 %v5041
        %v5966 = vunpack.c.l.b16 %v5042
        %v5967 = vunpack.c.h.b16 %v5042
        %v5968 = vunpack.c.l.b16 %v5043
        %v5969 = vunpack.c.h.b16 %v5043
        %v5970 = vunpack.c.l.b16 %v5044
        %v5971 = vunpack.c.h.b16 %v5044
        %v5972 = vunpack.c.l.b16 %v5045
        %v5973 = vunpack.c.h.b16 %v5045
        %v5974 = vunpack.c.l.b16 %v5046
        %v5975 = vunpack.c.h.b16 %v5046
        %v5976 = vunpack.c.l.b16 %v5047
        %v5977 = vunpack.c.h.b16 %v5047
        %v5978 = vunpack.c.l.b16 %v5048
        %v5979 = vunpack.c.h.b16 %v5048
        %v5980 = vunpack.c.l.b16 %v5049
        %v5981 = vunpack.c.h.b16 %v5049
        %v5982 = vunpack.c.l.b16 %v5050
        %v5983 = vunpack.c.h.b16 %v5050
        %v5984 = vunpack.c.l.b16 %v5051
        %v5985 = vunpack.c.h.b16 %v5051
        %v5986 = vunpack.c.l.b16 %v5052
        %v5987 = vunpack.c.h.b16 %v5052
        %v5988 = vunpack.c.l.b16 %v5053
        %v5989 = vunpack.c.h.b16 %v5053
        %v5990 = vunpack.c.l.b16 %v5054
        %v5991 = vunpack.c.h.b16 %v5054
        %v5992 = vunpack.c.l.b16 %v5055
        %v5993 = vunpack.c.h.b16 %v5055
        %v5994 = vunpack.c.l.b16 %v5056
        %v5995 = vunpack.c.h.b16 %v5056
        %v5996 = vunpack.c.l.b16 %v5057
        %v5997 = vunpack.c.h.b16 %v5057
        %v5998 = vunpack.c.l.b16 %v5058
        %v5999 = vunpack.c.h.b16 %v5058
        %v6000 = vunpack.c.l.b16 %v5059
        %v6001 = vunpack.c.h.b16 %v5059
        %v6002 = vunpack.c.l.b16 %v5060
        %v6003 = vunpack.c.h.b16 %v5060
        %v6004 = vunpack.c.l.b16 %v5061
        %v6005 = vunpack.c.h.b16 %v5061
        %v6006 = vunpack.c.l.b16 %v5062
        %v6007 = vunpack.c.h.b16 %v5062
        %v6008 = vunpack.c.l.b16 %v5063
        %v6009 = vunpack.c.h.b16 %v5063
        %v6010 = vunpack.c.l.b16 %v5064
        %v6011 = vunpack.c.h.b16 %v5064
        %v6012 = vunpack.c.l.b16 %v5065
        %v6013 = vunpack.c.h.b16 %v5065
        %v6014 = vunpack.c.l.b16 %v5066
        %v6015 = vunpack.c.h.b16 %v5066
        %v6016 = vunpack.c.l.b16 %v5067
        %v6017 = vunpack.c.h.b16 %v5067
        %v6018 = vunpack.c.l.b16 %v5068
        %v6019 = vunpack.c.h.b16 %v5068
        %v6020 = vunpack.c.l.b16 %v5069
        %v6021 = vunpack.c.h.b16 %v5069
        %v6022 = vunpack.c.l.b16 %v5070
        %v6023 = vunpack.c.h.b16 %v5070
        %v6024 = vunpack.c.l.b16 %v5071
        %v6025 = vunpack.c.h.b16 %v5071
        %v6026 = vunpack.c.l.b16 %v5072
        %v6027 = vunpack.c.h.b16 %v5072
        %v6028 = vunpack.c.l.b16 %v5073
        %v6029 = vunpack.c.h.b16 %v5073
        %v6030 = vunpack.c.l.b16 %v5074
        %v6031 = vunpack.c.h.b16 %v5074
        %v6032 = vunpack.c.l.b16 %v5075
        %v6033 = vunpack.c.h.b16 %v5075
        %v6034 = vunpack.c.l.b16 %v5076
        %v6035 = vunpack.c.h.b16 %v5076
        %v6036 = vunpack.c.l.b16 %v5077
        %v6037 = vunpack.c.h.b16 %v5077
        %v6038 = vunpack.c.l.b16 %v5078
        %v6039 = vunpack.c.h.b16 %v5078
        %v6040 = vpack.c.b16 %v5404, %v5400
        %v6041 = vpack.c.b16 %v5405, %v5401
        %v6042 = vpack.c.b16 %v5406, %v5402
        %v6043 = vpack.c.b16 %v5407, %v5403
        %v6044 = vpack.c.b16 %v5412, %v5408
        %v6045 = vpack.c.b16 %v5413, %v5409
        %v6046 = vpack.c.b16 %v5414, %v5410
        %v6047 = vpack.c.b16 %v5415, %v5411
        %v6048 = vpack.c.b16 %v5420, %v5416
        %v6049 = vpack.c.b16 %v5421, %v5417
        %v6050 = vpack.c.b16 %v5422, %v5418
        %v6051 = vpack.c.b16 %v5423, %v5419
        %v6052 = vpack.c.b16 %v5428, %v5424
        %v6053 = vpack.c.b16 %v5429, %v5425
        %v6054 = vpack.c.b16 %v5430, %v5426
        %v6055 = vpack.c.b16 %v5431, %v5427
        %v6056 = vpack.c.b16 %v5436, %v5432
        %v6057 = vpack.c.b16 %v5437, %v5433
        %v6058 = vpack.c.b16 %v5438, %v5434
        %v6059 = vpack.c.b16 %v5439, %v5435
        %v6060 = vpack.c.b16 %v5444, %v5440
        %v6061 = vpack.c.b16 %v5445, %v5441
        %v6062 = vpack.c.b16 %v5446, %v5442
        %v6063 = vpack.c.b16 %v5447, %v5443
        %v6064 = vpack.c.b16 %v5452, %v5448
        %v6065 = vpack.c.b16 %v5453, %v5449
        %v6066 = vpack.c.b16 %v5454, %v5450
        %v6067 = vpack.c.b16 %v5455, %v5451
        %v6068 = vpack.c.b16 %v5460, %v5456
        %v6069 = vpack.c.b16 %v5461, %v5457
        %v6070 = vpack.c.b16 %v5462, %v5458
        %v6071 = vpack.c.b16 %v5463, %v5459
        %v6072 = vpack.c.b16 %v5468, %v5464
        %v6073 = vpack.c.b16 %v5469, %v5465
        %v6074 = vpack.c.b16 %v5470, %v5466
        %v6075 = vpack.c.b16 %v5471, %v5467
        %v6076 = vpack.c.b16 %v5476, %v5472
        %v6077 = vpack.c.b16 %v5477, %v5473
        %v6078 = vpack.c.b16 %v5478, %v5474
        %v6079 = vpack.c.b16 %v5479, %v5475
        %v6080 = vpack.c.b16 %v5484, %v5480
        %v6081 = vpack.c.b16 %v5485, %v5481
        %v6082 = vpack.c.b16 %v5486, %v5482
        %v6083 = vpack.c.b16 %v5487, %v5483
        %v6084 = vpack.c.b16 %v5492, %v5488
        %v6085 = vpack.c.b16 %v5493, %v5489
        %v6086 = vpack.c.b16 %v5494, %v5490
        %v6087 = vpack.c.b16 %v5495, %v5491
        %v6088 = vpack.c.b16 %v5500, %v5496
        %v6089 = vpack.c.b16 %v5501, %v5497
        %v6090 = vpack.c.b16 %v5502, %v5498
        %v6091 = vpack.c.b16 %v5503, %v5499
        %v6092 = vpack.c.b16 %v5508, %v5504
        %v6093 = vpack.c.b16 %v5509, %v5505
        %v6094 = vpack.c.b16 %v5510, %v5506
        %v6095 = vpack.c.b16 %v5511, %v5507
        %v6096 = vpack.c.b16 %v5516, %v5512
        %v6097 = vpack.c.b16 %v5517, %v5513
        %v6098 = vpack.c.b16 %v5518, %v5514
        %v6099 = vpack.c.b16 %v5519, %v5515
        %v6100 = vpack.c.b16 %v5524, %v5520
        %v6101 = vpack.c.b16 %v5525, %v5521
        %v6102 = vpack.c.b16 %v5526, %v5522
        %v6103 = vpack.c.b16 %v5527, %v5523
        %v6104 = vpack.c.b16 %v5532, %v5528
        %v6105 = vpack.c.b16 %v5533, %v5529
        %v6106 = vpack.c.b16 %v5534, %v5530
        %v6107 = vpack.c.b16 %v5535, %v5531
        %v6108 = vpack.c.b16 %v5540, %v5536
        %v6109 = vpack.c.b16 %v5541, %v5537
        %v6110 = vpack.c.b16 %v5542, %v5538
        %v6111 = vpack.c.b16 %v5543, %v5539
        %v6112 = vpack.c.b16 %v5548, %v5544
        %v6113 = vpack.c.b16 %v5549, %v5545
        %v6114 = vpack.c.b16 %v5550, %v5546
        %v6115 = vpack.c.b16 %v5551, %v5547
        %v6116 = vpack.c.b16 %v5556, %v5552
        %v6117 = vpack.c.b16 %v5557, %v5553
        %v6118 = vpack.c.b16 %v5558, %v5554
        %v6119 = vpack.c.b16 %v5559, %v5555
        %v6120 = vpack.c.b16 %v5564, %v5560
        %v6121 = vpack.c.b16 %v5565, %v5561
        %v6122 = vpack.c.b16 %v5566, %v5562
        %v6123 = vpack.c.b16 %v5567, %v5563
        %v6124 = vpack.c.b16 %v5572, %v5568
        %v6125 = vpack.c.b16 %v5573, %v5569
        %v6126 = vpack.c.b16 %v5574, %v5570
        %v6127 = vpack.c.b16 %v5575, %v5571
        %v6128 = vpack.c.b16 %v5580, %v5576
        %v6129 = vpack.c.b16 %v5581, %v5577
        %v6130 = vpack.c.b16 %v5582, %v5578
        %v6131 = vpack.c.b16 %v5583, %v5579
        %v6132 = vpack.c.b16 %v5588, %v5584
        %v6133 = vpack.c.b16 %v5589, %v5585
        %v6134 = vpack.c.b16 %v5590, %v5586
        %v6135 = vpack.c.b16 %v5591, %v5587
        %v6136 = vpack.c.b16 %v5596, %v5592
        %v6137 = vpack.c.b16 %v5597, %v5593
        %v6138 = vpack.c.b16 %v5598, %v5594
        %v6139 = vpack.c.b16 %v5599, %v5595
        %v6140 = vpack.c.b16 %v5604, %v5600
        %v6141 = vpack.c.b16 %v5605, %v5601
        %v6142 = vpack.c.b16 %v5606, %v5602
        %v6143 = vpack.c.b16 %v5607, %v5603
        %v6144 = vpack.c.b16 %v5612, %v5608
        %v6145 = vpack.c.b16 %v5613, %v5609
        %v6146 = vpack.c.b16 %v5614, %v5610
        %v6147 = vpack.c.b16 %v5615, %v5611
        %v6148 = vpack.c.b16 %v5620, %v5616
        %v6149 = vpack.c.b16 %v5621, %v5617
        %v6150 = vpack.c.b16 %v5622, %v5618
        %v6151 = vpack.c.b16 %v5623, %v5619
        %v6152 = vpack.c.b16 %v5628, %v5624
        %v6153 = vpack.c.b16 %v5629, %v5625
        %v6154 = vpack.c.b16 %v5630, %v5626
        %v6155 = vpack.c.b16 %v5631, %v5627
        %v6156 = vpack.c.b16 %v5636, %v5632
        %v6157 = vpack.c.b16 %v5637, %v5633
        %v6158 = vpack.c.b16 %v5638, %v5634
        %v6159 = vpack.c.b16 %v5639, %v5635
        %v6160 = vpack.c.b16 %v5644, %v5640
        %v6161 = vpack.c.b16 %v5645, %v5641
        %v6162 = vpack.c.b16 %v5646, %v5642
        %v6163 = vpack.c.b16 %v5647, %v5643
        %v6164 = vpack.c.b16 %v5652, %v5648
        %v6165 = vpack.c.b16 %v5653, %v5649
        %v6166 = vpack.c.b16 %v5654, %v5650
        %v6167 = vpack.c.b16 %v5655, %v5651
        %v6168 = vpack.c.b16 %v5660, %v5656
        %v6169 = vpack.c.b16 %v5661, %v5657
        %v6170 = vpack.c.b16 %v5662, %v5658
        %v6171 = vpack.c.b16 %v5663, %v5659
        %v6172 = vpack.c.b16 %v5668, %v5664
        %v6173 = vpack.c.b16 %v5669, %v5665
        %v6174 = vpack.c.b16 %v5670, %v5666
        %v6175 = vpack.c.b16 %v5671, %v5667
        %v6176 = vpack.c.b16 %v5676, %v5672
        %v6177 = vpack.c.b16 %v5677, %v5673
        %v6178 = vpack.c.b16 %v5678, %v5674
        %v6179 = vpack.c.b16 %v5679, %v5675
        %v6180 = vpack.c.b16 %v5684, %v5680
        %v6181 = vpack.c.b16 %v5685, %v5681
        %v6182 = vpack.c.b16 %v5686, %v5682
        %v6183 = vpack.c.b16 %v5687, %v5683
        %v6184 = vpack.c.b16 %v5692, %v5688
        %v6185 = vpack.c.b16 %v5693, %v5689
        %v6186 = vpack.c.b16 %v5694, %v5690
        %v6187 = vpack.c.b16 %v5695, %v5691
        %v6188 = vpack.c.b16 %v5700, %v5696
        %v6189 = vpack.c.b16 %v5701, %v5697
        %v6190 = vpack.c.b16 %v5702, %v5698
        %v6191 = vpack.c.b16 %v5703, %v5699
        %v6192 = vpack.c.b16 %v5708, %v5704
        %v6193 = vpack.c.b16 %v5709, %v5705
        %v6194 = vpack.c.b16 %v5710, %v5706
        %v6195 = vpack.c.b16 %v5711, %v5707
        %v6196 = vpack.c.b16 %v5716, %v5712
        %v6197 = vpack.c.b16 %v5717, %v5713
        %v6198 = vpack.c.b16 %v5718, %v5714
        %v6199 = vpack.c.b16 %v5719, %v5715
        %v6200 = vpack.c.b16 %v5724, %v5720
        %v6201 = vpack.c.b16 %v5725, %v5721
        %v6202 = vpack.c.b16 %v5726, %v5722
        %v6203 = vpack.c.b16 %v5727, %v5723
        %v6204 = vpack.c.b16 %v5732, %v5728
        %v6205 = vpack.c.b16 %v5733, %v5729
        %v6206 = vpack.c.b16 %v5734, %v5730
        %v6207 = vpack.c.b16 %v5735, %v5731
        %v6208 = vpack.c.b16 %v5740, %v5736
        %v6209 = vpack.c.b16 %v5741, %v5737
        %v6210 = vpack.c.b16 %v5742, %v5738
        %v6211 = vpack.c.b16 %v5743, %v5739
        %v6212 = vpack.c.b16 %v5748, %v5744
        %v6213 = vpack.c.b16 %v5749, %v5745
        %v6214 = vpack.c.b16 %v5750, %v5746
        %v6215 = vpack.c.b16 %v5751, %v5747
        %v6216 = vpack.c.b16 %v5756, %v5752
        %v6217 = vpack.c.b16 %v5757, %v5753
        %v6218 = vpack.c.b16 %v5758, %v5754
        %v6219 = vpack.c.b16 %v5759, %v5755
        %v6220 = vpack.c.b16 %v5764, %v5760
        %v6221 = vpack.c.b16 %v5765, %v5761
        %v6222 = vpack.c.b16 %v5766, %v5762
        %v6223 = vpack.c.b16 %v5767, %v5763
        %v6224 = vpack.c.b16 %v5772, %v5768
        %v6225 = vpack.c.b16 %v5773, %v5769
        %v6226 = vpack.c.b16 %v5774, %v5770
        %v6227 = vpack.c.b16 %v5775, %v5771
        %v6228 = vpack.c.b16 %v5780, %v5776
        %v6229 = vpack.c.b16 %v5781, %v5777
        %v6230 = vpack.c.b16 %v5782, %v5778
        %v6231 = vpack.c.b16 %v5783, %v5779
        %v6232 = vpack.c.b16 %v5788, %v5784
        %v6233 = vpack.c.b16 %v5789, %v5785
        %v6234 = vpack.c.b16 %v5790, %v5786
        %v6235 = vpack.c.b16 %v5791, %v5787
        %v6236 = vpack.c.b16 %v5796, %v5792
        %v6237 = vpack.c.b16 %v5797, %v5793
        %v6238 = vpack.c.b16 %v5798, %v5794
        %v6239 = vpack.c.b16 %v5799, %v5795
        %v6240 = vpack.c.b16 %v5804, %v5800
        %v6241 = vpack.c.b16 %v5805, %v5801
        %v6242 = vpack.c.b16 %v5806, %v5802
        %v6243 = vpack.c.b16 %v5807, %v5803
        %v6244 = vpack.c.b16 %v5812, %v5808
        %v6245 = vpack.c.b16 %v5813, %v5809
        %v6246 = vpack.c.b16 %v5814, %v5810
        %v6247 = vpack.c.b16 %v5815, %v5811
        %v6248 = vpack.c.b16 %v5820, %v5816
        %v6249 = vpack.c.b16 %v5821, %v5817
        %v6250 = vpack.c.b16 %v5822, %v5818
        %v6251 = vpack.c.b16 %v5823, %v5819
        %v6252 = vpack.c.b16 %v5828, %v5824
        %v6253 = vpack.c.b16 %v5829, %v5825
        %v6254 = vpack.c.b16 %v5830, %v5826
        %v6255 = vpack.c.b16 %v5831, %v5827
        %v6256 = vpack.c.b16 %v5836, %v5832
        %v6257 = vpack.c.b16 %v5837, %v5833
        %v6258 = vpack.c.b16 %v5838, %v5834
        %v6259 = vpack.c.b16 %v5839, %v5835
        %v6260 = vpack.c.b16 %v5844, %v5840
        %v6261 = vpack.c.b16 %v5845, %v5841
        %v6262 = vpack.c.b16 %v5846, %v5842
        %v6263 = vpack.c.b16 %v5847, %v5843
        %v6264 = vpack.c.b16 %v5852, %v5848
        %v6265 = vpack.c.b16 %v5853, %v5849
        %v6266 = vpack.c.b16 %v5854, %v5850
        %v6267 = vpack.c.b16 %v5855, %v5851
        %v6268 = vpack.c.b16 %v5860, %v5856
        %v6269 = vpack.c.b16 %v5861, %v5857
        %v6270 = vpack.c.b16 %v5862, %v5858
        %v6271 = vpack.c.b16 %v5863, %v5859
        %v6272 = vpack.c.b16 %v5868, %v5864
        %v6273 = vpack.c.b16 %v5869, %v5865
        %v6274 = vpack.c.b16 %v5870, %v5866
        %v6275 = vpack.c.b16 %v5871, %v5867
        %v6276 = vpack.c.b16 %v5876, %v5872
        %v6277 = vpack.c.b16 %v5877, %v5873
        %v6278 = vpack.c.b16 %v5878, %v5874
        %v6279 = vpack.c.b16 %v5879, %v5875
        %v6280 = vpack.c.b16 %v5884, %v5880
        %v6281 = vpack.c.b16 %v5885, %v5881
        %v6282 = vpack.c.b16 %v5886, %v5882
        %v6283 = vpack.c.b16 %v5887, %v5883
        %v6284 = vpack.c.b16 %v5892, %v5888
        %v6285 = vpack.c.b16 %v5893, %v5889
        %v6286 = vpack.c.b16 %v5894, %v5890
        %v6287 = vpack.c.b16 %v5895, %v5891
        %v6288 = vpack.c.b16 %v5900, %v5896
        %v6289 = vpack.c.b16 %v5901, %v5897
        %v6290 = vpack.c.b16 %v5902, %v5898
        %v6291 = vpack.c.b16 %v5903, %v5899
        %v6292 = vpack.c.b16 %v5908, %v5904
        %v6293 = vpack.c.b16 %v5909, %v5905
        %v6294 = vpack.c.b16 %v5910, %v5906
        %v6295 = vpack.c.b16 %v5911, %v5907
        %v6296 = vpack.c.b16 %v5916, %v5912
        %v6297 = vpack.c.b16 %v5917, %v5913
        %v6298 = vpack.c.b16 %v5918, %v5914
        %v6299 = vpack.c.b16 %v5919, %v5915
        %v6300 = vpack.c.b16 %v5924, %v5920
        %v6301 = vpack.c.b16 %v5925, %v5921
        %v6302 = vpack.c.b16 %v5926, %v5922
        %v6303 = vpack.c.b16 %v5927, %v5923
        %v6304 = vpack.c.b16 %v5932, %v5928
        %v6305 = vpack.c.b16 %v5933, %v5929
        %v6306 = vpack.c.b16 %v5934, %v5930
        %v6307 = vpack.c.b16 %v5935, %v5931
        %v6308 = vpack.c.b16 %v5940, %v5936
        %v6309 = vpack.c.b16 %v5941, %v5937
        %v6310 = vpack.c.b16 %v5942, %v5938
        %v6311 = vpack.c.b16 %v5943, %v5939
        %v6312 = vpack.c.b16 %v5948, %v5944
        %v6313 = vpack.c.b16 %v5949, %v5945
        %v6314 = vpack.c.b16 %v5950, %v5946
        %v6315 = vpack.c.b16 %v5951, %v5947
        %v6316 = vpack.c.b16 %v5956, %v5952
        %v6317 = vpack.c.b16 %v5957, %v5953
        %v6318 = vpack.c.b16 %v5958, %v5954
        %v6319 = vpack.c.b16 %v5959, %v5955
        %v6320 = vpack.c.b16 %v5964, %v5960
        %v6321 = vpack.c.b16 %v5965, %v5961
        %v6322 = vpack.c.b16 %v5966, %v5962
        %v6323 = vpack.c.b16 %v5967, %v5963
        %v6324 = vpack.c.b16 %v5972, %v5968
        %v6325 = vpack.c.b16 %v5973, %v5969
        %v6326 = vpack.c.b16 %v5974, %v5970
        %v6327 = vpack.c.b16 %v5975, %v5971
        %v6328 = vpack.c.b16 %v5980, %v5976
        %v6329 = vpack.c.b16 %v5981, %v5977
        %v6330 = vpack.c.b16 %v5982, %v5978
        %v6331 = vpack.c.b16 %v5983, %v5979
        %v6332 = vpack.c.b16 %v5988, %v5984
        %v6333 = vpack.c.b16 %v5989, %v5985
        %v6334 = vpack.c.b16 %v5990, %v5986
        %v6335 = vpack.c.b16 %v5991, %v5987
        %v6336 = vpack.c.b16 %v5996, %v5992
        %v6337 = vpack.c.b16 %v5997, %v5993
        %v6338 = vpack.c.b16 %v5998, %v5994
        %v6339 = vpack.c.b16 %v5999, %v5995
        %v6340 = vpack.c.b16 %v6004, %v6000
        %v6341 = vpack.c.b16 %v6005, %v6001
        %v6342 = vpack.c.b16 %v6006, %v6002
        %v6343 = vpack.c.b16 %v6007, %v6003
        %v6344 = vpack.c.b16 %v6012, %v6008
        %v6345 = vpack.c.b16 %v6013, %v6009
        %v6346 = vpack.c.b16 %v6014, %v6010
        %v6347 = vpack.c.b16 %v6015, %v6011
        %v6348 = vpack.c.b16 %v6020, %v6016
        %v6349 = vpack.c.b16 %v6021, %v6017
        %v6350 = vpack.c.b16 %v6022, %v6018
        %v6351 = vpack.c.b16 %v6023, %v6019
        %v6352 = vpack.c.b16 %v6028, %v6024
        %v6353 = vpack.c.b16 %v6029, %v6025
        %v6354 = vpack.c.b16 %v6030, %v6026
        %v6355 = vpack.c.b16 %v6031, %v6027
        %v6356 = vpack.c.b16 %v6036, %v6032
        %v6357 = vpack.c.b16 %v6037, %v6033
        %v6358 = vpack.c.b16 %v6038, %v6034
        %v6359 = vpack.c.b16 %v6039, %v6035
        %v6681 = vlaneseq
        %v6682 = vshrl.u32 %v6681, 7
        %v6683 = vsub.s32 0, %v6682
        %v6684 = vrot.slane %v5079, %v6683
        %v6685 = vlaneseq
        %v6686 = vshrl.u32 %v6685, 7
        %v6687 = vsub.s32 1, %v6686
        %v6688 = vrot.slane %v5079, %v6687
        %v6689 = vlaneseq
        %v6690 = vshrl.u32 %v6689, 7
        %v6691 = vsub.s32 2, %v6690
        %v6692 = vrot.slane %v5079, %v6691
        %v6693 = vlaneseq
        %v6694 = vshrl.u32 %v6693, 7
        %v6695 = vsub.s32 3, %v6694
        %v6696 = vrot.slane %v5079, %v6695
        %6701 = vmatprep.subr.bf16.mxu0 %v6041
        %6702 = vmatpush1.bf16.msra.mxu0 %v6040
        %6703 = vmatprep.subr.bf16.mxu0 %v6045
        %6704 = vmatpush1.bf16.msra.mxu0 %v6044
        %6705 = vmatprep.subr.bf16.mxu0 %v6049
        %6706 = vmatpush1.bf16.msra.mxu0 %v6048
        %6707 = vmatprep.subr.bf16.mxu0 %v6053
        %6708 = vmatpush1.bf16.msra.mxu0 %v6052
        %6709 = vmatprep.subr.bf16.mxu0 %v6057
        %6710 = vmatpush1.bf16.msra.mxu0 %v6056
        %6711 = vmatprep.subr.bf16.mxu0 %v6061
        %6712 = vmatpush1.bf16.msra.mxu0 %v6060
        %6713 = vmatprep.subr.bf16.mxu0 %v6065
        %6714 = vmatpush1.bf16.msra.mxu0 %v6064
        %6715 = vmatprep.subr.bf16.mxu0 %v6069
        %6716 = vmatpush1.bf16.msra.mxu0 %v6068
        %6717 = vmatprep.subr.bf16.mxu0 %v6073
        %6718 = vmatpush1.bf16.msra.mxu0 %v6072
        %6719 = vmatprep.subr.bf16.mxu0 %v6077
        %6720 = vmatpush1.bf16.msra.mxu0 %v6076
        %6721 = vmatprep.subr.bf16.mxu0 %v6081
        %6722 = vmatpush1.bf16.msra.mxu0 %v6080
        %6723 = vmatprep.subr.bf16.mxu0 %v6085
        %6724 = vmatpush1.bf16.msra.mxu0 %v6084
        %6725 = vmatprep.subr.bf16.mxu0 %v6089
        %6726 = vmatpush1.bf16.msra.mxu0 %v6088
        %6727 = vmatprep.subr.bf16.mxu0 %v6093
        %6728 = vmatpush1.bf16.msra.mxu0 %v6092
        %6729 = vmatprep.subr.bf16.mxu0 %v6097
        %6730 = vmatpush1.bf16.msra.mxu0 %v6096
        %6731 = vmatprep.subr.bf16.mxu0 %v6101
        %6732 = vmatpush1.bf16.msra.mxu0 %v6100
        %6733 = vmatprep.mubr.bf16.mxu0 %v4750
        %6734 = vmatmul.mubr.bf16.gmra.mrb[0].mxu0 %v4749
        %v6735 = vpop.f32.mrb[0].mxu0
        %v6736 = vadd.f32 %v6684, %v6735
        %v6737 = vpop.f32.mrb[0].mxu0
        %v6738 = vadd.f32 %v6688, %v6737
        %v6739 = vpop.f32.mrb[0].mxu0
        %v6740 = vpop.f32.mrb[0].mxu0
        %6741 = vdwg.mxu0
        %6742 = vmatprep.subr.bf16.mxu0 %v6105
        %6743 = vmatpush1.bf16.msra.mxu0 %v6104
        %6744 = vmatprep.subr.bf16.mxu0 %v6109
        %6745 = vmatpush1.bf16.msra.mxu0 %v6108
        %6746 = vmatprep.subr.bf16.mxu0 %v6113
        %6747 = vmatpush1.bf16.msra.mxu0 %v6112
        %6748 = vmatprep.subr.bf16.mxu0 %v6117
        %6749 = vmatpush1.bf16.msra.mxu0 %v6116
        %6750 = vmatprep.subr.bf16.mxu0 %v6121
        %6751 = vmatpush1.bf16.msra.mxu0 %v6120
        %6752 = vmatprep.subr.bf16.mxu0 %v6125
        %6753 = vmatpush1.bf16.msra.mxu0 %v6124
        %6754 = vmatprep.subr.bf16.mxu0 %v6129
        %6755 = vmatpush1.bf16.msra.mxu0 %v6128
        %6756 = vmatprep.subr.bf16.mxu0 %v6133
        %6757 = vmatpush1.bf16.msra.mxu0 %v6132
        %6758 = vmatprep.subr.bf16.mxu0 %v6137
        %6759 = vmatpush1.bf16.msra.mxu0 %v6136
        %6760 = vmatprep.subr.bf16.mxu0 %v6141
        %6761 = vmatpush1.bf16.msra.mxu0 %v6140
        %6762 = vmatprep.subr.bf16.mxu0 %v6145
        %6763 = vmatpush1.bf16.msra.mxu0 %v6144
        %6764 = vmatprep.subr.bf16.mxu0 %v6149
        %6765 = vmatpush1.bf16.msra.mxu0 %v6148
        %6766 = vmatprep.subr.bf16.mxu0 %v6153
        %6767 = vmatpush1.bf16.msra.mxu0 %v6152
        %6768 = vmatprep.subr.bf16.mxu0 %v6157
        %6769 = vmatpush1.bf16.msra.mxu0 %v6156
        %6770 = vmatprep.subr.bf16.mxu0 %v6161
        %6771 = vmatpush1.bf16.msra.mxu0 %v6160
        %6772 = vmatprep.subr.bf16.mxu0 %v6165
        %6773 = vmatpush1.bf16.msra.mxu0 %v6164
        %6774 = vmatprep.mubr.bf16.mxu0 %v4752
        %6775 = vmatmul.mubr.bf16.gmra.mrb[0].mxu0 %v4751
        %v6776 = vpop.f32.mrb[0].mxu0
        %v6777 = vadd.f32 %v6736, %v6776
        %v6778 = vpop.f32.mrb[0].mxu0
        %v6779 = vadd.f32 %v6738, %v6778
        %v6780 = vpop.f32.mrb[0].mxu0
        %v6781 = vpop.f32.mrb[0].mxu0
        %6782 = vdwg.mxu0
        %6783 = vmatprep.subr.bf16.mxu0 %v6169
        %6784 = vmatpush1.bf16.msra.mxu0 %v6168
        %6785 = vmatprep.subr.bf16.mxu0 %v6173
        %6786 = vmatpush1.bf16.msra.mxu0 %v6172
        %6787 = vmatprep.subr.bf16.mxu0 %v6177
        %6788 = vmatpush1.bf16.msra.mxu0 %v6176
        %6789 = vmatprep.subr.bf16.mxu0 %v6181
        %6790 = vmatpush1.bf16.msra.mxu0 %v6180
        %6791 = vmatprep.subr.bf16.mxu0 %v6185
        %6792 = vmatpush1.bf16.msra.mxu0 %v6184
        %6793 = vmatprep.subr.bf16.mxu0 %v6189
        %6794 = vmatpush1.bf16.msra.mxu0 %v6188
        %6795 = vmatprep.subr.bf16.mxu0 %v6193
        %6796 = vmatpush1.bf16.msra.mxu0 %v6192
        %6797 = vmatprep.subr.bf16.mxu0 %v6197
        %6798 = vmatpush1.bf16.msra.mxu0 %v6196
        %6799 = vmatprep.subr.bf16.mxu0 %v6201
        %6800 = vmatpush1.bf16.msra.mxu0 %v6200
        %6801 = vmatprep.subr.bf16.mxu0 %v6205
        %6802 = vmatpush1.bf16.msra.mxu0 %v6204
        %6803 = vmatprep.subr.bf16.mxu0 %v6209
        %6804 = vmatpush1.bf16.msra.mxu0 %v6208
        %6805 = vmatprep.subr.bf16.mxu0 %v6213
        %6806 = vmatpush1.bf16.msra.mxu0 %v6212
        %6807 = vmatprep.subr.bf16.mxu0 %v6217
        %6808 = vmatpush1.bf16.msra.mxu0 %v6216
        %6809 = vmatprep.subr.bf16.mxu0 %v6221
        %6810 = vmatpush1.bf16.msra.mxu0 %v6220
        %6811 = vmatprep.subr.bf16.mxu0 %v6225
        %6812 = vmatpush1.bf16.msra.mxu0 %v6224
        %6813 = vmatprep.subr.bf16.mxu0 %v6229
        %6814 = vmatpush1.bf16.msra.mxu0 %v6228
        %6815 = vmatprep.mubr.bf16.mxu0 %v4754
        %6816 = vmatmul.mubr.bf16.gmra.mrb[0].mxu0 %v4753
        %v6817 = vpop.f32.mrb[0].mxu0
        %v6818 = vadd.f32 %v6777, %v6817
        %v6819 = vpop.f32.mrb[0].mxu0
        %v6820 = vadd.f32 %v6779, %v6819
        %v6821 = vpop.f32.mrb[0].mxu0
        %v6822 = vpop.f32.mrb[0].mxu0
        %6823 = vdwg.mxu0
        %6824 = vmatprep.subr.bf16.mxu0 %v6233
        %6825 = vmatpush1.bf16.msra.mxu0 %v6232
        %6826 = vmatprep.subr.bf16.mxu0 %v6237
        %6827 = vmatpush1.bf16.msra.mxu0 %v6236
        %6828 = vmatprep.subr.bf16.mxu0 %v6241
        %6829 = vmatpush1.bf16.msra.mxu0 %v6240
        %6830 = vmatprep.subr.bf16.mxu0 %v6245
        %6831 = vmatpush1.bf16.msra.mxu0 %v6244
        %6832 = vmatprep.subr.bf16.mxu0 %v6249
        %6833 = vmatpush1.bf16.msra.mxu0 %v6248
        %6834 = vmatprep.subr.bf16.mxu0 %v6253
        %6835 = vmatpush1.bf16.msra.mxu0 %v6252
        %6836 = vmatprep.subr.bf16.mxu0 %v6257
        %6837 = vmatpush1.bf16.msra.mxu0 %v6256
        %6838 = vmatprep.subr.bf16.mxu0 %v6261
        %6839 = vmatpush1.bf16.msra.mxu0 %v6260
        %6840 = vmatprep.subr.bf16.mxu0 %v6265
        %6841 = vmatpush1.bf16.msra.mxu0 %v6264
        %6842 = vmatprep.subr.bf16.mxu0 %v6269
        %6843 = vmatpush1.bf16.msra.mxu0 %v6268
        %6844 = vmatprep.subr.bf16.mxu0 %v6273
        %6845 = vmatpush1.bf16.msra.mxu0 %v6272
        %6846 = vmatprep.subr.bf16.mxu0 %v6277
        %6847 = vmatpush1.bf16.msra.mxu0 %v6276
        %6848 = vmatprep.subr.bf16.mxu0 %v6281
        %6849 = vmatpush1.bf16.msra.mxu0 %v6280
        %6850 = vmatprep.subr.bf16.mxu0 %v6285
        %6851 = vmatpush1.bf16.msra.mxu0 %v6284
        %6852 = vmatprep.subr.bf16.mxu0 %v6289
        %6853 = vmatpush1.bf16.msra.mxu0 %v6288
        %6854 = vmatprep.subr.bf16.mxu0 %v6293
        %6855 = vmatpush1.bf16.msra.mxu0 %v6292
        %6856 = vmatprep.mubr.bf16.mxu0 %v4756
        %6857 = vmatmul.mubr.bf16.gmra.mrb[0].mxu0 %v4755
        %v6858 = vpop.f32.mrb[0].mxu0
        %v6859 = vadd.f32 %v6818, %v6858
        %v6860 = vpop.f32.mrb[0].mxu0
        %v6861 = vadd.f32 %v6820, %v6860
        %v6862 = vpop.f32.mrb[0].mxu0
        %v6863 = vpop.f32.mrb[0].mxu0
        %6864 = vdwg.mxu0
        %6865 = vmatprep.subr.bf16.mxu0 %v6297
        %6866 = vmatpush1.bf16.msra.mxu0 %v6296
        %6867 = vmatprep.subr.bf16.mxu0 %v6301
        %6868 = vmatpush1.bf16.msra.mxu0 %v6300
        %6869 = vmatprep.subr.bf16.mxu0 %v6305
        %6870 = vmatpush1.bf16.msra.mxu0 %v6304
        %6871 = vmatprep.subr.bf16.mxu0 %v6309
        %6872 = vmatpush1.bf16.msra.mxu0 %v6308
        %6873 = vmatprep.subr.bf16.mxu0 %v6313
        %6874 = vmatpush1.bf16.msra.mxu0 %v6312
        %6875 = vmatprep.subr.bf16.mxu0 %v6317
        %6876 = vmatpush1.bf16.msra.mxu0 %v6316
        %6877 = vmatprep.subr.bf16.mxu0 %v6321
        %6878 = vmatpush1.bf16.msra.mxu0 %v6320
        %6879 = vmatprep.subr.bf16.mxu0 %v6325
        %6880 = vmatpush1.bf16.msra.mxu0 %v6324
        %6881 = vmatprep.subr.bf16.mxu0 %v6329
        %6882 = vmatpush1.bf16.msra.mxu0 %v6328
        %6883 = vmatprep.subr.bf16.mxu0 %v6333
        %6884 = vmatpush1.bf16.msra.mxu0 %v6332
        %6885 = vmatprep.subr.bf16.mxu0 %v6337
        %6886 = vmatpush1.bf16.msra.mxu0 %v6336
        %6887 = vmatprep.subr.bf16.mxu0 %v6341
        %6888 = vmatpush1.bf16.msra.mxu0 %v6340
        %6889 = vmatprep.subr.bf16.mxu0 %v6345
        %6890 = vmatpush1.bf16.msra.mxu0 %v6344
        %6891 = vmatprep.subr.bf16.mxu0 %v6349
        %6892 = vmatpush1.bf16.msra.mxu0 %v6348
        %6893 = vmatprep.subr.bf16.mxu0 %v6353
        %6894 = vmatpush1.bf16.msra.mxu0 %v6352
        %6895 = vmatprep.subr.bf16.mxu0 %v6357
        %6896 = vmatpush1.bf16.msra.mxu0 %v6356
        %6897 = vmatprep.mubr.bf16.mxu0 %v4758
        %6898 = vmatmul.mubr.bf16.gmra.mrb[0].mxu0 %v4757
        %v6899 = vpop.f32.mrb[0].mxu0
        %v6900 = vadd.f32 %v6859, %v6899
        %v6901 = vpop.f32.mrb[0].mxu0
        %v6902 = vadd.f32 %v6861, %v6901
        %v6903 = vpop.f32.mrb[0].mxu0
        %v6904 = vpop.f32.mrb[0].mxu0
        %6905 = vdwg.mxu0
        %6906 = vmatprep.subr.bf16.mxu0 %v6043
        %6907 = vmatpush1.bf16.msra.mxu0 %v6042
        %6908 = vmatprep.subr.bf16.mxu0 %v6047
        %6909 = vmatpush1.bf16.msra.mxu0 %v6046
        %6910 = vmatprep.subr.bf16.mxu0 %v6051
        %6911 = vmatpush1.bf16.msra.mxu0 %v6050
        %6912 = vmatprep.subr.bf16.mxu0 %v6055
        %6913 = vmatpush1.bf16.msra.mxu0 %v6054
        %6914 = vmatprep.subr.bf16.mxu0 %v6059
        %6915 = vmatpush1.bf16.msra.mxu0 %v6058
        %6916 = vmatprep.subr.bf16.mxu0 %v6063
        %6917 = vmatpush1.bf16.msra.mxu0 %v6062
        %6918 = vmatprep.subr.bf16.mxu0 %v6067
        %6919 = vmatpush1.bf16.msra.mxu0 %v6066
        %6920 = vmatprep.subr.bf16.mxu0 %v6071
        %6921 = vmatpush1.bf16.msra.mxu0 %v6070
        %6922 = vmatprep.subr.bf16.mxu0 %v6075
        %6923 = vmatpush1.bf16.msra.mxu0 %v6074
        %6924 = vmatprep.subr.bf16.mxu0 %v6079
        %6925 = vmatpush1.bf16.msra.mxu0 %v6078
        %6926 = vmatprep.subr.bf16.mxu0 %v6083
        %6927 = vmatpush1.bf16.msra.mxu0 %v6082
        %6928 = vmatprep.subr.bf16.mxu0 %v6087
        %6929 = vmatpush1.bf16.msra.mxu0 %v6086
        %6930 = vmatprep.subr.bf16.mxu0 %v6091
        %6931 = vmatpush1.bf16.msra.mxu0 %v6090
        %6932 = vmatprep.subr.bf16.mxu0 %v6095
        %6933 = vmatpush1.bf16.msra.mxu0 %v6094
        %6934 = vmatprep.subr.bf16.mxu0 %v6099
        %6935 = vmatpush1.bf16.msra.mxu0 %v6098
        %6936 = vmatprep.subr.bf16.mxu0 %v6103
        %6937 = vmatpush1.bf16.msra.mxu0 %v6102
        %6938 = vmatprep.mubr.bf16.mxu0 %v4750
        %6939 = vmatmul.mubr.bf16.gmra.mrb[0].mxu0 %v4749
        %v6940 = vpop.f32.mrb[0].mxu0
        %v6941 = vadd.f32 %v6692, %v6940
        %v6942 = vpop.f32.mrb[0].mxu0
        %v6943 = vadd.f32 %v6696, %v6942
        %v6944 = vpop.f32.mrb[0].mxu0
        %v6945 = vpop.f32.mrb[0].mxu0
        %6946 = vdwg.mxu0
        %6947 = vmatprep.subr.bf16.mxu0 %v6107
        %6948 = vmatpush1.bf16.msra.mxu0 %v6106
        %6949 = vmatprep.subr.bf16.mxu0 %v6111
        %6950 = vmatpush1.bf16.msra.mxu0 %v6110
        %6951 = vmatprep.subr.bf16.mxu0 %v6115
        %6952 = vmatpush1.bf16.msra.mxu0 %v6114
        %6953 = vmatprep.subr.bf16.mxu0 %v6119
        %6954 = vmatpush1.bf16.msra.mxu0 %v6118
        %6955 = vmatprep.subr.bf16.mxu0 %v6123
        %6956 = vmatpush1.bf16.msra.mxu0 %v6122
        %6957 = vmatprep.subr.bf16.mxu0 %v6127
        %6958 = vmatpush1.bf16.msra.mxu0 %v6126
        %6959 = vmatprep.subr.bf16.mxu0 %v6131
        %6960 = vmatpush1.bf16.msra.mxu0 %v6130
        %6961 = vmatprep.subr.bf16.mxu0 %v6135
        %6962 = vmatpush1.bf16.msra.mxu0 %v6134
        %6963 = vmatprep.subr.bf16.mxu0 %v6139
        %6964 = vmatpush1.bf16.msra.mxu0 %v6138
        %6965 = vmatprep.subr.bf16.mxu0 %v6143
        %6966 = vmatpush1.bf16.msra.mxu0 %v6142
        %6967 = vmatprep.subr.bf16.mxu0 %v6147
        %6968 = vmatpush1.bf16.msra.mxu0 %v6146
        %6969 = vmatprep.subr.bf16.mxu0 %v6151
        %6970 = vmatpush1.bf16.msra.mxu0 %v6150
        %6971 = vmatprep.subr.bf16.mxu0 %v6155
        %6972 = vmatpush1.bf16.msra.mxu0 %v6154
        %6973 = vmatprep.subr.bf16.mxu0 %v6159
        %6974 = vmatpush1.bf16.msra.mxu0 %v6158
        %6975 = vmatprep.subr.bf16.mxu0 %v6163
        %6976 = vmatpush1.bf16.msra.mxu0 %v6162
        %6977 = vmatprep.subr.bf16.mxu0 %v6167
        %6978 = vmatpush1.bf16.msra.mxu0 %v6166
        %6979 = vmatprep.mubr.bf16.mxu0 %v4752
        %6980 = vmatmul.mubr.bf16.gmra.mrb[0].mxu0 %v4751
        %v6981 = vpop.f32.mrb[0].mxu0
        %v6982 = vadd.f32 %v6941, %v6981
        %v6983 = vpop.f32.mrb[0].mxu0
        %v6984 = vadd.f32 %v6943, %v6983
        %v6985 = vpop.f32.mrb[0].mxu0
        %v6986 = vpop.f32.mrb[0].mxu0
        %6987 = vdwg.mxu0
        %6988 = vmatprep.subr.bf16.mxu0 %v6171
        %6989 = vmatpush1.bf16.msra.mxu0 %v6170
        %6990 = vmatprep.subr.bf16.mxu0 %v6175
        %6991 = vmatpush1.bf16.msra.mxu0 %v6174
        %6992 = vmatprep.subr.bf16.mxu0 %v6179
        %6993 = vmatpush1.bf16.msra.mxu0 %v6178
        %6994 = vmatprep.subr.bf16.mxu0 %v6183
        %6995 = vmatpush1.bf16.msra.mxu0 %v6182
        %6996 = vmatprep.subr.bf16.mxu0 %v6187
        %6997 = vmatpush1.bf16.msra.mxu0 %v6186
        %6998 = vmatprep.subr.bf16.mxu0 %v6191
        %6999 = vmatpush1.bf16.msra.mxu0 %v6190
        %7000 = vmatprep.subr.bf16.mxu0 %v6195
        %7001 = vmatpush1.bf16.msra.mxu0 %v6194
        %7002 = vmatprep.subr.bf16.mxu0 %v6199
        %7003 = vmatpush1.bf16.msra.mxu0 %v6198
        %7004 = vmatprep.subr.bf16.mxu0 %v6203
        %7005 = vmatpush1.bf16.msra.mxu0 %v6202
        %7006 = vmatprep.subr.bf16.mxu0 %v6207
        %7007 = vmatpush1.bf16.msra.mxu0 %v6206
        %7008 = vmatprep.subr.bf16.mxu0 %v6211
        %7009 = vmatpush1.bf16.msra.mxu0 %v6210
        %7010 = vmatprep.subr.bf16.mxu0 %v6215
        %7011 = vmatpush1.bf16.msra.mxu0 %v6214
        %7012 = vmatprep.subr.bf16.mxu0 %v6219
        %7013 = vmatpush1.bf16.msra.mxu0 %v6218
        %7014 = vmatprep.subr.bf16.mxu0 %v6223
        %7015 = vmatpush1.bf16.msra.mxu0 %v6222
        %7016 = vmatprep.subr.bf16.mxu0 %v6227
        %7017 = vmatpush1.bf16.msra.mxu0 %v6226
        %7018 = vmatprep.subr.bf16.mxu0 %v6231
        %7019 = vmatpush1.bf16.msra.mxu0 %v6230
        %7020 = vmatprep.mubr.bf16.mxu0 %v4754
        %7021 = vmatmul.mubr.bf16.gmra.mrb[0].mxu0 %v4753
        %v7022 = vpop.f32.mrb[0].mxu0
        %v7023 = vadd.f32 %v6982, %v7022
        %v7024 = vpop.f32.mrb[0].mxu0
        %v7025 = vadd.f32 %v6984, %v7024
        %v7026 = vpop.f32.mrb[0].mxu0
        %v7027 = vpop.f32.mrb[0].mxu0
        %7028 = vdwg.mxu0
        %7029 = vmatprep.subr.bf16.mxu0 %v6235
        %7030 = vmatpush1.bf16.msra.mxu0 %v6234
        %7031 = vmatprep.subr.bf16.mxu0 %v6239
        %7032 = vmatpush1.bf16.msra.mxu0 %v6238
        %7033 = vmatprep.subr.bf16.mxu0 %v6243
        %7034 = vmatpush1.bf16.msra.mxu0 %v6242
        %7035 = vmatprep.subr.bf16.mxu0 %v6247
        %7036 = vmatpush1.bf16.msra.mxu0 %v6246
        %7037 = vmatprep.subr.bf16.mxu0 %v6251
        %7038 = vmatpush1.bf16.msra.mxu0 %v6250
        %7039 = vmatprep.subr.bf16.mxu0 %v6255
        %7040 = vmatpush1.bf16.msra.mxu0 %v6254
        %7041 = vmatprep.subr.bf16.mxu0 %v6259
        %7042 = vmatpush1.bf16.msra.mxu0 %v6258
        %7043 = vmatprep.subr.bf16.mxu0 %v6263
        %7044 = vmatpush1.bf16.msra.mxu0 %v6262
        %7045 = vmatprep.subr.bf16.mxu0 %v6267
        %7046 = vmatpush1.bf16.msra.mxu0 %v6266
        %7047 = vmatprep.subr.bf16.mxu0 %v6271
        %7048 = vmatpush1.bf16.msra.mxu0 %v6270
        %7049 = vmatprep.subr.bf16.mxu0 %v6275
        %7050 = vmatpush1.bf16.msra.mxu0 %v6274
        %7051 = vmatprep.subr.bf16.mxu0 %v6279
        %7052 = vmatpush1.bf16.msra.mxu0 %v6278
        %7053 = vmatprep.subr.bf16.mxu0 %v6283
        %7054 = vmatpush1.bf16.msra.mxu0 %v6282
        %7055 = vmatprep.subr.bf16.mxu0 %v6287
        %7056 = vmatpush1.bf16.msra.mxu0 %v6286
        %7057 = vmatprep.subr.bf16.mxu0 %v6291
        %7058 = vmatpush1.bf16.msra.mxu0 %v6290
        %7059 = vmatprep.subr.bf16.mxu0 %v6295
        %7060 = vmatpush1.bf16.msra.mxu0 %v6294
        %7061 = vmatprep.mubr.bf16.mxu0 %v4756
        %7062 = vmatmul.mubr.bf16.gmra.mrb[0].mxu0 %v4755
        %v7063 = vpop.f32.mrb[0].mxu0
        %v7064 = vadd.f32 %v7023, %v7063
        %v7065 = vpop.f32.mrb[0].mxu0
        %v7066 = vadd.f32 %v7025, %v7065
        %v7067 = vpop.f32.mrb[0].mxu0
        %v7068 = vpop.f32.mrb[0].mxu0
        %7069 = vdwg.mxu0
        %7070 = vmatprep.subr.bf16.mxu0 %v6299
        %7071 = vmatpush1.bf16.msra.mxu0 %v6298
        %7072 = vmatprep.subr.bf16.mxu0 %v6303
        %7073 = vmatpush1.bf16.msra.mxu0 %v6302
        %7074 = vmatprep.subr.bf16.mxu0 %v6307
        %7075 = vmatpush1.bf16.msra.mxu0 %v6306
        %7076 = vmatprep.subr.bf16.mxu0 %v6311
        %7077 = vmatpush1.bf16.msra.mxu0 %v6310
        %7078 = vmatprep.subr.bf16.mxu0 %v6315
        %7079 = vmatpush1.bf16.msra.mxu0 %v6314
        %7080 = vmatprep.subr.bf16.mxu0 %v6319
        %7081 = vmatpush1.bf16.msra.mxu0 %v6318
        %7082 = vmatprep.subr.bf16.mxu0 %v6323
        %7083 = vmatpush1.bf16.msra.mxu0 %v6322
        %7084 = vmatprep.subr.bf16.mxu0 %v6327
        %7085 = vmatpush1.bf16.msra.mxu0 %v6326
        %7086 = vmatprep.subr.bf16.mxu0 %v6331
        %7087 = vmatpush1.bf16.msra.mxu0 %v6330
        %7088 = vmatprep.subr.bf16.mxu0 %v6335
        %7089 = vmatpush1.bf16.msra.mxu0 %v6334
        %7090 = vmatprep.subr.bf16.mxu0 %v6339
        %7091 = vmatpush1.bf16.msra.mxu0 %v6338
        %7092 = vmatprep.subr.bf16.mxu0 %v6343
        %7093 = vmatpush1.bf16.msra.mxu0 %v6342
        %7094 = vmatprep.subr.bf16.mxu0 %v6347
        %7095 = vmatpush1.bf16.msra.mxu0 %v6346
        %7096 = vmatprep.subr.bf16.mxu0 %v6351
        %7097 = vmatpush1.bf16.msra.mxu0 %v6350
        %7098 = vmatprep.subr.bf16.mxu0 %v6355
        %7099 = vmatpush1.bf16.msra.mxu0 %v6354
        %7100 = vmatprep.subr.bf16.mxu0 %v6359
        %7101 = vmatpush1.bf16.msra.mxu0 %v6358
        %7102 = vmatprep.mubr.bf16.mxu0 %v4758
        %7103 = vmatmul.mubr.bf16.gmra.mrb[0].mxu0 %v4757
        %v7104 = vpop.f32.mrb[0].mxu0
        %v7105 = vadd.f32 %v7064, %v7104
        %v7106 = vpop.f32.mrb[0].mxu0
        %v7107 = vadd.f32 %v7066, %v7106
        %v7108 = vpop.f32.mrb[0].mxu0
        %v7109 = vpop.f32.mrb[0].mxu0
        %7110 = vdwg.mxu0
        %v7111 = vmax.f32 %v6900, 0.0
        %v7112 = vmax.f32 %v6902, 0.0
        %v7113 = vmax.f32 %v7105, 0.0
        %v7114 = vmax.f32 %v7107, 0.0
        %v7115 = vld [vmem:[%s7] sm:$0xff]
        %v7116 = vld [vmem:[%s7 + $0x8] sm:$0xff]
        %v7117 = vld [vmem:[%s7 + $0x10] sm:$0xff]
        %v7118 = vld [vmem:[%s7 + $0x18] sm:$0xff]
        %v7119 = vld [vmem:[%s7 + $0x20] sm:$0xff]
        %v7120 = vld [vmem:[%s7 + $0x28] sm:$0xff]
        %v7121 = vld [vmem:[%s7 + $0x30] sm:$0xff]
        %v7122 = vld [vmem:[%s7 + $0x38] sm:$0xff]
        %v7123 = vld [vmem:[%s7 + $0x40] sm:$0xff]
        %v7124 = vld [vmem:[%s7 + $0x48] sm:$0xff]
        %v7125 = vld [vmem:[%s7 + $0x50] sm:$0xff]
        %v7126 = vld [vmem:[%s7 + $0x58] sm:$0xff]
        %v7127 = vld [vmem:[%s7 + $0x60] sm:$0xff]
        %v7128 = vld [vmem:[%s7 + $0x68] sm:$0xff]
        %v7129 = vld [vmem:[%s7 + $0x70] sm:$0xff]
        %v7130 = vld [vmem:[%s7 + $0x78] sm:$0xff]
        %v7131 = vld [vmem:[%s7 + $0x80] sm:$0xff]
        %v7132 = vld [vmem:[%s7 + $0x88] sm:$0xff]
        %v7133 = vld [vmem:[%s7 + $0x90] sm:$0xff]
        %v7134 = vld [vmem:[%s7 + $0x98] sm:$0xff]
        %v7135 = vld [vmem:[%s7 + $0xa0] sm:$0xff]
        %v7136 = vld [vmem:[%s7 + $0xa8] sm:$0xff]
        %v7137 = vld [vmem:[%s7 + $0xb0] sm:$0xff]
        %v7138 = vld [vmem:[%s7 + $0xb8] sm:$0xff]
        %v7139 = vld [vmem:[%s7 + $0xc0] sm:$0xff]
        %v7140 = vld [vmem:[%s7 + $0xc8] sm:$0xff]
        %v7141 = vld [vmem:[%s7 + $0xd0] sm:$0xff]
        %v7142 = vld [vmem:[%s7 + $0xd8] sm:$0xff]
        %v7143 = vld [vmem:[%s7 + $0xe0] sm:$0xff]
        %v7144 = vld [vmem:[%s7 + $0xe8] sm:$0xff]
        %v7145 = vld [vmem:[%s7 + $0xf0] sm:$0xff]
        %v7146 = vld [vmem:[%s7 + $0xf8] sm:$0xff]
        %v7147 = vld [vmem:[%s7 + $0x100] sm:$0xff]
        %v7148 = vld [vmem:[%s7 + $0x108] sm:$0xff]
        %v7149 = vld [vmem:[%s7 + $0x110] sm:$0xff]
        %v7150 = vld [vmem:[%s7 + $0x118] sm:$0xff]
        %v7151 = vld [vmem:[%s7 + $0x120] sm:$0xff]
        %v7152 = vld [vmem:[%s7 + $0x128] sm:$0xff]
        %v7153 = vld [vmem:[%s7 + $0x130] sm:$0xff]
        %v7154 = vld [vmem:[%s7 + $0x138] sm:$0xff]
        %v7155 = vld [vmem:[%s7 + $0x140] sm:$0xff]
        %v7156 = vld [vmem:[%s7 + $0x148] sm:$0xff]
        %v7157 = vld [vmem:[%s7 + $0x150] sm:$0xff]
        %v7158 = vld [vmem:[%s7 + $0x158] sm:$0xff]
        %v7159 = vld [vmem:[%s7 + $0x160] sm:$0xff]
        %v7160 = vld [vmem:[%s7 + $0x168] sm:$0xff]
        %v7161 = vld [vmem:[%s7 + $0x170] sm:$0xff]
        %v7162 = vld [vmem:[%s7 + $0x178] sm:$0xff]
        %v7163 = vld [vmem:[%s7 + $0x180] sm:$0xff]
        %v7164 = vld [vmem:[%s7 + $0x188] sm:$0xff]
        %v7165 = vld [vmem:[%s7 + $0x190] sm:$0xff]
        %v7166 = vld [vmem:[%s7 + $0x198] sm:$0xff]
        %v7167 = vld [vmem:[%s7 + $0x1a0] sm:$0xff]
        %v7168 = vld [vmem:[%s7 + $0x1a8] sm:$0xff]
        %v7169 = vld [vmem:[%s7 + $0x1b0] sm:$0xff]
        %v7170 = vld [vmem:[%s7 + $0x1b8] sm:$0xff]
        %v7171 = vld [vmem:[%s7 + $0x1c0] sm:$0xff]
        %v7172 = vld [vmem:[%s7 + $0x1c8] sm:$0xff]
        %v7173 = vld [vmem:[%s7 + $0x1d0] sm:$0xff]
        %v7174 = vld [vmem:[%s7 + $0x1d8] sm:$0xff]
        %v7175 = vld [vmem:[%s7 + $0x1e0] sm:$0xff]
        %v7176 = vld [vmem:[%s7 + $0x1e8] sm:$0xff]
        %v7177 = vld [vmem:[%s7 + $0x1f0] sm:$0xff]
        %v7178 = vld [vmem:[%s7 + $0x1f8] sm:$0xff]
        %v7179 = vld [vmem:[%s8] sm:$0x1]
        %7180 = vmatprep.subr.mxu0 0.0
        %7181 = vmatpush1.msra.mxu0 %v7115
        %7182 = vmatprep.subr.mxu0 0.0
        %7183 = vmatpush1.msra.mxu0 %v7116
        %7184 = vmatprep.subr.mxu0 0.0
        %7185 = vmatpush1.msra.mxu0 %v7117
        %7186 = vmatprep.subr.mxu0 0.0
        %7187 = vmatpush1.msra.mxu0 %v7118
        %7188 = vmatprep.subr.mxu0 0.0
        %7189 = vmatpush1.msra.mxu0 %v7119
        %7190 = vmatprep.subr.mxu0 0.0
        %7191 = vmatpush1.msra.mxu0 %v7120
        %7192 = vmatprep.subr.mxu0 0.0
        %7193 = vmatpush1.msra.mxu0 %v7121
        %7194 = vmatprep.subr.mxu0 0.0
        %7195 = vmatpush1.msra.mxu0 %v7122
        %7196 = vmatprep.subr.mxu0 0.0
        %7197 = vmatpush1.msra.mxu0 %v7123
        %7198 = vmatprep.subr.mxu0 0.0
        %7199 = vmatpush1.msra.mxu0 %v7124
        %7200 = vmatprep.subr.mxu0 0.0
        %7201 = vmatpush1.msra.mxu0 %v7125
        %7202 = vmatprep.subr.mxu0 0.0
        %7203 = vmatpush1.msra.mxu0 %v7126
        %7204 = vmatprep.subr.mxu0 0.0
        %7205 = vmatpush1.msra.mxu0 %v7127
        %7206 = vmatprep.subr.mxu0 0.0
        %7207 = vmatpush1.msra.mxu0 %v7128
        %7208 = vmatprep.subr.mxu0 0.0
        %7209 = vmatpush1.msra.mxu0 %v7129
        %7210 = vmatprep.subr.mxu0 0.0
        %7211 = vmatpush1.msra.mxu0 %v7130
        %7212 = vmatprep.subr.mxu0 0.0
        %7213 = vmatpush1.msra.mxu0 %v7131
        %7214 = vmatprep.subr.mxu0 0.0
        %7215 = vmatpush1.msra.mxu0 %v7132
        %7216 = vmatprep.subr.mxu0 0.0
        %7217 = vmatpush1.msra.mxu0 %v7133
        %7218 = vmatprep.subr.mxu0 0.0
        %7219 = vmatpush1.msra.mxu0 %v7134
        %7220 = vmatprep.subr.mxu0 0.0
        %7221 = vmatpush1.msra.mxu0 %v7135
        %7222 = vmatprep.subr.mxu0 0.0
        %7223 = vmatpush1.msra.mxu0 %v7136
        %7224 = vmatprep.subr.mxu0 0.0
        %7225 = vmatpush1.msra.mxu0 %v7137
        %7226 = vmatprep.subr.mxu0 0.0
        %7227 = vmatpush1.msra.mxu0 %v7138
        %7228 = vmatprep.subr.mxu0 0.0
        %7229 = vmatpush1.msra.mxu0 %v7139
        %7230 = vmatprep.subr.mxu0 0.0
        %7231 = vmatpush1.msra.mxu0 %v7140
        %7232 = vmatprep.subr.mxu0 0.0
        %7233 = vmatpush1.msra.mxu0 %v7141
        %7234 = vmatprep.subr.mxu0 0.0
        %7235 = vmatpush1.msra.mxu0 %v7142
        %7236 = vmatprep.subr.mxu0 0.0
        %7237 = vmatpush1.msra.mxu0 %v7143
        %7238 = vmatprep.subr.mxu0 0.0
        %7239 = vmatpush1.msra.mxu0 %v7144
        %7240 = vmatprep.subr.mxu0 0.0
        %7241 = vmatpush1.msra.mxu0 %v7145
        %7242 = vmatprep.subr.mxu0 0.0
        %7243 = vmatpush1.msra.mxu0 %v7146
        %7244 = vmatprep.mubr.f32.mxu0 %v7112
        %7245 = vmatmul.mubr.f32.gmra.mrb[0].mxu0 %v7111
        %v7246 = vpop.f32.mrb[0].mxu0
        %v7247 = vadd.f32 %v7179, %v7246
        %v7248 = vpop.f32.mrb[0].mxu0
        %7249 = vdwg.mxu0
        %7250 = vmatprep.subr.mxu0 0.0
        %7251 = vmatpush1.msra.mxu0 %v7147
        %7252 = vmatprep.subr.mxu0 0.0
        %7253 = vmatpush1.msra.mxu0 %v7148
        %7254 = vmatprep.subr.mxu0 0.0
        %7255 = vmatpush1.msra.mxu0 %v7149
        %7256 = vmatprep.subr.mxu0 0.0
        %7257 = vmatpush1.msra.mxu0 %v7150
        %7258 = vmatprep.subr.mxu0 0.0
        %7259 = vmatpush1.msra.mxu0 %v7151
        %7260 = vmatprep.subr.mxu0 0.0
        %7261 = vmatpush1.msra.mxu0 %v7152
        %7262 = vmatprep.subr.mxu0 0.0
        %7263 = vmatpush1.msra.mxu0 %v7153
        %7264 = vmatprep.subr.mxu0 0.0
        %7265 = vmatpush1.msra.mxu0 %v7154
        %7266 = vmatprep.subr.mxu0 0.0
        %7267 = vmatpush1.msra.mxu0 %v7155
        %7268 = vmatprep.subr.mxu0 0.0
        %7269 = vmatpush1.msra.mxu0 %v7156
        %7270 = vmatprep.subr.mxu0 0.0
        %7271 = vmatpush1.msra.mxu0 %v7157
        %7272 = vmatprep.subr.mxu0 0.0
        %7273 = vmatpush1.msra.mxu0 %v7158
        %7274 = vmatprep.subr.mxu0 0.0
        %7275 = vmatpush1.msra.mxu0 %v7159
        %7276 = vmatprep.subr.mxu0 0.0
        %7277 = vmatpush1.msra.mxu0 %v7160
        %7278 = vmatprep.subr.mxu0 0.0
        %7279 = vmatpush1.msra.mxu0 %v7161
        %7280 = vmatprep.subr.mxu0 0.0
        %7281 = vmatpush1.msra.mxu0 %v7162
        %7282 = vmatprep.subr.mxu0 0.0
        %7283 = vmatpush1.msra.mxu0 %v7163
        %7284 = vmatprep.subr.mxu0 0.0
        %7285 = vmatpush1.msra.mxu0 %v7164
        %7286 = vmatprep.subr.mxu0 0.0
        %7287 = vmatpush1.msra.mxu0 %v7165
        %7288 = vmatprep.subr.mxu0 0.0
        %7289 = vmatpush1.msra.mxu0 %v7166
        %7290 = vmatprep.subr.mxu0 0.0
        %7291 = vmatpush1.msra.mxu0 %v7167
        %7292 = vmatprep.subr.mxu0 0.0
        %7293 = vmatpush1.msra.mxu0 %v7168
        %7294 = vmatprep.subr.mxu0 0.0
        %7295 = vmatpush1.msra.mxu0 %v7169
        %7296 = vmatprep.subr.mxu0 0.0
        %7297 = vmatpush1.msra.mxu0 %v7170
        %7298 = vmatprep.subr.mxu0 0.0
        %7299 = vmatpush1.msra.mxu0 %v7171
        %7300 = vmatprep.subr.mxu0 0.0
        %7301 = vmatpush1.msra.mxu0 %v7172
        %7302 = vmatprep.subr.mxu0 0.0
        %7303 = vmatpush1.msra.mxu0 %v7173
        %7304 = vmatprep.subr.mxu0 0.0
        %7305 = vmatpush1.msra.mxu0 %v7174
        %7306 = vmatprep.subr.mxu0 0.0
        %7307 = vmatpush1.msra.mxu0 %v7175
        %7308 = vmatprep.subr.mxu0 0.0
        %7309 = vmatpush1.msra.mxu0 %v7176
        %7310 = vmatprep.subr.mxu0 0.0
        %7311 = vmatpush1.msra.mxu0 %v7177
        %7312 = vmatprep.subr.mxu0 0.0
        %7313 = vmatpush1.msra.mxu0 %v7178
        %7314 = vmatprep.mubr.f32.mxu0 %v7114
        %7315 = vmatmul.mubr.f32.gmra.mrb[0].mxu0 %v7113
        %v7316 = vpop.f32.mrb[0].mxu0
        %v7317 = vadd.f32 %v7247, %v7316
        %v7318 = vpop.f32.mrb[0].mxu0
        %7319 = vdwg.mxu0
        %7320 = vst [vmem:[%s324] sm:$0x1] %v7317
        %s7321 = sand.u32 %s225, 1
        %s7322 = scalar_lea.sflag [#allocation3], %s7321
        %s7323 = sand.u32 %s225, 1
        %s7324 = scalar_lea.vmem [#allocation2], %s7323
        // Predicated region
        $region57: #{face_recognition_forward.1} parent=55 // pred_check
          %p7325 = pneg %p235
        $region58: #{face_recognition_forward.1} parent=55 // pred_check_branch
          %7327 = sbr.rel (%p7325) target = $region60
        $region59: #{face_recognition_forward.1} parent=55 // pred_region
          %s7329 = ssub.s32 16, 16
          %7330 = vsyncadd %s7322, %s7329
          %s7331 = smul.addr %s23, 16
          %s7332 = scalar_lea.hbm %s9, %s7331
          %s7334 = sshll.u32 %s7324, 4
          %s7335 = int_to_ptr.vmem [resolvable:$true] %s7334
          %7337 = dma.vmem_to_hbm [thread:$0]  %s7335, 16, %s7332, %s7322
        $region60: #{face_recognition_forward.1} parent=55 // pred_fallthru
          _
      $region56: #{face_recognition_forward.1} parent=5 // pred_fallthru
        _
      %p7338 = scmp.le.s32.totalorder 2, %s18
      // Predicated region
      $region61: #{face_recognition_forward.1} parent=5 // pred_check
        %p7339 = pneg %p7338
      $region62: #{face_recognition_forward.1} parent=5 // pred_check_branch
        %7341 = sbr.rel (%p7339) target = $region64
      $region63: #{face_recognition_forward.1} parent=5 // pred_region
        %s7342 = ssub.s32 %s18, 2
        // Predicated region
        $region65: #{face_recognition_forward.1} parent=63 // pred_check
          %p7343 = pneg %p241
        $region66: #{face_recognition_forward.1} parent=63 // pred_check_branch
          %7345 = sbr.rel (%p7343) target = $region68
        $region67: #{face_recognition_forward.1} parent=63 // pred_region
          %s7346 = sand.u32 %s226, 1
          %s7347 = scalar_lea.sflag [#allocation3], %s7346
          %s7348 = sand.u32 %s226, 1
          %s7349 = scalar_lea.vmem [#allocation2], %s7348
          %7350 = dma.done %s7347, 16
        $region68: #{face_recognition_forward.1} parent=63 // pred_fallthru
          _
      $region64: #{face_recognition_forward.1} parent=5 // pred_fallthru
        _
    $region6: #{face_recognition_forward.1} parent=1 // loop_footer
      %s22 = sadd.s32 1, %s18
    $region7: #{face_recognition_forward.1} parent=1 // loop_footer_branch
      %17 = sbr.rel target = $region3
    $region8: #{face_recognition_forward.1} parent=1 // loop_exit
      _
    %7351 = vsyncpa [#allocation3], 1
    %s7352 = scalar_lea.sflag [#allocation3], 1
    %7353 = vsyncpa %s7352, 1

</llo_original>
